<compile_context>
chip_gen: v7x
topology: tpu7x:2x2x1
jax: 0.10.0
libtpu: 0.0.40
codegen_flags: <defaults>
</compile_context>

<pallas_src>
import functools

import jax
import jax.numpy as jnp
from jax.experimental import pallas as pl
from jax.experimental.pallas import tpu as pltpu

BN_EPS = 1e-5
NEG_SLOPE = 0.2
NEG_INF = -1e30


# ----------------------------- fused Pallas kernel ---------------------------


def _fused_gnn_kernel(x_ref, adjb_ref, ea_ref, slab_ref,
                      w1_ref, w2_ref, w3_ref, w4_ref, w5_ref, w6_ref,
                      mw1_ref, mw2_ref, mw3_ref,
                      out_ref, *, layer_cfg):
    """Whole forward pass: 6x (GATConv + folded-BN + ReLU), MLP head, log_softmax.

    Operands:
      x_ref    [N, Fin]        node features (f32)
      adjb_ref [N, Hmax*N]     additive adjacency mask (0 / -1e30), tiled per head
      ea_ref   [N, Hmax*N]     dense edge attribute (edge_dim == 1), tiled per head
      slab_ref [35, W]         packed one-row params; per GAT layer l the rows
                               5l..5l+4 are (att_src, att_dst, K_row, scale, shift),
                               rows 30..34 are the MLP (s1, sh1, s2, sh2, b3)
      w*_ref                   bf16 projection weights (6 GAT layers)
      mw*_ref                  bf16 MLP weights
    """
    f32 = jnp.float32
    bf16 = jnp.bfloat16
    n = x_ref.shape[0]
    w_refs = (w1_ref, w2_ref, w3_ref, w4_ref, w5_ref, w6_ref)

    adjb_t = adjb_ref[...]                       # [N, Hmax*N]
    ea_t = ea_ref[...]                           # [N, Hmax*N]

    h_act = x_ref[...]                           # current activation, lives in vregs
    for li, (H, C) in enumerate(layer_cfg):      # static unroll over layers
        HC, HN = H * C, H * n
        r0 = 5 * li
        asr = slab_ref[r0:r0 + 1, 0:HC]          # att_src   [1, HC]
        adr = slab_ref[r0 + 1:r0 + 2, 0:HC]      # att_dst   [1, HC]
        krw = slab_ref[r0 + 2:r0 + 3, 0:HN]      # K[h] repeated over each N-lane block
        sc = slab_ref[r0 + 3:r0 + 4, 0:HC]       # folded BN scale
        sh = slab_ref[r0 + 4:r0 + 5, 0:HC]       # folded bias + BN shift

        # Node projection on the MXU (bf16 operands, f32 accumulate).
        xp = jnp.dot(h_act.astype(bf16), w_refs[li][...],
                     preferred_element_type=f32)                       # [N, HC]

        # Full-width attention-score multiplies (hoisted out of the head loop).
        t_src = xp * asr
        t_dst = xp * adr
        a_src_cols, a_dst_cols = [], []
        for h in range(H):                        # tiny per-head lane reduces only
            cs = slice(h * C, (h + 1) * C)
            a_src_cols.append(jnp.transpose(
                jnp.sum(t_src[:, cs], axis=1, keepdims=True)))         # [1, N]
            a_dst_cols.append(jnp.sum(t_dst[:, cs], axis=1, keepdims=True))  # [N, 1]
        a_src_row = jnp.concatenate(a_src_cols, axis=1)                # [1, HN]
        a_dst_blk = jnp.concatenate(
            [jnp.broadcast_to(c, (n, n)) for c in a_dst_cols], axis=1)  # [N, HN]

        # Head-stacked logits: e[i, h*N + j] = a_dst[i,h] + a_src[j,h] + K[h]*ea[i,j]
        e = a_dst_blk + a_src_row + ea_t[:, :HN] * krw
        e = jnp.where(e > 0, e, NEG_SLOPE * e)     # leaky-ReLU, 64-lane dense
        e = e + adjb_t[:, :HN]                     # additive mask (precomputed)

        # Per-head max for a numerically safe softmax (broadcast back across lanes).
        mx = [jnp.max(e[:, h * n:(h + 1) * n], axis=1, keepdims=True) for h in range(H)]
        e = e - jnp.concatenate([jnp.broadcast_to(m, (n, n)) for m in mx], axis=1)
        p = jnp.exp(e)                             # masked entries underflow to 0
        sm = [jnp.sum(p[:, h * n:(h + 1) * n], axis=1, keepdims=True) for h in range(H)]
        alpha = p / jnp.concatenate(               # EXACT divide (no approx recip)
            [jnp.broadcast_to(s, (n, n)) for s in sm], axis=1)

        # Per-head aggregation on the MXU, concatenated in registers.
        outs = [jnp.dot(alpha[:, h * n:(h + 1) * n], xp[:, h * C:(h + 1) * C],
                        preferred_element_type=f32) for h in range(H)]
        o = jnp.concatenate(outs, axis=1) if H > 1 else outs[0]        # [N, HC]

        # Fused (bias + BN) scale/shift and ReLU, full-width, stays in registers.
        h_act = jnp.maximum(o * sc + sh, 0.0)

    # MLP head: Linear->BN->ReLU->(dropout=id)->Linear->BN->ReLU->Linear->log_softmax
    mb = 5 * len(layer_cfg)
    d1 = mw1_ref.shape[1]
    d2 = mw2_ref.shape[1]
    d3 = mw3_ref.shape[1]
    s1 = slab_ref[mb:mb + 1, 0:d1]
    sh1 = slab_ref[mb + 1:mb + 2, 0:d1]
    s2 = slab_ref[mb + 2:mb + 3, 0:d2]
    sh2 = slab_ref[mb + 3:mb + 4, 0:d2]
    b3 = slab_ref[mb + 4:mb + 5, 0:d3]

    hm = jnp.dot(h_act.astype(bf16), mw1_ref[...], preferred_element_type=f32)
    hm = jnp.maximum(hm * s1 + sh1, 0.0)
    hm = jnp.dot(hm.astype(bf16), mw2_ref[...], preferred_element_type=f32)
    hm = jnp.maximum(hm * s2 + sh2, 0.0)
    logits = jnp.dot(hm.astype(bf16), mw3_ref[...], preferred_element_type=f32) + b3
    z = logits - jnp.max(logits, axis=1, keepdims=True)
    out_ref[...] = z - jnp.log(jnp.sum(jnp.exp(z), axis=1, keepdims=True))


# ------------------------------ JAX glue --------------------------------------


def _full_specs(arrays):
    """Whole-array BlockSpecs (block == full array) for a trivial grid=(1,)."""
    specs = []
    for a in arrays:
        nd = a.ndim
        specs.append(pl.BlockSpec(a.shape, (lambda n: (lambda i: (0,) * n))(nd)))
    return specs


def build_dense_graph(edge_index, edge_attr, num_nodes):
    """Dense adjacency + dense edge attribute (edge_dim=1) with PyG-style self loops.

    Matches GATConv's remove_self_loops + add_self_loops(fill_value='mean'): the
    self-loop attribute is the mean of the *non-self* incoming edge attrs.
    """
    assert edge_attr.shape[1] == 1, "edge_dim must be 1 for this model"
    src, dst = edge_index[0], edge_index[1]
    not_self = (src != dst).astype(jnp.float32)
    counts = jnp.zeros((num_nodes,), jnp.float32).at[dst].add(not_self)
    sums = jnp.zeros((num_nodes, 1), jnp.float32).at[dst].add(edge_attr * not_self[:, None])
    loop_attr = sums / jnp.maximum(counts, 1.0)[:, None]          # fill_value='mean'
    adj = jnp.zeros((num_nodes, num_nodes), jnp.float32).at[dst, src].set(1.0)
    adj = jnp.maximum(adj, jnp.eye(num_nodes, dtype=jnp.float32))  # self loops always present
    ea = jnp.zeros((num_nodes, num_nodes, 1), jnp.float32).at[dst, src].set(edge_attr)
    diag = jnp.arange(num_nodes)
    ea = ea.at[diag, diag].set(loop_attr)
    return adj, ea[:, :, 0]                                        # [N,N], [N,N]


def particle_gnn_bigger_forward(x, edge_index, edge_attr, params, hidden, heads,
                                num_classes):
    N = x.shape[0]
    f32 = jnp.float32
    bf16 = jnp.bfloat16
    # (heads, out_per_head) per GAT layer; conv6 is heads=1 concat=False (== 1 head).
    layer_cfg = ((heads, hidden), (heads, hidden), (heads, hidden * 2),
                 (heads, hidden * 2), (heads, hidden), (1, hidden))
    layer_names = ("conv1", "conv2", "conv3", "conv4", "conv5", "conv6")
    Hmax = max(H for H, _ in layer_cfg)

    adj, ea2d = build_dense_graph(edge_index, edge_attr, N)
    adj_bias = jnp.where(adj > 0, 0.0, NEG_INF).astype(f32)        # hoisted mask
    adjb_t = jnp.tile(adj_bias, (1, Hmax))                          # [N, Hmax*N]
    ea_t = jnp.tile(ea2d, (1, Hmax))                                # [N, Hmax*N]

    # ---- pack every tiny one-row parameter into a single [rows, width] slab ----
    width = max(max(H * C for H, C in layer_cfg), 2 * hidden, Hmax * N, num_classes)
    rows, weights = [], []
    for name, (H, C) in zip(layer_names, layer_cfg):
        p = params[name]
        HC = H * C
        # Edge attention folding (edge_dim=1): K[h] = sum_c W_edge[0,h,c]*att_edge[h,c]
        K = (p["W_edge"].reshape(1, H, C) * p["att_edge"][None]).sum(-1).reshape(H)
        scale = p["bn_gamma"] / jnp.sqrt(p["bn_var"] + BN_EPS)
        shift = p["bn_beta"] + (p["bias"] - p["bn_mean"]) * scale   # GAT bias folded in
        rows += [p["att_src"].reshape(HC), p["att_dst"].reshape(HC),
                 jnp.repeat(K, N),                                   # K_row [H*N]
                 scale, shift]
        weights.append(p["W"].astype(bf16))
    mp = params["mlp"]
    s1 = mp["bn1_gamma"] / jnp.sqrt(mp["bn1_var"] + BN_EPS)
    sh1 = mp["bn1_beta"] + (mp["b1"] - mp["bn1_mean"]) * s1
    s2 = mp["bn2_gamma"] / jnp.sqrt(mp["bn2_var"] + BN_EPS)
    sh2 = mp["bn2_beta"] + (mp["b2"] - mp["bn2_mean"]) * s2
    rows += [s1, sh1, s2, sh2, mp["b3"]]
    slab = jnp.stack([jnp.pad(r.astype(f32), (0, width - r.shape[0])) for r in rows])

    mlp_ws = [mp["w1"].astype(bf16), mp["w2"].astype(bf16), mp["w3"].astype(bf16)]

    args = [x.astype(f32), adjb_t, ea_t, slab] + weights + mlp_ws   # 13 operands

    kernel = functools.partial(_fused_gnn_kernel, layer_cfg=layer_cfg)
    return pl.pallas_call(
        kernel,
        out_shape=jax.ShapeDtypeStruct((N, num_classes), f32),
        grid=(1,),
        in_specs=_full_specs(args),
        out_specs=pl.BlockSpec((N, num_classes), lambda i: (0, 0)),
        compiler_params=pltpu.CompilerParams(dimension_semantics=("arbitrary",)),
    )(*args)


# --------------------------- parameter init ----------------------------------


def _init_gat(key, fin, heads, out_per_head, concat=True, edge_dim=1):
    H, C = heads, out_per_head
    out_dim = H * C if concat else C
    ks = jax.random.split(key, 5)
    f32 = jnp.float32
    return {
        "W": jax.random.normal(ks[0], (fin, H * C), f32) / jnp.sqrt(jnp.asarray(fin, f32)),
        "att_src": jax.random.normal(ks[1], (H, C), f32) * 0.1,
        "att_dst": jax.random.normal(ks[2], (H, C), f32) * 0.1,
        "W_edge": jax.random.normal(ks[3], (edge_dim, H * C), f32) * 0.5,
        "att_edge": jax.random.normal(ks[4], (H, C), f32) * 0.1,
        "bias": jnp.zeros((out_dim,), f32),
        "bn_gamma": jnp.ones((out_dim,), f32), "bn_beta": jnp.zeros((out_dim,), f32),
        "bn_mean": jnp.zeros((out_dim,), f32), "bn_var": jnp.ones((out_dim,), f32),
    }


def init_params(key, num_node_features, hidden, heads, num_classes):
    keys = jax.random.split(key, 7)
    p = {
        "conv1": _init_gat(keys[0], num_node_features, heads, hidden),
        "conv2": _init_gat(keys[1], hidden * heads, heads, hidden),
        "conv3": _init_gat(keys[2], hidden * heads, heads, hidden * 2),
        "conv4": _init_gat(keys[3], hidden * 2 * heads, heads, hidden * 2),
        "conv5": _init_gat(keys[4], hidden * 2 * heads, heads, hidden),
        "conv6": _init_gat(keys[5], hidden * heads, 1, hidden, concat=False),
    }
    mk = jax.random.split(keys[6], 3)
    f32 = jnp.float32
    p["mlp"] = {
        "w1": jax.random.normal(mk[0], (hidden, hidden * 2), f32) / jnp.sqrt(jnp.asarray(hidden, f32)),
        "b1": jnp.zeros((hidden * 2,), f32),
        "bn1_gamma": jnp.ones((hidden * 2,), f32), "bn1_beta": jnp.zeros((hidden * 2,), f32),
        "bn1_mean": jnp.zeros((hidden * 2,), f32), "bn1_var": jnp.ones((hidden * 2,), f32),
        "w2": jax.random.normal(mk[1], (hidden * 2, hidden), f32) / jnp.sqrt(jnp.asarray(hidden * 2, f32)),
        "b2": jnp.zeros((hidden,), f32),
        "bn2_gamma": jnp.ones((hidden,), f32), "bn2_beta": jnp.zeros((hidden,), f32),
        "bn2_mean": jnp.zeros((hidden,), f32), "bn2_var": jnp.ones((hidden,), f32),
        "w3": jax.random.normal(mk[2], (hidden, num_classes), f32) / jnp.sqrt(jnp.asarray(hidden, f32)),
        "b3": jnp.zeros((num_classes,), f32),
    }
    return p


# --------------------------------- main ---------------------------------------


if __name__ == "__main__":
    NUM_NODES = 16
    NUM_NODE_FEATURES = 8
    HIDDEN = 32
    HEADS = 4
    NUM_CLASSES = 3

    key = jax.random.PRNGKey(0)
    k_x, k_ea, k_p = jax.random.split(key, 3)

    # Node features [N, F]
    x = jax.random.normal(k_x, (NUM_NODES, NUM_NODE_FEATURES), jnp.float32)

    # Bidirectional ring graph: 2*N directed edges, edge_attr [E, 1]
    src = jnp.arange(NUM_NODES, dtype=jnp.int32)
    dst = (src + 1) % NUM_NODES
    edge_index = jnp.stack([jnp.concatenate([src, dst]),
                            jnp.concatenate([dst, src])], axis=0)       # [2, 32]
    edge_attr = jax.random.uniform(k_ea, (edge_index.shape[1], 1), jnp.float32)

    params = init_params(k_p, NUM_NODE_FEATURES, HIDDEN, HEADS, NUM_CLASSES)

    log_probs = particle_gnn_bigger_forward(
        x, edge_index, edge_attr, params, HIDDEN, HEADS, NUM_CLASSES)
    log_probs = jax.block_until_ready(log_probs)

    assert log_probs.shape == (NUM_NODES, NUM_CLASSES)
    assert bool(jnp.all(jnp.isfinite(log_probs)))
    # rows of exp(log_probs) must sum to 1 (log_softmax over dim=1)
    assert bool(jnp.allclose(jnp.sum(jnp.exp(log_probs), axis=1), 1.0, atol=1e-5))
    print("KERNEL_OK")
</pallas_src>

<mosaic_0001>
module attributes {stable_mosaic.version = 11 : i64} {
  func.func @_fused_gnn_kernel(%arg0: i32, %arg1: memref<16x8xf32, #tpu.memory_space<vmem>>, %arg2: memref<16x64xf32, #tpu.memory_space<vmem>>, %arg3: memref<16x64xf32, #tpu.memory_space<vmem>>, %arg4: memref<35x256xf32, #tpu.memory_space<vmem>>, %arg5: memref<8x128xbf16, #tpu.memory_space<vmem>>, %arg6: memref<128x128xbf16, #tpu.memory_space<vmem>>, %arg7: memref<128x256xbf16, #tpu.memory_space<vmem>>, %arg8: memref<256x256xbf16, #tpu.memory_space<vmem>>, %arg9: memref<256x128xbf16, #tpu.memory_space<vmem>>, %arg10: memref<128x32xbf16, #tpu.memory_space<vmem>>, %arg11: memref<32x64xbf16, #tpu.memory_space<vmem>>, %arg12: memref<64x32xbf16, #tpu.memory_space<vmem>>, %arg13: memref<32x3xbf16, #tpu.memory_space<vmem>>, %arg14: memref<16x3xf32, #tpu.memory_space<vmem>>) attributes {dimension_semantics = [#tpu.dimension_semantics<arbitrary>], iteration_bounds = array<i64: 1>, scalar_prefetch = 0 : i64, scratch_operands = 0 : i64, tpu.core_type = #tpu.core_type<tc>, window_params = [{pipeline_mode = #tpu.pipeline_mode<synchronous>, transform_indices = @transform_0, window_bounds = array<i64: 16, 8>}, {pipeline_mode = #tpu.pipeline_mode<synchronous>, transform_indices = @transform_1, window_bounds = array<i64: 16, 64>}, {pipeline_mode = #tpu.pipeline_mode<synchronous>, transform_indices = @transform_2, window_bounds = array<i64: 16, 64>}, {pipeline_mode = #tpu.pipeline_mode<synchronous>, transform_indices = @transform_3, window_bounds = array<i64: 35, 256>}, {pipeline_mode = #tpu.pipeline_mode<synchronous>, transform_indices = @transform_4, window_bounds = array<i64: 8, 128>}, {pipeline_mode = #tpu.pipeline_mode<synchronous>, transform_indices = @transform_5, window_bounds = array<i64: 128, 128>}, {pipeline_mode = #tpu.pipeline_mode<synchronous>, transform_indices = @transform_6, window_bounds = array<i64: 128, 256>}, {pipeline_mode = #tpu.pipeline_mode<synchronous>, transform_indices = @transform_7, window_bounds = array<i64: 256, 256>}, {pipeline_mode = #tpu.pipeline_mode<synchronous>, transform_indices = @transform_8, window_bounds = array<i64: 256, 128>}, {pipeline_mode = #tpu.pipeline_mode<synchronous>, transform_indices = @transform_9, window_bounds = array<i64: 128, 32>}, {pipeline_mode = #tpu.pipeline_mode<synchronous>, transform_indices = @transform_10, window_bounds = array<i64: 32, 64>}, {pipeline_mode = #tpu.pipeline_mode<synchronous>, transform_indices = @transform_11, window_bounds = array<i64: 64, 32>}, {pipeline_mode = #tpu.pipeline_mode<synchronous>, transform_indices = @transform_12, window_bounds = array<i64: 32, 3>}, {pipeline_mode = #tpu.pipeline_mode<synchronous>, transform_indices = @transform_13, window_bounds = array<i64: 16, 3>}]} {
    %c0 = arith.constant 0 : index
    %c0_0 = arith.constant 0 : index
    %0 = vector.load %arg2[%c0, %c0_0] : memref<16x64xf32, #tpu.memory_space<vmem>>, vector<16x64xf32>
    %c0_1 = arith.constant 0 : index
    %c0_2 = arith.constant 0 : index
    %1 = vector.load %arg3[%c0_1, %c0_2] : memref<16x64xf32, #tpu.memory_space<vmem>>, vector<16x64xf32>
    %c0_3 = arith.constant 0 : index
    %c0_4 = arith.constant 0 : index
    %2 = vector.load %arg1[%c0_3, %c0_4] : memref<16x8xf32, #tpu.memory_space<vmem>>, vector<16x8xf32>
    %c0_5 = arith.constant 0 : index
    %c0_6 = arith.constant 0 : index
    %3 = vector.load %arg4[%c0_5, %c0_6] : memref<35x256xf32, #tpu.memory_space<vmem>>, vector<1x128xf32>
    %c1 = arith.constant 1 : index
    %c0_7 = arith.constant 0 : index
    %4 = vector.load %arg4[%c1, %c0_7] : memref<35x256xf32, #tpu.memory_space<vmem>>, vector<1x128xf32>
    %c2 = arith.constant 2 : index
    %c0_8 = arith.constant 0 : index
    %5 = vector.load %arg4[%c2, %c0_8] : memref<35x256xf32, #tpu.memory_space<vmem>>, vector<1x64xf32>
    %c3 = arith.constant 3 : index
    %c0_9 = arith.constant 0 : index
    %6 = vector.load %arg4[%c3, %c0_9] : memref<35x256xf32, #tpu.memory_space<vmem>>, vector<1x128xf32>
    %c4 = arith.constant 4 : index
    %c0_10 = arith.constant 0 : index
    %7 = vector.load %arg4[%c4, %c0_10] : memref<35x256xf32, #tpu.memory_space<vmem>>, vector<1x128xf32>
    %8 = arith.truncf %2 : vector<16x8xf32> to vector<16x8xbf16>
    %c0_11 = arith.constant 0 : index
    %c0_12 = arith.constant 0 : index
    %9 = vector.load %arg5[%c0_11, %c0_12] : memref<8x128xbf16, #tpu.memory_space<vmem>>, vector<8x128xbf16>
    %cst = arith.constant dense<0.000000e+00> : vector<16x128xf32>
    %10 = tpu.matmul %8, %9, %cst {dimension_numbers = #tpu.dot_dimension_numbers<[1], [0], [0], [1], [0, 0, 1, 1], [], []>} : vector<16x8xbf16>, vector<8x128xbf16>, vector<16x128xf32> -> vector<16x128xf32>
    %11 = vector.broadcast %3 : vector<1x128xf32> to vector<16x128xf32>
    %12 = arith.mulf %10, %11 : vector<16x128xf32>
    %13 = vector.broadcast %4 : vector<1x128xf32> to vector<16x128xf32>
    %14 = arith.mulf %10, %13 : vector<16x128xf32>
    %15 = vector.extract_strided_slice %12 {offsets = [0, 0], sizes = [16, 32], strides = [1, 1]} : vector<16x128xf32> to vector<16x32xf32>
    %cst_13 = arith.constant dense<0.000000e+00> : vector<16xf32>
    %16 = vector.multi_reduction <add>, %15, %cst_13 [1] : vector<16x32xf32> to vector<16xf32>
    %17 = vector.shape_cast %16 : vector<16xf32> to vector<16x1xf32>
    %18 = tpu.transpose %17, [1, 0] : vector<16x1xf32> -> vector<1x16xf32>
    %19 = vector.extract_strided_slice %14 {offsets = [0, 0], sizes = [16, 32], strides = [1, 1]} : vector<16x128xf32> to vector<16x32xf32>
    %cst_14 = arith.constant dense<0.000000e+00> : vector<16xf32>
    %20 = vector.multi_reduction <add>, %19, %cst_14 [1] : vector<16x32xf32> to vector<16xf32>
    %21 = vector.shape_cast %20 : vector<16xf32> to vector<16x1xf32>
    %22 = vector.extract_strided_slice %12 {offsets = [0, 32], sizes = [16, 32], strides = [1, 1]} : vector<16x128xf32> to vector<16x32xf32>
    %cst_15 = arith.constant dense<0.000000e+00> : vector<16xf32>
    %23 = vector.multi_reduction <add>, %22, %cst_15 [1] : vector<16x32xf32> to vector<16xf32>
    %24 = vector.shape_cast %23 : vector<16xf32> to vector<16x1xf32>
    %25 = tpu.transpose %24, [1, 0] : vector<16x1xf32> -> vector<1x16xf32>
    %26 = vector.extract_strided_slice %14 {offsets = [0, 32], sizes = [16, 32], strides = [1, 1]} : vector<16x128xf32> to vector<16x32xf32>
    %cst_16 = arith.constant dense<0.000000e+00> : vector<16xf32>
    %27 = vector.multi_reduction <add>, %26, %cst_16 [1] : vector<16x32xf32> to vector<16xf32>
    %28 = vector.shape_cast %27 : vector<16xf32> to vector<16x1xf32>
    %29 = vector.extract_strided_slice %12 {offsets = [0, 64], sizes = [16, 32], strides = [1, 1]} : vector<16x128xf32> to vector<16x32xf32>
    %cst_17 = arith.constant dense<0.000000e+00> : vector<16xf32>
    %30 = vector.multi_reduction <add>, %29, %cst_17 [1] : vector<16x32xf32> to vector<16xf32>
    %31 = vector.shape_cast %30 : vector<16xf32> to vector<16x1xf32>
    %32 = tpu.transpose %31, [1, 0] : vector<16x1xf32> -> vector<1x16xf32>
    %33 = vector.extract_strided_slice %14 {offsets = [0, 64], sizes = [16, 32], strides = [1, 1]} : vector<16x128xf32> to vector<16x32xf32>
    %cst_18 = arith.constant dense<0.000000e+00> : vector<16xf32>
    %34 = vector.multi_reduction <add>, %33, %cst_18 [1] : vector<16x32xf32> to vector<16xf32>
    %35 = vector.shape_cast %34 : vector<16xf32> to vector<16x1xf32>
    %36 = vector.extract_strided_slice %12 {offsets = [0, 96], sizes = [16, 32], strides = [1, 1]} : vector<16x128xf32> to vector<16x32xf32>
    %cst_19 = arith.constant dense<0.000000e+00> : vector<16xf32>
    %37 = vector.multi_reduction <add>, %36, %cst_19 [1] : vector<16x32xf32> to vector<16xf32>
    %38 = vector.shape_cast %37 : vector<16xf32> to vector<16x1xf32>
    %39 = tpu.transpose %38, [1, 0] : vector<16x1xf32> -> vector<1x16xf32>
    %40 = vector.extract_strided_slice %14 {offsets = [0, 96], sizes = [16, 32], strides = [1, 1]} : vector<16x128xf32> to vector<16x32xf32>
    %cst_20 = arith.constant dense<0.000000e+00> : vector<16xf32>
    %41 = vector.multi_reduction <add>, %40, %cst_20 [1] : vector<16x32xf32> to vector<16xf32>
    %42 = vector.shape_cast %41 : vector<16xf32> to vector<16x1xf32>
    %43 = tpu.concatenate %18, %25, %32, %39 in 1 : vector<1x16xf32>, vector<1x16xf32>, vector<1x16xf32>, vector<1x16xf32> -> vector<1x64xf32>
    %44 = vector.shape_cast %21 : vector<16x1xf32> to vector<16x1xf32>
    %45 = vector.broadcast %44 : vector<16x1xf32> to vector<16x16xf32>
    %46 = vector.shape_cast %28 : vector<16x1xf32> to vector<16x1xf32>
    %47 = vector.broadcast %46 : vector<16x1xf32> to vector<16x16xf32>
    %48 = vector.shape_cast %35 : vector<16x1xf32> to vector<16x1xf32>
    %49 = vector.broadcast %48 : vector<16x1xf32> to vector<16x16xf32>
    %50 = vector.shape_cast %42 : vector<16x1xf32> to vector<16x1xf32>
    %51 = vector.broadcast %50 : vector<16x1xf32> to vector<16x16xf32>
    %52 = tpu.concatenate %45, %47, %49, %51 in 1 : vector<16x16xf32>, vector<16x16xf32>, vector<16x16xf32>, vector<16x16xf32> -> vector<16x64xf32>
    %53 = vector.broadcast %43 : vector<1x64xf32> to vector<16x64xf32>
    %54 = arith.addf %52, %53 : vector<16x64xf32>
    %55 = vector.broadcast %5 : vector<1x64xf32> to vector<16x64xf32>
    %56 = arith.mulf %1, %55 : vector<16x64xf32>
    %57 = arith.addf %54, %56 : vector<16x64xf32>
    %cst_21 = arith.constant 0.000000e+00 : f32
    %58 = vector.broadcast %cst_21 : f32 to vector<16x64xf32>
    %59 = arith.cmpf ogt, %57, %58 : vector<16x64xf32>
    %cst_22 = arith.constant 2.000000e-01 : f32
    %60 = vector.broadcast %cst_22 : f32 to vector<16x64xf32>
    %61 = arith.mulf %60, %57 : vector<16x64xf32>
    %62 = arith.select %59, %57, %61 : vector<16x64xi1>, vector<16x64xf32>
    %63 = arith.addf %62, %0 : vector<16x64xf32>
    %64 = vector.extract_strided_slice %63 {offsets = [0, 0], sizes = [16, 16], strides = [1, 1]} : vector<16x64xf32> to vector<16x16xf32>
    %cst_23 = arith.constant dense<0xFF800000> : vector<16xf32>
    %65 = vector.multi_reduction <maximumf>, %64, %cst_23 [1] : vector<16x16xf32> to vector<16xf32>
    %66 = vector.shape_cast %65 : vector<16xf32> to vector<16x1xf32>
    %67 = vector.extract_strided_slice %63 {offsets = [0, 16], sizes = [16, 16], strides = [1, 1]} : vector<16x64xf32> to vector<16x16xf32>
    %cst_24 = arith.constant dense<0xFF800000> : vector<16xf32>
    %68 = vector.multi_reduction <maximumf>, %67, %cst_24 [1] : vector<16x16xf32> to vector<16xf32>
    %69 = vector.shape_cast %68 : vector<16xf32> to vector<16x1xf32>
    %70 = vector.extract_strided_slice %63 {offsets = [0, 32], sizes = [16, 16], strides = [1, 1]} : vector<16x64xf32> to vector<16x16xf32>
    %cst_25 = arith.constant dense<0xFF800000> : vector<16xf32>
    %71 = vector.multi_reduction <maximumf>, %70, %cst_25 [1] : vector<16x16xf32> to vector<16xf32>
    %72 = vector.shape_cast %71 : vector<16xf32> to vector<16x1xf32>
    %73 = vector.extract_strided_slice %63 {offsets = [0, 48], sizes = [16, 16], strides = [1, 1]} : vector<16x64xf32> to vector<16x16xf32>
    %cst_26 = arith.constant dense<0xFF800000> : vector<16xf32>
    %74 = vector.multi_reduction <maximumf>, %73, %cst_26 [1] : vector<16x16xf32> to vector<16xf32>
    %75 = vector.shape_cast %74 : vector<16xf32> to vector<16x1xf32>
    %76 = vector.shape_cast %66 : vector<16x1xf32> to vector<16x1xf32>
    %77 = vector.broadcast %76 : vector<16x1xf32> to vector<16x16xf32>
    %78 = vector.shape_cast %69 : vector<16x1xf32> to vector<16x1xf32>
    %79 = vector.broadcast %78 : vector<16x1xf32> to vector<16x16xf32>
    %80 = vector.shape_cast %72 : vector<16x1xf32> to vector<16x1xf32>
    %81 = vector.broadcast %80 : vector<16x1xf32> to vector<16x16xf32>
    %82 = vector.shape_cast %75 : vector<16x1xf32> to vector<16x1xf32>
    %83 = vector.broadcast %82 : vector<16x1xf32> to vector<16x16xf32>
    %84 = tpu.concatenate %77, %79, %81, %83 in 1 : vector<16x16xf32>, vector<16x16xf32>, vector<16x16xf32>, vector<16x16xf32> -> vector<16x64xf32>
    %85 = arith.subf %63, %84 : vector<16x64xf32>
    %86 = math.exp %85 : vector<16x64xf32>
    %87 = vector.extract_strided_slice %86 {offsets = [0, 0], sizes = [16, 16], strides = [1, 1]} : vector<16x64xf32> to vector<16x16xf32>
    %cst_27 = arith.constant dense<0.000000e+00> : vector<16xf32>
    %88 = vector.multi_reduction <add>, %87, %cst_27 [1] : vector<16x16xf32> to vector<16xf32>
    %89 = vector.shape_cast %88 : vector<16xf32> to vector<16x1xf32>
    %90 = vector.extract_strided_slice %86 {offsets = [0, 16], sizes = [16, 16], strides = [1, 1]} : vector<16x64xf32> to vector<16x16xf32>
    %cst_28 = arith.constant dense<0.000000e+00> : vector<16xf32>
    %91 = vector.multi_reduction <add>, %90, %cst_28 [1] : vector<16x16xf32> to vector<16xf32>
    %92 = vector.shape_cast %91 : vector<16xf32> to vector<16x1xf32>
    %93 = vector.extract_strided_slice %86 {offsets = [0, 32], sizes = [16, 16], strides = [1, 1]} : vector<16x64xf32> to vector<16x16xf32>
    %cst_29 = arith.constant dense<0.000000e+00> : vector<16xf32>
    %94 = vector.multi_reduction <add>, %93, %cst_29 [1] : vector<16x16xf32> to vector<16xf32>
    %95 = vector.shape_cast %94 : vector<16xf32> to vector<16x1xf32>
    %96 = vector.extract_strided_slice %86 {offsets = [0, 48], sizes = [16, 16], strides = [1, 1]} : vector<16x64xf32> to vector<16x16xf32>
    %cst_30 = arith.constant dense<0.000000e+00> : vector<16xf32>
    %97 = vector.multi_reduction <add>, %96, %cst_30 [1] : vector<16x16xf32> to vector<16xf32>
    %98 = vector.shape_cast %97 : vector<16xf32> to vector<16x1xf32>
    %99 = vector.shape_cast %89 : vector<16x1xf32> to vector<16x1xf32>
    %100 = vector.broadcast %99 : vector<16x1xf32> to vector<16x16xf32>
    %101 = vector.shape_cast %92 : vector<16x1xf32> to vector<16x1xf32>
    %102 = vector.broadcast %101 : vector<16x1xf32> to vector<16x16xf32>
    %103 = vector.shape_cast %95 : vector<16x1xf32> to vector<16x1xf32>
    %104 = vector.broadcast %103 : vector<16x1xf32> to vector<16x16xf32>
    %105 = vector.shape_cast %98 : vector<16x1xf32> to vector<16x1xf32>
    %106 = vector.broadcast %105 : vector<16x1xf32> to vector<16x16xf32>
    %107 = tpu.concatenate %100, %102, %104, %106 in 1 : vector<16x16xf32>, vector<16x16xf32>, vector<16x16xf32>, vector<16x16xf32> -> vector<16x64xf32>
    %108 = arith.divf %86, %107 : vector<16x64xf32>
    %109 = vector.extract_strided_slice %108 {offsets = [0, 0], sizes = [16, 16], strides = [1, 1]} : vector<16x64xf32> to vector<16x16xf32>
    %110 = vector.extract_strided_slice %10 {offsets = [0, 0], sizes = [16, 32], strides = [1, 1]} : vector<16x128xf32> to vector<16x32xf32>
    %cst_31 = arith.constant dense<0.000000e+00> : vector<16x32xf32>
    %111 = tpu.matmul %109, %110, %cst_31 {dimension_numbers = #tpu.dot_dimension_numbers<[1], [0], [0], [1], [0, 0, 1, 1], [], []>} : vector<16x16xf32>, vector<16x32xf32>, vector<16x32xf32> -> vector<16x32xf32>
    %112 = vector.extract_strided_slice %108 {offsets = [0, 16], sizes = [16, 16], strides = [1, 1]} : vector<16x64xf32> to vector<16x16xf32>
    %113 = vector.extract_strided_slice %10 {offsets = [0, 32], sizes = [16, 32], strides = [1, 1]} : vector<16x128xf32> to vector<16x32xf32>
    %cst_32 = arith.constant dense<0.000000e+00> : vector<16x32xf32>
    %114 = tpu.matmul %112, %113, %cst_32 {dimension_numbers = #tpu.dot_dimension_numbers<[1], [0], [0], [1], [0, 0, 1, 1], [], []>} : vector<16x16xf32>, vector<16x32xf32>, vector<16x32xf32> -> vector<16x32xf32>
    %115 = vector.extract_strided_slice %108 {offsets = [0, 32], sizes = [16, 16], strides = [1, 1]} : vector<16x64xf32> to vector<16x16xf32>
    %116 = vector.extract_strided_slice %10 {offsets = [0, 64], sizes = [16, 32], strides = [1, 1]} : vector<16x128xf32> to vector<16x32xf32>
    %cst_33 = arith.constant dense<0.000000e+00> : vector<16x32xf32>
    %117 = tpu.matmul %115, %116, %cst_33 {dimension_numbers = #tpu.dot_dimension_numbers<[1], [0], [0], [1], [0, 0, 1, 1], [], []>} : vector<16x16xf32>, vector<16x32xf32>, vector<16x32xf32> -> vector<16x32xf32>
    %118 = vector.extract_strided_slice %108 {offsets = [0, 48], sizes = [16, 16], strides = [1, 1]} : vector<16x64xf32> to vector<16x16xf32>
    %119 = vector.extract_strided_slice %10 {offsets = [0, 96], sizes = [16, 32], strides = [1, 1]} : vector<16x128xf32> to vector<16x32xf32>
    %cst_34 = arith.constant dense<0.000000e+00> : vector<16x32xf32>
    %120 = tpu.matmul %118, %119, %cst_34 {dimension_numbers = #tpu.dot_dimension_numbers<[1], [0], [0], [1], [0, 0, 1, 1], [], []>} : vector<16x16xf32>, vector<16x32xf32>, vector<16x32xf32> -> vector<16x32xf32>
    %121 = tpu.concatenate %111, %114, %117, %120 in 1 : vector<16x32xf32>, vector<16x32xf32>, vector<16x32xf32>, vector<16x32xf32> -> vector<16x128xf32>
    %122 = vector.broadcast %6 : vector<1x128xf32> to vector<16x128xf32>
    %123 = arith.mulf %121, %122 : vector<16x128xf32>
    %124 = vector.broadcast %7 : vector<1x128xf32> to vector<16x128xf32>
    %125 = arith.addf %123, %124 : vector<16x128xf32>
    %cst_35 = arith.constant 0.000000e+00 : f32
    %126 = vector.broadcast %cst_35 : f32 to vector<16x128xf32>
    %127 = arith.maximumf %125, %126 : vector<16x128xf32>
    %c5 = arith.constant 5 : index
    %c0_36 = arith.constant 0 : index
    %128 = vector.load %arg4[%c5, %c0_36] : memref<35x256xf32, #tpu.memory_space<vmem>>, vector<1x128xf32>
    %c6 = arith.constant 6 : index
    %c0_37 = arith.constant 0 : index
    %129 = vector.load %arg4[%c6, %c0_37] : memref<35x256xf32, #tpu.memory_space<vmem>>, vector<1x128xf32>
    %c7 = arith.constant 7 : index
    %c0_38 = arith.constant 0 : index
    %130 = vector.load %arg4[%c7, %c0_38] : memref<35x256xf32, #tpu.memory_space<vmem>>, vector<1x64xf32>
    %c8 = arith.constant 8 : index
    %c0_39 = arith.constant 0 : index
    %131 = vector.load %arg4[%c8, %c0_39] : memref<35x256xf32, #tpu.memory_space<vmem>>, vector<1x128xf32>
    %c9 = arith.constant 9 : index
    %c0_40 = arith.constant 0 : index
    %132 = vector.load %arg4[%c9, %c0_40] : memref<35x256xf32, #tpu.memory_space<vmem>>, vector<1x128xf32>
    %133 = arith.truncf %127 : vector<16x128xf32> to vector<16x128xbf16>
    %c0_41 = arith.constant 0 : index
    %c0_42 = arith.constant 0 : index
    %134 = vector.load %arg6[%c0_41, %c0_42] : memref<128x128xbf16, #tpu.memory_space<vmem>>, vector<128x128xbf16>
    %cst_43 = arith.constant dense<0.000000e+00> : vector<16x128xf32>
    %135 = tpu.matmul %133, %134, %cst_43 {dimension_numbers = #tpu.dot_dimension_numbers<[1], [0], [0], [1], [0, 0, 1, 1], [], []>} : vector<16x128xbf16>, vector<128x128xbf16>, vector<16x128xf32> -> vector<16x128xf32>
    %136 = vector.broadcast %128 : vector<1x128xf32> to vector<16x128xf32>
    %137 = arith.mulf %135, %136 : vector<16x128xf32>
    %138 = vector.broadcast %129 : vector<1x128xf32> to vector<16x128xf32>
    %139 = arith.mulf %135, %138 : vector<16x128xf32>
    %140 = vector.extract_strided_slice %137 {offsets = [0, 0], sizes = [16, 32], strides = [1, 1]} : vector<16x128xf32> to vector<16x32xf32>
    %cst_44 = arith.constant dense<0.000000e+00> : vector<16xf32>
    %141 = vector.multi_reduction <add>, %140, %cst_44 [1] : vector<16x32xf32> to vector<16xf32>
    %142 = vector.shape_cast %141 : vector<16xf32> to vector<16x1xf32>
    %143 = tpu.transpose %142, [1, 0] : vector<16x1xf32> -> vector<1x16xf32>
    %144 = vector.extract_strided_slice %139 {offsets = [0, 0], sizes = [16, 32], strides = [1, 1]} : vector<16x128xf32> to vector<16x32xf32>
    %cst_45 = arith.constant dense<0.000000e+00> : vector<16xf32>
    %145 = vector.multi_reduction <add>, %144, %cst_45 [1] : vector<16x32xf32> to vector<16xf32>
    %146 = vector.shape_cast %145 : vector<16xf32> to vector<16x1xf32>
    %147 = vector.extract_strided_slice %137 {offsets = [0, 32], sizes = [16, 32], strides = [1, 1]} : vector<16x128xf32> to vector<16x32xf32>
    %cst_46 = arith.constant dense<0.000000e+00> : vector<16xf32>
    %148 = vector.multi_reduction <add>, %147, %cst_46 [1] : vector<16x32xf32> to vector<16xf32>
    %149 = vector.shape_cast %148 : vector<16xf32> to vector<16x1xf32>
    %150 = tpu.transpose %149, [1, 0] : vector<16x1xf32> -> vector<1x16xf32>
    %151 = vector.extract_strided_slice %139 {offsets = [0, 32], sizes = [16, 32], strides = [1, 1]} : vector<16x128xf32> to vector<16x32xf32>
    %cst_47 = arith.constant dense<0.000000e+00> : vector<16xf32>
    %152 = vector.multi_reduction <add>, %151, %cst_47 [1] : vector<16x32xf32> to vector<16xf32>
    %153 = vector.shape_cast %152 : vector<16xf32> to vector<16x1xf32>
    %154 = vector.extract_strided_slice %137 {offsets = [0, 64], sizes = [16, 32], strides = [1, 1]} : vector<16x128xf32> to vector<16x32xf32>
    %cst_48 = arith.constant dense<0.000000e+00> : vector<16xf32>
    %155 = vector.multi_reduction <add>, %154, %cst_48 [1] : vector<16x32xf32> to vector<16xf32>
    %156 = vector.shape_cast %155 : vector<16xf32> to vector<16x1xf32>
    %157 = tpu.transpose %156, [1, 0] : vector<16x1xf32> -> vector<1x16xf32>
    %158 = vector.extract_strided_slice %139 {offsets = [0, 64], sizes = [16, 32], strides = [1, 1]} : vector<16x128xf32> to vector<16x32xf32>
    %cst_49 = arith.constant dense<0.000000e+00> : vector<16xf32>
    %159 = vector.multi_reduction <add>, %158, %cst_49 [1] : vector<16x32xf32> to vector<16xf32>
    %160 = vector.shape_cast %159 : vector<16xf32> to vector<16x1xf32>
    %161 = vector.extract_strided_slice %137 {offsets = [0, 96], sizes = [16, 32], strides = [1, 1]} : vector<16x128xf32> to vector<16x32xf32>
    %cst_50 = arith.constant dense<0.000000e+00> : vector<16xf32>
    %162 = vector.multi_reduction <add>, %161, %cst_50 [1] : vector<16x32xf32> to vector<16xf32>
    %163 = vector.shape_cast %162 : vector<16xf32> to vector<16x1xf32>
    %164 = tpu.transpose %163, [1, 0] : vector<16x1xf32> -> vector<1x16xf32>
    %165 = vector.extract_strided_slice %139 {offsets = [0, 96], sizes = [16, 32], strides = [1, 1]} : vector<16x128xf32> to vector<16x32xf32>
    %cst_51 = arith.constant dense<0.000000e+00> : vector<16xf32>
    %166 = vector.multi_reduction <add>, %165, %cst_51 [1] : vector<16x32xf32> to vector<16xf32>
    %167 = vector.shape_cast %166 : vector<16xf32> to vector<16x1xf32>
    %168 = tpu.concatenate %143, %150, %157, %164 in 1 : vector<1x16xf32>, vector<1x16xf32>, vector<1x16xf32>, vector<1x16xf32> -> vector<1x64xf32>
    %169 = vector.shape_cast %146 : vector<16x1xf32> to vector<16x1xf32>
    %170 = vector.broadcast %169 : vector<16x1xf32> to vector<16x16xf32>
    %171 = vector.shape_cast %153 : vector<16x1xf32> to vector<16x1xf32>
    %172 = vector.broadcast %171 : vector<16x1xf32> to vector<16x16xf32>
    %173 = vector.shape_cast %160 : vector<16x1xf32> to vector<16x1xf32>
    %174 = vector.broadcast %173 : vector<16x1xf32> to vector<16x16xf32>
    %175 = vector.shape_cast %167 : vector<16x1xf32> to vector<16x1xf32>
    %176 = vector.broadcast %175 : vector<16x1xf32> to vector<16x16xf32>
    %177 = tpu.concatenate %170, %172, %174, %176 in 1 : vector<16x16xf32>, vector<16x16xf32>, vector<16x16xf32>, vector<16x16xf32> -> vector<16x64xf32>
    %178 = vector.broadcast %168 : vector<1x64xf32> to vector<16x64xf32>
    %179 = arith.addf %177, %178 : vector<16x64xf32>
    %180 = vector.broadcast %130 : vector<1x64xf32> to vector<16x64xf32>
    %181 = arith.mulf %1, %180 : vector<16x64xf32>
    %182 = arith.addf %179, %181 : vector<16x64xf32>
    %cst_52 = arith.constant 0.000000e+00 : f32
    %183 = vector.broadcast %cst_52 : f32 to vector<16x64xf32>
    %184 = arith.cmpf ogt, %182, %183 : vector<16x64xf32>
    %cst_53 = arith.constant 2.000000e-01 : f32
    %185 = vector.broadcast %cst_53 : f32 to vector<16x64xf32>
    %186 = arith.mulf %185, %182 : vector<16x64xf32>
    %187 = arith.select %184, %182, %186 : vector<16x64xi1>, vector<16x64xf32>
    %188 = arith.addf %187, %0 : vector<16x64xf32>
    %189 = vector.extract_strided_slice %188 {offsets = [0, 0], sizes = [16, 16], strides = [1, 1]} : vector<16x64xf32> to vector<16x16xf32>
    %cst_54 = arith.constant dense<0xFF800000> : vector<16xf32>
    %190 = vector.multi_reduction <maximumf>, %189, %cst_54 [1] : vector<16x16xf32> to vector<16xf32>
    %191 = vector.shape_cast %190 : vector<16xf32> to vector<16x1xf32>
    %192 = vector.extract_strided_slice %188 {offsets = [0, 16], sizes = [16, 16], strides = [1, 1]} : vector<16x64xf32> to vector<16x16xf32>
    %cst_55 = arith.constant dense<0xFF800000> : vector<16xf32>
    %193 = vector.multi_reduction <maximumf>, %192, %cst_55 [1] : vector<16x16xf32> to vector<16xf32>
    %194 = vector.shape_cast %193 : vector<16xf32> to vector<16x1xf32>
    %195 = vector.extract_strided_slice %188 {offsets = [0, 32], sizes = [16, 16], strides = [1, 1]} : vector<16x64xf32> to vector<16x16xf32>
    %cst_56 = arith.constant dense<0xFF800000> : vector<16xf32>
    %196 = vector.multi_reduction <maximumf>, %195, %cst_56 [1] : vector<16x16xf32> to vector<16xf32>
    %197 = vector.shape_cast %196 : vector<16xf32> to vector<16x1xf32>
    %198 = vector.extract_strided_slice %188 {offsets = [0, 48], sizes = [16, 16], strides = [1, 1]} : vector<16x64xf32> to vector<16x16xf32>
    %cst_57 = arith.constant dense<0xFF800000> : vector<16xf32>
    %199 = vector.multi_reduction <maximumf>, %198, %cst_57 [1] : vector<16x16xf32> to vector<16xf32>
    %200 = vector.shape_cast %199 : vector<16xf32> to vector<16x1xf32>
    %201 = vector.shape_cast %191 : vector<16x1xf32> to vector<16x1xf32>
    %202 = vector.broadcast %201 : vector<16x1xf32> to vector<16x16xf32>
    %203 = vector.shape_cast %194 : vector<16x1xf32> to vector<16x1xf32>
    %204 = vector.broadcast %203 : vector<16x1xf32> to vector<16x16xf32>
    %205 = vector.shape_cast %197 : vector<16x1xf32> to vector<16x1xf32>
    %206 = vector.broadcast %205 : vector<16x1xf32> to vector<16x16xf32>
    %207 = vector.shape_cast %200 : vector<16x1xf32> to vector<16x1xf32>
    %208 = vector.broadcast %207 : vector<16x1xf32> to vector<16x16xf32>
    %209 = tpu.concatenate %202, %204, %206, %208 in 1 : vector<16x16xf32>, vector<16x16xf32>, vector<16x16xf32>, vector<16x16xf32> -> vector<16x64xf32>
    %210 = arith.subf %188, %209 : vector<16x64xf32>
    %211 = math.exp %210 : vector<16x64xf32>
    %212 = vector.extract_strided_slice %211 {offsets = [0, 0], sizes = [16, 16], strides = [1, 1]} : vector<16x64xf32> to vector<16x16xf32>
    %cst_58 = arith.constant dense<0.000000e+00> : vector<16xf32>
    %213 = vector.multi_reduction <add>, %212, %cst_58 [1] : vector<16x16xf32> to vector<16xf32>
    %214 = vector.shape_cast %213 : vector<16xf32> to vector<16x1xf32>
    %215 = vector.extract_strided_slice %211 {offsets = [0, 16], sizes = [16, 16], strides = [1, 1]} : vector<16x64xf32> to vector<16x16xf32>
    %cst_59 = arith.constant dense<0.000000e+00> : vector<16xf32>
    %216 = vector.multi_reduction <add>, %215, %cst_59 [1] : vector<16x16xf32> to vector<16xf32>
    %217 = vector.shape_cast %216 : vector<16xf32> to vector<16x1xf32>
    %218 = vector.extract_strided_slice %211 {offsets = [0, 32], sizes = [16, 16], strides = [1, 1]} : vector<16x64xf32> to vector<16x16xf32>
    %cst_60 = arith.constant dense<0.000000e+00> : vector<16xf32>
    %219 = vector.multi_reduction <add>, %218, %cst_60 [1] : vector<16x16xf32> to vector<16xf32>
    %220 = vector.shape_cast %219 : vector<16xf32> to vector<16x1xf32>
    %221 = vector.extract_strided_slice %211 {offsets = [0, 48], sizes = [16, 16], strides = [1, 1]} : vector<16x64xf32> to vector<16x16xf32>
    %cst_61 = arith.constant dense<0.000000e+00> : vector<16xf32>
    %222 = vector.multi_reduction <add>, %221, %cst_61 [1] : vector<16x16xf32> to vector<16xf32>
    %223 = vector.shape_cast %222 : vector<16xf32> to vector<16x1xf32>
    %224 = vector.shape_cast %214 : vector<16x1xf32> to vector<16x1xf32>
    %225 = vector.broadcast %224 : vector<16x1xf32> to vector<16x16xf32>
    %226 = vector.shape_cast %217 : vector<16x1xf32> to vector<16x1xf32>
    %227 = vector.broadcast %226 : vector<16x1xf32> to vector<16x16xf32>
    %228 = vector.shape_cast %220 : vector<16x1xf32> to vector<16x1xf32>
    %229 = vector.broadcast %228 : vector<16x1xf32> to vector<16x16xf32>
    %230 = vector.shape_cast %223 : vector<16x1xf32> to vector<16x1xf32>
    %231 = vector.broadcast %230 : vector<16x1xf32> to vector<16x16xf32>
    %232 = tpu.concatenate %225, %227, %229, %231 in 1 : vector<16x16xf32>, vector<16x16xf32>, vector<16x16xf32>, vector<16x16xf32> -> vector<16x64xf32>
    %233 = arith.divf %211, %232 : vector<16x64xf32>
    %234 = vector.extract_strided_slice %233 {offsets = [0, 0], sizes = [16, 16], strides = [1, 1]} : vector<16x64xf32> to vector<16x16xf32>
    %235 = vector.extract_strided_slice %135 {offsets = [0, 0], sizes = [16, 32], strides = [1, 1]} : vector<16x128xf32> to vector<16x32xf32>
    %cst_62 = arith.constant dense<0.000000e+00> : vector<16x32xf32>
    %236 = tpu.matmul %234, %235, %cst_62 {dimension_numbers = #tpu.dot_dimension_numbers<[1], [0], [0], [1], [0, 0, 1, 1], [], []>} : vector<16x16xf32>, vector<16x32xf32>, vector<16x32xf32> -> vector<16x32xf32>
    %237 = vector.extract_strided_slice %233 {offsets = [0, 16], sizes = [16, 16], strides = [1, 1]} : vector<16x64xf32> to vector<16x16xf32>
    %238 = vector.extract_strided_slice %135 {offsets = [0, 32], sizes = [16, 32], strides = [1, 1]} : vector<16x128xf32> to vector<16x32xf32>
    %cst_63 = arith.constant dense<0.000000e+00> : vector<16x32xf32>
    %239 = tpu.matmul %237, %238, %cst_63 {dimension_numbers = #tpu.dot_dimension_numbers<[1], [0], [0], [1], [0, 0, 1, 1], [], []>} : vector<16x16xf32>, vector<16x32xf32>, vector<16x32xf32> -> vector<16x32xf32>
    %240 = vector.extract_strided_slice %233 {offsets = [0, 32], sizes = [16, 16], strides = [1, 1]} : vector<16x64xf32> to vector<16x16xf32>
    %241 = vector.extract_strided_slice %135 {offsets = [0, 64], sizes = [16, 32], strides = [1, 1]} : vector<16x128xf32> to vector<16x32xf32>
    %cst_64 = arith.constant dense<0.000000e+00> : vector<16x32xf32>
    %242 = tpu.matmul %240, %241, %cst_64 {dimension_numbers = #tpu.dot_dimension_numbers<[1], [0], [0], [1], [0, 0, 1, 1], [], []>} : vector<16x16xf32>, vector<16x32xf32>, vector<16x32xf32> -> vector<16x32xf32>
    %243 = vector.extract_strided_slice %233 {offsets = [0, 48], sizes = [16, 16], strides = [1, 1]} : vector<16x64xf32> to vector<16x16xf32>
    %244 = vector.extract_strided_slice %135 {offsets = [0, 96], sizes = [16, 32], strides = [1, 1]} : vector<16x128xf32> to vector<16x32xf32>
    %cst_65 = arith.constant dense<0.000000e+00> : vector<16x32xf32>
    %245 = tpu.matmul %243, %244, %cst_65 {dimension_numbers = #tpu.dot_dimension_numbers<[1], [0], [0], [1], [0, 0, 1, 1], [], []>} : vector<16x16xf32>, vector<16x32xf32>, vector<16x32xf32> -> vector<16x32xf32>
    %246 = tpu.concatenate %236, %239, %242, %245 in 1 : vector<16x32xf32>, vector<16x32xf32>, vector<16x32xf32>, vector<16x32xf32> -> vector<16x128xf32>
    %247 = vector.broadcast %131 : vector<1x128xf32> to vector<16x128xf32>
    %248 = arith.mulf %246, %247 : vector<16x128xf32>
    %249 = vector.broadcast %132 : vector<1x128xf32> to vector<16x128xf32>
    %250 = arith.addf %248, %249 : vector<16x128xf32>
    %cst_66 = arith.constant 0.000000e+00 : f32
    %251 = vector.broadcast %cst_66 : f32 to vector<16x128xf32>
    %252 = arith.maximumf %250, %251 : vector<16x128xf32>
    %c10 = arith.constant 10 : index
    %c0_67 = arith.constant 0 : index
    %253 = vector.load %arg4[%c10, %c0_67] : memref<35x256xf32, #tpu.memory_space<vmem>>, vector<1x256xf32>
    %c11 = arith.constant 11 : index
    %c0_68 = arith.constant 0 : index
    %254 = vector.load %arg4[%c11, %c0_68] : memref<35x256xf32, #tpu.memory_space<vmem>>, vector<1x256xf32>
    %c12 = arith.constant 12 : index
    %c0_69 = arith.constant 0 : index
    %255 = vector.load %arg4[%c12, %c0_69] : memref<35x256xf32, #tpu.memory_space<vmem>>, vector<1x64xf32>
    %c13 = arith.constant 13 : index
    %c0_70 = arith.constant 0 : index
    %256 = vector.load %arg4[%c13, %c0_70] : memref<35x256xf32, #tpu.memory_space<vmem>>, vector<1x256xf32>
    %c14 = arith.constant 14 : index
    %c0_71 = arith.constant 0 : index
    %257 = vector.load %arg4[%c14, %c0_71] : memref<35x256xf32, #tpu.memory_space<vmem>>, vector<1x256xf32>
    %258 = arith.truncf %252 : vector<16x128xf32> to vector<16x128xbf16>
    %c0_72 = arith.constant 0 : index
    %c0_73 = arith.constant 0 : index
    %259 = vector.load %arg7[%c0_72, %c0_73] : memref<128x256xbf16, #tpu.memory_space<vmem>>, vector<128x256xbf16>
    %cst_74 = arith.constant dense<0.000000e+00> : vector<16x256xf32>
    %260 = tpu.matmul %258, %259, %cst_74 {dimension_numbers = #tpu.dot_dimension_numbers<[1], [0], [0], [1], [0, 0, 1, 1], [], []>} : vector<16x128xbf16>, vector<128x256xbf16>, vector<16x256xf32> -> vector<16x256xf32>
    %261 = vector.broadcast %253 : vector<1x256xf32> to vector<16x256xf32>
    %262 = arith.mulf %260, %261 : vector<16x256xf32>
    %263 = vector.broadcast %254 : vector<1x256xf32> to vector<16x256xf32>
    %264 = arith.mulf %260, %263 : vector<16x256xf32>
    %265 = vector.extract_strided_slice %262 {offsets = [0, 0], sizes = [16, 64], strides = [1, 1]} : vector<16x256xf32> to vector<16x64xf32>
    %cst_75 = arith.constant dense<0.000000e+00> : vector<16xf32>
    %266 = vector.multi_reduction <add>, %265, %cst_75 [1] : vector<16x64xf32> to vector<16xf32>
    %267 = vector.shape_cast %266 : vector<16xf32> to vector<16x1xf32>
    %268 = tpu.transpose %267, [1, 0] : vector<16x1xf32> -> vector<1x16xf32>
    %269 = vector.extract_strided_slice %264 {offsets = [0, 0], sizes = [16, 64], strides = [1, 1]} : vector<16x256xf32> to vector<16x64xf32>
    %cst_76 = arith.constant dense<0.000000e+00> : vector<16xf32>
    %270 = vector.multi_reduction <add>, %269, %cst_76 [1] : vector<16x64xf32> to vector<16xf32>
    %271 = vector.shape_cast %270 : vector<16xf32> to vector<16x1xf32>
    %272 = vector.extract_strided_slice %262 {offsets = [0, 64], sizes = [16, 64], strides = [1, 1]} : vector<16x256xf32> to vector<16x64xf32>
    %cst_77 = arith.constant dense<0.000000e+00> : vector<16xf32>
    %273 = vector.multi_reduction <add>, %272, %cst_77 [1] : vector<16x64xf32> to vector<16xf32>
    %274 = vector.shape_cast %273 : vector<16xf32> to vector<16x1xf32>
    %275 = tpu.transpose %274, [1, 0] : vector<16x1xf32> -> vector<1x16xf32>
    %276 = vector.extract_strided_slice %264 {offsets = [0, 64], sizes = [16, 64], strides = [1, 1]} : vector<16x256xf32> to vector<16x64xf32>
    %cst_78 = arith.constant dense<0.000000e+00> : vector<16xf32>
    %277 = vector.multi_reduction <add>, %276, %cst_78 [1] : vector<16x64xf32> to vector<16xf32>
    %278 = vector.shape_cast %277 : vector<16xf32> to vector<16x1xf32>
    %279 = vector.extract_strided_slice %262 {offsets = [0, 128], sizes = [16, 64], strides = [1, 1]} : vector<16x256xf32> to vector<16x64xf32>
    %cst_79 = arith.constant dense<0.000000e+00> : vector<16xf32>
    %280 = vector.multi_reduction <add>, %279, %cst_79 [1] : vector<16x64xf32> to vector<16xf32>
    %281 = vector.shape_cast %280 : vector<16xf32> to vector<16x1xf32>
    %282 = tpu.transpose %281, [1, 0] : vector<16x1xf32> -> vector<1x16xf32>
    %283 = vector.extract_strided_slice %264 {offsets = [0, 128], sizes = [16, 64], strides = [1, 1]} : vector<16x256xf32> to vector<16x64xf32>
    %cst_80 = arith.constant dense<0.000000e+00> : vector<16xf32>
    %284 = vector.multi_reduction <add>, %283, %cst_80 [1] : vector<16x64xf32> to vector<16xf32>
    %285 = vector.shape_cast %284 : vector<16xf32> to vector<16x1xf32>
    %286 = vector.extract_strided_slice %262 {offsets = [0, 192], sizes = [16, 64], strides = [1, 1]} : vector<16x256xf32> to vector<16x64xf32>
    %cst_81 = arith.constant dense<0.000000e+00> : vector<16xf32>
    %287 = vector.multi_reduction <add>, %286, %cst_81 [1] : vector<16x64xf32> to vector<16xf32>
    %288 = vector.shape_cast %287 : vector<16xf32> to vector<16x1xf32>
    %289 = tpu.transpose %288, [1, 0] : vector<16x1xf32> -> vector<1x16xf32>
    %290 = vector.extract_strided_slice %264 {offsets = [0, 192], sizes = [16, 64], strides = [1, 1]} : vector<16x256xf32> to vector<16x64xf32>
    %cst_82 = arith.constant dense<0.000000e+00> : vector<16xf32>
    %291 = vector.multi_reduction <add>, %290, %cst_82 [1] : vector<16x64xf32> to vector<16xf32>
    %292 = vector.shape_cast %291 : vector<16xf32> to vector<16x1xf32>
    %293 = tpu.concatenate %268, %275, %282, %289 in 1 : vector<1x16xf32>, vector<1x16xf32>, vector<1x16xf32>, vector<1x16xf32> -> vector<1x64xf32>
    %294 = vector.shape_cast %271 : vector<16x1xf32> to vector<16x1xf32>
    %295 = vector.broadcast %294 : vector<16x1xf32> to vector<16x16xf32>
    %296 = vector.shape_cast %278 : vector<16x1xf32> to vector<16x1xf32>
    %297 = vector.broadcast %296 : vector<16x1xf32> to vector<16x16xf32>
    %298 = vector.shape_cast %285 : vector<16x1xf32> to vector<16x1xf32>
    %299 = vector.broadcast %298 : vector<16x1xf32> to vector<16x16xf32>
    %300 = vector.shape_cast %292 : vector<16x1xf32> to vector<16x1xf32>
    %301 = vector.broadcast %300 : vector<16x1xf32> to vector<16x16xf32>
    %302 = tpu.concatenate %295, %297, %299, %301 in 1 : vector<16x16xf32>, vector<16x16xf32>, vector<16x16xf32>, vector<16x16xf32> -> vector<16x64xf32>
    %303 = vector.broadcast %293 : vector<1x64xf32> to vector<16x64xf32>
    %304 = arith.addf %302, %303 : vector<16x64xf32>
    %305 = vector.broadcast %255 : vector<1x64xf32> to vector<16x64xf32>
    %306 = arith.mulf %1, %305 : vector<16x64xf32>
    %307 = arith.addf %304, %306 : vector<16x64xf32>
    %cst_83 = arith.constant 0.000000e+00 : f32
    %308 = vector.broadcast %cst_83 : f32 to vector<16x64xf32>
    %309 = arith.cmpf ogt, %307, %308 : vector<16x64xf32>
    %cst_84 = arith.constant 2.000000e-01 : f32
    %310 = vector.broadcast %cst_84 : f32 to vector<16x64xf32>
    %311 = arith.mulf %310, %307 : vector<16x64xf32>
    %312 = arith.select %309, %307, %311 : vector<16x64xi1>, vector<16x64xf32>
    %313 = arith.addf %312, %0 : vector<16x64xf32>
    %314 = vector.extract_strided_slice %313 {offsets = [0, 0], sizes = [16, 16], strides = [1, 1]} : vector<16x64xf32> to vector<16x16xf32>
    %cst_85 = arith.constant dense<0xFF800000> : vector<16xf32>
    %315 = vector.multi_reduction <maximumf>, %314, %cst_85 [1] : vector<16x16xf32> to vector<16xf32>
    %316 = vector.shape_cast %315 : vector<16xf32> to vector<16x1xf32>
    %317 = vector.extract_strided_slice %313 {offsets = [0, 16], sizes = [16, 16], strides = [1, 1]} : vector<16x64xf32> to vector<16x16xf32>
    %cst_86 = arith.constant dense<0xFF800000> : vector<16xf32>
    %318 = vector.multi_reduction <maximumf>, %317, %cst_86 [1] : vector<16x16xf32> to vector<16xf32>
    %319 = vector.shape_cast %318 : vector<16xf32> to vector<16x1xf32>
    %320 = vector.extract_strided_slice %313 {offsets = [0, 32], sizes = [16, 16], strides = [1, 1]} : vector<16x64xf32> to vector<16x16xf32>
    %cst_87 = arith.constant dense<0xFF800000> : vector<16xf32>
    %321 = vector.multi_reduction <maximumf>, %320, %cst_87 [1] : vector<16x16xf32> to vector<16xf32>
    %322 = vector.shape_cast %321 : vector<16xf32> to vector<16x1xf32>
    %323 = vector.extract_strided_slice %313 {offsets = [0, 48], sizes = [16, 16], strides = [1, 1]} : vector<16x64xf32> to vector<16x16xf32>
    %cst_88 = arith.constant dense<0xFF800000> : vector<16xf32>
    %324 = vector.multi_reduction <maximumf>, %323, %cst_88 [1] : vector<16x16xf32> to vector<16xf32>
    %325 = vector.shape_cast %324 : vector<16xf32> to vector<16x1xf32>
    %326 = vector.shape_cast %316 : vector<16x1xf32> to vector<16x1xf32>
    %327 = vector.broadcast %326 : vector<16x1xf32> to vector<16x16xf32>
    %328 = vector.shape_cast %319 : vector<16x1xf32> to vector<16x1xf32>
    %329 = vector.broadcast %328 : vector<16x1xf32> to vector<16x16xf32>
    %330 = vector.shape_cast %322 : vector<16x1xf32> to vector<16x1xf32>
    %331 = vector.broadcast %330 : vector<16x1xf32> to vector<16x16xf32>
    %332 = vector.shape_cast %325 : vector<16x1xf32> to vector<16x1xf32>
    %333 = vector.broadcast %332 : vector<16x1xf32> to vector<16x16xf32>
    %334 = tpu.concatenate %327, %329, %331, %333 in 1 : vector<16x16xf32>, vector<16x16xf32>, vector<16x16xf32>, vector<16x16xf32> -> vector<16x64xf32>
    %335 = arith.subf %313, %334 : vector<16x64xf32>
    %336 = math.exp %335 : vector<16x64xf32>
    %337 = vector.extract_strided_slice %336 {offsets = [0, 0], sizes = [16, 16], strides = [1, 1]} : vector<16x64xf32> to vector<16x16xf32>
    %cst_89 = arith.constant dense<0.000000e+00> : vector<16xf32>
    %338 = vector.multi_reduction <add>, %337, %cst_89 [1] : vector<16x16xf32> to vector<16xf32>
    %339 = vector.shape_cast %338 : vector<16xf32> to vector<16x1xf32>
    %340 = vector.extract_strided_slice %336 {offsets = [0, 16], sizes = [16, 16], strides = [1, 1]} : vector<16x64xf32> to vector<16x16xf32>
    %cst_90 = arith.constant dense<0.000000e+00> : vector<16xf32>
    %341 = vector.multi_reduction <add>, %340, %cst_90 [1] : vector<16x16xf32> to vector<16xf32>
    %342 = vector.shape_cast %341 : vector<16xf32> to vector<16x1xf32>
    %343 = vector.extract_strided_slice %336 {offsets = [0, 32], sizes = [16, 16], strides = [1, 1]} : vector<16x64xf32> to vector<16x16xf32>
    %cst_91 = arith.constant dense<0.000000e+00> : vector<16xf32>
    %344 = vector.multi_reduction <add>, %343, %cst_91 [1] : vector<16x16xf32> to vector<16xf32>
    %345 = vector.shape_cast %344 : vector<16xf32> to vector<16x1xf32>
    %346 = vector.extract_strided_slice %336 {offsets = [0, 48], sizes = [16, 16], strides = [1, 1]} : vector<16x64xf32> to vector<16x16xf32>
    %cst_92 = arith.constant dense<0.000000e+00> : vector<16xf32>
    %347 = vector.multi_reduction <add>, %346, %cst_92 [1] : vector<16x16xf32> to vector<16xf32>
    %348 = vector.shape_cast %347 : vector<16xf32> to vector<16x1xf32>
    %349 = vector.shape_cast %339 : vector<16x1xf32> to vector<16x1xf32>
    %350 = vector.broadcast %349 : vector<16x1xf32> to vector<16x16xf32>
    %351 = vector.shape_cast %342 : vector<16x1xf32> to vector<16x1xf32>
    %352 = vector.broadcast %351 : vector<16x1xf32> to vector<16x16xf32>
    %353 = vector.shape_cast %345 : vector<16x1xf32> to vector<16x1xf32>
    %354 = vector.broadcast %353 : vector<16x1xf32> to vector<16x16xf32>
    %355 = vector.shape_cast %348 : vector<16x1xf32> to vector<16x1xf32>
    %356 = vector.broadcast %355 : vector<16x1xf32> to vector<16x16xf32>
    %357 = tpu.concatenate %350, %352, %354, %356 in 1 : vector<16x16xf32>, vector<16x16xf32>, vector<16x16xf32>, vector<16x16xf32> -> vector<16x64xf32>
    %358 = arith.divf %336, %357 : vector<16x64xf32>
    %359 = vector.extract_strided_slice %358 {offsets = [0, 0], sizes = [16, 16], strides = [1, 1]} : vector<16x64xf32> to vector<16x16xf32>
    %360 = vector.extract_strided_slice %260 {offsets = [0, 0], sizes = [16, 64], strides = [1, 1]} : vector<16x256xf32> to vector<16x64xf32>
    %cst_93 = arith.constant dense<0.000000e+00> : vector<16x64xf32>
    %361 = tpu.matmul %359, %360, %cst_93 {dimension_numbers = #tpu.dot_dimension_numbers<[1], [0], [0], [1], [0, 0, 1, 1], [], []>} : vector<16x16xf32>, vector<16x64xf32>, vector<16x64xf32> -> vector<16x64xf32>
    %362 = vector.extract_strided_slice %358 {offsets = [0, 16], sizes = [16, 16], strides = [1, 1]} : vector<16x64xf32> to vector<16x16xf32>
    %363 = vector.extract_strided_slice %260 {offsets = [0, 64], sizes = [16, 64], strides = [1, 1]} : vector<16x256xf32> to vector<16x64xf32>
    %cst_94 = arith.constant dense<0.000000e+00> : vector<16x64xf32>
    %364 = tpu.matmul %362, %363, %cst_94 {dimension_numbers = #tpu.dot_dimension_numbers<[1], [0], [0], [1], [0, 0, 1, 1], [], []>} : vector<16x16xf32>, vector<16x64xf32>, vector<16x64xf32> -> vector<16x64xf32>
    %365 = vector.extract_strided_slice %358 {offsets = [0, 32], sizes = [16, 16], strides = [1, 1]} : vector<16x64xf32> to vector<16x16xf32>
    %366 = vector.extract_strided_slice %260 {offsets = [0, 128], sizes = [16, 64], strides = [1, 1]} : vector<16x256xf32> to vector<16x64xf32>
    %cst_95 = arith.constant dense<0.000000e+00> : vector<16x64xf32>
    %367 = tpu.matmul %365, %366, %cst_95 {dimension_numbers = #tpu.dot_dimension_numbers<[1], [0], [0], [1], [0, 0, 1, 1], [], []>} : vector<16x16xf32>, vector<16x64xf32>, vector<16x64xf32> -> vector<16x64xf32>
    %368 = vector.extract_strided_slice %358 {offsets = [0, 48], sizes = [16, 16], strides = [1, 1]} : vector<16x64xf32> to vector<16x16xf32>
    %369 = vector.extract_strided_slice %260 {offsets = [0, 192], sizes = [16, 64], strides = [1, 1]} : vector<16x256xf32> to vector<16x64xf32>
    %cst_96 = arith.constant dense<0.000000e+00> : vector<16x64xf32>
    %370 = tpu.matmul %368, %369, %cst_96 {dimension_numbers = #tpu.dot_dimension_numbers<[1], [0], [0], [1], [0, 0, 1, 1], [], []>} : vector<16x16xf32>, vector<16x64xf32>, vector<16x64xf32> -> vector<16x64xf32>
    %371 = tpu.concatenate %361, %364, %367, %370 in 1 : vector<16x64xf32>, vector<16x64xf32>, vector<16x64xf32>, vector<16x64xf32> -> vector<16x256xf32>
    %372 = vector.broadcast %256 : vector<1x256xf32> to vector<16x256xf32>
    %373 = arith.mulf %371, %372 : vector<16x256xf32>
    %374 = vector.broadcast %257 : vector<1x256xf32> to vector<16x256xf32>
    %375 = arith.addf %373, %374 : vector<16x256xf32>
    %cst_97 = arith.constant 0.000000e+00 : f32
    %376 = vector.broadcast %cst_97 : f32 to vector<16x256xf32>
    %377 = arith.maximumf %375, %376 : vector<16x256xf32>
    %c15 = arith.constant 15 : index
    %c0_98 = arith.constant 0 : index
    %378 = vector.load %arg4[%c15, %c0_98] : memref<35x256xf32, #tpu.memory_space<vmem>>, vector<1x256xf32>
    %c16 = arith.constant 16 : index
    %c0_99 = arith.constant 0 : index
    %379 = vector.load %arg4[%c16, %c0_99] : memref<35x256xf32, #tpu.memory_space<vmem>>, vector<1x256xf32>
    %c17 = arith.constant 17 : index
    %c0_100 = arith.constant 0 : index
    %380 = vector.load %arg4[%c17, %c0_100] : memref<35x256xf32, #tpu.memory_space<vmem>>, vector<1x64xf32>
    %c18 = arith.constant 18 : index
    %c0_101 = arith.constant 0 : index
    %381 = vector.load %arg4[%c18, %c0_101] : memref<35x256xf32, #tpu.memory_space<vmem>>, vector<1x256xf32>
    %c19 = arith.constant 19 : index
    %c0_102 = arith.constant 0 : index
    %382 = vector.load %arg4[%c19, %c0_102] : memref<35x256xf32, #tpu.memory_space<vmem>>, vector<1x256xf32>
    %383 = arith.truncf %377 : vector<16x256xf32> to vector<16x256xbf16>
    %c0_103 = arith.constant 0 : index
    %c0_104 = arith.constant 0 : index
    %384 = vector.load %arg8[%c0_103, %c0_104] : memref<256x256xbf16, #tpu.memory_space<vmem>>, vector<256x256xbf16>
    %cst_105 = arith.constant dense<0.000000e+00> : vector<16x256xf32>
    %385 = tpu.matmul %383, %384, %cst_105 {dimension_numbers = #tpu.dot_dimension_numbers<[1], [0], [0], [1], [0, 0, 1, 1], [], []>} : vector<16x256xbf16>, vector<256x256xbf16>, vector<16x256xf32> -> vector<16x256xf32>
    %386 = vector.broadcast %378 : vector<1x256xf32> to vector<16x256xf32>
    %387 = arith.mulf %385, %386 : vector<16x256xf32>
    %388 = vector.broadcast %379 : vector<1x256xf32> to vector<16x256xf32>
    %389 = arith.mulf %385, %388 : vector<16x256xf32>
    %390 = vector.extract_strided_slice %387 {offsets = [0, 0], sizes = [16, 64], strides = [1, 1]} : vector<16x256xf32> to vector<16x64xf32>
    %cst_106 = arith.constant dense<0.000000e+00> : vector<16xf32>
    %391 = vector.multi_reduction <add>, %390, %cst_106 [1] : vector<16x64xf32> to vector<16xf32>
    %392 = vector.shape_cast %391 : vector<16xf32> to vector<16x1xf32>
    %393 = tpu.transpose %392, [1, 0] : vector<16x1xf32> -> vector<1x16xf32>
    %394 = vector.extract_strided_slice %389 {offsets = [0, 0], sizes = [16, 64], strides = [1, 1]} : vector<16x256xf32> to vector<16x64xf32>
    %cst_107 = arith.constant dense<0.000000e+00> : vector<16xf32>
    %395 = vector.multi_reduction <add>, %394, %cst_107 [1] : vector<16x64xf32> to vector<16xf32>
    %396 = vector.shape_cast %395 : vector<16xf32> to vector<16x1xf32>
    %397 = vector.extract_strided_slice %387 {offsets = [0, 64], sizes = [16, 64], strides = [1, 1]} : vector<16x256xf32> to vector<16x64xf32>
    %cst_108 = arith.constant dense<0.000000e+00> : vector<16xf32>
    %398 = vector.multi_reduction <add>, %397, %cst_108 [1] : vector<16x64xf32> to vector<16xf32>
    %399 = vector.shape_cast %398 : vector<16xf32> to vector<16x1xf32>
    %400 = tpu.transpose %399, [1, 0] : vector<16x1xf32> -> vector<1x16xf32>
    %401 = vector.extract_strided_slice %389 {offsets = [0, 64], sizes = [16, 64], strides = [1, 1]} : vector<16x256xf32> to vector<16x64xf32>
    %cst_109 = arith.constant dense<0.000000e+00> : vector<16xf32>
    %402 = vector.multi_reduction <add>, %401, %cst_109 [1] : vector<16x64xf32> to vector<16xf32>
    %403 = vector.shape_cast %402 : vector<16xf32> to vector<16x1xf32>
    %404 = vector.extract_strided_slice %387 {offsets = [0, 128], sizes = [16, 64], strides = [1, 1]} : vector<16x256xf32> to vector<16x64xf32>
    %cst_110 = arith.constant dense<0.000000e+00> : vector<16xf32>
    %405 = vector.multi_reduction <add>, %404, %cst_110 [1] : vector<16x64xf32> to vector<16xf32>
    %406 = vector.shape_cast %405 : vector<16xf32> to vector<16x1xf32>
    %407 = tpu.transpose %406, [1, 0] : vector<16x1xf32> -> vector<1x16xf32>
    %408 = vector.extract_strided_slice %389 {offsets = [0, 128], sizes = [16, 64], strides = [1, 1]} : vector<16x256xf32> to vector<16x64xf32>
    %cst_111 = arith.constant dense<0.000000e+00> : vector<16xf32>
    %409 = vector.multi_reduction <add>, %408, %cst_111 [1] : vector<16x64xf32> to vector<16xf32>
    %410 = vector.shape_cast %409 : vector<16xf32> to vector<16x1xf32>
    %411 = vector.extract_strided_slice %387 {offsets = [0, 192], sizes = [16, 64], strides = [1, 1]} : vector<16x256xf32> to vector<16x64xf32>
    %cst_112 = arith.constant dense<0.000000e+00> : vector<16xf32>
    %412 = vector.multi_reduction <add>, %411, %cst_112 [1] : vector<16x64xf32> to vector<16xf32>
    %413 = vector.shape_cast %412 : vector<16xf32> to vector<16x1xf32>
    %414 = tpu.transpose %413, [1, 0] : vector<16x1xf32> -> vector<1x16xf32>
    %415 = vector.extract_strided_slice %389 {offsets = [0, 192], sizes = [16, 64], strides = [1, 1]} : vector<16x256xf32> to vector<16x64xf32>
    %cst_113 = arith.constant dense<0.000000e+00> : vector<16xf32>
    %416 = vector.multi_reduction <add>, %415, %cst_113 [1] : vector<16x64xf32> to vector<16xf32>
    %417 = vector.shape_cast %416 : vector<16xf32> to vector<16x1xf32>
    %418 = tpu.concatenate %393, %400, %407, %414 in 1 : vector<1x16xf32>, vector<1x16xf32>, vector<1x16xf32>, vector<1x16xf32> -> vector<1x64xf32>
    %419 = vector.shape_cast %396 : vector<16x1xf32> to vector<16x1xf32>
    %420 = vector.broadcast %419 : vector<16x1xf32> to vector<16x16xf32>
    %421 = vector.shape_cast %403 : vector<16x1xf32> to vector<16x1xf32>
    %422 = vector.broadcast %421 : vector<16x1xf32> to vector<16x16xf32>
    %423 = vector.shape_cast %410 : vector<16x1xf32> to vector<16x1xf32>
    %424 = vector.broadcast %423 : vector<16x1xf32> to vector<16x16xf32>
    %425 = vector.shape_cast %417 : vector<16x1xf32> to vector<16x1xf32>
    %426 = vector.broadcast %425 : vector<16x1xf32> to vector<16x16xf32>
    %427 = tpu.concatenate %420, %422, %424, %426 in 1 : vector<16x16xf32>, vector<16x16xf32>, vector<16x16xf32>, vector<16x16xf32> -> vector<16x64xf32>
    %428 = vector.broadcast %418 : vector<1x64xf32> to vector<16x64xf32>
    %429 = arith.addf %427, %428 : vector<16x64xf32>
    %430 = vector.broadcast %380 : vector<1x64xf32> to vector<16x64xf32>
    %431 = arith.mulf %1, %430 : vector<16x64xf32>
    %432 = arith.addf %429, %431 : vector<16x64xf32>
    %cst_114 = arith.constant 0.000000e+00 : f32
    %433 = vector.broadcast %cst_114 : f32 to vector<16x64xf32>
    %434 = arith.cmpf ogt, %432, %433 : vector<16x64xf32>
    %cst_115 = arith.constant 2.000000e-01 : f32
    %435 = vector.broadcast %cst_115 : f32 to vector<16x64xf32>
    %436 = arith.mulf %435, %432 : vector<16x64xf32>
    %437 = arith.select %434, %432, %436 : vector<16x64xi1>, vector<16x64xf32>
    %438 = arith.addf %437, %0 : vector<16x64xf32>
    %439 = vector.extract_strided_slice %438 {offsets = [0, 0], sizes = [16, 16], strides = [1, 1]} : vector<16x64xf32> to vector<16x16xf32>
    %cst_116 = arith.constant dense<0xFF800000> : vector<16xf32>
    %440 = vector.multi_reduction <maximumf>, %439, %cst_116 [1] : vector<16x16xf32> to vector<16xf32>
    %441 = vector.shape_cast %440 : vector<16xf32> to vector<16x1xf32>
    %442 = vector.extract_strided_slice %438 {offsets = [0, 16], sizes = [16, 16], strides = [1, 1]} : vector<16x64xf32> to vector<16x16xf32>
    %cst_117 = arith.constant dense<0xFF800000> : vector<16xf32>
    %443 = vector.multi_reduction <maximumf>, %442, %cst_117 [1] : vector<16x16xf32> to vector<16xf32>
    %444 = vector.shape_cast %443 : vector<16xf32> to vector<16x1xf32>
    %445 = vector.extract_strided_slice %438 {offsets = [0, 32], sizes = [16, 16], strides = [1, 1]} : vector<16x64xf32> to vector<16x16xf32>
    %cst_118 = arith.constant dense<0xFF800000> : vector<16xf32>
    %446 = vector.multi_reduction <maximumf>, %445, %cst_118 [1] : vector<16x16xf32> to vector<16xf32>
    %447 = vector.shape_cast %446 : vector<16xf32> to vector<16x1xf32>
    %448 = vector.extract_strided_slice %438 {offsets = [0, 48], sizes = [16, 16], strides = [1, 1]} : vector<16x64xf32> to vector<16x16xf32>
    %cst_119 = arith.constant dense<0xFF800000> : vector<16xf32>
    %449 = vector.multi_reduction <maximumf>, %448, %cst_119 [1] : vector<16x16xf32> to vector<16xf32>
    %450 = vector.shape_cast %449 : vector<16xf32> to vector<16x1xf32>
    %451 = vector.shape_cast %441 : vector<16x1xf32> to vector<16x1xf32>
    %452 = vector.broadcast %451 : vector<16x1xf32> to vector<16x16xf32>
    %453 = vector.shape_cast %444 : vector<16x1xf32> to vector<16x1xf32>
    %454 = vector.broadcast %453 : vector<16x1xf32> to vector<16x16xf32>
    %455 = vector.shape_cast %447 : vector<16x1xf32> to vector<16x1xf32>
    %456 = vector.broadcast %455 : vector<16x1xf32> to vector<16x16xf32>
    %457 = vector.shape_cast %450 : vector<16x1xf32> to vector<16x1xf32>
    %458 = vector.broadcast %457 : vector<16x1xf32> to vector<16x16xf32>
    %459 = tpu.concatenate %452, %454, %456, %458 in 1 : vector<16x16xf32>, vector<16x16xf32>, vector<16x16xf32>, vector<16x16xf32> -> vector<16x64xf32>
    %460 = arith.subf %438, %459 : vector<16x64xf32>
    %461 = math.exp %460 : vector<16x64xf32>
    %462 = vector.extract_strided_slice %461 {offsets = [0, 0], sizes = [16, 16], strides = [1, 1]} : vector<16x64xf32> to vector<16x16xf32>
    %cst_120 = arith.constant dense<0.000000e+00> : vector<16xf32>
    %463 = vector.multi_reduction <add>, %462, %cst_120 [1] : vector<16x16xf32> to vector<16xf32>
    %464 = vector.shape_cast %463 : vector<16xf32> to vector<16x1xf32>
    %465 = vector.extract_strided_slice %461 {offsets = [0, 16], sizes = [16, 16], strides = [1, 1]} : vector<16x64xf32> to vector<16x16xf32>
    %cst_121 = arith.constant dense<0.000000e+00> : vector<16xf32>
    %466 = vector.multi_reduction <add>, %465, %cst_121 [1] : vector<16x16xf32> to vector<16xf32>
    %467 = vector.shape_cast %466 : vector<16xf32> to vector<16x1xf32>
    %468 = vector.extract_strided_slice %461 {offsets = [0, 32], sizes = [16, 16], strides = [1, 1]} : vector<16x64xf32> to vector<16x16xf32>
    %cst_122 = arith.constant dense<0.000000e+00> : vector<16xf32>
    %469 = vector.multi_reduction <add>, %468, %cst_122 [1] : vector<16x16xf32> to vector<16xf32>
    %470 = vector.shape_cast %469 : vector<16xf32> to vector<16x1xf32>
    %471 = vector.extract_strided_slice %461 {offsets = [0, 48], sizes = [16, 16], strides = [1, 1]} : vector<16x64xf32> to vector<16x16xf32>
    %cst_123 = arith.constant dense<0.000000e+00> : vector<16xf32>
    %472 = vector.multi_reduction <add>, %471, %cst_123 [1] : vector<16x16xf32> to vector<16xf32>
    %473 = vector.shape_cast %472 : vector<16xf32> to vector<16x1xf32>
    %474 = vector.shape_cast %464 : vector<16x1xf32> to vector<16x1xf32>
    %475 = vector.broadcast %474 : vector<16x1xf32> to vector<16x16xf32>
    %476 = vector.shape_cast %467 : vector<16x1xf32> to vector<16x1xf32>
    %477 = vector.broadcast %476 : vector<16x1xf32> to vector<16x16xf32>
    %478 = vector.shape_cast %470 : vector<16x1xf32> to vector<16x1xf32>
    %479 = vector.broadcast %478 : vector<16x1xf32> to vector<16x16xf32>
    %480 = vector.shape_cast %473 : vector<16x1xf32> to vector<16x1xf32>
    %481 = vector.broadcast %480 : vector<16x1xf32> to vector<16x16xf32>
    %482 = tpu.concatenate %475, %477, %479, %481 in 1 : vector<16x16xf32>, vector<16x16xf32>, vector<16x16xf32>, vector<16x16xf32> -> vector<16x64xf32>
    %483 = arith.divf %461, %482 : vector<16x64xf32>
    %484 = vector.extract_strided_slice %483 {offsets = [0, 0], sizes = [16, 16], strides = [1, 1]} : vector<16x64xf32> to vector<16x16xf32>
    %485 = vector.extract_strided_slice %385 {offsets = [0, 0], sizes = [16, 64], strides = [1, 1]} : vector<16x256xf32> to vector<16x64xf32>
    %cst_124 = arith.constant dense<0.000000e+00> : vector<16x64xf32>
    %486 = tpu.matmul %484, %485, %cst_124 {dimension_numbers = #tpu.dot_dimension_numbers<[1], [0], [0], [1], [0, 0, 1, 1], [], []>} : vector<16x16xf32>, vector<16x64xf32>, vector<16x64xf32> -> vector<16x64xf32>
    %487 = vector.extract_strided_slice %483 {offsets = [0, 16], sizes = [16, 16], strides = [1, 1]} : vector<16x64xf32> to vector<16x16xf32>
    %488 = vector.extract_strided_slice %385 {offsets = [0, 64], sizes = [16, 64], strides = [1, 1]} : vector<16x256xf32> to vector<16x64xf32>
    %cst_125 = arith.constant dense<0.000000e+00> : vector<16x64xf32>
    %489 = tpu.matmul %487, %488, %cst_125 {dimension_numbers = #tpu.dot_dimension_numbers<[1], [0], [0], [1], [0, 0, 1, 1], [], []>} : vector<16x16xf32>, vector<16x64xf32>, vector<16x64xf32> -> vector<16x64xf32>
    %490 = vector.extract_strided_slice %483 {offsets = [0, 32], sizes = [16, 16], strides = [1, 1]} : vector<16x64xf32> to vector<16x16xf32>
    %491 = vector.extract_strided_slice %385 {offsets = [0, 128], sizes = [16, 64], strides = [1, 1]} : vector<16x256xf32> to vector<16x64xf32>
    %cst_126 = arith.constant dense<0.000000e+00> : vector<16x64xf32>
    %492 = tpu.matmul %490, %491, %cst_126 {dimension_numbers = #tpu.dot_dimension_numbers<[1], [0], [0], [1], [0, 0, 1, 1], [], []>} : vector<16x16xf32>, vector<16x64xf32>, vector<16x64xf32> -> vector<16x64xf32>
    %493 = vector.extract_strided_slice %483 {offsets = [0, 48], sizes = [16, 16], strides = [1, 1]} : vector<16x64xf32> to vector<16x16xf32>
    %494 = vector.extract_strided_slice %385 {offsets = [0, 192], sizes = [16, 64], strides = [1, 1]} : vector<16x256xf32> to vector<16x64xf32>
    %cst_127 = arith.constant dense<0.000000e+00> : vector<16x64xf32>
    %495 = tpu.matmul %493, %494, %cst_127 {dimension_numbers = #tpu.dot_dimension_numbers<[1], [0], [0], [1], [0, 0, 1, 1], [], []>} : vector<16x16xf32>, vector<16x64xf32>, vector<16x64xf32> -> vector<16x64xf32>
    %496 = tpu.concatenate %486, %489, %492, %495 in 1 : vector<16x64xf32>, vector<16x64xf32>, vector<16x64xf32>, vector<16x64xf32> -> vector<16x256xf32>
    %497 = vector.broadcast %381 : vector<1x256xf32> to vector<16x256xf32>
    %498 = arith.mulf %496, %497 : vector<16x256xf32>
    %499 = vector.broadcast %382 : vector<1x256xf32> to vector<16x256xf32>
    %500 = arith.addf %498, %499 : vector<16x256xf32>
    %cst_128 = arith.constant 0.000000e+00 : f32
    %501 = vector.broadcast %cst_128 : f32 to vector<16x256xf32>
    %502 = arith.maximumf %500, %501 : vector<16x256xf32>
    %c20 = arith.constant 20 : index
    %c0_129 = arith.constant 0 : index
    %503 = vector.load %arg4[%c20, %c0_129] : memref<35x256xf32, #tpu.memory_space<vmem>>, vector<1x128xf32>
    %c21 = arith.constant 21 : index
    %c0_130 = arith.constant 0 : index
    %504 = vector.load %arg4[%c21, %c0_130] : memref<35x256xf32, #tpu.memory_space<vmem>>, vector<1x128xf32>
    %c22 = arith.constant 22 : index
    %c0_131 = arith.constant 0 : index
    %505 = vector.load %arg4[%c22, %c0_131] : memref<35x256xf32, #tpu.memory_space<vmem>>, vector<1x64xf32>
    %c23 = arith.constant 23 : index
    %c0_132 = arith.constant 0 : index
    %506 = vector.load %arg4[%c23, %c0_132] : memref<35x256xf32, #tpu.memory_space<vmem>>, vector<1x128xf32>
    %c24 = arith.constant 24 : index
    %c0_133 = arith.constant 0 : index
    %507 = vector.load %arg4[%c24, %c0_133] : memref<35x256xf32, #tpu.memory_space<vmem>>, vector<1x128xf32>
    %508 = arith.truncf %502 : vector<16x256xf32> to vector<16x256xbf16>
    %c0_134 = arith.constant 0 : index
    %c0_135 = arith.constant 0 : index
    %509 = vector.load %arg9[%c0_134, %c0_135] : memref<256x128xbf16, #tpu.memory_space<vmem>>, vector<256x128xbf16>
    %cst_136 = arith.constant dense<0.000000e+00> : vector<16x128xf32>
    %510 = tpu.matmul %508, %509, %cst_136 {dimension_numbers = #tpu.dot_dimension_numbers<[1], [0], [0], [1], [0, 0, 1, 1], [], []>} : vector<16x256xbf16>, vector<256x128xbf16>, vector<16x128xf32> -> vector<16x128xf32>
    %511 = vector.broadcast %503 : vector<1x128xf32> to vector<16x128xf32>
    %512 = arith.mulf %510, %511 : vector<16x128xf32>
    %513 = vector.broadcast %504 : vector<1x128xf32> to vector<16x128xf32>
    %514 = arith.mulf %510, %513 : vector<16x128xf32>
    %515 = vector.extract_strided_slice %512 {offsets = [0, 0], sizes = [16, 32], strides = [1, 1]} : vector<16x128xf32> to vector<16x32xf32>
    %cst_137 = arith.constant dense<0.000000e+00> : vector<16xf32>
    %516 = vector.multi_reduction <add>, %515, %cst_137 [1] : vector<16x32xf32> to vector<16xf32>
    %517 = vector.shape_cast %516 : vector<16xf32> to vector<16x1xf32>
    %518 = tpu.transpose %517, [1, 0] : vector<16x1xf32> -> vector<1x16xf32>
    %519 = vector.extract_strided_slice %514 {offsets = [0, 0], sizes = [16, 32], strides = [1, 1]} : vector<16x128xf32> to vector<16x32xf32>
    %cst_138 = arith.constant dense<0.000000e+00> : vector<16xf32>
    %520 = vector.multi_reduction <add>, %519, %cst_138 [1] : vector<16x32xf32> to vector<16xf32>
    %521 = vector.shape_cast %520 : vector<16xf32> to vector<16x1xf32>
    %522 = vector.extract_strided_slice %512 {offsets = [0, 32], sizes = [16, 32], strides = [1, 1]} : vector<16x128xf32> to vector<16x32xf32>
    %cst_139 = arith.constant dense<0.000000e+00> : vector<16xf32>
    %523 = vector.multi_reduction <add>, %522, %cst_139 [1] : vector<16x32xf32> to vector<16xf32>
    %524 = vector.shape_cast %523 : vector<16xf32> to vector<16x1xf32>
    %525 = tpu.transpose %524, [1, 0] : vector<16x1xf32> -> vector<1x16xf32>
    %526 = vector.extract_strided_slice %514 {offsets = [0, 32], sizes = [16, 32], strides = [1, 1]} : vector<16x128xf32> to vector<16x32xf32>
    %cst_140 = arith.constant dense<0.000000e+00> : vector<16xf32>
    %527 = vector.multi_reduction <add>, %526, %cst_140 [1] : vector<16x32xf32> to vector<16xf32>
    %528 = vector.shape_cast %527 : vector<16xf32> to vector<16x1xf32>
    %529 = vector.extract_strided_slice %512 {offsets = [0, 64], sizes = [16, 32], strides = [1, 1]} : vector<16x128xf32> to vector<16x32xf32>
    %cst_141 = arith.constant dense<0.000000e+00> : vector<16xf32>
    %530 = vector.multi_reduction <add>, %529, %cst_141 [1] : vector<16x32xf32> to vector<16xf32>
    %531 = vector.shape_cast %530 : vector<16xf32> to vector<16x1xf32>
    %532 = tpu.transpose %531, [1, 0] : vector<16x1xf32> -> vector<1x16xf32>
    %533 = vector.extract_strided_slice %514 {offsets = [0, 64], sizes = [16, 32], strides = [1, 1]} : vector<16x128xf32> to vector<16x32xf32>
    %cst_142 = arith.constant dense<0.000000e+00> : vector<16xf32>
    %534 = vector.multi_reduction <add>, %533, %cst_142 [1] : vector<16x32xf32> to vector<16xf32>
    %535 = vector.shape_cast %534 : vector<16xf32> to vector<16x1xf32>
    %536 = vector.extract_strided_slice %512 {offsets = [0, 96], sizes = [16, 32], strides = [1, 1]} : vector<16x128xf32> to vector<16x32xf32>
    %cst_143 = arith.constant dense<0.000000e+00> : vector<16xf32>
    %537 = vector.multi_reduction <add>, %536, %cst_143 [1] : vector<16x32xf32> to vector<16xf32>
    %538 = vector.shape_cast %537 : vector<16xf32> to vector<16x1xf32>
    %539 = tpu.transpose %538, [1, 0] : vector<16x1xf32> -> vector<1x16xf32>
    %540 = vector.extract_strided_slice %514 {offsets = [0, 96], sizes = [16, 32], strides = [1, 1]} : vector<16x128xf32> to vector<16x32xf32>
    %cst_144 = arith.constant dense<0.000000e+00> : vector<16xf32>
    %541 = vector.multi_reduction <add>, %540, %cst_144 [1] : vector<16x32xf32> to vector<16xf32>
    %542 = vector.shape_cast %541 : vector<16xf32> to vector<16x1xf32>
    %543 = tpu.concatenate %518, %525, %532, %539 in 1 : vector<1x16xf32>, vector<1x16xf32>, vector<1x16xf32>, vector<1x16xf32> -> vector<1x64xf32>
    %544 = vector.shape_cast %521 : vector<16x1xf32> to vector<16x1xf32>
    %545 = vector.broadcast %544 : vector<16x1xf32> to vector<16x16xf32>
    %546 = vector.shape_cast %528 : vector<16x1xf32> to vector<16x1xf32>
    %547 = vector.broadcast %546 : vector<16x1xf32> to vector<16x16xf32>
    %548 = vector.shape_cast %535 : vector<16x1xf32> to vector<16x1xf32>
    %549 = vector.broadcast %548 : vector<16x1xf32> to vector<16x16xf32>
    %550 = vector.shape_cast %542 : vector<16x1xf32> to vector<16x1xf32>
    %551 = vector.broadcast %550 : vector<16x1xf32> to vector<16x16xf32>
    %552 = tpu.concatenate %545, %547, %549, %551 in 1 : vector<16x16xf32>, vector<16x16xf32>, vector<16x16xf32>, vector<16x16xf32> -> vector<16x64xf32>
    %553 = vector.broadcast %543 : vector<1x64xf32> to vector<16x64xf32>
    %554 = arith.addf %552, %553 : vector<16x64xf32>
    %555 = vector.broadcast %505 : vector<1x64xf32> to vector<16x64xf32>
    %556 = arith.mulf %1, %555 : vector<16x64xf32>
    %557 = arith.addf %554, %556 : vector<16x64xf32>
    %cst_145 = arith.constant 0.000000e+00 : f32
    %558 = vector.broadcast %cst_145 : f32 to vector<16x64xf32>
    %559 = arith.cmpf ogt, %557, %558 : vector<16x64xf32>
    %cst_146 = arith.constant 2.000000e-01 : f32
    %560 = vector.broadcast %cst_146 : f32 to vector<16x64xf32>
    %561 = arith.mulf %560, %557 : vector<16x64xf32>
    %562 = arith.select %559, %557, %561 : vector<16x64xi1>, vector<16x64xf32>
    %563 = arith.addf %562, %0 : vector<16x64xf32>
    %564 = vector.extract_strided_slice %563 {offsets = [0, 0], sizes = [16, 16], strides = [1, 1]} : vector<16x64xf32> to vector<16x16xf32>
    %cst_147 = arith.constant dense<0xFF800000> : vector<16xf32>
    %565 = vector.multi_reduction <maximumf>, %564, %cst_147 [1] : vector<16x16xf32> to vector<16xf32>
    %566 = vector.shape_cast %565 : vector<16xf32> to vector<16x1xf32>
    %567 = vector.extract_strided_slice %563 {offsets = [0, 16], sizes = [16, 16], strides = [1, 1]} : vector<16x64xf32> to vector<16x16xf32>
    %cst_148 = arith.constant dense<0xFF800000> : vector<16xf32>
    %568 = vector.multi_reduction <maximumf>, %567, %cst_148 [1] : vector<16x16xf32> to vector<16xf32>
    %569 = vector.shape_cast %568 : vector<16xf32> to vector<16x1xf32>
    %570 = vector.extract_strided_slice %563 {offsets = [0, 32], sizes = [16, 16], strides = [1, 1]} : vector<16x64xf32> to vector<16x16xf32>
    %cst_149 = arith.constant dense<0xFF800000> : vector<16xf32>
    %571 = vector.multi_reduction <maximumf>, %570, %cst_149 [1] : vector<16x16xf32> to vector<16xf32>
    %572 = vector.shape_cast %571 : vector<16xf32> to vector<16x1xf32>
    %573 = vector.extract_strided_slice %563 {offsets = [0, 48], sizes = [16, 16], strides = [1, 1]} : vector<16x64xf32> to vector<16x16xf32>
    %cst_150 = arith.constant dense<0xFF800000> : vector<16xf32>
    %574 = vector.multi_reduction <maximumf>, %573, %cst_150 [1] : vector<16x16xf32> to vector<16xf32>
    %575 = vector.shape_cast %574 : vector<16xf32> to vector<16x1xf32>
    %576 = vector.shape_cast %566 : vector<16x1xf32> to vector<16x1xf32>
    %577 = vector.broadcast %576 : vector<16x1xf32> to vector<16x16xf32>
    %578 = vector.shape_cast %569 : vector<16x1xf32> to vector<16x1xf32>
    %579 = vector.broadcast %578 : vector<16x1xf32> to vector<16x16xf32>
    %580 = vector.shape_cast %572 : vector<16x1xf32> to vector<16x1xf32>
    %581 = vector.broadcast %580 : vector<16x1xf32> to vector<16x16xf32>
    %582 = vector.shape_cast %575 : vector<16x1xf32> to vector<16x1xf32>
    %583 = vector.broadcast %582 : vector<16x1xf32> to vector<16x16xf32>
    %584 = tpu.concatenate %577, %579, %581, %583 in 1 : vector<16x16xf32>, vector<16x16xf32>, vector<16x16xf32>, vector<16x16xf32> -> vector<16x64xf32>
    %585 = arith.subf %563, %584 : vector<16x64xf32>
    %586 = math.exp %585 : vector<16x64xf32>
    %587 = vector.extract_strided_slice %586 {offsets = [0, 0], sizes = [16, 16], strides = [1, 1]} : vector<16x64xf32> to vector<16x16xf32>
    %cst_151 = arith.constant dense<0.000000e+00> : vector<16xf32>
    %588 = vector.multi_reduction <add>, %587, %cst_151 [1] : vector<16x16xf32> to vector<16xf32>
    %589 = vector.shape_cast %588 : vector<16xf32> to vector<16x1xf32>
    %590 = vector.extract_strided_slice %586 {offsets = [0, 16], sizes = [16, 16], strides = [1, 1]} : vector<16x64xf32> to vector<16x16xf32>
    %cst_152 = arith.constant dense<0.000000e+00> : vector<16xf32>
    %591 = vector.multi_reduction <add>, %590, %cst_152 [1] : vector<16x16xf32> to vector<16xf32>
    %592 = vector.shape_cast %591 : vector<16xf32> to vector<16x1xf32>
    %593 = vector.extract_strided_slice %586 {offsets = [0, 32], sizes = [16, 16], strides = [1, 1]} : vector<16x64xf32> to vector<16x16xf32>
    %cst_153 = arith.constant dense<0.000000e+00> : vector<16xf32>
    %594 = vector.multi_reduction <add>, %593, %cst_153 [1] : vector<16x16xf32> to vector<16xf32>
    %595 = vector.shape_cast %594 : vector<16xf32> to vector<16x1xf32>
    %596 = vector.extract_strided_slice %586 {offsets = [0, 48], sizes = [16, 16], strides = [1, 1]} : vector<16x64xf32> to vector<16x16xf32>
    %cst_154 = arith.constant dense<0.000000e+00> : vector<16xf32>
    %597 = vector.multi_reduction <add>, %596, %cst_154 [1] : vector<16x16xf32> to vector<16xf32>
    %598 = vector.shape_cast %597 : vector<16xf32> to vector<16x1xf32>
    %599 = vector.shape_cast %589 : vector<16x1xf32> to vector<16x1xf32>
    %600 = vector.broadcast %599 : vector<16x1xf32> to vector<16x16xf32>
    %601 = vector.shape_cast %592 : vector<16x1xf32> to vector<16x1xf32>
    %602 = vector.broadcast %601 : vector<16x1xf32> to vector<16x16xf32>
    %603 = vector.shape_cast %595 : vector<16x1xf32> to vector<16x1xf32>
    %604 = vector.broadcast %603 : vector<16x1xf32> to vector<16x16xf32>
    %605 = vector.shape_cast %598 : vector<16x1xf32> to vector<16x1xf32>
    %606 = vector.broadcast %605 : vector<16x1xf32> to vector<16x16xf32>
    %607 = tpu.concatenate %600, %602, %604, %606 in 1 : vector<16x16xf32>, vector<16x16xf32>, vector<16x16xf32>, vector<16x16xf32> -> vector<16x64xf32>
    %608 = arith.divf %586, %607 : vector<16x64xf32>
    %609 = vector.extract_strided_slice %608 {offsets = [0, 0], sizes = [16, 16], strides = [1, 1]} : vector<16x64xf32> to vector<16x16xf32>
    %610 = vector.extract_strided_slice %510 {offsets = [0, 0], sizes = [16, 32], strides = [1, 1]} : vector<16x128xf32> to vector<16x32xf32>
    %cst_155 = arith.constant dense<0.000000e+00> : vector<16x32xf32>
    %611 = tpu.matmul %609, %610, %cst_155 {dimension_numbers = #tpu.dot_dimension_numbers<[1], [0], [0], [1], [0, 0, 1, 1], [], []>} : vector<16x16xf32>, vector<16x32xf32>, vector<16x32xf32> -> vector<16x32xf32>
    %612 = vector.extract_strided_slice %608 {offsets = [0, 16], sizes = [16, 16], strides = [1, 1]} : vector<16x64xf32> to vector<16x16xf32>
    %613 = vector.extract_strided_slice %510 {offsets = [0, 32], sizes = [16, 32], strides = [1, 1]} : vector<16x128xf32> to vector<16x32xf32>
    %cst_156 = arith.constant dense<0.000000e+00> : vector<16x32xf32>
    %614 = tpu.matmul %612, %613, %cst_156 {dimension_numbers = #tpu.dot_dimension_numbers<[1], [0], [0], [1], [0, 0, 1, 1], [], []>} : vector<16x16xf32>, vector<16x32xf32>, vector<16x32xf32> -> vector<16x32xf32>
    %615 = vector.extract_strided_slice %608 {offsets = [0, 32], sizes = [16, 16], strides = [1, 1]} : vector<16x64xf32> to vector<16x16xf32>
    %616 = vector.extract_strided_slice %510 {offsets = [0, 64], sizes = [16, 32], strides = [1, 1]} : vector<16x128xf32> to vector<16x32xf32>
    %cst_157 = arith.constant dense<0.000000e+00> : vector<16x32xf32>
    %617 = tpu.matmul %615, %616, %cst_157 {dimension_numbers = #tpu.dot_dimension_numbers<[1], [0], [0], [1], [0, 0, 1, 1], [], []>} : vector<16x16xf32>, vector<16x32xf32>, vector<16x32xf32> -> vector<16x32xf32>
    %618 = vector.extract_strided_slice %608 {offsets = [0, 48], sizes = [16, 16], strides = [1, 1]} : vector<16x64xf32> to vector<16x16xf32>
    %619 = vector.extract_strided_slice %510 {offsets = [0, 96], sizes = [16, 32], strides = [1, 1]} : vector<16x128xf32> to vector<16x32xf32>
    %cst_158 = arith.constant dense<0.000000e+00> : vector<16x32xf32>
    %620 = tpu.matmul %618, %619, %cst_158 {dimension_numbers = #tpu.dot_dimension_numbers<[1], [0], [0], [1], [0, 0, 1, 1], [], []>} : vector<16x16xf32>, vector<16x32xf32>, vector<16x32xf32> -> vector<16x32xf32>
    %621 = tpu.concatenate %611, %614, %617, %620 in 1 : vector<16x32xf32>, vector<16x32xf32>, vector<16x32xf32>, vector<16x32xf32> -> vector<16x128xf32>
    %622 = vector.broadcast %506 : vector<1x128xf32> to vector<16x128xf32>
    %623 = arith.mulf %621, %622 : vector<16x128xf32>
    %624 = vector.broadcast %507 : vector<1x128xf32> to vector<16x128xf32>
    %625 = arith.addf %623, %624 : vector<16x128xf32>
    %cst_159 = arith.constant 0.000000e+00 : f32
    %626 = vector.broadcast %cst_159 : f32 to vector<16x128xf32>
    %627 = arith.maximumf %625, %626 : vector<16x128xf32>
    %c25 = arith.constant 25 : index
    %c0_160 = arith.constant 0 : index
    %628 = vector.load %arg4[%c25, %c0_160] : memref<35x256xf32, #tpu.memory_space<vmem>>, vector<1x32xf32>
    %c26 = arith.constant 26 : index
    %c0_161 = arith.constant 0 : index
    %629 = vector.load %arg4[%c26, %c0_161] : memref<35x256xf32, #tpu.memory_space<vmem>>, vector<1x32xf32>
    %c27 = arith.constant 27 : index
    %c0_162 = arith.constant 0 : index
    %630 = vector.load %arg4[%c27, %c0_162] : memref<35x256xf32, #tpu.memory_space<vmem>>, vector<1x16xf32>
    %c28 = arith.constant 28 : index
    %c0_163 = arith.constant 0 : index
    %631 = vector.load %arg4[%c28, %c0_163] : memref<35x256xf32, #tpu.memory_space<vmem>>, vector<1x32xf32>
    %c29 = arith.constant 29 : index
    %c0_164 = arith.constant 0 : index
    %632 = vector.load %arg4[%c29, %c0_164] : memref<35x256xf32, #tpu.memory_space<vmem>>, vector<1x32xf32>
    %633 = arith.truncf %627 : vector<16x128xf32> to vector<16x128xbf16>
    %c0_165 = arith.constant 0 : index
    %c0_166 = arith.constant 0 : index
    %634 = vector.load %arg10[%c0_165, %c0_166] : memref<128x32xbf16, #tpu.memory_space<vmem>>, vector<128x32xbf16>
    %cst_167 = arith.constant dense<0.000000e+00> : vector<16x32xf32>
    %635 = tpu.matmul %633, %634, %cst_167 {dimension_numbers = #tpu.dot_dimension_numbers<[1], [0], [0], [1], [0, 0, 1, 1], [], []>} : vector<16x128xbf16>, vector<128x32xbf16>, vector<16x32xf32> -> vector<16x32xf32>
    %636 = vector.broadcast %628 : vector<1x32xf32> to vector<16x32xf32>
    %637 = arith.mulf %635, %636 : vector<16x32xf32>
    %638 = vector.broadcast %629 : vector<1x32xf32> to vector<16x32xf32>
    %639 = arith.mulf %635, %638 : vector<16x32xf32>
    %cst_168 = arith.constant dense<0.000000e+00> : vector<16xf32>
    %640 = vector.multi_reduction <add>, %637, %cst_168 [1] : vector<16x32xf32> to vector<16xf32>
    %641 = vector.shape_cast %640 : vector<16xf32> to vector<16x1xf32>
    %642 = tpu.transpose %641, [1, 0] : vector<16x1xf32> -> vector<1x16xf32>
    %cst_169 = arith.constant dense<0.000000e+00> : vector<16xf32>
    %643 = vector.multi_reduction <add>, %639, %cst_169 [1] : vector<16x32xf32> to vector<16xf32>
    %644 = vector.shape_cast %643 : vector<16xf32> to vector<16x1xf32>
    %645 = vector.shape_cast %644 : vector<16x1xf32> to vector<16x1xf32>
    %646 = vector.broadcast %645 : vector<16x1xf32> to vector<16x16xf32>
    %647 = vector.broadcast %642 : vector<1x16xf32> to vector<16x16xf32>
    %648 = arith.addf %646, %647 : vector<16x16xf32>
    %649 = vector.extract_strided_slice %1 {offsets = [0, 0], sizes = [16, 16], strides = [1, 1]} : vector<16x64xf32> to vector<16x16xf32>
    %650 = vector.broadcast %630 : vector<1x16xf32> to vector<16x16xf32>
    %651 = arith.mulf %649, %650 : vector<16x16xf32>
    %652 = arith.addf %648, %651 : vector<16x16xf32>
    %cst_170 = arith.constant 0.000000e+00 : f32
    %653 = vector.broadcast %cst_170 : f32 to vector<16x16xf32>
    %654 = arith.cmpf ogt, %652, %653 : vector<16x16xf32>
    %cst_171 = arith.constant 2.000000e-01 : f32
    %655 = vector.broadcast %cst_171 : f32 to vector<16x16xf32>
    %656 = arith.mulf %655, %652 : vector<16x16xf32>
    %657 = arith.select %654, %652, %656 : vector<16x16xi1>, vector<16x16xf32>
    %658 = vector.extract_strided_slice %0 {offsets = [0, 0], sizes = [16, 16], strides = [1, 1]} : vector<16x64xf32> to vector<16x16xf32>
    %659 = arith.addf %657, %658 : vector<16x16xf32>
    %cst_172 = arith.constant dense<0xFF800000> : vector<16xf32>
    %660 = vector.multi_reduction <maximumf>, %659, %cst_172 [1] : vector<16x16xf32> to vector<16xf32>
    %661 = vector.shape_cast %660 : vector<16xf32> to vector<16x1xf32>
    %662 = vector.shape_cast %661 : vector<16x1xf32> to vector<16x1xf32>
    %663 = vector.broadcast %662 : vector<16x1xf32> to vector<16x16xf32>
    %664 = arith.subf %659, %663 : vector<16x16xf32>
    %665 = math.exp %664 : vector<16x16xf32>
    %cst_173 = arith.constant dense<0.000000e+00> : vector<16xf32>
    %666 = vector.multi_reduction <add>, %665, %cst_173 [1] : vector<16x16xf32> to vector<16xf32>
    %667 = vector.shape_cast %666 : vector<16xf32> to vector<16x1xf32>
    %668 = vector.shape_cast %667 : vector<16x1xf32> to vector<16x1xf32>
    %669 = vector.broadcast %668 : vector<16x1xf32> to vector<16x16xf32>
    %670 = arith.divf %665, %669 : vector<16x16xf32>
    %cst_174 = arith.constant dense<0.000000e+00> : vector<16x32xf32>
    %671 = tpu.matmul %670, %635, %cst_174 {dimension_numbers = #tpu.dot_dimension_numbers<[1], [0], [0], [1], [0, 0, 1, 1], [], []>} : vector<16x16xf32>, vector<16x32xf32>, vector<16x32xf32> -> vector<16x32xf32>
    %672 = vector.broadcast %631 : vector<1x32xf32> to vector<16x32xf32>
    %673 = arith.mulf %671, %672 : vector<16x32xf32>
    %674 = vector.broadcast %632 : vector<1x32xf32> to vector<16x32xf32>
    %675 = arith.addf %673, %674 : vector<16x32xf32>
    %cst_175 = arith.constant 0.000000e+00 : f32
    %676 = vector.broadcast %cst_175 : f32 to vector<16x32xf32>
    %677 = arith.maximumf %675, %676 : vector<16x32xf32>
    %c30 = arith.constant 30 : index
    %c0_176 = arith.constant 0 : index
    %678 = vector.load %arg4[%c30, %c0_176] : memref<35x256xf32, #tpu.memory_space<vmem>>, vector<1x64xf32>
    %c31 = arith.constant 31 : index
    %c0_177 = arith.constant 0 : index
    %679 = vector.load %arg4[%c31, %c0_177] : memref<35x256xf32, #tpu.memory_space<vmem>>, vector<1x64xf32>
    %c32 = arith.constant 32 : index
    %c0_178 = arith.constant 0 : index
    %680 = vector.load %arg4[%c32, %c0_178] : memref<35x256xf32, #tpu.memory_space<vmem>>, vector<1x32xf32>
    %c33 = arith.constant 33 : index
    %c0_179 = arith.constant 0 : index
    %681 = vector.load %arg4[%c33, %c0_179] : memref<35x256xf32, #tpu.memory_space<vmem>>, vector<1x32xf32>
    %c34 = arith.constant 34 : index
    %c0_180 = arith.constant 0 : index
    %682 = vector.load %arg4[%c34, %c0_180] : memref<35x256xf32, #tpu.memory_space<vmem>>, vector<1x3xf32>
    %683 = arith.truncf %677 : vector<16x32xf32> to vector<16x32xbf16>
    %c0_181 = arith.constant 0 : index
    %c0_182 = arith.constant 0 : index
    %684 = vector.load %arg11[%c0_181, %c0_182] : memref<32x64xbf16, #tpu.memory_space<vmem>>, vector<32x64xbf16>
    %cst_183 = arith.constant dense<0.000000e+00> : vector<16x64xf32>
    %685 = tpu.matmul %683, %684, %cst_183 {dimension_numbers = #tpu.dot_dimension_numbers<[1], [0], [0], [1], [0, 0, 1, 1], [], []>} : vector<16x32xbf16>, vector<32x64xbf16>, vector<16x64xf32> -> vector<16x64xf32>
    %686 = vector.broadcast %678 : vector<1x64xf32> to vector<16x64xf32>
    %687 = arith.mulf %685, %686 : vector<16x64xf32>
    %688 = vector.broadcast %679 : vector<1x64xf32> to vector<16x64xf32>
    %689 = arith.addf %687, %688 : vector<16x64xf32>
    %cst_184 = arith.constant 0.000000e+00 : f32
    %690 = vector.broadcast %cst_184 : f32 to vector<16x64xf32>
    %691 = arith.maximumf %689, %690 : vector<16x64xf32>
    %692 = arith.truncf %691 : vector<16x64xf32> to vector<16x64xbf16>
    %c0_185 = arith.constant 0 : index
    %c0_186 = arith.constant 0 : index
    %693 = vector.load %arg12[%c0_185, %c0_186] : memref<64x32xbf16, #tpu.memory_space<vmem>>, vector<64x32xbf16>
    %cst_187 = arith.constant dense<0.000000e+00> : vector<16x32xf32>
    %694 = tpu.matmul %692, %693, %cst_187 {dimension_numbers = #tpu.dot_dimension_numbers<[1], [0], [0], [1], [0, 0, 1, 1], [], []>} : vector<16x64xbf16>, vector<64x32xbf16>, vector<16x32xf32> -> vector<16x32xf32>
    %695 = vector.broadcast %680 : vector<1x32xf32> to vector<16x32xf32>
    %696 = arith.mulf %694, %695 : vector<16x32xf32>
    %697 = vector.broadcast %681 : vector<1x32xf32> to vector<16x32xf32>
    %698 = arith.addf %696, %697 : vector<16x32xf32>
    %cst_188 = arith.constant 0.000000e+00 : f32
    %699 = vector.broadcast %cst_188 : f32 to vector<16x32xf32>
    %700 = arith.maximumf %698, %699 : vector<16x32xf32>
    %701 = arith.truncf %700 : vector<16x32xf32> to vector<16x32xbf16>
    %c0_189 = arith.constant 0 : index
    %c0_190 = arith.constant 0 : index
    %702 = vector.load %arg13[%c0_189, %c0_190] : memref<32x3xbf16, #tpu.memory_space<vmem>>, vector<32x3xbf16>
    %cst_191 = arith.constant dense<0.000000e+00> : vector<16x3xf32>
    %703 = tpu.matmul %701, %702, %cst_191 {dimension_numbers = #tpu.dot_dimension_numbers<[1], [0], [0], [1], [0, 0, 1, 1], [], []>} : vector<16x32xbf16>, vector<32x3xbf16>, vector<16x3xf32> -> vector<16x3xf32>
    %704 = vector.broadcast %682 : vector<1x3xf32> to vector<16x3xf32>
    %705 = arith.addf %703, %704 : vector<16x3xf32>
    %cst_192 = arith.constant dense<0xFF800000> : vector<16xf32>
    %706 = vector.multi_reduction <maximumf>, %705, %cst_192 [1] : vector<16x3xf32> to vector<16xf32>
    %707 = vector.shape_cast %706 : vector<16xf32> to vector<16x1xf32>
    %708 = vector.broadcast %707 : vector<16x1xf32> to vector<16x3xf32>
    %709 = arith.subf %705, %708 : vector<16x3xf32>
    %710 = math.exp %709 : vector<16x3xf32>
    %cst_193 = arith.constant dense<0.000000e+00> : vector<16xf32>
    %711 = vector.multi_reduction <add>, %710, %cst_193 [1] : vector<16x3xf32> to vector<16xf32>
    %712 = vector.shape_cast %711 : vector<16xf32> to vector<16x1xf32>
    %713 = math.log %712 : vector<16x1xf32>
    %714 = vector.broadcast %713 : vector<16x1xf32> to vector<16x3xf32>
    %715 = arith.subf %709, %714 : vector<16x3xf32>
    %c0_194 = arith.constant 0 : index
    %c0_195 = arith.constant 0 : index
    %716 = vector.load %arg14[%c0_194, %c0_195] : memref<16x3xf32, #tpu.memory_space<vmem>>, vector<16x3xf32>
    tpu.vector_store %arg14[%c0_194, %c0_195], %715 {strides = array<i32>} : memref<16x3xf32, #tpu.memory_space<vmem>>, vector<16x3xf32>,
    return
  }
  func.func @transform_0(%arg0: i32) -> (i32, i32) {
    %c0_i32 = arith.constant 0 : i32
    %c0_i32_0 = arith.constant 0 : i32
    %c0_i32_1 = arith.constant 0 : i32
    return %c0_i32, %c0_i32_0 : i32, i32
  }
  func.func @transform_1(%arg0: i32) -> (i32, i32) {
    %c0_i32 = arith.constant 0 : i32
    %c0_i32_0 = arith.constant 0 : i32
    %c0_i32_1 = arith.constant 0 : i32
    return %c0_i32, %c0_i32_0 : i32, i32
  }
  func.func @transform_2(%arg0: i32) -> (i32, i32) {
    %c0_i32 = arith.constant 0 : i32
    %c0_i32_0 = arith.constant 0 : i32
    %c0_i32_1 = arith.constant 0 : i32
    return %c0_i32, %c0_i32_0 : i32, i32
  }
  func.func @transform_3(%arg0: i32) -> (i32, i32) {
    %c0_i32 = arith.constant 0 : i32
    %c0_i32_0 = arith.constant 0 : i32
    %c0_i32_1 = arith.constant 0 : i32
    return %c0_i32, %c0_i32_0 : i32, i32
  }
  func.func @transform_4(%arg0: i32) -> (i32, i32) {
    %c0_i32 = arith.constant 0 : i32
    %c0_i32_0 = arith.constant 0 : i32
    %c0_i32_1 = arith.constant 0 : i32
    return %c0_i32, %c0_i32_0 : i32, i32
  }
  func.func @transform_5(%arg0: i32) -> (i32, i32) {
    %c0_i32 = arith.constant 0 : i32
    %c0_i32_0 = arith.constant 0 : i32
    %c0_i32_1 = arith.constant 0 : i32
    return %c0_i32, %c0_i32_0 : i32, i32
  }
  func.func @transform_6(%arg0: i32) -> (i32, i32) {
    %c0_i32 = arith.constant 0 : i32
    %c0_i32_0 = arith.constant 0 : i32
    %c0_i32_1 = arith.constant 0 : i32
    return %c0_i32, %c0_i32_0 : i32, i32
  }
  func.func @transform_7(%arg0: i32) -> (i32, i32) {
    %c0_i32 = arith.constant 0 : i32
    %c0_i32_0 = arith.constant 0 : i32
    %c0_i32_1 = arith.constant 0 : i32
    return %c0_i32, %c0_i32_0 : i32, i32
  }
  func.func @transform_8(%arg0: i32) -> (i32, i32) {
    %c0_i32 = arith.constant 0 : i32
    %c0_i32_0 = arith.constant 0 : i32
    %c0_i32_1 = arith.constant 0 : i32
    return %c0_i32, %c0_i32_0 : i32, i32
  }
  func.func @transform_9(%arg0: i32) -> (i32, i32) {
    %c0_i32 = arith.constant 0 : i32
    %c0_i32_0 = arith.constant 0 : i32
    %c0_i32_1 = arith.constant 0 : i32
    return %c0_i32, %c0_i32_0 : i32, i32
  }
  func.func @transform_10(%arg0: i32) -> (i32, i32) {
    %c0_i32 = arith.constant 0 : i32
    %c0_i32_0 = arith.constant 0 : i32
    %c0_i32_1 = arith.constant 0 : i32
    return %c0_i32, %c0_i32_0 : i32, i32
  }
  func.func @transform_11(%arg0: i32) -> (i32, i32) {
    %c0_i32 = arith.constant 0 : i32
    %c0_i32_0 = arith.constant 0 : i32
    %c0_i32_1 = arith.constant 0 : i32
    return %c0_i32, %c0_i32_0 : i32, i32
  }
  func.func @transform_12(%arg0: i32) -> (i32, i32) {
    %c0_i32 = arith.constant 0 : i32
    %c0_i32_0 = arith.constant 0 : i32
    %c0_i32_1 = arith.constant 0 : i32
    return %c0_i32, %c0_i32_0 : i32, i32
  }
  func.func @transform_13(%arg0: i32) -> (i32, i32) {
    %c0_i32 = arith.constant 0 : i32
    %c0_i32_0 = arith.constant 0 : i32
    %c0_i32_1 = arith.constant 0 : i32
    return %c0_i32, %c0_i32_0 : i32, i32
  }
}

</mosaic_0001>

<llo_original>
// kernel: tpu_custom_call.1
$region0: #{tpu_custom_call.1}
  #allocation0 [shape = 'u32[]', space=smem, size = 0x4, offset = 0x4, fixed_abs, tag = 'smem constant byte address 0x4 - core index']
  #allocation1 [shape = 'u32[144,128]{1,0:T(1,128)}', space=vmem, size = 0x12000, scoped, tag = 'internal scratch']
  %s0 = inlined_call_operand.vmem [shape: f32[16,8], index: 0, kind: input, shape index: {}]
  %s1 = inlined_call_operand.hbm [shape: f32[16,64], index: 1, kind: input, shape index: {}]
  %s2 = inlined_call_operand.hbm [shape: f32[16,64], index: 2, kind: input, shape index: {}]
  %s3 = inlined_call_operand.hbm [shape: f32[35,256], index: 3, kind: input, shape index: {}]
  %s4 = inlined_call_operand.hbm [shape: bf16[8,128], index: 4, kind: input, shape index: {}]
  %s5 = inlined_call_operand.vmem [shape: bf16[128,128], index: 5, kind: input, shape index: {}]
  %s6 = inlined_call_operand.vmem [shape: bf16[128,256], index: 6, kind: input, shape index: {}]
  %s7 = inlined_call_operand.hbm [shape: bf16[256,256], index: 7, kind: input, shape index: {}]
  %s8 = inlined_call_operand.hbm [shape: bf16[256,128], index: 8, kind: input, shape index: {}]
  %s9 = inlined_call_operand.vmem [shape: bf16[128,32], index: 9, kind: input, shape index: {}]
  %s10 = inlined_call_operand.hbm [shape: bf16[32,64], index: 10, kind: input, shape index: {}]
  %s11 = inlined_call_operand.vmem [shape: bf16[64,32], index: 11, kind: input, shape index: {}]
  %s12 = inlined_call_operand.vmem [shape: bf16[32,3], index: 12, kind: input, shape index: {}]
  %s13 = inlined_call_operand.vmem [shape: f32[16,3], index: 13, kind: output, shape index: {}]
  %s14 = sld [smem:[#allocation0]]
  $region90: #{tpu_custom_call.1} parent=0
    _
  %s16 = ssub.s32 1, %s14
  %s17 = scalar_select 0, %s16, %s14
  $region1: #{tpu_custom_call.1} parent=0
    #allocation2 [shape = 'u8[8192]{0}', space=vmem, size = 0x2000, scoped, tag = 'input window, operand 1, single buffered']
    #allocation3 [shape = 's32[1]{0}', space=sflag, size = 0x4, scoped, tag = 'scoped memory for tpu_custom_call.1']
    #allocation4 [shape = 'u8[8192]{0}', space=vmem, size = 0x2000, scoped, tag = 'input window, operand 2, single buffered']
    #allocation5 [shape = 's32[1]{0}', space=sflag, size = 0x4, scoped, tag = 'scoped memory for tpu_custom_call.1']
    #allocation6 [shape = 'u8[40960]{0}', space=vmem, size = 0xa000, scoped, tag = 'input window, operand 3, single buffered']
    #allocation7 [shape = 'u8[2048]{0}', space=vmem, size = 0x800, scoped, tag = 'input window, operand 4, single buffered']
    #allocation8 [shape = 's32[1]{0}', space=sflag, size = 0x4, scoped, tag = 'scoped memory for tpu_custom_call.1']
    #allocation9 [shape = 'u8[131072]{0}', space=vmem, size = 0x20000, scoped, tag = 'input window, operand 7, single buffered']
    #allocation10 [shape = 'u8[65536]{0}', space=vmem, size = 0x10000, scoped, tag = 'input window, operand 8, single buffered']
    #allocation11 [shape = 's32[1]{0}', space=sflag, size = 0x4, scoped, tag = 'scoped memory for tpu_custom_call.1']
    #allocation12 [shape = 'u8[8192]{0}', space=vmem, size = 0x2000, scoped, tag = 'input window, operand 10, single buffered']
    %18 = vsyncpa [#allocation3], 0
    %19 = vsyncpa [#allocation5], 0
    %20 = vsyncpa [#allocation8], 0
    %21 = vsyncpa [#allocation11], 0
    // Predicated region
    $region2: #{tpu_custom_call.1} parent=1 // pred_check
      _
    $region3: #{tpu_custom_call.1} parent=1 // pred_check_branch
      %23 = sbr.rel (0) target = $region5
    $region4: #{tpu_custom_call.1} parent=1 // pred_region
      _
    $region5: #{tpu_custom_call.1} parent=1 // pred_fallthru
      _
    // Predicated region
    $region6: #{tpu_custom_call.1} parent=1 // pred_check
      _
    $region7: #{tpu_custom_call.1} parent=1 // pred_check_branch
      %25 = sbr.rel (0) target = $region9
    $region8: #{tpu_custom_call.1} parent=1 // pred_region
      %s27 = ssub.s32 256, 256
      %28 = vsyncadd [#allocation3], %s27
      %s29 = sshll.u32 [#allocation2], 4
      %s30 = int_to_ptr.vmem [resolvable:$true] %s29
      %35 = dma.hbm_to_vmem [thread:$0]  %s1, 256, %s30, [#allocation3], 128, 128, 8
    $region9: #{tpu_custom_call.1} parent=1 // pred_fallthru
      _
    // Predicated region
    $region10: #{tpu_custom_call.1} parent=1 // pred_check
      _
    $region11: #{tpu_custom_call.1} parent=1 // pred_check_branch
      %37 = sbr.rel (0) target = $region13
    $region12: #{tpu_custom_call.1} parent=1 // pred_region
      %s39 = ssub.s32 256, 256
      %40 = vsyncadd [#allocation5], %s39
      %s41 = sshll.u32 [#allocation4], 4
      %s42 = int_to_ptr.vmem [resolvable:$true] %s41
      %47 = dma.hbm_to_vmem [thread:$0]  %s2, 256, %s42, [#allocation5], 128, 128, 8
    $region13: #{tpu_custom_call.1} parent=1 // pred_fallthru
      _
    // Predicated region
    $region14: #{tpu_custom_call.1} parent=1 // pred_check
      _
    $region15: #{tpu_custom_call.1} parent=1 // pred_check_branch
      %49 = sbr.rel (0) target = $region17
    $region16: #{tpu_custom_call.1} parent=1 // pred_region
      %s51 = ssub.s32 1280, 1280
      %52 = vsyncadd [#allocation5], %s51
      %s53 = sshll.u32 [#allocation6], 4
      %s54 = int_to_ptr.vmem [resolvable:$true] %s53
      %59 = dma.hbm_to_vmem [thread:$0]  %s3, 1280, %s54, [#allocation5], 256, 256, 16
    $region17: #{tpu_custom_call.1} parent=1 // pred_fallthru
      _
    // Predicated region
    $region18: #{tpu_custom_call.1} parent=1 // pred_check
      _
    $region19: #{tpu_custom_call.1} parent=1 // pred_check_branch
      %61 = sbr.rel (0) target = $region21
    $region20: #{tpu_custom_call.1} parent=1 // pred_region
      %s63 = ssub.s32 64, 64
      %64 = vsyncadd [#allocation8], %s63
      %s66 = sshll.u32 [#allocation7], 4
      %s67 = int_to_ptr.vmem [resolvable:$true] %s66
      %69 = dma.hbm_to_vmem [thread:$0]  %s4, 64, %s67, [#allocation8]
    $region21: #{tpu_custom_call.1} parent=1 // pred_fallthru
      _
    // Predicated region
    $region22: #{tpu_custom_call.1} parent=1 // pred_check
      _
    $region23: #{tpu_custom_call.1} parent=1 // pred_check_branch
      %71 = sbr.rel (0) target = $region25
    $region24: #{tpu_custom_call.1} parent=1 // pred_region
      _
    $region25: #{tpu_custom_call.1} parent=1 // pred_fallthru
      _
    // Predicated region
    $region26: #{tpu_custom_call.1} parent=1 // pred_check
      _
    $region27: #{tpu_custom_call.1} parent=1 // pred_check_branch
      %73 = sbr.rel (0) target = $region29
    $region28: #{tpu_custom_call.1} parent=1 // pred_region
      _
    $region29: #{tpu_custom_call.1} parent=1 // pred_fallthru
      _
    // Predicated region
    $region30: #{tpu_custom_call.1} parent=1 // pred_check
      _
    $region31: #{tpu_custom_call.1} parent=1 // pred_check_branch
      %75 = sbr.rel (0) target = $region33
    $region32: #{tpu_custom_call.1} parent=1 // pred_region
      %s77 = ssub.s32 4096, 4096
      %78 = vsyncadd [#allocation8], %s77
      %s79 = sshll.u32 [#allocation9], 4
      %s80 = int_to_ptr.vmem [resolvable:$true] %s79
      %85 = dma.hbm_to_vmem [thread:$0]  %s7, 4096, %s80, [#allocation8], 128, 128, 8
    $region33: #{tpu_custom_call.1} parent=1 // pred_fallthru
      _
    // Predicated region
    $region34: #{tpu_custom_call.1} parent=1 // pred_check
      _
    $region35: #{tpu_custom_call.1} parent=1 // pred_check_branch
      %87 = sbr.rel (0) target = $region37
    $region36: #{tpu_custom_call.1} parent=1 // pred_region
      %s89 = ssub.s32 2048, 2048
      %90 = vsyncadd [#allocation11], %s89
      %s91 = sshll.u32 [#allocation10], 4
      %s92 = int_to_ptr.vmem [resolvable:$true] %s91
      %97 = dma.hbm_to_vmem [thread:$0]  %s8, 2048, %s92, [#allocation11], 64, 64, 4
    $region37: #{tpu_custom_call.1} parent=1 // pred_fallthru
      _
    // Predicated region
    $region38: #{tpu_custom_call.1} parent=1 // pred_check
      _
    $region39: #{tpu_custom_call.1} parent=1 // pred_check_branch
      %99 = sbr.rel (0) target = $region41
    $region40: #{tpu_custom_call.1} parent=1 // pred_region
      _
    $region41: #{tpu_custom_call.1} parent=1 // pred_fallthru
      _
    // Predicated region
    $region42: #{tpu_custom_call.1} parent=1 // pred_check
      _
    $region43: #{tpu_custom_call.1} parent=1 // pred_check_branch
      %101 = sbr.rel (0) target = $region45
    $region44: #{tpu_custom_call.1} parent=1 // pred_region
      %s103 = ssub.s32 256, 256
      %104 = vsyncadd [#allocation11], %s103
      %s105 = sshll.u32 [#allocation12], 4
      %s106 = int_to_ptr.vmem [resolvable:$true] %s105
      %111 = dma.hbm_to_vmem [thread:$0]  %s10, 256, %s106, [#allocation11], 64, 64, 4
    $region45: #{tpu_custom_call.1} parent=1 // pred_fallthru
      _
    // Predicated region
    $region46: #{tpu_custom_call.1} parent=1 // pred_check
      _
    $region47: #{tpu_custom_call.1} parent=1 // pred_check_branch
      %113 = sbr.rel (0) target = $region49
    $region48: #{tpu_custom_call.1} parent=1 // pred_region
      _
    $region49: #{tpu_custom_call.1} parent=1 // pred_fallthru
      _
    // Predicated region
    $region50: #{tpu_custom_call.1} parent=1 // pred_check
      _
    $region51: #{tpu_custom_call.1} parent=1 // pred_check_branch
      %115 = sbr.rel (0) target = $region53
    $region52: #{tpu_custom_call.1} parent=1 // pred_region
      _
    $region53: #{tpu_custom_call.1} parent=1 // pred_fallthru
      _
    // Predicated region
    $region54: #{tpu_custom_call.1} parent=1 // pred_check
      _
    $region55: #{tpu_custom_call.1} parent=1 // pred_check_branch
      %117 = sbr.rel (0) target = $region57
    $region56: #{tpu_custom_call.1} parent=1 // pred_region
      %118 = dma.done [#allocation3], 256
    $region57: #{tpu_custom_call.1} parent=1 // pred_fallthru
      _
    // Predicated region
    $region58: #{tpu_custom_call.1} parent=1 // pred_check
      _
    $region59: #{tpu_custom_call.1} parent=1 // pred_check_branch
      %120 = sbr.rel (0) target = $region61
    $region60: #{tpu_custom_call.1} parent=1 // pred_region
      %121 = dma.done [#allocation5], 256
    $region61: #{tpu_custom_call.1} parent=1 // pred_fallthru
      _
    // Predicated region
    $region62: #{tpu_custom_call.1} parent=1 // pred_check
      _
    $region63: #{tpu_custom_call.1} parent=1 // pred_check_branch
      %123 = sbr.rel (0) target = $region65
    $region64: #{tpu_custom_call.1} parent=1 // pred_region
      %124 = dma.done [#allocation5], 1280
    $region65: #{tpu_custom_call.1} parent=1 // pred_fallthru
      _
    // Predicated region
    $region66: #{tpu_custom_call.1} parent=1 // pred_check
      _
    $region67: #{tpu_custom_call.1} parent=1 // pred_check_branch
      %126 = sbr.rel (0) target = $region69
    $region68: #{tpu_custom_call.1} parent=1 // pred_region
      %127 = dma.done [#allocation8], 64
    $region69: #{tpu_custom_call.1} parent=1 // pred_fallthru
      _
    // Predicated region
    $region70: #{tpu_custom_call.1} parent=1 // pred_check
      _
    $region71: #{tpu_custom_call.1} parent=1 // pred_check_branch
      %129 = sbr.rel (0) target = $region73
    $region72: #{tpu_custom_call.1} parent=1 // pred_region
      %130 = dma.done [#allocation8], 4096
    $region73: #{tpu_custom_call.1} parent=1 // pred_fallthru
      _
    // Predicated region
    $region74: #{tpu_custom_call.1} parent=1 // pred_check
      _
    $region75: #{tpu_custom_call.1} parent=1 // pred_check_branch
      %132 = sbr.rel (0) target = $region77
    $region76: #{tpu_custom_call.1} parent=1 // pred_region
      %133 = dma.done [#allocation11], 2048
    $region77: #{tpu_custom_call.1} parent=1 // pred_fallthru
      _
    // Predicated region
    $region78: #{tpu_custom_call.1} parent=1 // pred_check
      _
    $region79: #{tpu_custom_call.1} parent=1 // pred_check_branch
      %135 = sbr.rel (0) target = $region81
    $region80: #{tpu_custom_call.1} parent=1 // pred_region
      %136 = dma.done [#allocation11], 256
    $region81: #{tpu_custom_call.1} parent=1 // pred_fallthru
      _
    %v138 = vld [vmem:[#allocation2] sm:$0xff]
    %v139 = vld [vmem:[#allocation2 + $0x8] sm:$0xff]
    %v140 = vld [vmem:[#allocation4] sm:$0xff]
    %v141 = vld [vmem:[#allocation4 + $0x8] sm:$0xff]
    %v142 = vld [vmem:[%s0] sm:$0xff]
    %v143 = vld [vmem:[%s0 + $0x8] sm:$0xff]
    %v144 = vld [vmem:[#allocation6] ss:$0 sm:$0xff]
    %v145 = vld [vmem:[#allocation6 + $0x1] ss:$0 sm:$0xff]
    %v146 = vld [vmem:[#allocation6 + $0x2] ss:$0 sm:$0xff]
    %v147 = vld [vmem:[#allocation6 + $0x3] ss:$0 sm:$0xff]
    %v148 = vld [vmem:[#allocation6 + $0x4] ss:$0 sm:$0xff]
    %v149 = vpack.c.bf16 %v143, %v142
    %v150 = vld [vmem:[#allocation7] sm:$0xf]
    %vm151 = vcmask 64512
    %v153 = vsel %vm151, %v149, 0
    %vm155 = vcmask 1043456
    %v157 = vsel %vm155, %v150, 0
    %159 = vmatprep.subr.bf16.mxu0 0
    %160 = vmatpush1.bf16.msra.mxu0 %v157
    %161 = vmatprep.subr.bf16.mxu0 0
    %162 = vmatpush1.bf16.msra.mxu0 0
    %163 = vmatprep.subr.bf16.mxu0 0
    %164 = vmatpush1.bf16.msra.mxu0 0
    %165 = vmatprep.subr.bf16.mxu0 0
    %166 = vmatpush1.bf16.msra.mxu0 0
    %167 = vmatprep.subr.bf16.mxu0 0
    %168 = vmatpush1.bf16.msra.mxu0 0
    %169 = vmatprep.subr.bf16.mxu0 0
    %170 = vmatpush1.bf16.msra.mxu0 0
    %171 = vmatprep.subr.bf16.mxu0 0
    %172 = vmatpush1.bf16.msra.mxu0 0
    %173 = vmatprep.subr.bf16.mxu0 0
    %174 = vmatpush1.bf16.msra.mxu0 0
    %175 = vmatprep.subr.bf16.mxu0 0
    %176 = vmatpush1.bf16.msra.mxu0 0
    %177 = vmatprep.subr.bf16.mxu0 0
    %178 = vmatpush1.bf16.msra.mxu0 0
    %179 = vmatprep.subr.bf16.mxu0 0
    %180 = vmatpush1.bf16.msra.mxu0 0
    %181 = vmatprep.subr.bf16.mxu0 0
    %182 = vmatpush1.bf16.msra.mxu0 0
    %183 = vmatprep.subr.bf16.mxu0 0
    %184 = vmatpush1.bf16.msra.mxu0 0
    %185 = vmatprep.subr.bf16.mxu0 0
    %186 = vmatpush1.bf16.msra.mxu0 0
    %187 = vmatprep.subr.bf16.mxu0 0
    %188 = vmatpush1.bf16.msra.mxu0 0
    %189 = vmatprep.subr.bf16.mxu0 0
    %190 = vmatpush1.bf16.msra.mxu0 0
    %191 = vmatprep.mubr.bf16.mxu0 0
    %192 = vmatmul.mubr.bf16.gmra.mrb[0].mxu0 %v153
    %v193 = vpop.f32.mrb[0].mxu0
    %v194 = vadd.f32 0.0, %v193
    %v195 = vpop.f32.mrb[0].mxu0
    %v196 = vpop.f32.mrb[0].mxu0
    %v197 = vadd.f32 0.0, %v196
    %v198 = vpop.f32.mrb[0].mxu0
    %199 = vdwg.mxu0
    %v200 = vmul.f32 %v194, %v144
    %v201 = vmul.f32 %v197, %v144
    %v202 = vmul.f32 %v194, %v145
    %v203 = vmul.f32 %v197, %v145
    %vm204 = vcmask 261120
    %v205 = vsel %vm204, %v200, 0.0
    %206 = vadd.xlane.f32.xlu0 %v205
    %v207 = vpop.xlane.xlu0 %206
    %v208 = vsel %vm204, %v201, 0.0
    %209 = vadd.xlane.f32.xlu0 %v208
    %v210 = vpop.xlane.xlu0 %209
    %211 = vxpose.xlu0.b32.start [1/16] %v207, 128
    %212 = vxpose.xlu0.b32.cont [2/16] %v210, 128
    %213 = vxpose.xlu0.b32.cont [3/16] 0.0, 128
    %214 = vxpose.xlu0.b32.cont [4/16] 0.0, 128
    %215 = vxpose.xlu0.b32.cont [5/16] 0.0, 128
    %216 = vxpose.xlu0.b32.cont [6/16] 0.0, 128
    %217 = vxpose.xlu0.b32.cont [7/16] 0.0, 128
    %218 = vxpose.xlu0.b32.cont [8/16] 0.0, 128
    %219 = vxpose.xlu0.b32.cont [9/16] 0.0, 128
    %220 = vxpose.xlu0.b32.cont [10/16] 0.0, 128
    %221 = vxpose.xlu0.b32.cont [11/16] 0.0, 128
    %222 = vxpose.xlu0.b32.cont [12/16] 0.0, 128
    %223 = vxpose.xlu0.b32.cont [13/16] 0.0, 128
    %224 = vxpose.xlu0.b32.cont [14/16] 0.0, 128
    %225 = vxpose.xlu0.b32.cont [15/16] 0.0, 128
    %226 = vxpose.xlu0.b32.end [16/16] 0.0, 128
    %v227 = vpop.trf.xlu0
    %v228 = vpop.trf.xlu0
    %v229 = vpop.trf.xlu0
    %v230 = vpop.trf.xlu0
    %v231 = vpop.trf.xlu0
    %v232 = vpop.trf.xlu0
    %v233 = vpop.trf.xlu0
    %v234 = vpop.trf.xlu0
    %v235 = vpop.trf.xlu0
    %v236 = vpop.trf.xlu0
    %v237 = vpop.trf.xlu0
    %v238 = vpop.trf.xlu0
    %v239 = vpop.trf.xlu0
    %v240 = vpop.trf.xlu0
    %v241 = vpop.trf.xlu0
    %v242 = vpop.trf.xlu0
    %v243 = vsel %vm204, %v202, 0.0
    %244 = vadd.xlane.f32.xlu0 %v243
    %v245 = vpop.xlane.xlu0 %244
    %v246 = vsel %vm204, %v203, 0.0
    %247 = vadd.xlane.f32.xlu0 %v246
    %v248 = vpop.xlane.xlu0 %247
    %251 = vrot.lane.b32.xlu0 %v200, 96
    %v252 = vpop.permute.xlu0 %251
    %253 = vrot.lane.b32.xlu0 %v201, 96
    %v254 = vpop.permute.xlu0 %253
    %v257 = vsel %vm204, %v252, 0.0
    %258 = vadd.xlane.f32.xlu0 %v257
    %v259 = vpop.xlane.xlu0 %258
    %v260 = vsel %vm204, %v254, 0.0
    %261 = vadd.xlane.f32.xlu0 %v260
    %v262 = vpop.xlane.xlu0 %261
    %263 = vxpose.xlu0.b32.start [1/16] %v259, 128
    %264 = vxpose.xlu0.b32.cont [2/16] %v262, 128
    %265 = vxpose.xlu0.b32.cont [3/16] 0.0, 128
    %266 = vxpose.xlu0.b32.cont [4/16] 0.0, 128
    %267 = vxpose.xlu0.b32.cont [5/16] 0.0, 128
    %268 = vxpose.xlu0.b32.cont [6/16] 0.0, 128
    %269 = vxpose.xlu0.b32.cont [7/16] 0.0, 128
    %270 = vxpose.xlu0.b32.cont [8/16] 0.0, 128
    %271 = vxpose.xlu0.b32.cont [9/16] 0.0, 128
    %272 = vxpose.xlu0.b32.cont [10/16] 0.0, 128
    %273 = vxpose.xlu0.b32.cont [11/16] 0.0, 128
    %274 = vxpose.xlu0.b32.cont [12/16] 0.0, 128
    %275 = vxpose.xlu0.b32.cont [13/16] 0.0, 128
    %276 = vxpose.xlu0.b32.cont [14/16] 0.0, 128
    %277 = vxpose.xlu0.b32.cont [15/16] 0.0, 128
    %278 = vxpose.xlu0.b32.end [16/16] 0.0, 128
    %v279 = vpop.trf.xlu0
    %v280 = vpop.trf.xlu0
    %v281 = vpop.trf.xlu0
    %v282 = vpop.trf.xlu0
    %v283 = vpop.trf.xlu0
    %v284 = vpop.trf.xlu0
    %v285 = vpop.trf.xlu0
    %v286 = vpop.trf.xlu0
    %v287 = vpop.trf.xlu0
    %v288 = vpop.trf.xlu0
    %v289 = vpop.trf.xlu0
    %v290 = vpop.trf.xlu0
    %v291 = vpop.trf.xlu0
    %v292 = vpop.trf.xlu0
    %v293 = vpop.trf.xlu0
    %v294 = vpop.trf.xlu0
    %297 = vrot.lane.b32.xlu0 %v202, 96
    %v298 = vpop.permute.xlu0 %297
    %299 = vrot.lane.b32.xlu0 %v203, 96
    %v300 = vpop.permute.xlu0 %299
    %v303 = vsel %vm204, %v298, 0.0
    %304 = vadd.xlane.f32.xlu0 %v303
    %v305 = vpop.xlane.xlu0 %304
    %v306 = vsel %vm204, %v300, 0.0
    %307 = vadd.xlane.f32.xlu0 %v306
    %v308 = vpop.xlane.xlu0 %307
    %309 = vrot.lane.b32.xlu0 %v200, 64
    %v310 = vpop.permute.xlu0 %309
    %311 = vrot.lane.b32.xlu0 %v201, 64
    %v312 = vpop.permute.xlu0 %311
    %v315 = vsel %vm204, %v310, 0.0
    %316 = vadd.xlane.f32.xlu0 %v315
    %v317 = vpop.xlane.xlu0 %316
    %v318 = vsel %vm204, %v312, 0.0
    %319 = vadd.xlane.f32.xlu0 %v318
    %v320 = vpop.xlane.xlu0 %319
    %321 = vxpose.xlu0.b32.start [1/16] %v317, 128
    %322 = vxpose.xlu0.b32.cont [2/16] %v320, 128
    %323 = vxpose.xlu0.b32.cont [3/16] 0.0, 128
    %324 = vxpose.xlu0.b32.cont [4/16] 0.0, 128
    %325 = vxpose.xlu0.b32.cont [5/16] 0.0, 128
    %326 = vxpose.xlu0.b32.cont [6/16] 0.0, 128
    %327 = vxpose.xlu0.b32.cont [7/16] 0.0, 128
    %328 = vxpose.xlu0.b32.cont [8/16] 0.0, 128
    %329 = vxpose.xlu0.b32.cont [9/16] 0.0, 128
    %330 = vxpose.xlu0.b32.cont [10/16] 0.0, 128
    %331 = vxpose.xlu0.b32.cont [11/16] 0.0, 128
    %332 = vxpose.xlu0.b32.cont [12/16] 0.0, 128
    %333 = vxpose.xlu0.b32.cont [13/16] 0.0, 128
    %334 = vxpose.xlu0.b32.cont [14/16] 0.0, 128
    %335 = vxpose.xlu0.b32.cont [15/16] 0.0, 128
    %336 = vxpose.xlu0.b32.end [16/16] 0.0, 128
    %v337 = vpop.trf.xlu0
    %v338 = vpop.trf.xlu0
    %v339 = vpop.trf.xlu0
    %v340 = vpop.trf.xlu0
    %v341 = vpop.trf.xlu0
    %v342 = vpop.trf.xlu0
    %v343 = vpop.trf.xlu0
    %v344 = vpop.trf.xlu0
    %v345 = vpop.trf.xlu0
    %v346 = vpop.trf.xlu0
    %v347 = vpop.trf.xlu0
    %v348 = vpop.trf.xlu0
    %v349 = vpop.trf.xlu0
    %v350 = vpop.trf.xlu0
    %v351 = vpop.trf.xlu0
    %v352 = vpop.trf.xlu0
    %353 = vrot.lane.b32.xlu0 %v202, 64
    %v354 = vpop.permute.xlu0 %353
    %355 = vrot.lane.b32.xlu0 %v203, 64
    %v356 = vpop.permute.xlu0 %355
    %v359 = vsel %vm204, %v354, 0.0
    %360 = vadd.xlane.f32.xlu0 %v359
    %v361 = vpop.xlane.xlu0 %360
    %v362 = vsel %vm204, %v356, 0.0
    %363 = vadd.xlane.f32.xlu0 %v362
    %v364 = vpop.xlane.xlu0 %363
    %365 = vrot.lane.b32.xlu0 %v200, 32
    %v366 = vpop.permute.xlu0 %365
    %367 = vrot.lane.b32.xlu0 %v201, 32
    %v368 = vpop.permute.xlu0 %367
    %v371 = vsel %vm204, %v366, 0.0
    %372 = vadd.xlane.f32.xlu0 %v371
    %v373 = vpop.xlane.xlu0 %372
    %v374 = vsel %vm204, %v368, 0.0
    %375 = vadd.xlane.f32.xlu0 %v374
    %v376 = vpop.xlane.xlu0 %375
    %377 = vxpose.xlu0.b32.start [1/16] %v373, 128
    %378 = vxpose.xlu0.b32.cont [2/16] %v376, 128
    %379 = vxpose.xlu0.b32.cont [3/16] 0.0, 128
    %380 = vxpose.xlu0.b32.cont [4/16] 0.0, 128
    %381 = vxpose.xlu0.b32.cont [5/16] 0.0, 128
    %382 = vxpose.xlu0.b32.cont [6/16] 0.0, 128
    %383 = vxpose.xlu0.b32.cont [7/16] 0.0, 128
    %384 = vxpose.xlu0.b32.cont [8/16] 0.0, 128
    %385 = vxpose.xlu0.b32.cont [9/16] 0.0, 128
    %386 = vxpose.xlu0.b32.cont [10/16] 0.0, 128
    %387 = vxpose.xlu0.b32.cont [11/16] 0.0, 128
    %388 = vxpose.xlu0.b32.cont [12/16] 0.0, 128
    %389 = vxpose.xlu0.b32.cont [13/16] 0.0, 128
    %390 = vxpose.xlu0.b32.cont [14/16] 0.0, 128
    %391 = vxpose.xlu0.b32.cont [15/16] 0.0, 128
    %392 = vxpose.xlu0.b32.end [16/16] 0.0, 128
    %v393 = vpop.trf.xlu0
    %v394 = vpop.trf.xlu0
    %v395 = vpop.trf.xlu0
    %v396 = vpop.trf.xlu0
    %v397 = vpop.trf.xlu0
    %v398 = vpop.trf.xlu0
    %v399 = vpop.trf.xlu0
    %v400 = vpop.trf.xlu0
    %v401 = vpop.trf.xlu0
    %v402 = vpop.trf.xlu0
    %v403 = vpop.trf.xlu0
    %v404 = vpop.trf.xlu0
    %v405 = vpop.trf.xlu0
    %v406 = vpop.trf.xlu0
    %v407 = vpop.trf.xlu0
    %v408 = vpop.trf.xlu0
    %409 = vrot.lane.b32.xlu0 %v202, 32
    %v410 = vpop.permute.xlu0 %409
    %411 = vrot.lane.b32.xlu0 %v203, 32
    %v412 = vpop.permute.xlu0 %411
    %v415 = vsel %vm204, %v410, 0.0
    %416 = vadd.xlane.f32.xlu0 %v415
    %v417 = vpop.xlane.xlu0 %416
    %v418 = vsel %vm204, %v412, 0.0
    %419 = vadd.xlane.f32.xlu0 %v418
    %v420 = vpop.xlane.xlu0 %419
    %422 = vrot.lane.b32.xlu0 %v279, 16
    %v423 = vpop.permute.xlu0 %422
    %426 = vrot.lane.b32.xlu0 %v337, 32
    %v427 = vpop.permute.xlu0 %426
    %430 = vrot.lane.b32.xlu0 %v393, 48
    %v431 = vpop.permute.xlu0 %430
    %vm433 = vcmask 130048
    %v434 = vsel %vm433, %v227, %v423
    %v435 = vsel %vm204, %v434, %v427
    %vm436 = vcmask 392192
    %v437 = vsel %vm436, %v435, %v431
    %v438 = vsel %vm433, %v245, %v305
    %v439 = vsel %vm433, %v248, %v308
    %v440 = vsel %vm204, %v438, %v361
    %v441 = vsel %vm204, %v439, %v364
    %v442 = vsel %vm436, %v440, %v417
    %v443 = vsel %vm436, %v441, %v420
    %v444 = vlaneseq
    %v445 = vshrl.u32 %v444, 7
    %v446 = vsub.s32 0, %v445
    %v447 = vrot.slane %v437, %v446
    %v448 = vadd.f32 %v442, %v447
    %v449 = vadd.f32 %v443, %v447
    %v450 = vmul.f32 %v140, %v146
    %v451 = vmul.f32 %v141, %v146
    %v452 = vadd.f32 %v448, %v450
    %v453 = vadd.f32 %v449, %v451
    %vm454 = vcmp.gt.f32.partialorder %v452, 0.0
    %vm455 = vcmp.gt.f32.partialorder %v453, 0.0
    %v456 = vmul.f32 %v452, 0.2
    %v457 = vmul.f32 %v453, 0.2
    %v458 = vsel %vm454, %v452, %v456
    %v459 = vsel %vm455, %v453, %v457
    %v460 = vadd.f32 %v458, %v138
    %v461 = vadd.f32 %v459, %v139
    %v462 = vsel %vm433, %v460, -inf
    %463 = vmax.xlane.f32.xlu0 %v462
    %v464 = vpop.xlane.xlu0 %463
    %v465 = vsel %vm433, %v461, -inf
    %466 = vmax.xlane.f32.xlu0 %v465
    %v467 = vpop.xlane.xlu0 %466
    %vm468 = vcmask 261248
    %v469 = vsel %vm468, %v460, -inf
    %470 = vmax.xlane.f32.xlu0 %v469
    %v471 = vpop.xlane.xlu0 %470
    %v472 = vsel %vm468, %v461, -inf
    %473 = vmax.xlane.f32.xlu0 %v472
    %v474 = vpop.xlane.xlu0 %473
    %vm475 = vcmask 392448
    %v476 = vsel %vm475, %v460, -inf
    %477 = vmax.xlane.f32.xlu0 %v476
    %v478 = vpop.xlane.xlu0 %477
    %v479 = vsel %vm475, %v461, -inf
    %480 = vmax.xlane.f32.xlu0 %v479
    %v481 = vpop.xlane.xlu0 %480
    %vm482 = vcmask 523648
    %v483 = vsel %vm482, %v460, -inf
    %484 = vmax.xlane.f32.xlu0 %v483
    %v485 = vpop.xlane.xlu0 %484
    %v486 = vsel %vm482, %v461, -inf
    %487 = vmax.xlane.f32.xlu0 %v486
    %v488 = vpop.xlane.xlu0 %487
    %v489 = vsel %vm433, %v464, %v471
    %v490 = vsel %vm433, %v467, %v474
    %v491 = vsel %vm204, %v489, %v478
    %v492 = vsel %vm204, %v490, %v481
    %v493 = vsel %vm436, %v491, %v485
    %v494 = vsel %vm436, %v492, %v488
    %v495 = vsub.f32 %v460, %v493
    %v496 = vsub.f32 %v461, %v494
    %v497 = vmul.f32 %v495, 1.442695
    %v498 = vpow.pop %v497
    %v499 = vmul.f32 %v496, 1.442695
    %v500 = vpow.pop %v499
    %v501 = vsel %vm433, %v498, 0.0
    %502 = vadd.xlane.f32.xlu0 %v501
    %v503 = vpop.xlane.xlu0 %502
    %v504 = vsel %vm433, %v500, 0.0
    %505 = vadd.xlane.f32.xlu0 %v504
    %v506 = vpop.xlane.xlu0 %505
    %509 = vrot.lane.b32.xlu0 %v498, 112
    %v510 = vpop.permute.xlu0 %509
    %511 = vrot.lane.b32.xlu0 %v500, 112
    %v512 = vpop.permute.xlu0 %511
    %v515 = vsel %vm433, %v510, 0.0
    %516 = vadd.xlane.f32.xlu0 %v515
    %v517 = vpop.xlane.xlu0 %516
    %v518 = vsel %vm433, %v512, 0.0
    %519 = vadd.xlane.f32.xlu0 %v518
    %v520 = vpop.xlane.xlu0 %519
    %521 = vrot.lane.b32.xlu0 %v498, 96
    %v522 = vpop.permute.xlu0 %521
    %523 = vrot.lane.b32.xlu0 %v500, 96
    %v524 = vpop.permute.xlu0 %523
    %v527 = vsel %vm433, %v522, 0.0
    %528 = vadd.xlane.f32.xlu0 %v527
    %v529 = vpop.xlane.xlu0 %528
    %v530 = vsel %vm433, %v524, 0.0
    %531 = vadd.xlane.f32.xlu0 %v530
    %v532 = vpop.xlane.xlu0 %531
    %533 = vrot.lane.b32.xlu0 %v498, 80
    %v534 = vpop.permute.xlu0 %533
    %535 = vrot.lane.b32.xlu0 %v500, 80
    %v536 = vpop.permute.xlu0 %535
    %v539 = vsel %vm433, %v534, 0.0
    %540 = vadd.xlane.f32.xlu0 %v539
    %v541 = vpop.xlane.xlu0 %540
    %v542 = vsel %vm433, %v536, 0.0
    %543 = vadd.xlane.f32.xlu0 %v542
    %v544 = vpop.xlane.xlu0 %543
    %v545 = vsel %vm433, %v503, %v517
    %v546 = vsel %vm433, %v506, %v520
    %v547 = vsel %vm204, %v545, %v529
    %v548 = vsel %vm204, %v546, %v532
    %v549 = vsel %vm436, %v547, %v541
    %v550 = vsel %vm436, %v548, %v544
    %v551 = vrcp.pop %v549
    %v552 = vmul.f32 %v498, %v551
    %v553 = vrcp.pop %v550
    %v554 = vmul.f32 %v500, %v553
    %v556 = vsel %vm433, %v552, 0
    %v559 = vsel %vm433, %v554, 0
    %561 = vmatprep.subr.mxu0 0.0
    %562 = vmatpush1.msra.mxu0 %v194
    %563 = vmatprep.subr.mxu0 0.0
    %564 = vmatpush1.msra.mxu0 %v197
    %565 = vmatprep.subr.mxu0 0.0
    %566 = vmatpush1.msra.mxu0 0.0
    %567 = vmatprep.subr.mxu0 0.0
    %568 = vmatpush1.msra.mxu0 0.0
    %569 = vmatprep.subr.mxu0 0.0
    %570 = vmatpush1.msra.mxu0 0.0
    %571 = vmatprep.subr.mxu0 0.0
    %572 = vmatpush1.msra.mxu0 0.0
    %573 = vmatprep.subr.mxu0 0.0
    %574 = vmatpush1.msra.mxu0 0.0
    %575 = vmatprep.subr.mxu0 0.0
    %576 = vmatpush1.msra.mxu0 0.0
    %577 = vmatprep.subr.mxu0 0.0
    %578 = vmatpush1.msra.mxu0 0.0
    %579 = vmatprep.subr.mxu0 0.0
    %580 = vmatpush1.msra.mxu0 0.0
    %581 = vmatprep.subr.mxu0 0.0
    %582 = vmatpush1.msra.mxu0 0.0
    %583 = vmatprep.subr.mxu0 0.0
    %584 = vmatpush1.msra.mxu0 0.0
    %585 = vmatprep.subr.mxu0 0.0
    %586 = vmatpush1.msra.mxu0 0.0
    %587 = vmatprep.subr.mxu0 0.0
    %588 = vmatpush1.msra.mxu0 0.0
    %589 = vmatprep.subr.mxu0 0.0
    %590 = vmatpush1.msra.mxu0 0.0
    %591 = vmatprep.subr.mxu0 0.0
    %592 = vmatpush1.msra.mxu0 0.0
    %593 = vmatprep.subr.mxu0 0.0
    %594 = vmatpush1.msra.mxu0 0.0
    %595 = vmatprep.subr.mxu0 0.0
    %596 = vmatpush1.msra.mxu0 0.0
    %597 = vmatprep.subr.mxu0 0.0
    %598 = vmatpush1.msra.mxu0 0.0
    %599 = vmatprep.subr.mxu0 0.0
    %600 = vmatpush1.msra.mxu0 0.0
    %601 = vmatprep.subr.mxu0 0.0
    %602 = vmatpush1.msra.mxu0 0.0
    %603 = vmatprep.subr.mxu0 0.0
    %604 = vmatpush1.msra.mxu0 0.0
    %605 = vmatprep.subr.mxu0 0.0
    %606 = vmatpush1.msra.mxu0 0.0
    %607 = vmatprep.subr.mxu0 0.0
    %608 = vmatpush1.msra.mxu0 0.0
    %609 = vmatprep.subr.mxu0 0.0
    %610 = vmatpush1.msra.mxu0 0.0
    %611 = vmatprep.subr.mxu0 0.0
    %612 = vmatpush1.msra.mxu0 0.0
    %613 = vmatprep.subr.mxu0 0.0
    %614 = vmatpush1.msra.mxu0 0.0
    %615 = vmatprep.subr.mxu0 0.0
    %616 = vmatpush1.msra.mxu0 0.0
    %617 = vmatprep.subr.mxu0 0.0
    %618 = vmatpush1.msra.mxu0 0.0
    %619 = vmatprep.subr.mxu0 0.0
    %620 = vmatpush1.msra.mxu0 0.0
    %621 = vmatprep.subr.mxu0 0.0
    %622 = vmatpush1.msra.mxu0 0.0
    %623 = vmatprep.subr.mxu0 0.0
    %624 = vmatpush1.msra.mxu0 0.0
    %625 = vmatprep.mubr.f32.mxu0 0.0
    %626 = vmatmul.mubr.f32.gmra.mrb[0].mxu0 %v556
    %v627 = vpop.f32.mrb[0].mxu0
    %v628 = vadd.f32 0.0, %v627
    %v629 = vpop.f32.mrb[0].mxu0
    %630 = vmatprep.mubr.f32.mxu0 0.0
    %631 = vmatmul.mubr.f32.gmra.mrb[0].mxu0 %v559
    %v632 = vpop.f32.mrb[0].mxu0
    %v633 = vadd.f32 0.0, %v632
    %v634 = vpop.f32.mrb[0].mxu0
    %635 = vdwg.mxu0
    %636 = vrot.lane.b32.xlu0 %v552, 112
    %v637 = vpop.permute.xlu0 %636
    %638 = vrot.lane.b32.xlu0 %v554, 112
    %v639 = vpop.permute.xlu0 %638
    %642 = vrot.lane.b32.xlu0 %v194, 96
    %v643 = vpop.permute.xlu0 %642
    %644 = vrot.lane.b32.xlu0 %v197, 96
    %v645 = vpop.permute.xlu0 %644
    %v648 = vsel %vm433, %v637, 0
    %v650 = vsel %vm433, %v639, 0
    %652 = vmatprep.subr.mxu0 0.0
    %653 = vmatpush1.msra.mxu0 %v643
    %654 = vmatprep.subr.mxu0 0.0
    %655 = vmatpush1.msra.mxu0 %v645
    %656 = vmatprep.subr.mxu0 0.0
    %657 = vmatpush1.msra.mxu0 0.0
    %658 = vmatprep.subr.mxu0 0.0
    %659 = vmatpush1.msra.mxu0 0.0
    %660 = vmatprep.subr.mxu0 0.0
    %661 = vmatpush1.msra.mxu0 0.0
    %662 = vmatprep.subr.mxu0 0.0
    %663 = vmatpush1.msra.mxu0 0.0
    %664 = vmatprep.subr.mxu0 0.0
    %665 = vmatpush1.msra.mxu0 0.0
    %666 = vmatprep.subr.mxu0 0.0
    %667 = vmatpush1.msra.mxu0 0.0
    %668 = vmatprep.subr.mxu0 0.0
    %669 = vmatpush1.msra.mxu0 0.0
    %670 = vmatprep.subr.mxu0 0.0
    %671 = vmatpush1.msra.mxu0 0.0
    %672 = vmatprep.subr.mxu0 0.0
    %673 = vmatpush1.msra.mxu0 0.0
    %674 = vmatprep.subr.mxu0 0.0
    %675 = vmatpush1.msra.mxu0 0.0
    %676 = vmatprep.subr.mxu0 0.0
    %677 = vmatpush1.msra.mxu0 0.0
    %678 = vmatprep.subr.mxu0 0.0
    %679 = vmatpush1.msra.mxu0 0.0
    %680 = vmatprep.subr.mxu0 0.0
    %681 = vmatpush1.msra.mxu0 0.0
    %682 = vmatprep.subr.mxu0 0.0
    %683 = vmatpush1.msra.mxu0 0.0
    %684 = vmatprep.subr.mxu0 0.0
    %685 = vmatpush1.msra.mxu0 0.0
    %686 = vmatprep.subr.mxu0 0.0
    %687 = vmatpush1.msra.mxu0 0.0
    %688 = vmatprep.subr.mxu0 0.0
    %689 = vmatpush1.msra.mxu0 0.0
    %690 = vmatprep.subr.mxu0 0.0
    %691 = vmatpush1.msra.mxu0 0.0
    %692 = vmatprep.subr.mxu0 0.0
    %693 = vmatpush1.msra.mxu0 0.0
    %694 = vmatprep.subr.mxu0 0.0
    %695 = vmatpush1.msra.mxu0 0.0
    %696 = vmatprep.subr.mxu0 0.0
    %697 = vmatpush1.msra.mxu0 0.0
    %698 = vmatprep.subr.mxu0 0.0
    %699 = vmatpush1.msra.mxu0 0.0
    %700 = vmatprep.subr.mxu0 0.0
    %701 = vmatpush1.msra.mxu0 0.0
    %702 = vmatprep.subr.mxu0 0.0
    %703 = vmatpush1.msra.mxu0 0.0
    %704 = vmatprep.subr.mxu0 0.0
    %705 = vmatpush1.msra.mxu0 0.0
    %706 = vmatprep.subr.mxu0 0.0
    %707 = vmatpush1.msra.mxu0 0.0
    %708 = vmatprep.subr.mxu0 0.0
    %709 = vmatpush1.msra.mxu0 0.0
    %710 = vmatprep.subr.mxu0 0.0
    %711 = vmatpush1.msra.mxu0 0.0
    %712 = vmatprep.subr.mxu0 0.0
    %713 = vmatpush1.msra.mxu0 0.0
    %714 = vmatprep.subr.mxu0 0.0
    %715 = vmatpush1.msra.mxu0 0.0
    %716 = vmatprep.mubr.f32.mxu0 0.0
    %717 = vmatmul.mubr.f32.gmra.mrb[0].mxu0 %v648
    %v718 = vpop.f32.mrb[0].mxu0
    %v719 = vadd.f32 0.0, %v718
    %v720 = vpop.f32.mrb[0].mxu0
    %721 = vmatprep.mubr.f32.mxu0 0.0
    %722 = vmatmul.mubr.f32.gmra.mrb[0].mxu0 %v650
    %v723 = vpop.f32.mrb[0].mxu0
    %v724 = vadd.f32 0.0, %v723
    %v725 = vpop.f32.mrb[0].mxu0
    %726 = vdwg.mxu0
    %727 = vrot.lane.b32.xlu0 %v552, 96
    %v728 = vpop.permute.xlu0 %727
    %729 = vrot.lane.b32.xlu0 %v554, 96
    %v730 = vpop.permute.xlu0 %729
    %731 = vrot.lane.b32.xlu0 %v194, 64
    %v732 = vpop.permute.xlu0 %731
    %733 = vrot.lane.b32.xlu0 %v197, 64
    %v734 = vpop.permute.xlu0 %733
    %v737 = vsel %vm433, %v728, 0
    %v739 = vsel %vm433, %v730, 0
    %741 = vmatprep.subr.mxu0 0.0
    %742 = vmatpush1.msra.mxu0 %v732
    %743 = vmatprep.subr.mxu0 0.0
    %744 = vmatpush1.msra.mxu0 %v734
    %745 = vmatprep.subr.mxu0 0.0
    %746 = vmatpush1.msra.mxu0 0.0
    %747 = vmatprep.subr.mxu0 0.0
    %748 = vmatpush1.msra.mxu0 0.0
    %749 = vmatprep.subr.mxu0 0.0
    %750 = vmatpush1.msra.mxu0 0.0
    %751 = vmatprep.subr.mxu0 0.0
    %752 = vmatpush1.msra.mxu0 0.0
    %753 = vmatprep.subr.mxu0 0.0
    %754 = vmatpush1.msra.mxu0 0.0
    %755 = vmatprep.subr.mxu0 0.0
    %756 = vmatpush1.msra.mxu0 0.0
    %757 = vmatprep.subr.mxu0 0.0
    %758 = vmatpush1.msra.mxu0 0.0
    %759 = vmatprep.subr.mxu0 0.0
    %760 = vmatpush1.msra.mxu0 0.0
    %761 = vmatprep.subr.mxu0 0.0
    %762 = vmatpush1.msra.mxu0 0.0
    %763 = vmatprep.subr.mxu0 0.0
    %764 = vmatpush1.msra.mxu0 0.0
    %765 = vmatprep.subr.mxu0 0.0
    %766 = vmatpush1.msra.mxu0 0.0
    %767 = vmatprep.subr.mxu0 0.0
    %768 = vmatpush1.msra.mxu0 0.0
    %769 = vmatprep.subr.mxu0 0.0
    %770 = vmatpush1.msra.mxu0 0.0
    %771 = vmatprep.subr.mxu0 0.0
    %772 = vmatpush1.msra.mxu0 0.0
    %773 = vmatprep.subr.mxu0 0.0
    %774 = vmatpush1.msra.mxu0 0.0
    %775 = vmatprep.subr.mxu0 0.0
    %776 = vmatpush1.msra.mxu0 0.0
    %777 = vmatprep.subr.mxu0 0.0
    %778 = vmatpush1.msra.mxu0 0.0
    %779 = vmatprep.subr.mxu0 0.0
    %780 = vmatpush1.msra.mxu0 0.0
    %781 = vmatprep.subr.mxu0 0.0
    %782 = vmatpush1.msra.mxu0 0.0
    %783 = vmatprep.subr.mxu0 0.0
    %784 = vmatpush1.msra.mxu0 0.0
    %785 = vmatprep.subr.mxu0 0.0
    %786 = vmatpush1.msra.mxu0 0.0
    %787 = vmatprep.subr.mxu0 0.0
    %788 = vmatpush1.msra.mxu0 0.0
    %789 = vmatprep.subr.mxu0 0.0
    %790 = vmatpush1.msra.mxu0 0.0
    %791 = vmatprep.subr.mxu0 0.0
    %792 = vmatpush1.msra.mxu0 0.0
    %793 = vmatprep.subr.mxu0 0.0
    %794 = vmatpush1.msra.mxu0 0.0
    %795 = vmatprep.subr.mxu0 0.0
    %796 = vmatpush1.msra.mxu0 0.0
    %797 = vmatprep.subr.mxu0 0.0
    %798 = vmatpush1.msra.mxu0 0.0
    %799 = vmatprep.subr.mxu0 0.0
    %800 = vmatpush1.msra.mxu0 0.0
    %801 = vmatprep.subr.mxu0 0.0
    %802 = vmatpush1.msra.mxu0 0.0
    %803 = vmatprep.subr.mxu0 0.0
    %804 = vmatpush1.msra.mxu0 0.0
    %805 = vmatprep.mubr.f32.mxu0 0.0
    %806 = vmatmul.mubr.f32.gmra.mrb[0].mxu0 %v737
    %v807 = vpop.f32.mrb[0].mxu0
    %v808 = vadd.f32 0.0, %v807
    %v809 = vpop.f32.mrb[0].mxu0
    %810 = vmatprep.mubr.f32.mxu0 0.0
    %811 = vmatmul.mubr.f32.gmra.mrb[0].mxu0 %v739
    %v812 = vpop.f32.mrb[0].mxu0
    %v813 = vadd.f32 0.0, %v812
    %v814 = vpop.f32.mrb[0].mxu0
    %815 = vdwg.mxu0
    %816 = vrot.lane.b32.xlu0 %v552, 80
    %v817 = vpop.permute.xlu0 %816
    %818 = vrot.lane.b32.xlu0 %v554, 80
    %v819 = vpop.permute.xlu0 %818
    %820 = vrot.lane.b32.xlu0 %v194, 32
    %v821 = vpop.permute.xlu0 %820
    %822 = vrot.lane.b32.xlu0 %v197, 32
    %v823 = vpop.permute.xlu0 %822
    %v826 = vsel %vm433, %v817, 0
    %v828 = vsel %vm433, %v819, 0
    %830 = vmatprep.subr.mxu0 0.0
    %831 = vmatpush1.msra.mxu0 %v821
    %832 = vmatprep.subr.mxu0 0.0
    %833 = vmatpush1.msra.mxu0 %v823
    %834 = vmatprep.subr.mxu0 0.0
    %835 = vmatpush1.msra.mxu0 0.0
    %836 = vmatprep.subr.mxu0 0.0
    %837 = vmatpush1.msra.mxu0 0.0
    %838 = vmatprep.subr.mxu0 0.0
    %839 = vmatpush1.msra.mxu0 0.0
    %840 = vmatprep.subr.mxu0 0.0
    %841 = vmatpush1.msra.mxu0 0.0
    %842 = vmatprep.subr.mxu0 0.0
    %843 = vmatpush1.msra.mxu0 0.0
    %844 = vmatprep.subr.mxu0 0.0
    %845 = vmatpush1.msra.mxu0 0.0
    %846 = vmatprep.subr.mxu0 0.0
    %847 = vmatpush1.msra.mxu0 0.0
    %848 = vmatprep.subr.mxu0 0.0
    %849 = vmatpush1.msra.mxu0 0.0
    %850 = vmatprep.subr.mxu0 0.0
    %851 = vmatpush1.msra.mxu0 0.0
    %852 = vmatprep.subr.mxu0 0.0
    %853 = vmatpush1.msra.mxu0 0.0
    %854 = vmatprep.subr.mxu0 0.0
    %855 = vmatpush1.msra.mxu0 0.0
    %856 = vmatprep.subr.mxu0 0.0
    %857 = vmatpush1.msra.mxu0 0.0
    %858 = vmatprep.subr.mxu0 0.0
    %859 = vmatpush1.msra.mxu0 0.0
    %860 = vmatprep.subr.mxu0 0.0
    %861 = vmatpush1.msra.mxu0 0.0
    %862 = vmatprep.subr.mxu0 0.0
    %863 = vmatpush1.msra.mxu0 0.0
    %864 = vmatprep.subr.mxu0 0.0
    %865 = vmatpush1.msra.mxu0 0.0
    %866 = vmatprep.subr.mxu0 0.0
    %867 = vmatpush1.msra.mxu0 0.0
    %868 = vmatprep.subr.mxu0 0.0
    %869 = vmatpush1.msra.mxu0 0.0
    %870 = vmatprep.subr.mxu0 0.0
    %871 = vmatpush1.msra.mxu0 0.0
    %872 = vmatprep.subr.mxu0 0.0
    %873 = vmatpush1.msra.mxu0 0.0
    %874 = vmatprep.subr.mxu0 0.0
    %875 = vmatpush1.msra.mxu0 0.0
    %876 = vmatprep.subr.mxu0 0.0
    %877 = vmatpush1.msra.mxu0 0.0
    %878 = vmatprep.subr.mxu0 0.0
    %879 = vmatpush1.msra.mxu0 0.0
    %880 = vmatprep.subr.mxu0 0.0
    %881 = vmatpush1.msra.mxu0 0.0
    %882 = vmatprep.subr.mxu0 0.0
    %883 = vmatpush1.msra.mxu0 0.0
    %884 = vmatprep.subr.mxu0 0.0
    %885 = vmatpush1.msra.mxu0 0.0
    %886 = vmatprep.subr.mxu0 0.0
    %887 = vmatpush1.msra.mxu0 0.0
    %888 = vmatprep.subr.mxu0 0.0
    %889 = vmatpush1.msra.mxu0 0.0
    %890 = vmatprep.subr.mxu0 0.0
    %891 = vmatpush1.msra.mxu0 0.0
    %892 = vmatprep.subr.mxu0 0.0
    %893 = vmatpush1.msra.mxu0 0.0
    %894 = vmatprep.mubr.f32.mxu0 0.0
    %895 = vmatmul.mubr.f32.gmra.mrb[0].mxu0 %v826
    %v896 = vpop.f32.mrb[0].mxu0
    %v897 = vadd.f32 0.0, %v896
    %v898 = vpop.f32.mrb[0].mxu0
    %899 = vmatprep.mubr.f32.mxu0 0.0
    %900 = vmatmul.mubr.f32.gmra.mrb[0].mxu0 %v828
    %v901 = vpop.f32.mrb[0].mxu0
    %v902 = vadd.f32 0.0, %v901
    %v903 = vpop.f32.mrb[0].mxu0
    %904 = vdwg.mxu0
    %907 = vrot.lane.b32.xlu0 %v719, 32
    %v908 = vpop.permute.xlu0 %907
    %909 = vrot.lane.b32.xlu0 %v724, 32
    %v910 = vpop.permute.xlu0 %909
    %915 = vrot.lane.b32.xlu0 %v808, 64
    %v916 = vpop.permute.xlu0 %915
    %917 = vrot.lane.b32.xlu0 %v813, 64
    %v918 = vpop.permute.xlu0 %917
    %923 = vrot.lane.b32.xlu0 %v897, 96
    %v924 = vpop.permute.xlu0 %923
    %925 = vrot.lane.b32.xlu0 %v902, 96
    %v926 = vpop.permute.xlu0 %925
    %v929 = vsel %vm204, %v628, %v908
    %v930 = vsel %vm204, %v633, %v910
    %vm931 = vcmask 523264
    %v932 = vsel %vm931, %v929, %v916
    %v933 = vsel %vm931, %v930, %v918
    %vm934 = vcmask 785408
    %v935 = vsel %vm934, %v932, %v924
    %v936 = vsel %vm934, %v933, %v926
    %v937 = vmul.f32 %v935, %v147
    %v938 = vmul.f32 %v936, %v147
    %v939 = vadd.f32 %v937, %v148
    %v940 = vadd.f32 %v938, %v148
    %v941 = vmax.f32 %v939, 0.0
    %v942 = vmax.f32 %v940, 0.0
    %v943 = vld [vmem:[#allocation6 + $0x5] ss:$0 sm:$0xff]
    %v944 = vld [vmem:[#allocation6 + $0x6] ss:$0 sm:$0xff]
    %v945 = vld [vmem:[#allocation6 + $0x7] ss:$0 sm:$0xff]
    %v946 = vld [vmem:[#allocation6 + $0x10] ss:$0 sm:$0xff]
    %v947 = vld [vmem:[#allocation6 + $0x11] ss:$0 sm:$0xff]
    %v948 = vpack.c.bf16 %v942, %v941
    %v949 = vld [vmem:[%s5] sm:$0xf]
    %v950 = vld [vmem:[%s5 + $0x4] sm:$0xf]
    %v951 = vld [vmem:[%s5 + $0x8] sm:$0xf]
    %v952 = vld [vmem:[%s5 + $0xc] sm:$0xf]
    %v953 = vld [vmem:[%s5 + $0x10] sm:$0xf]
    %v954 = vld [vmem:[%s5 + $0x14] sm:$0xf]
    %v955 = vld [vmem:[%s5 + $0x18] sm:$0xf]
    %v956 = vld [vmem:[%s5 + $0x1c] sm:$0xf]
    %v957 = vld [vmem:[%s5 + $0x20] sm:$0xf]
    %v958 = vld [vmem:[%s5 + $0x24] sm:$0xf]
    %v959 = vld [vmem:[%s5 + $0x28] sm:$0xf]
    %v960 = vld [vmem:[%s5 + $0x2c] sm:$0xf]
    %v961 = vld [vmem:[%s5 + $0x30] sm:$0xf]
    %v962 = vld [vmem:[%s5 + $0x34] sm:$0xf]
    %v963 = vld [vmem:[%s5 + $0x38] sm:$0xf]
    %v964 = vld [vmem:[%s5 + $0x3c] sm:$0xf]
    %v981 = vunpack.c.l.b16 %v949
    %v982 = vunpack.c.l.b16 %v950
    %v983 = vunpack.c.l.b16 %v951
    %v984 = vunpack.c.l.b16 %v952
    %v985 = vunpack.c.l.b16 %v953
    %v986 = vunpack.c.l.b16 %v954
    %v987 = vunpack.c.l.b16 %v955
    %v988 = vunpack.c.l.b16 %v956
    %v989 = vunpack.c.l.b16 %v957
    %v990 = vunpack.c.l.b16 %v958
    %v991 = vunpack.c.l.b16 %v959
    %v992 = vunpack.c.l.b16 %v960
    %v993 = vunpack.c.l.b16 %v961
    %v994 = vunpack.c.l.b16 %v962
    %v995 = vunpack.c.l.b16 %v963
    %v996 = vunpack.c.l.b16 %v964
    %v997 = vpack.c.b16 %v982, %v981
    %v998 = vpack.c.b16 %v984, %v983
    %v999 = vpack.c.b16 %v986, %v985
    %v1000 = vpack.c.b16 %v988, %v987
    %v1001 = vpack.c.b16 %v990, %v989
    %v1002 = vpack.c.b16 %v992, %v991
    %v1003 = vpack.c.b16 %v994, %v993
    %v1004 = vpack.c.b16 %v996, %v995
    %1013 = vmatprep.subr.bf16.mxu0 0
    %1014 = vmatpush1.bf16.msra.mxu0 %v997
    %1015 = vmatprep.subr.bf16.mxu0 0
    %1016 = vmatpush1.bf16.msra.mxu0 %v998
    %1017 = vmatprep.subr.bf16.mxu0 0
    %1018 = vmatpush1.bf16.msra.mxu0 %v999
    %1019 = vmatprep.subr.bf16.mxu0 0
    %1020 = vmatpush1.bf16.msra.mxu0 %v1000
    %1021 = vmatprep.subr.bf16.mxu0 0
    %1022 = vmatpush1.bf16.msra.mxu0 %v1001
    %1023 = vmatprep.subr.bf16.mxu0 0
    %1024 = vmatpush1.bf16.msra.mxu0 %v1002
    %1025 = vmatprep.subr.bf16.mxu0 0
    %1026 = vmatpush1.bf16.msra.mxu0 %v1003
    %1027 = vmatprep.subr.bf16.mxu0 0
    %1028 = vmatpush1.bf16.msra.mxu0 %v1004
    %1029 = vmatprep.subr.bf16.mxu0 0
    %1030 = vmatpush1.bf16.msra.mxu0 0
    %1031 = vmatprep.subr.bf16.mxu0 0
    %1032 = vmatpush1.bf16.msra.mxu0 0
    %1033 = vmatprep.subr.bf16.mxu0 0
    %1034 = vmatpush1.bf16.msra.mxu0 0
    %1035 = vmatprep.subr.bf16.mxu0 0
    %1036 = vmatpush1.bf16.msra.mxu0 0
    %1037 = vmatprep.subr.bf16.mxu0 0
    %1038 = vmatpush1.bf16.msra.mxu0 0
    %1039 = vmatprep.subr.bf16.mxu0 0
    %1040 = vmatpush1.bf16.msra.mxu0 0
    %1041 = vmatprep.subr.bf16.mxu0 0
    %1042 = vmatpush1.bf16.msra.mxu0 0
    %1043 = vmatprep.subr.bf16.mxu0 0
    %1044 = vmatpush1.bf16.msra.mxu0 0
    %1045 = vmatprep.mubr.bf16.mxu0 0
    %1046 = vmatmul.mubr.bf16.gmra.mrb[0].mxu0 %v948
    %v1047 = vpop.f32.mrb[0].mxu0
    %v1048 = vadd.f32 0.0, %v1047
    %v1049 = vpop.f32.mrb[0].mxu0
    %v1050 = vpop.f32.mrb[0].mxu0
    %v1051 = vadd.f32 0.0, %v1050
    %v1052 = vpop.f32.mrb[0].mxu0
    %1053 = vdwg.mxu0
    %v1054 = vmul.f32 %v1048, %v943
    %v1055 = vmul.f32 %v1051, %v943
    %v1056 = vmul.f32 %v1048, %v944
    %v1057 = vmul.f32 %v1051, %v944
    %v1058 = vsel %vm204, %v1054, 0.0
    %1059 = vadd.xlane.f32.xlu0 %v1058
    %v1060 = vpop.xlane.xlu0 %1059
    %v1061 = vsel %vm204, %v1055, 0.0
    %1062 = vadd.xlane.f32.xlu0 %v1061
    %v1063 = vpop.xlane.xlu0 %1062
    %1064 = vxpose.xlu0.b32.start [1/16] %v1060, 128
    %1065 = vxpose.xlu0.b32.cont [2/16] %v1063, 128
    %1066 = vxpose.xlu0.b32.cont [3/16] 0.0, 128
    %1067 = vxpose.xlu0.b32.cont [4/16] 0.0, 128
    %1068 = vxpose.xlu0.b32.cont [5/16] 0.0, 128
    %1069 = vxpose.xlu0.b32.cont [6/16] 0.0, 128
    %1070 = vxpose.xlu0.b32.cont [7/16] 0.0, 128
    %1071 = vxpose.xlu0.b32.cont [8/16] 0.0, 128
    %1072 = vxpose.xlu0.b32.cont [9/16] 0.0, 128
    %1073 = vxpose.xlu0.b32.cont [10/16] 0.0, 128
    %1074 = vxpose.xlu0.b32.cont [11/16] 0.0, 128
    %1075 = vxpose.xlu0.b32.cont [12/16] 0.0, 128
    %1076 = vxpose.xlu0.b32.cont [13/16] 0.0, 128
    %1077 = vxpose.xlu0.b32.cont [14/16] 0.0, 128
    %1078 = vxpose.xlu0.b32.cont [15/16] 0.0, 128
    %1079 = vxpose.xlu0.b32.end [16/16] 0.0, 128
    %v1080 = vpop.trf.xlu0
    %v1081 = vpop.trf.xlu0
    %v1082 = vpop.trf.xlu0
    %v1083 = vpop.trf.xlu0
    %v1084 = vpop.trf.xlu0
    %v1085 = vpop.trf.xlu0
    %v1086 = vpop.trf.xlu0
    %v1087 = vpop.trf.xlu0
    %v1088 = vpop.trf.xlu0
    %v1089 = vpop.trf.xlu0
    %v1090 = vpop.trf.xlu0
    %v1091 = vpop.trf.xlu0
    %v1092 = vpop.trf.xlu0
    %v1093 = vpop.trf.xlu0
    %v1094 = vpop.trf.xlu0
    %v1095 = vpop.trf.xlu0
    %v1096 = vsel %vm204, %v1056, 0.0
    %1097 = vadd.xlane.f32.xlu0 %v1096
    %v1098 = vpop.xlane.xlu0 %1097
    %v1099 = vsel %vm204, %v1057, 0.0
    %1100 = vadd.xlane.f32.xlu0 %v1099
    %v1101 = vpop.xlane.xlu0 %1100
    %1104 = vrot.lane.b32.xlu0 %v1054, 96
    %v1105 = vpop.permute.xlu0 %1104
    %1106 = vrot.lane.b32.xlu0 %v1055, 96
    %v1107 = vpop.permute.xlu0 %1106
    %v1110 = vsel %vm204, %v1105, 0.0
    %1111 = vadd.xlane.f32.xlu0 %v1110
    %v1112 = vpop.xlane.xlu0 %1111
    %v1113 = vsel %vm204, %v1107, 0.0
    %1114 = vadd.xlane.f32.xlu0 %v1113
    %v1115 = vpop.xlane.xlu0 %1114
    %1116 = vxpose.xlu0.b32.start [1/16] %v1112, 128
    %1117 = vxpose.xlu0.b32.cont [2/16] %v1115, 128
    %1118 = vxpose.xlu0.b32.cont [3/16] 0.0, 128
    %1119 = vxpose.xlu0.b32.cont [4/16] 0.0, 128
    %1120 = vxpose.xlu0.b32.cont [5/16] 0.0, 128
    %1121 = vxpose.xlu0.b32.cont [6/16] 0.0, 128
    %1122 = vxpose.xlu0.b32.cont [7/16] 0.0, 128
    %1123 = vxpose.xlu0.b32.cont [8/16] 0.0, 128
    %1124 = vxpose.xlu0.b32.cont [9/16] 0.0, 128
    %1125 = vxpose.xlu0.b32.cont [10/16] 0.0, 128
    %1126 = vxpose.xlu0.b32.cont [11/16] 0.0, 128
    %1127 = vxpose.xlu0.b32.cont [12/16] 0.0, 128
    %1128 = vxpose.xlu0.b32.cont [13/16] 0.0, 128
    %1129 = vxpose.xlu0.b32.cont [14/16] 0.0, 128
    %1130 = vxpose.xlu0.b32.cont [15/16] 0.0, 128
    %1131 = vxpose.xlu0.b32.end [16/16] 0.0, 128
    %v1132 = vpop.trf.xlu0
    %v1133 = vpop.trf.xlu0
    %v1134 = vpop.trf.xlu0
    %v1135 = vpop.trf.xlu0
    %v1136 = vpop.trf.xlu0
    %v1137 = vpop.trf.xlu0
    %v1138 = vpop.trf.xlu0
    %v1139 = vpop.trf.xlu0
    %v1140 = vpop.trf.xlu0
    %v1141 = vpop.trf.xlu0
    %v1142 = vpop.trf.xlu0
    %v1143 = vpop.trf.xlu0
    %v1144 = vpop.trf.xlu0
    %v1145 = vpop.trf.xlu0
    %v1146 = vpop.trf.xlu0
    %v1147 = vpop.trf.xlu0
    %1150 = vrot.lane.b32.xlu0 %v1056, 96
    %v1151 = vpop.permute.xlu0 %1150
    %1152 = vrot.lane.b32.xlu0 %v1057, 96
    %v1153 = vpop.permute.xlu0 %1152
    %v1156 = vsel %vm204, %v1151, 0.0
    %1157 = vadd.xlane.f32.xlu0 %v1156
    %v1158 = vpop.xlane.xlu0 %1157
    %v1159 = vsel %vm204, %v1153, 0.0
    %1160 = vadd.xlane.f32.xlu0 %v1159
    %v1161 = vpop.xlane.xlu0 %1160
    %1162 = vrot.lane.b32.xlu0 %v1054, 64
    %v1163 = vpop.permute.xlu0 %1162
    %1164 = vrot.lane.b32.xlu0 %v1055, 64
    %v1165 = vpop.permute.xlu0 %1164
    %v1168 = vsel %vm204, %v1163, 0.0
    %1169 = vadd.xlane.f32.xlu0 %v1168
    %v1170 = vpop.xlane.xlu0 %1169
    %v1171 = vsel %vm204, %v1165, 0.0
    %1172 = vadd.xlane.f32.xlu0 %v1171
    %v1173 = vpop.xlane.xlu0 %1172
    %1174 = vxpose.xlu0.b32.start [1/16] %v1170, 128
    %1175 = vxpose.xlu0.b32.cont [2/16] %v1173, 128
    %1176 = vxpose.xlu0.b32.cont [3/16] 0.0, 128
    %1177 = vxpose.xlu0.b32.cont [4/16] 0.0, 128
    %1178 = vxpose.xlu0.b32.cont [5/16] 0.0, 128
    %1179 = vxpose.xlu0.b32.cont [6/16] 0.0, 128
    %1180 = vxpose.xlu0.b32.cont [7/16] 0.0, 128
    %1181 = vxpose.xlu0.b32.cont [8/16] 0.0, 128
    %1182 = vxpose.xlu0.b32.cont [9/16] 0.0, 128
    %1183 = vxpose.xlu0.b32.cont [10/16] 0.0, 128
    %1184 = vxpose.xlu0.b32.cont [11/16] 0.0, 128
    %1185 = vxpose.xlu0.b32.cont [12/16] 0.0, 128
    %1186 = vxpose.xlu0.b32.cont [13/16] 0.0, 128
    %1187 = vxpose.xlu0.b32.cont [14/16] 0.0, 128
    %1188 = vxpose.xlu0.b32.cont [15/16] 0.0, 128
    %1189 = vxpose.xlu0.b32.end [16/16] 0.0, 128
    %v1190 = vpop.trf.xlu0
    %v1191 = vpop.trf.xlu0
    %v1192 = vpop.trf.xlu0
    %v1193 = vpop.trf.xlu0
    %v1194 = vpop.trf.xlu0
    %v1195 = vpop.trf.xlu0
    %v1196 = vpop.trf.xlu0
    %v1197 = vpop.trf.xlu0
    %v1198 = vpop.trf.xlu0
    %v1199 = vpop.trf.xlu0
    %v1200 = vpop.trf.xlu0
    %v1201 = vpop.trf.xlu0
    %v1202 = vpop.trf.xlu0
    %v1203 = vpop.trf.xlu0
    %v1204 = vpop.trf.xlu0
    %v1205 = vpop.trf.xlu0
    %1206 = vrot.lane.b32.xlu0 %v1056, 64
    %v1207 = vpop.permute.xlu0 %1206
    %1208 = vrot.lane.b32.xlu0 %v1057, 64
    %v1209 = vpop.permute.xlu0 %1208
    %v1212 = vsel %vm204, %v1207, 0.0
    %1213 = vadd.xlane.f32.xlu0 %v1212
    %v1214 = vpop.xlane.xlu0 %1213
    %v1215 = vsel %vm204, %v1209, 0.0
    %1216 = vadd.xlane.f32.xlu0 %v1215
    %v1217 = vpop.xlane.xlu0 %1216
    %1218 = vrot.lane.b32.xlu0 %v1054, 32
    %v1219 = vpop.permute.xlu0 %1218
    %1220 = vrot.lane.b32.xlu0 %v1055, 32
    %v1221 = vpop.permute.xlu0 %1220
    %v1224 = vsel %vm204, %v1219, 0.0
    %1225 = vadd.xlane.f32.xlu0 %v1224
    %v1226 = vpop.xlane.xlu0 %1225
    %v1227 = vsel %vm204, %v1221, 0.0
    %1228 = vadd.xlane.f32.xlu0 %v1227
    %v1229 = vpop.xlane.xlu0 %1228
    %1230 = vxpose.xlu0.b32.start [1/16] %v1226, 128
    %1231 = vxpose.xlu0.b32.cont [2/16] %v1229, 128
    %1232 = vxpose.xlu0.b32.cont [3/16] 0.0, 128
    %1233 = vxpose.xlu0.b32.cont [4/16] 0.0, 128
    %1234 = vxpose.xlu0.b32.cont [5/16] 0.0, 128
    %1235 = vxpose.xlu0.b32.cont [6/16] 0.0, 128
    %1236 = vxpose.xlu0.b32.cont [7/16] 0.0, 128
    %1237 = vxpose.xlu0.b32.cont [8/16] 0.0, 128
    %1238 = vxpose.xlu0.b32.cont [9/16] 0.0, 128
    %1239 = vxpose.xlu0.b32.cont [10/16] 0.0, 128
    %1240 = vxpose.xlu0.b32.cont [11/16] 0.0, 128
    %1241 = vxpose.xlu0.b32.cont [12/16] 0.0, 128
    %1242 = vxpose.xlu0.b32.cont [13/16] 0.0, 128
    %1243 = vxpose.xlu0.b32.cont [14/16] 0.0, 128
    %1244 = vxpose.xlu0.b32.cont [15/16] 0.0, 128
    %1245 = vxpose.xlu0.b32.end [16/16] 0.0, 128
    %v1246 = vpop.trf.xlu0
    %v1247 = vpop.trf.xlu0
    %v1248 = vpop.trf.xlu0
    %v1249 = vpop.trf.xlu0
    %v1250 = vpop.trf.xlu0
    %v1251 = vpop.trf.xlu0
    %v1252 = vpop.trf.xlu0
    %v1253 = vpop.trf.xlu0
    %v1254 = vpop.trf.xlu0
    %v1255 = vpop.trf.xlu0
    %v1256 = vpop.trf.xlu0
    %v1257 = vpop.trf.xlu0
    %v1258 = vpop.trf.xlu0
    %v1259 = vpop.trf.xlu0
    %v1260 = vpop.trf.xlu0
    %v1261 = vpop.trf.xlu0
    %1262 = vrot.lane.b32.xlu0 %v1056, 32
    %v1263 = vpop.permute.xlu0 %1262
    %1264 = vrot.lane.b32.xlu0 %v1057, 32
    %v1265 = vpop.permute.xlu0 %1264
    %v1268 = vsel %vm204, %v1263, 0.0
    %1269 = vadd.xlane.f32.xlu0 %v1268
    %v1270 = vpop.xlane.xlu0 %1269
    %v1271 = vsel %vm204, %v1265, 0.0
    %1272 = vadd.xlane.f32.xlu0 %v1271
    %v1273 = vpop.xlane.xlu0 %1272
    %1275 = vrot.lane.b32.xlu0 %v1132, 16
    %v1276 = vpop.permute.xlu0 %1275
    %1279 = vrot.lane.b32.xlu0 %v1190, 32
    %v1280 = vpop.permute.xlu0 %1279
    %1283 = vrot.lane.b32.xlu0 %v1246, 48
    %v1284 = vpop.permute.xlu0 %1283
    %v1286 = vsel %vm433, %v1080, %v1276
    %v1287 = vsel %vm204, %v1286, %v1280
    %v1288 = vsel %vm436, %v1287, %v1284
    %v1289 = vsel %vm433, %v1098, %v1158
    %v1290 = vsel %vm433, %v1101, %v1161
    %v1291 = vsel %vm204, %v1289, %v1214
    %v1292 = vsel %vm204, %v1290, %v1217
    %v1293 = vsel %vm436, %v1291, %v1270
    %v1294 = vsel %vm436, %v1292, %v1273
    %v1295 = vlaneseq
    %v1296 = vshrl.u32 %v1295, 7
    %v1297 = vsub.s32 0, %v1296
    %v1298 = vrot.slane %v1288, %v1297
    %v1299 = vadd.f32 %v1293, %v1298
    %v1300 = vadd.f32 %v1294, %v1298
    %v1301 = vmul.f32 %v140, %v945
    %v1302 = vmul.f32 %v141, %v945
    %v1303 = vadd.f32 %v1299, %v1301
    %v1304 = vadd.f32 %v1300, %v1302
    %vm1305 = vcmp.gt.f32.partialorder %v1303, 0.0
    %vm1306 = vcmp.gt.f32.partialorder %v1304, 0.0
    %v1307 = vmul.f32 %v1303, 0.2
    %v1308 = vmul.f32 %v1304, 0.2
    %v1309 = vsel %vm1305, %v1303, %v1307
    %v1310 = vsel %vm1306, %v1304, %v1308
    %v1311 = vadd.f32 %v1309, %v138
    %v1312 = vadd.f32 %v1310, %v139
    %v1313 = vsel %vm433, %v1311, -inf
    %1314 = vmax.xlane.f32.xlu0 %v1313
    %v1315 = vpop.xlane.xlu0 %1314
    %v1316 = vsel %vm433, %v1312, -inf
    %1317 = vmax.xlane.f32.xlu0 %v1316
    %v1318 = vpop.xlane.xlu0 %1317
    %v1319 = vsel %vm468, %v1311, -inf
    %1320 = vmax.xlane.f32.xlu0 %v1319
    %v1321 = vpop.xlane.xlu0 %1320
    %v1322 = vsel %vm468, %v1312, -inf
    %1323 = vmax.xlane.f32.xlu0 %v1322
    %v1324 = vpop.xlane.xlu0 %1323
    %v1325 = vsel %vm475, %v1311, -inf
    %1326 = vmax.xlane.f32.xlu0 %v1325
    %v1327 = vpop.xlane.xlu0 %1326
    %v1328 = vsel %vm475, %v1312, -inf
    %1329 = vmax.xlane.f32.xlu0 %v1328
    %v1330 = vpop.xlane.xlu0 %1329
    %v1331 = vsel %vm482, %v1311, -inf
    %1332 = vmax.xlane.f32.xlu0 %v1331
    %v1333 = vpop.xlane.xlu0 %1332
    %v1334 = vsel %vm482, %v1312, -inf
    %1335 = vmax.xlane.f32.xlu0 %v1334
    %v1336 = vpop.xlane.xlu0 %1335
    %v1337 = vsel %vm433, %v1315, %v1321
    %v1338 = vsel %vm433, %v1318, %v1324
    %v1339 = vsel %vm204, %v1337, %v1327
    %v1340 = vsel %vm204, %v1338, %v1330
    %v1341 = vsel %vm436, %v1339, %v1333
    %v1342 = vsel %vm436, %v1340, %v1336
    %v1343 = vsub.f32 %v1311, %v1341
    %v1344 = vsub.f32 %v1312, %v1342
    %v1345 = vmul.f32 %v1343, 1.442695
    %v1346 = vpow.pop %v1345
    %v1347 = vmul.f32 %v1344, 1.442695
    %v1348 = vpow.pop %v1347
    %v1349 = vsel %vm433, %v1346, 0.0
    %1350 = vadd.xlane.f32.xlu0 %v1349
    %v1351 = vpop.xlane.xlu0 %1350
    %v1352 = vsel %vm433, %v1348, 0.0
    %1353 = vadd.xlane.f32.xlu0 %v1352
    %v1354 = vpop.xlane.xlu0 %1353
    %1357 = vrot.lane.b32.xlu0 %v1346, 112
    %v1358 = vpop.permute.xlu0 %1357
    %1359 = vrot.lane.b32.xlu0 %v1348, 112
    %v1360 = vpop.permute.xlu0 %1359
    %v1363 = vsel %vm433, %v1358, 0.0
    %1364 = vadd.xlane.f32.xlu0 %v1363
    %v1365 = vpop.xlane.xlu0 %1364
    %v1366 = vsel %vm433, %v1360, 0.0
    %1367 = vadd.xlane.f32.xlu0 %v1366
    %v1368 = vpop.xlane.xlu0 %1367
    %1369 = vrot.lane.b32.xlu0 %v1346, 96
    %v1370 = vpop.permute.xlu0 %1369
    %1371 = vrot.lane.b32.xlu0 %v1348, 96
    %v1372 = vpop.permute.xlu0 %1371
    %v1375 = vsel %vm433, %v1370, 0.0
    %1376 = vadd.xlane.f32.xlu0 %v1375
    %v1377 = vpop.xlane.xlu0 %1376
    %v1378 = vsel %vm433, %v1372, 0.0
    %1379 = vadd.xlane.f32.xlu0 %v1378
    %v1380 = vpop.xlane.xlu0 %1379
    %1381 = vrot.lane.b32.xlu0 %v1346, 80
    %v1382 = vpop.permute.xlu0 %1381
    %1383 = vrot.lane.b32.xlu0 %v1348, 80
    %v1384 = vpop.permute.xlu0 %1383
    %v1387 = vsel %vm433, %v1382, 0.0
    %1388 = vadd.xlane.f32.xlu0 %v1387
    %v1389 = vpop.xlane.xlu0 %1388
    %v1390 = vsel %vm433, %v1384, 0.0
    %1391 = vadd.xlane.f32.xlu0 %v1390
    %v1392 = vpop.xlane.xlu0 %1391
    %v1393 = vsel %vm433, %v1351, %v1365
    %v1394 = vsel %vm433, %v1354, %v1368
    %v1395 = vsel %vm204, %v1393, %v1377
    %v1396 = vsel %vm204, %v1394, %v1380
    %v1397 = vsel %vm436, %v1395, %v1389
    %v1398 = vsel %vm436, %v1396, %v1392
    %v1399 = vrcp.pop %v1397
    %v1400 = vmul.f32 %v1346, %v1399
    %v1401 = vrcp.pop %v1398
    %v1402 = vmul.f32 %v1348, %v1401
    %v1404 = vsel %vm433, %v1400, 0
    %v1407 = vsel %vm433, %v1402, 0
    %1409 = vmatprep.subr.mxu0 0.0
    %1410 = vmatpush1.msra.mxu0 %v1048
    %1411 = vmatprep.subr.mxu0 0.0
    %1412 = vmatpush1.msra.mxu0 %v1051
    %1413 = vmatprep.subr.mxu0 0.0
    %1414 = vmatpush1.msra.mxu0 0.0
    %1415 = vmatprep.subr.mxu0 0.0
    %1416 = vmatpush1.msra.mxu0 0.0
    %1417 = vmatprep.subr.mxu0 0.0
    %1418 = vmatpush1.msra.mxu0 0.0
    %1419 = vmatprep.subr.mxu0 0.0
    %1420 = vmatpush1.msra.mxu0 0.0
    %1421 = vmatprep.subr.mxu0 0.0
    %1422 = vmatpush1.msra.mxu0 0.0
    %1423 = vmatprep.subr.mxu0 0.0
    %1424 = vmatpush1.msra.mxu0 0.0
    %1425 = vmatprep.subr.mxu0 0.0
    %1426 = vmatpush1.msra.mxu0 0.0
    %1427 = vmatprep.subr.mxu0 0.0
    %1428 = vmatpush1.msra.mxu0 0.0
    %1429 = vmatprep.subr.mxu0 0.0
    %1430 = vmatpush1.msra.mxu0 0.0
    %1431 = vmatprep.subr.mxu0 0.0
    %1432 = vmatpush1.msra.mxu0 0.0
    %1433 = vmatprep.subr.mxu0 0.0
    %1434 = vmatpush1.msra.mxu0 0.0
    %1435 = vmatprep.subr.mxu0 0.0
    %1436 = vmatpush1.msra.mxu0 0.0
    %1437 = vmatprep.subr.mxu0 0.0
    %1438 = vmatpush1.msra.mxu0 0.0
    %1439 = vmatprep.subr.mxu0 0.0
    %1440 = vmatpush1.msra.mxu0 0.0
    %1441 = vmatprep.subr.mxu0 0.0
    %1442 = vmatpush1.msra.mxu0 0.0
    %1443 = vmatprep.subr.mxu0 0.0
    %1444 = vmatpush1.msra.mxu0 0.0
    %1445 = vmatprep.subr.mxu0 0.0
    %1446 = vmatpush1.msra.mxu0 0.0
    %1447 = vmatprep.subr.mxu0 0.0
    %1448 = vmatpush1.msra.mxu0 0.0
    %1449 = vmatprep.subr.mxu0 0.0
    %1450 = vmatpush1.msra.mxu0 0.0
    %1451 = vmatprep.subr.mxu0 0.0
    %1452 = vmatpush1.msra.mxu0 0.0
    %1453 = vmatprep.subr.mxu0 0.0
    %1454 = vmatpush1.msra.mxu0 0.0
    %1455 = vmatprep.subr.mxu0 0.0
    %1456 = vmatpush1.msra.mxu0 0.0
    %1457 = vmatprep.subr.mxu0 0.0
    %1458 = vmatpush1.msra.mxu0 0.0
    %1459 = vmatprep.subr.mxu0 0.0
    %1460 = vmatpush1.msra.mxu0 0.0
    %1461 = vmatprep.subr.mxu0 0.0
    %1462 = vmatpush1.msra.mxu0 0.0
    %1463 = vmatprep.subr.mxu0 0.0
    %1464 = vmatpush1.msra.mxu0 0.0
    %1465 = vmatprep.subr.mxu0 0.0
    %1466 = vmatpush1.msra.mxu0 0.0
    %1467 = vmatprep.subr.mxu0 0.0
    %1468 = vmatpush1.msra.mxu0 0.0
    %1469 = vmatprep.subr.mxu0 0.0
    %1470 = vmatpush1.msra.mxu0 0.0
    %1471 = vmatprep.subr.mxu0 0.0
    %1472 = vmatpush1.msra.mxu0 0.0
    %1473 = vmatprep.mubr.f32.mxu0 0.0
    %1474 = vmatmul.mubr.f32.gmra.mrb[0].mxu0 %v1404
    %v1475 = vpop.f32.mrb[0].mxu0
    %v1476 = vadd.f32 0.0, %v1475
    %v1477 = vpop.f32.mrb[0].mxu0
    %1478 = vmatprep.mubr.f32.mxu0 0.0
    %1479 = vmatmul.mubr.f32.gmra.mrb[0].mxu0 %v1407
    %v1480 = vpop.f32.mrb[0].mxu0
    %v1481 = vadd.f32 0.0, %v1480
    %v1482 = vpop.f32.mrb[0].mxu0
    %1483 = vdwg.mxu0
    %1484 = vrot.lane.b32.xlu0 %v1400, 112
    %v1485 = vpop.permute.xlu0 %1484
    %1486 = vrot.lane.b32.xlu0 %v1402, 112
    %v1487 = vpop.permute.xlu0 %1486
    %1490 = vrot.lane.b32.xlu0 %v1048, 96
    %v1491 = vpop.permute.xlu0 %1490
    %1492 = vrot.lane.b32.xlu0 %v1051, 96
    %v1493 = vpop.permute.xlu0 %1492
    %v1496 = vsel %vm433, %v1485, 0
    %v1498 = vsel %vm433, %v1487, 0
    %1500 = vmatprep.subr.mxu0 0.0
    %1501 = vmatpush1.msra.mxu0 %v1491
    %1502 = vmatprep.subr.mxu0 0.0
    %1503 = vmatpush1.msra.mxu0 %v1493
    %1504 = vmatprep.subr.mxu0 0.0
    %1505 = vmatpush1.msra.mxu0 0.0
    %1506 = vmatprep.subr.mxu0 0.0
    %1507 = vmatpush1.msra.mxu0 0.0
    %1508 = vmatprep.subr.mxu0 0.0
    %1509 = vmatpush1.msra.mxu0 0.0
    %1510 = vmatprep.subr.mxu0 0.0
    %1511 = vmatpush1.msra.mxu0 0.0
    %1512 = vmatprep.subr.mxu0 0.0
    %1513 = vmatpush1.msra.mxu0 0.0
    %1514 = vmatprep.subr.mxu0 0.0
    %1515 = vmatpush1.msra.mxu0 0.0
    %1516 = vmatprep.subr.mxu0 0.0
    %1517 = vmatpush1.msra.mxu0 0.0
    %1518 = vmatprep.subr.mxu0 0.0
    %1519 = vmatpush1.msra.mxu0 0.0
    %1520 = vmatprep.subr.mxu0 0.0
    %1521 = vmatpush1.msra.mxu0 0.0
    %1522 = vmatprep.subr.mxu0 0.0
    %1523 = vmatpush1.msra.mxu0 0.0
    %1524 = vmatprep.subr.mxu0 0.0
    %1525 = vmatpush1.msra.mxu0 0.0
    %1526 = vmatprep.subr.mxu0 0.0
    %1527 = vmatpush1.msra.mxu0 0.0
    %1528 = vmatprep.subr.mxu0 0.0
    %1529 = vmatpush1.msra.mxu0 0.0
    %1530 = vmatprep.subr.mxu0 0.0
    %1531 = vmatpush1.msra.mxu0 0.0
    %1532 = vmatprep.subr.mxu0 0.0
    %1533 = vmatpush1.msra.mxu0 0.0
    %1534 = vmatprep.subr.mxu0 0.0
    %1535 = vmatpush1.msra.mxu0 0.0
    %1536 = vmatprep.subr.mxu0 0.0
    %1537 = vmatpush1.msra.mxu0 0.0
    %1538 = vmatprep.subr.mxu0 0.0
    %1539 = vmatpush1.msra.mxu0 0.0
    %1540 = vmatprep.subr.mxu0 0.0
    %1541 = vmatpush1.msra.mxu0 0.0
    %1542 = vmatprep.subr.mxu0 0.0
    %1543 = vmatpush1.msra.mxu0 0.0
    %1544 = vmatprep.subr.mxu0 0.0
    %1545 = vmatpush1.msra.mxu0 0.0
    %1546 = vmatprep.subr.mxu0 0.0
    %1547 = vmatpush1.msra.mxu0 0.0
    %1548 = vmatprep.subr.mxu0 0.0
    %1549 = vmatpush1.msra.mxu0 0.0
    %1550 = vmatprep.subr.mxu0 0.0
    %1551 = vmatpush1.msra.mxu0 0.0
    %1552 = vmatprep.subr.mxu0 0.0
    %1553 = vmatpush1.msra.mxu0 0.0
    %1554 = vmatprep.subr.mxu0 0.0
    %1555 = vmatpush1.msra.mxu0 0.0
    %1556 = vmatprep.subr.mxu0 0.0
    %1557 = vmatpush1.msra.mxu0 0.0
    %1558 = vmatprep.subr.mxu0 0.0
    %1559 = vmatpush1.msra.mxu0 0.0
    %1560 = vmatprep.subr.mxu0 0.0
    %1561 = vmatpush1.msra.mxu0 0.0
    %1562 = vmatprep.subr.mxu0 0.0
    %1563 = vmatpush1.msra.mxu0 0.0
    %1564 = vmatprep.mubr.f32.mxu0 0.0
    %1565 = vmatmul.mubr.f32.gmra.mrb[0].mxu0 %v1496
    %v1566 = vpop.f32.mrb[0].mxu0
    %v1567 = vadd.f32 0.0, %v1566
    %v1568 = vpop.f32.mrb[0].mxu0
    %1569 = vmatprep.mubr.f32.mxu0 0.0
    %1570 = vmatmul.mubr.f32.gmra.mrb[0].mxu0 %v1498
    %v1571 = vpop.f32.mrb[0].mxu0
    %v1572 = vadd.f32 0.0, %v1571
    %v1573 = vpop.f32.mrb[0].mxu0
    %1574 = vdwg.mxu0
    %1575 = vrot.lane.b32.xlu0 %v1400, 96
    %v1576 = vpop.permute.xlu0 %1575
    %1577 = vrot.lane.b32.xlu0 %v1402, 96
    %v1578 = vpop.permute.xlu0 %1577
    %1579 = vrot.lane.b32.xlu0 %v1048, 64
    %v1580 = vpop.permute.xlu0 %1579
    %1581 = vrot.lane.b32.xlu0 %v1051, 64
    %v1582 = vpop.permute.xlu0 %1581
    %v1585 = vsel %vm433, %v1576, 0
    %v1587 = vsel %vm433, %v1578, 0
    %1589 = vmatprep.subr.mxu0 0.0
    %1590 = vmatpush1.msra.mxu0 %v1580
    %1591 = vmatprep.subr.mxu0 0.0
    %1592 = vmatpush1.msra.mxu0 %v1582
    %1593 = vmatprep.subr.mxu0 0.0
    %1594 = vmatpush1.msra.mxu0 0.0
    %1595 = vmatprep.subr.mxu0 0.0
    %1596 = vmatpush1.msra.mxu0 0.0
    %1597 = vmatprep.subr.mxu0 0.0
    %1598 = vmatpush1.msra.mxu0 0.0
    %1599 = vmatprep.subr.mxu0 0.0
    %1600 = vmatpush1.msra.mxu0 0.0
    %1601 = vmatprep.subr.mxu0 0.0
    %1602 = vmatpush1.msra.mxu0 0.0
    %1603 = vmatprep.subr.mxu0 0.0
    %1604 = vmatpush1.msra.mxu0 0.0
    %1605 = vmatprep.subr.mxu0 0.0
    %1606 = vmatpush1.msra.mxu0 0.0
    %1607 = vmatprep.subr.mxu0 0.0
    %1608 = vmatpush1.msra.mxu0 0.0
    %1609 = vmatprep.subr.mxu0 0.0
    %1610 = vmatpush1.msra.mxu0 0.0
    %1611 = vmatprep.subr.mxu0 0.0
    %1612 = vmatpush1.msra.mxu0 0.0
    %1613 = vmatprep.subr.mxu0 0.0
    %1614 = vmatpush1.msra.mxu0 0.0
    %1615 = vmatprep.subr.mxu0 0.0
    %1616 = vmatpush1.msra.mxu0 0.0
    %1617 = vmatprep.subr.mxu0 0.0
    %1618 = vmatpush1.msra.mxu0 0.0
    %1619 = vmatprep.subr.mxu0 0.0
    %1620 = vmatpush1.msra.mxu0 0.0
    %1621 = vmatprep.subr.mxu0 0.0
    %1622 = vmatpush1.msra.mxu0 0.0
    %1623 = vmatprep.subr.mxu0 0.0
    %1624 = vmatpush1.msra.mxu0 0.0
    %1625 = vmatprep.subr.mxu0 0.0
    %1626 = vmatpush1.msra.mxu0 0.0
    %1627 = vmatprep.subr.mxu0 0.0
    %1628 = vmatpush1.msra.mxu0 0.0
    %1629 = vmatprep.subr.mxu0 0.0
    %1630 = vmatpush1.msra.mxu0 0.0
    %1631 = vmatprep.subr.mxu0 0.0
    %1632 = vmatpush1.msra.mxu0 0.0
    %1633 = vmatprep.subr.mxu0 0.0
    %1634 = vmatpush1.msra.mxu0 0.0
    %1635 = vmatprep.subr.mxu0 0.0
    %1636 = vmatpush1.msra.mxu0 0.0
    %1637 = vmatprep.subr.mxu0 0.0
    %1638 = vmatpush1.msra.mxu0 0.0
    %1639 = vmatprep.subr.mxu0 0.0
    %1640 = vmatpush1.msra.mxu0 0.0
    %1641 = vmatprep.subr.mxu0 0.0
    %1642 = vmatpush1.msra.mxu0 0.0
    %1643 = vmatprep.subr.mxu0 0.0
    %1644 = vmatpush1.msra.mxu0 0.0
    %1645 = vmatprep.subr.mxu0 0.0
    %1646 = vmatpush1.msra.mxu0 0.0
    %1647 = vmatprep.subr.mxu0 0.0
    %1648 = vmatpush1.msra.mxu0 0.0
    %1649 = vmatprep.subr.mxu0 0.0
    %1650 = vmatpush1.msra.mxu0 0.0
    %1651 = vmatprep.subr.mxu0 0.0
    %1652 = vmatpush1.msra.mxu0 0.0
    %1653 = vmatprep.mubr.f32.mxu0 0.0
    %1654 = vmatmul.mubr.f32.gmra.mrb[0].mxu0 %v1585
    %v1655 = vpop.f32.mrb[0].mxu0
    %v1656 = vadd.f32 0.0, %v1655
    %v1657 = vpop.f32.mrb[0].mxu0
    %1658 = vmatprep.mubr.f32.mxu0 0.0
    %1659 = vmatmul.mubr.f32.gmra.mrb[0].mxu0 %v1587
    %v1660 = vpop.f32.mrb[0].mxu0
    %v1661 = vadd.f32 0.0, %v1660
    %v1662 = vpop.f32.mrb[0].mxu0
    %1663 = vdwg.mxu0
    %1664 = vrot.lane.b32.xlu0 %v1400, 80
    %v1665 = vpop.permute.xlu0 %1664
    %1666 = vrot.lane.b32.xlu0 %v1402, 80
    %v1667 = vpop.permute.xlu0 %1666
    %1668 = vrot.lane.b32.xlu0 %v1048, 32
    %v1669 = vpop.permute.xlu0 %1668
    %1670 = vrot.lane.b32.xlu0 %v1051, 32
    %v1671 = vpop.permute.xlu0 %1670
    %v1674 = vsel %vm433, %v1665, 0
    %v1676 = vsel %vm433, %v1667, 0
    %1678 = vmatprep.subr.mxu0 0.0
    %1679 = vmatpush1.msra.mxu0 %v1669
    %1680 = vmatprep.subr.mxu0 0.0
    %1681 = vmatpush1.msra.mxu0 %v1671
    %1682 = vmatprep.subr.mxu0 0.0
    %1683 = vmatpush1.msra.mxu0 0.0
    %1684 = vmatprep.subr.mxu0 0.0
    %1685 = vmatpush1.msra.mxu0 0.0
    %1686 = vmatprep.subr.mxu0 0.0
    %1687 = vmatpush1.msra.mxu0 0.0
    %1688 = vmatprep.subr.mxu0 0.0
    %1689 = vmatpush1.msra.mxu0 0.0
    %1690 = vmatprep.subr.mxu0 0.0
    %1691 = vmatpush1.msra.mxu0 0.0
    %1692 = vmatprep.subr.mxu0 0.0
    %1693 = vmatpush1.msra.mxu0 0.0
    %1694 = vmatprep.subr.mxu0 0.0
    %1695 = vmatpush1.msra.mxu0 0.0
    %1696 = vmatprep.subr.mxu0 0.0
    %1697 = vmatpush1.msra.mxu0 0.0
    %1698 = vmatprep.subr.mxu0 0.0
    %1699 = vmatpush1.msra.mxu0 0.0
    %1700 = vmatprep.subr.mxu0 0.0
    %1701 = vmatpush1.msra.mxu0 0.0
    %1702 = vmatprep.subr.mxu0 0.0
    %1703 = vmatpush1.msra.mxu0 0.0
    %1704 = vmatprep.subr.mxu0 0.0
    %1705 = vmatpush1.msra.mxu0 0.0
    %1706 = vmatprep.subr.mxu0 0.0
    %1707 = vmatpush1.msra.mxu0 0.0
    %1708 = vmatprep.subr.mxu0 0.0
    %1709 = vmatpush1.msra.mxu0 0.0
    %1710 = vmatprep.subr.mxu0 0.0
    %1711 = vmatpush1.msra.mxu0 0.0
    %1712 = vmatprep.subr.mxu0 0.0
    %1713 = vmatpush1.msra.mxu0 0.0
    %1714 = vmatprep.subr.mxu0 0.0
    %1715 = vmatpush1.msra.mxu0 0.0
    %1716 = vmatprep.subr.mxu0 0.0
    %1717 = vmatpush1.msra.mxu0 0.0
    %1718 = vmatprep.subr.mxu0 0.0
    %1719 = vmatpush1.msra.mxu0 0.0
    %1720 = vmatprep.subr.mxu0 0.0
    %1721 = vmatpush1.msra.mxu0 0.0
    %1722 = vmatprep.subr.mxu0 0.0
    %1723 = vmatpush1.msra.mxu0 0.0
    %1724 = vmatprep.subr.mxu0 0.0
    %1725 = vmatpush1.msra.mxu0 0.0
    %1726 = vmatprep.subr.mxu0 0.0
    %1727 = vmatpush1.msra.mxu0 0.0
    %1728 = vmatprep.subr.mxu0 0.0
    %1729 = vmatpush1.msra.mxu0 0.0
    %1730 = vmatprep.subr.mxu0 0.0
    %1731 = vmatpush1.msra.mxu0 0.0
    %1732 = vmatprep.subr.mxu0 0.0
    %1733 = vmatpush1.msra.mxu0 0.0
    %1734 = vmatprep.subr.mxu0 0.0
    %1735 = vmatpush1.msra.mxu0 0.0
    %1736 = vmatprep.subr.mxu0 0.0
    %1737 = vmatpush1.msra.mxu0 0.0
    %1738 = vmatprep.subr.mxu0 0.0
    %1739 = vmatpush1.msra.mxu0 0.0
    %1740 = vmatprep.subr.mxu0 0.0
    %1741 = vmatpush1.msra.mxu0 0.0
    %1742 = vmatprep.mubr.f32.mxu0 0.0
    %1743 = vmatmul.mubr.f32.gmra.mrb[0].mxu0 %v1674
    %v1744 = vpop.f32.mrb[0].mxu0
    %v1745 = vadd.f32 0.0, %v1744
    %v1746 = vpop.f32.mrb[0].mxu0
    %1747 = vmatprep.mubr.f32.mxu0 0.0
    %1748 = vmatmul.mubr.f32.gmra.mrb[0].mxu0 %v1676
    %v1749 = vpop.f32.mrb[0].mxu0
    %v1750 = vadd.f32 0.0, %v1749
    %v1751 = vpop.f32.mrb[0].mxu0
    %1752 = vdwg.mxu0
    %1755 = vrot.lane.b32.xlu0 %v1567, 32
    %v1756 = vpop.permute.xlu0 %1755
    %1757 = vrot.lane.b32.xlu0 %v1572, 32
    %v1758 = vpop.permute.xlu0 %1757
    %1763 = vrot.lane.b32.xlu0 %v1656, 64
    %v1764 = vpop.permute.xlu0 %1763
    %1765 = vrot.lane.b32.xlu0 %v1661, 64
    %v1766 = vpop.permute.xlu0 %1765
    %1771 = vrot.lane.b32.xlu0 %v1745, 96
    %v1772 = vpop.permute.xlu0 %1771
    %1773 = vrot.lane.b32.xlu0 %v1750, 96
    %v1774 = vpop.permute.xlu0 %1773
    %v1777 = vsel %vm204, %v1476, %v1756
    %v1778 = vsel %vm204, %v1481, %v1758
    %v1779 = vsel %vm931, %v1777, %v1764
    %v1780 = vsel %vm931, %v1778, %v1766
    %v1781 = vsel %vm934, %v1779, %v1772
    %v1782 = vsel %vm934, %v1780, %v1774
    %v1783 = vmul.f32 %v1781, %v946
    %v1784 = vmul.f32 %v1782, %v946
    %v1785 = vadd.f32 %v1783, %v947
    %v1786 = vadd.f32 %v1784, %v947
    %v1787 = vmax.f32 %v1785, 0.0
    %v1788 = vmax.f32 %v1786, 0.0
    %s1789 = scalar_lea.vmem [#allocation6], 18
    %v1790 = vld [vmem:[%s1789] ss:$8 sm:$0x3]
    %s1791 = scalar_lea.vmem [#allocation6], 19
    %v1792 = vld [vmem:[%s1791] ss:$8 sm:$0x3]
    %v1793 = vld [vmem:[#allocation6 + $0x14] ss:$0 sm:$0xff]
    %s1794 = scalar_lea.vmem [#allocation6], 21
    %v1795 = vld [vmem:[%s1794] ss:$8 sm:$0x3]
    %s1796 = scalar_lea.vmem [#allocation6], 22
    %v1797 = vld [vmem:[%s1796] ss:$8 sm:$0x3]
    %v1798 = vpack.c.bf16 %v1788, %v1787
    %v1799 = vld [vmem:[%s6] sm:$0xff]
    %v1800 = vld [vmem:[%s6 + $0x8] sm:$0xff]
    %v1801 = vld [vmem:[%s6 + $0x10] sm:$0xff]
    %v1802 = vld [vmem:[%s6 + $0x18] sm:$0xff]
    %v1803 = vld [vmem:[%s6 + $0x20] sm:$0xff]
    %v1804 = vld [vmem:[%s6 + $0x28] sm:$0xff]
    %v1805 = vld [vmem:[%s6 + $0x30] sm:$0xff]
    %v1806 = vld [vmem:[%s6 + $0x38] sm:$0xff]
    %v1807 = vld [vmem:[%s6 + $0x40] sm:$0xff]
    %v1808 = vld [vmem:[%s6 + $0x48] sm:$0xff]
    %v1809 = vld [vmem:[%s6 + $0x50] sm:$0xff]
    %v1810 = vld [vmem:[%s6 + $0x58] sm:$0xff]
    %v1811 = vld [vmem:[%s6 + $0x60] sm:$0xff]
    %v1812 = vld [vmem:[%s6 + $0x68] sm:$0xff]
    %v1813 = vld [vmem:[%s6 + $0x70] sm:$0xff]
    %v1814 = vld [vmem:[%s6 + $0x78] sm:$0xff]
    %v1831 = vunpack.c.l.b16 %v1799
    %v1832 = vunpack.c.h.b16 %v1799
    %v1833 = vunpack.c.l.b16 %v1800
    %v1834 = vunpack.c.h.b16 %v1800
    %v1835 = vunpack.c.l.b16 %v1801
    %v1836 = vunpack.c.h.b16 %v1801
    %v1837 = vunpack.c.l.b16 %v1802
    %v1838 = vunpack.c.h.b16 %v1802
    %v1839 = vunpack.c.l.b16 %v1803
    %v1840 = vunpack.c.h.b16 %v1803
    %v1841 = vunpack.c.l.b16 %v1804
    %v1842 = vunpack.c.h.b16 %v1804
    %v1843 = vunpack.c.l.b16 %v1805
    %v1844 = vunpack.c.h.b16 %v1805
    %v1845 = vunpack.c.l.b16 %v1806
    %v1846 = vunpack.c.h.b16 %v1806
    %v1847 = vunpack.c.l.b16 %v1807
    %v1848 = vunpack.c.h.b16 %v1807
    %v1849 = vunpack.c.l.b16 %v1808
    %v1850 = vunpack.c.h.b16 %v1808
    %v1851 = vunpack.c.l.b16 %v1809
    %v1852 = vunpack.c.h.b16 %v1809
    %v1853 = vunpack.c.l.b16 %v1810
    %v1854 = vunpack.c.h.b16 %v1810
    %v1855 = vunpack.c.l.b16 %v1811
    %v1856 = vunpack.c.h.b16 %v1811
    %v1857 = vunpack.c.l.b16 %v1812
    %v1858 = vunpack.c.h.b16 %v1812
    %v1859 = vunpack.c.l.b16 %v1813
    %v1860 = vunpack.c.h.b16 %v1813
    %v1861 = vunpack.c.l.b16 %v1814
    %v1862 = vunpack.c.h.b16 %v1814
    %v1863 = vpack.c.b16 %v1833, %v1831
    %v1864 = vpack.c.b16 %v1834, %v1832
    %v1865 = vpack.c.b16 %v1837, %v1835
    %v1866 = vpack.c.b16 %v1838, %v1836
    %v1867 = vpack.c.b16 %v1841, %v1839
    %v1868 = vpack.c.b16 %v1842, %v1840
    %v1869 = vpack.c.b16 %v1845, %v1843
    %v1870 = vpack.c.b16 %v1846, %v1844
    %v1871 = vpack.c.b16 %v1849, %v1847
    %v1872 = vpack.c.b16 %v1850, %v1848
    %v1873 = vpack.c.b16 %v1853, %v1851
    %v1874 = vpack.c.b16 %v1854, %v1852
    %v1875 = vpack.c.b16 %v1857, %v1855
    %v1876 = vpack.c.b16 %v1858, %v1856
    %v1877 = vpack.c.b16 %v1861, %v1859
    %v1878 = vpack.c.b16 %v1862, %v1860
    %1895 = vmatprep.subr.bf16.mxu0 %v1864
    %1896 = vmatpush1.bf16.msra.mxu0 %v1863
    %1897 = vmatprep.subr.bf16.mxu0 %v1866
    %1898 = vmatpush1.bf16.msra.mxu0 %v1865
    %1899 = vmatprep.subr.bf16.mxu0 %v1868
    %1900 = vmatpush1.bf16.msra.mxu0 %v1867
    %1901 = vmatprep.subr.bf16.mxu0 %v1870
    %1902 = vmatpush1.bf16.msra.mxu0 %v1869
    %1903 = vmatprep.subr.bf16.mxu0 %v1872
    %1904 = vmatpush1.bf16.msra.mxu0 %v1871
    %1905 = vmatprep.subr.bf16.mxu0 %v1874
    %1906 = vmatpush1.bf16.msra.mxu0 %v1873
    %1907 = vmatprep.subr.bf16.mxu0 %v1876
    %1908 = vmatpush1.bf16.msra.mxu0 %v1875
    %1909 = vmatprep.subr.bf16.mxu0 %v1878
    %1910 = vmatpush1.bf16.msra.mxu0 %v1877
    %1911 = vmatprep.subr.bf16.mxu0 0
    %1912 = vmatpush1.bf16.msra.mxu0 0
    %1913 = vmatprep.subr.bf16.mxu0 0
    %1914 = vmatpush1.bf16.msra.mxu0 0
    %1915 = vmatprep.subr.bf16.mxu0 0
    %1916 = vmatpush1.bf16.msra.mxu0 0
    %1917 = vmatprep.subr.bf16.mxu0 0
    %1918 = vmatpush1.bf16.msra.mxu0 0
    %1919 = vmatprep.subr.bf16.mxu0 0
    %1920 = vmatpush1.bf16.msra.mxu0 0
    %1921 = vmatprep.subr.bf16.mxu0 0
    %1922 = vmatpush1.bf16.msra.mxu0 0
    %1923 = vmatprep.subr.bf16.mxu0 0
    %1924 = vmatpush1.bf16.msra.mxu0 0
    %1925 = vmatprep.subr.bf16.mxu0 0
    %1926 = vmatpush1.bf16.msra.mxu0 0
    %1927 = vmatprep.mubr.bf16.mxu0 0
    %1928 = vmatmul.mubr.bf16.gmra.mrb[0].mxu0 %v1798
    %v1929 = vpop.f32.mrb[0].mxu0
    %v1930 = vadd.f32 0.0, %v1929
    %v1931 = vpop.f32.mrb[0].mxu0
    %v1932 = vadd.f32 0.0, %v1931
    %v1933 = vpop.f32.mrb[0].mxu0
    %v1934 = vadd.f32 0.0, %v1933
    %v1935 = vpop.f32.mrb[0].mxu0
    %v1936 = vadd.f32 0.0, %v1935
    %1937 = vdwg.mxu0
    %v1939 = vlaneseq
    %v1940 = vshrl.u32 %v1939, 7
    %v1941 = vsub.s32 0, %v1940
    %v1942 = vrot.slane %v1790, %v1941
    %v1943 = vlaneseq
    %v1944 = vshrl.u32 %v1943, 7
    %v1945 = vsub.s32 1, %v1944
    %v1946 = vrot.slane %v1790, %v1945
    %v1949 = vmul.f32 %v1930, %v1942
    %v1950 = vmul.f32 %v1932, %v1946
    %v1951 = vmul.f32 %v1934, %v1942
    %v1952 = vmul.f32 %v1936, %v1946
    %v1954 = vlaneseq
    %v1955 = vshrl.u32 %v1954, 7
    %v1956 = vsub.s32 0, %v1955
    %v1957 = vrot.slane %v1792, %v1956
    %v1958 = vlaneseq
    %v1959 = vshrl.u32 %v1958, 7
    %v1960 = vsub.s32 1, %v1959
    %v1961 = vrot.slane %v1792, %v1960
    %v1964 = vmul.f32 %v1930, %v1957
    %v1965 = vmul.f32 %v1932, %v1961
    %v1966 = vmul.f32 %v1934, %v1957
    %v1967 = vmul.f32 %v1936, %v1961
    %v1968 = vsel %vm931, %v1949, 0.0
    %1969 = vadd.xlane.f32.xlu0 %v1968
    %v1970 = vpop.xlane.xlu0 %1969
    %v1971 = vsel %vm931, %v1951, 0.0
    %1972 = vadd.xlane.f32.xlu0 %v1971
    %v1973 = vpop.xlane.xlu0 %1972
    %1974 = vxpose.xlu0.b32.start [1/16] %v1970, 128
    %1975 = vxpose.xlu0.b32.cont [2/16] %v1973, 128
    %1976 = vxpose.xlu0.b32.cont [3/16] 0.0, 128
    %1977 = vxpose.xlu0.b32.cont [4/16] 0.0, 128
    %1978 = vxpose.xlu0.b32.cont [5/16] 0.0, 128
    %1979 = vxpose.xlu0.b32.cont [6/16] 0.0, 128
    %1980 = vxpose.xlu0.b32.cont [7/16] 0.0, 128
    %1981 = vxpose.xlu0.b32.cont [8/16] 0.0, 128
    %1982 = vxpose.xlu0.b32.cont [9/16] 0.0, 128
    %1983 = vxpose.xlu0.b32.cont [10/16] 0.0, 128
    %1984 = vxpose.xlu0.b32.cont [11/16] 0.0, 128
    %1985 = vxpose.xlu0.b32.cont [12/16] 0.0, 128
    %1986 = vxpose.xlu0.b32.cont [13/16] 0.0, 128
    %1987 = vxpose.xlu0.b32.cont [14/16] 0.0, 128
    %1988 = vxpose.xlu0.b32.cont [15/16] 0.0, 128
    %1989 = vxpose.xlu0.b32.end [16/16] 0.0, 128
    %v1990 = vpop.trf.xlu0
    %v1991 = vpop.trf.xlu0
    %v1992 = vpop.trf.xlu0
    %v1993 = vpop.trf.xlu0
    %v1994 = vpop.trf.xlu0
    %v1995 = vpop.trf.xlu0
    %v1996 = vpop.trf.xlu0
    %v1997 = vpop.trf.xlu0
    %v1998 = vpop.trf.xlu0
    %v1999 = vpop.trf.xlu0
    %v2000 = vpop.trf.xlu0
    %v2001 = vpop.trf.xlu0
    %v2002 = vpop.trf.xlu0
    %v2003 = vpop.trf.xlu0
    %v2004 = vpop.trf.xlu0
    %v2005 = vpop.trf.xlu0
    %v2006 = vsel %vm931, %v1964, 0.0
    %2007 = vadd.xlane.f32.xlu0 %v2006
    %v2008 = vpop.xlane.xlu0 %2007
    %v2009 = vsel %vm931, %v1966, 0.0
    %2010 = vadd.xlane.f32.xlu0 %v2009
    %v2011 = vpop.xlane.xlu0 %2010
    %2014 = vrot.lane.b32.xlu0 %v1949, 64
    %v2015 = vpop.permute.xlu0 %2014
    %2016 = vrot.lane.b32.xlu0 %v1951, 64
    %v2017 = vpop.permute.xlu0 %2016
    %v2020 = vsel %vm931, %v2015, 0.0
    %2021 = vadd.xlane.f32.xlu0 %v2020
    %v2022 = vpop.xlane.xlu0 %2021
    %v2023 = vsel %vm931, %v2017, 0.0
    %2024 = vadd.xlane.f32.xlu0 %v2023
    %v2025 = vpop.xlane.xlu0 %2024
    %2026 = vxpose.xlu0.b32.start [1/16] %v2022, 128
    %2027 = vxpose.xlu0.b32.cont [2/16] %v2025, 128
    %2028 = vxpose.xlu0.b32.cont [3/16] 0.0, 128
    %2029 = vxpose.xlu0.b32.cont [4/16] 0.0, 128
    %2030 = vxpose.xlu0.b32.cont [5/16] 0.0, 128
    %2031 = vxpose.xlu0.b32.cont [6/16] 0.0, 128
    %2032 = vxpose.xlu0.b32.cont [7/16] 0.0, 128
    %2033 = vxpose.xlu0.b32.cont [8/16] 0.0, 128
    %2034 = vxpose.xlu0.b32.cont [9/16] 0.0, 128
    %2035 = vxpose.xlu0.b32.cont [10/16] 0.0, 128
    %2036 = vxpose.xlu0.b32.cont [11/16] 0.0, 128
    %2037 = vxpose.xlu0.b32.cont [12/16] 0.0, 128
    %2038 = vxpose.xlu0.b32.cont [13/16] 0.0, 128
    %2039 = vxpose.xlu0.b32.cont [14/16] 0.0, 128
    %2040 = vxpose.xlu0.b32.cont [15/16] 0.0, 128
    %2041 = vxpose.xlu0.b32.end [16/16] 0.0, 128
    %v2042 = vpop.trf.xlu0
    %v2043 = vpop.trf.xlu0
    %v2044 = vpop.trf.xlu0
    %v2045 = vpop.trf.xlu0
    %v2046 = vpop.trf.xlu0
    %v2047 = vpop.trf.xlu0
    %v2048 = vpop.trf.xlu0
    %v2049 = vpop.trf.xlu0
    %v2050 = vpop.trf.xlu0
    %v2051 = vpop.trf.xlu0
    %v2052 = vpop.trf.xlu0
    %v2053 = vpop.trf.xlu0
    %v2054 = vpop.trf.xlu0
    %v2055 = vpop.trf.xlu0
    %v2056 = vpop.trf.xlu0
    %v2057 = vpop.trf.xlu0
    %2060 = vrot.lane.b32.xlu0 %v1964, 64
    %v2061 = vpop.permute.xlu0 %2060
    %2062 = vrot.lane.b32.xlu0 %v1966, 64
    %v2063 = vpop.permute.xlu0 %2062
    %v2066 = vsel %vm931, %v2061, 0.0
    %2067 = vadd.xlane.f32.xlu0 %v2066
    %v2068 = vpop.xlane.xlu0 %2067
    %v2069 = vsel %vm931, %v2063, 0.0
    %2070 = vadd.xlane.f32.xlu0 %v2069
    %v2071 = vpop.xlane.xlu0 %2070
    %v2072 = vsel %vm931, %v1950, 0.0
    %2073 = vadd.xlane.f32.xlu0 %v2072
    %v2074 = vpop.xlane.xlu0 %2073
    %v2075 = vsel %vm931, %v1952, 0.0
    %2076 = vadd.xlane.f32.xlu0 %v2075
    %v2077 = vpop.xlane.xlu0 %2076
    %2078 = vxpose.xlu0.b32.start [1/16] %v2074, 128
    %2079 = vxpose.xlu0.b32.cont [2/16] %v2077, 128
    %2080 = vxpose.xlu0.b32.cont [3/16] 0.0, 128
    %2081 = vxpose.xlu0.b32.cont [4/16] 0.0, 128
    %2082 = vxpose.xlu0.b32.cont [5/16] 0.0, 128
    %2083 = vxpose.xlu0.b32.cont [6/16] 0.0, 128
    %2084 = vxpose.xlu0.b32.cont [7/16] 0.0, 128
    %2085 = vxpose.xlu0.b32.cont [8/16] 0.0, 128
    %2086 = vxpose.xlu0.b32.cont [9/16] 0.0, 128
    %2087 = vxpose.xlu0.b32.cont [10/16] 0.0, 128
    %2088 = vxpose.xlu0.b32.cont [11/16] 0.0, 128
    %2089 = vxpose.xlu0.b32.cont [12/16] 0.0, 128
    %2090 = vxpose.xlu0.b32.cont [13/16] 0.0, 128
    %2091 = vxpose.xlu0.b32.cont [14/16] 0.0, 128
    %2092 = vxpose.xlu0.b32.cont [15/16] 0.0, 128
    %2093 = vxpose.xlu0.b32.end [16/16] 0.0, 128
    %v2094 = vpop.trf.xlu0
    %v2095 = vpop.trf.xlu0
    %v2096 = vpop.trf.xlu0
    %v2097 = vpop.trf.xlu0
    %v2098 = vpop.trf.xlu0
    %v2099 = vpop.trf.xlu0
    %v2100 = vpop.trf.xlu0
    %v2101 = vpop.trf.xlu0
    %v2102 = vpop.trf.xlu0
    %v2103 = vpop.trf.xlu0
    %v2104 = vpop.trf.xlu0
    %v2105 = vpop.trf.xlu0
    %v2106 = vpop.trf.xlu0
    %v2107 = vpop.trf.xlu0
    %v2108 = vpop.trf.xlu0
    %v2109 = vpop.trf.xlu0
    %v2110 = vsel %vm931, %v1965, 0.0
    %2111 = vadd.xlane.f32.xlu0 %v2110
    %v2112 = vpop.xlane.xlu0 %2111
    %v2113 = vsel %vm931, %v1967, 0.0
    %2114 = vadd.xlane.f32.xlu0 %v2113
    %v2115 = vpop.xlane.xlu0 %2114
    %2118 = vrot.lane.b32.xlu0 %v1950, 64
    %v2119 = vpop.permute.xlu0 %2118
    %2120 = vrot.lane.b32.xlu0 %v1952, 64
    %v2121 = vpop.permute.xlu0 %2120
    %v2124 = vsel %vm931, %v2119, 0.0
    %2125 = vadd.xlane.f32.xlu0 %v2124
    %v2126 = vpop.xlane.xlu0 %2125
    %v2127 = vsel %vm931, %v2121, 0.0
    %2128 = vadd.xlane.f32.xlu0 %v2127
    %v2129 = vpop.xlane.xlu0 %2128
    %2130 = vxpose.xlu0.b32.start [1/16] %v2126, 128
    %2131 = vxpose.xlu0.b32.cont [2/16] %v2129, 128
    %2132 = vxpose.xlu0.b32.cont [3/16] 0.0, 128
    %2133 = vxpose.xlu0.b32.cont [4/16] 0.0, 128
    %2134 = vxpose.xlu0.b32.cont [5/16] 0.0, 128
    %2135 = vxpose.xlu0.b32.cont [6/16] 0.0, 128
    %2136 = vxpose.xlu0.b32.cont [7/16] 0.0, 128
    %2137 = vxpose.xlu0.b32.cont [8/16] 0.0, 128
    %2138 = vxpose.xlu0.b32.cont [9/16] 0.0, 128
    %2139 = vxpose.xlu0.b32.cont [10/16] 0.0, 128
    %2140 = vxpose.xlu0.b32.cont [11/16] 0.0, 128
    %2141 = vxpose.xlu0.b32.cont [12/16] 0.0, 128
    %2142 = vxpose.xlu0.b32.cont [13/16] 0.0, 128
    %2143 = vxpose.xlu0.b32.cont [14/16] 0.0, 128
    %2144 = vxpose.xlu0.b32.cont [15/16] 0.0, 128
    %2145 = vxpose.xlu0.b32.end [16/16] 0.0, 128
    %v2146 = vpop.trf.xlu0
    %v2147 = vpop.trf.xlu0
    %v2148 = vpop.trf.xlu0
    %v2149 = vpop.trf.xlu0
    %v2150 = vpop.trf.xlu0
    %v2151 = vpop.trf.xlu0
    %v2152 = vpop.trf.xlu0
    %v2153 = vpop.trf.xlu0
    %v2154 = vpop.trf.xlu0
    %v2155 = vpop.trf.xlu0
    %v2156 = vpop.trf.xlu0
    %v2157 = vpop.trf.xlu0
    %v2158 = vpop.trf.xlu0
    %v2159 = vpop.trf.xlu0
    %v2160 = vpop.trf.xlu0
    %v2161 = vpop.trf.xlu0
    %2164 = vrot.lane.b32.xlu0 %v1965, 64
    %v2165 = vpop.permute.xlu0 %2164
    %2166 = vrot.lane.b32.xlu0 %v1967, 64
    %v2167 = vpop.permute.xlu0 %2166
    %v2170 = vsel %vm931, %v2165, 0.0
    %2171 = vadd.xlane.f32.xlu0 %v2170
    %v2172 = vpop.xlane.xlu0 %2171
    %v2173 = vsel %vm931, %v2167, 0.0
    %2174 = vadd.xlane.f32.xlu0 %v2173
    %v2175 = vpop.xlane.xlu0 %2174
    %2177 = vrot.lane.b32.xlu0 %v2042, 16
    %v2178 = vpop.permute.xlu0 %2177
    %2181 = vrot.lane.b32.xlu0 %v2094, 32
    %v2182 = vpop.permute.xlu0 %2181
    %2185 = vrot.lane.b32.xlu0 %v2146, 48
    %v2186 = vpop.permute.xlu0 %2185
    %v2188 = vsel %vm433, %v1990, %v2178
    %v2189 = vsel %vm204, %v2188, %v2182
    %v2190 = vsel %vm436, %v2189, %v2186
    %v2191 = vsel %vm433, %v2008, %v2068
    %v2192 = vsel %vm433, %v2011, %v2071
    %v2193 = vsel %vm204, %v2191, %v2112
    %v2194 = vsel %vm204, %v2192, %v2115
    %v2195 = vsel %vm436, %v2193, %v2172
    %v2196 = vsel %vm436, %v2194, %v2175
    %v2197 = vlaneseq
    %v2198 = vshrl.u32 %v2197, 7
    %v2199 = vsub.s32 0, %v2198
    %v2200 = vrot.slane %v2190, %v2199
    %v2201 = vadd.f32 %v2195, %v2200
    %v2202 = vadd.f32 %v2196, %v2200
    %v2203 = vmul.f32 %v140, %v1793
    %v2204 = vmul.f32 %v141, %v1793
    %v2205 = vadd.f32 %v2201, %v2203
    %v2206 = vadd.f32 %v2202, %v2204
    %vm2207 = vcmp.gt.f32.partialorder %v2205, 0.0
    %vm2208 = vcmp.gt.f32.partialorder %v2206, 0.0
    %v2209 = vmul.f32 %v2205, 0.2
    %v2210 = vmul.f32 %v2206, 0.2
    %v2211 = vsel %vm2207, %v2205, %v2209
    %v2212 = vsel %vm2208, %v2206, %v2210
    %v2213 = vadd.f32 %v2211, %v138
    %v2214 = vadd.f32 %v2212, %v139
    %v2215 = vsel %vm433, %v2213, -inf
    %2216 = vmax.xlane.f32.xlu0 %v2215
    %v2217 = vpop.xlane.xlu0 %2216
    %v2218 = vsel %vm433, %v2214, -inf
    %2219 = vmax.xlane.f32.xlu0 %v2218
    %v2220 = vpop.xlane.xlu0 %2219
    %v2221 = vsel %vm468, %v2213, -inf
    %2222 = vmax.xlane.f32.xlu0 %v2221
    %v2223 = vpop.xlane.xlu0 %2222
    %v2224 = vsel %vm468, %v2214, -inf
    %2225 = vmax.xlane.f32.xlu0 %v2224
    %v2226 = vpop.xlane.xlu0 %2225
    %v2227 = vsel %vm475, %v2213, -inf
    %2228 = vmax.xlane.f32.xlu0 %v2227
    %v2229 = vpop.xlane.xlu0 %2228
    %v2230 = vsel %vm475, %v2214, -inf
    %2231 = vmax.xlane.f32.xlu0 %v2230
    %v2232 = vpop.xlane.xlu0 %2231
    %v2233 = vsel %vm482, %v2213, -inf
    %2234 = vmax.xlane.f32.xlu0 %v2233
    %v2235 = vpop.xlane.xlu0 %2234
    %v2236 = vsel %vm482, %v2214, -inf
    %2237 = vmax.xlane.f32.xlu0 %v2236
    %v2238 = vpop.xlane.xlu0 %2237
    %v2239 = vsel %vm433, %v2217, %v2223
    %v2240 = vsel %vm433, %v2220, %v2226
    %v2241 = vsel %vm204, %v2239, %v2229
    %v2242 = vsel %vm204, %v2240, %v2232
    %v2243 = vsel %vm436, %v2241, %v2235
    %v2244 = vsel %vm436, %v2242, %v2238
    %v2245 = vsub.f32 %v2213, %v2243
    %v2246 = vsub.f32 %v2214, %v2244
    %v2247 = vmul.f32 %v2245, 1.442695
    %v2248 = vpow.pop %v2247
    %v2249 = vmul.f32 %v2246, 1.442695
    %v2250 = vpow.pop %v2249
    %v2251 = vsel %vm433, %v2248, 0.0
    %2252 = vadd.xlane.f32.xlu0 %v2251
    %v2253 = vpop.xlane.xlu0 %2252
    %v2254 = vsel %vm433, %v2250, 0.0
    %2255 = vadd.xlane.f32.xlu0 %v2254
    %v2256 = vpop.xlane.xlu0 %2255
    %2259 = vrot.lane.b32.xlu0 %v2248, 112
    %v2260 = vpop.permute.xlu0 %2259
    %2261 = vrot.lane.b32.xlu0 %v2250, 112
    %v2262 = vpop.permute.xlu0 %2261
    %v2265 = vsel %vm433, %v2260, 0.0
    %2266 = vadd.xlane.f32.xlu0 %v2265
    %v2267 = vpop.xlane.xlu0 %2266
    %v2268 = vsel %vm433, %v2262, 0.0
    %2269 = vadd.xlane.f32.xlu0 %v2268
    %v2270 = vpop.xlane.xlu0 %2269
    %2271 = vrot.lane.b32.xlu0 %v2248, 96
    %v2272 = vpop.permute.xlu0 %2271
    %2273 = vrot.lane.b32.xlu0 %v2250, 96
    %v2274 = vpop.permute.xlu0 %2273
    %v2277 = vsel %vm433, %v2272, 0.0
    %2278 = vadd.xlane.f32.xlu0 %v2277
    %v2279 = vpop.xlane.xlu0 %2278
    %v2280 = vsel %vm433, %v2274, 0.0
    %2281 = vadd.xlane.f32.xlu0 %v2280
    %v2282 = vpop.xlane.xlu0 %2281
    %2283 = vrot.lane.b32.xlu0 %v2248, 80
    %v2284 = vpop.permute.xlu0 %2283
    %2285 = vrot.lane.b32.xlu0 %v2250, 80
    %v2286 = vpop.permute.xlu0 %2285
    %v2289 = vsel %vm433, %v2284, 0.0
    %2290 = vadd.xlane.f32.xlu0 %v2289
    %v2291 = vpop.xlane.xlu0 %2290
    %v2292 = vsel %vm433, %v2286, 0.0
    %2293 = vadd.xlane.f32.xlu0 %v2292
    %v2294 = vpop.xlane.xlu0 %2293
    %v2295 = vsel %vm433, %v2253, %v2267
    %v2296 = vsel %vm433, %v2256, %v2270
    %v2297 = vsel %vm204, %v2295, %v2279
    %v2298 = vsel %vm204, %v2296, %v2282
    %v2299 = vsel %vm436, %v2297, %v2291
    %v2300 = vsel %vm436, %v2298, %v2294
    %v2301 = vrcp.pop %v2299
    %v2302 = vmul.f32 %v2248, %v2301
    %v2303 = vrcp.pop %v2300
    %v2304 = vmul.f32 %v2250, %v2303
    %v2306 = vsel %vm433, %v2302, 0
    %v2309 = vsel %vm433, %v2304, 0
    %2311 = vmatprep.subr.mxu0 0.0
    %2312 = vmatpush1.msra.mxu0 %v1930
    %2313 = vmatprep.subr.mxu0 0.0
    %2314 = vmatpush1.msra.mxu0 %v1934
    %2315 = vmatprep.subr.mxu0 0.0
    %2316 = vmatpush1.msra.mxu0 0.0
    %2317 = vmatprep.subr.mxu0 0.0
    %2318 = vmatpush1.msra.mxu0 0.0
    %2319 = vmatprep.subr.mxu0 0.0
    %2320 = vmatpush1.msra.mxu0 0.0
    %2321 = vmatprep.subr.mxu0 0.0
    %2322 = vmatpush1.msra.mxu0 0.0
    %2323 = vmatprep.subr.mxu0 0.0
    %2324 = vmatpush1.msra.mxu0 0.0
    %2325 = vmatprep.subr.mxu0 0.0
    %2326 = vmatpush1.msra.mxu0 0.0
    %2327 = vmatprep.subr.mxu0 0.0
    %2328 = vmatpush1.msra.mxu0 0.0
    %2329 = vmatprep.subr.mxu0 0.0
    %2330 = vmatpush1.msra.mxu0 0.0
    %2331 = vmatprep.subr.mxu0 0.0
    %2332 = vmatpush1.msra.mxu0 0.0
    %2333 = vmatprep.subr.mxu0 0.0
    %2334 = vmatpush1.msra.mxu0 0.0
    %2335 = vmatprep.subr.mxu0 0.0
    %2336 = vmatpush1.msra.mxu0 0.0
    %2337 = vmatprep.subr.mxu0 0.0
    %2338 = vmatpush1.msra.mxu0 0.0
    %2339 = vmatprep.subr.mxu0 0.0
    %2340 = vmatpush1.msra.mxu0 0.0
    %2341 = vmatprep.subr.mxu0 0.0
    %2342 = vmatpush1.msra.mxu0 0.0
    %2343 = vmatprep.subr.mxu0 0.0
    %2344 = vmatpush1.msra.mxu0 0.0
    %2345 = vmatprep.subr.mxu0 0.0
    %2346 = vmatpush1.msra.mxu0 0.0
    %2347 = vmatprep.subr.mxu0 0.0
    %2348 = vmatpush1.msra.mxu0 0.0
    %2349 = vmatprep.subr.mxu0 0.0
    %2350 = vmatpush1.msra.mxu0 0.0
    %2351 = vmatprep.subr.mxu0 0.0
    %2352 = vmatpush1.msra.mxu0 0.0
    %2353 = vmatprep.subr.mxu0 0.0
    %2354 = vmatpush1.msra.mxu0 0.0
    %2355 = vmatprep.subr.mxu0 0.0
    %2356 = vmatpush1.msra.mxu0 0.0
    %2357 = vmatprep.subr.mxu0 0.0
    %2358 = vmatpush1.msra.mxu0 0.0
    %2359 = vmatprep.subr.mxu0 0.0
    %2360 = vmatpush1.msra.mxu0 0.0
    %2361 = vmatprep.subr.mxu0 0.0
    %2362 = vmatpush1.msra.mxu0 0.0
    %2363 = vmatprep.subr.mxu0 0.0
    %2364 = vmatpush1.msra.mxu0 0.0
    %2365 = vmatprep.subr.mxu0 0.0
    %2366 = vmatpush1.msra.mxu0 0.0
    %2367 = vmatprep.subr.mxu0 0.0
    %2368 = vmatpush1.msra.mxu0 0.0
    %2369 = vmatprep.subr.mxu0 0.0
    %2370 = vmatpush1.msra.mxu0 0.0
    %2371 = vmatprep.subr.mxu0 0.0
    %2372 = vmatpush1.msra.mxu0 0.0
    %2373 = vmatprep.subr.mxu0 0.0
    %2374 = vmatpush1.msra.mxu0 0.0
    %2375 = vmatprep.mubr.f32.mxu0 0.0
    %2376 = vmatmul.mubr.f32.gmra.mrb[0].mxu0 %v2306
    %v2377 = vpop.f32.mrb[0].mxu0
    %v2378 = vadd.f32 0.0, %v2377
    %v2379 = vpop.f32.mrb[0].mxu0
    %2380 = vmatprep.mubr.f32.mxu0 0.0
    %2381 = vmatmul.mubr.f32.gmra.mrb[0].mxu0 %v2309
    %v2382 = vpop.f32.mrb[0].mxu0
    %v2383 = vadd.f32 0.0, %v2382
    %v2384 = vpop.f32.mrb[0].mxu0
    %2385 = vdwg.mxu0
    %2386 = vrot.lane.b32.xlu0 %v2302, 112
    %v2387 = vpop.permute.xlu0 %2386
    %2388 = vrot.lane.b32.xlu0 %v2304, 112
    %v2389 = vpop.permute.xlu0 %2388
    %2392 = vrot.lane.b32.xlu0 %v1930, 64
    %v2393 = vpop.permute.xlu0 %2392
    %2394 = vrot.lane.b32.xlu0 %v1934, 64
    %v2395 = vpop.permute.xlu0 %2394
    %v2398 = vsel %vm433, %v2387, 0
    %v2400 = vsel %vm433, %v2389, 0
    %2402 = vmatprep.subr.mxu0 0.0
    %2403 = vmatpush1.msra.mxu0 %v2393
    %2404 = vmatprep.subr.mxu0 0.0
    %2405 = vmatpush1.msra.mxu0 %v2395
    %2406 = vmatprep.subr.mxu0 0.0
    %2407 = vmatpush1.msra.mxu0 0.0
    %2408 = vmatprep.subr.mxu0 0.0
    %2409 = vmatpush1.msra.mxu0 0.0
    %2410 = vmatprep.subr.mxu0 0.0
    %2411 = vmatpush1.msra.mxu0 0.0
    %2412 = vmatprep.subr.mxu0 0.0
    %2413 = vmatpush1.msra.mxu0 0.0
    %2414 = vmatprep.subr.mxu0 0.0
    %2415 = vmatpush1.msra.mxu0 0.0
    %2416 = vmatprep.subr.mxu0 0.0
    %2417 = vmatpush1.msra.mxu0 0.0
    %2418 = vmatprep.subr.mxu0 0.0
    %2419 = vmatpush1.msra.mxu0 0.0
    %2420 = vmatprep.subr.mxu0 0.0
    %2421 = vmatpush1.msra.mxu0 0.0
    %2422 = vmatprep.subr.mxu0 0.0
    %2423 = vmatpush1.msra.mxu0 0.0
    %2424 = vmatprep.subr.mxu0 0.0
    %2425 = vmatpush1.msra.mxu0 0.0
    %2426 = vmatprep.subr.mxu0 0.0
    %2427 = vmatpush1.msra.mxu0 0.0
    %2428 = vmatprep.subr.mxu0 0.0
    %2429 = vmatpush1.msra.mxu0 0.0
    %2430 = vmatprep.subr.mxu0 0.0
    %2431 = vmatpush1.msra.mxu0 0.0
    %2432 = vmatprep.subr.mxu0 0.0
    %2433 = vmatpush1.msra.mxu0 0.0
    %2434 = vmatprep.subr.mxu0 0.0
    %2435 = vmatpush1.msra.mxu0 0.0
    %2436 = vmatprep.subr.mxu0 0.0
    %2437 = vmatpush1.msra.mxu0 0.0
    %2438 = vmatprep.subr.mxu0 0.0
    %2439 = vmatpush1.msra.mxu0 0.0
    %2440 = vmatprep.subr.mxu0 0.0
    %2441 = vmatpush1.msra.mxu0 0.0
    %2442 = vmatprep.subr.mxu0 0.0
    %2443 = vmatpush1.msra.mxu0 0.0
    %2444 = vmatprep.subr.mxu0 0.0
    %2445 = vmatpush1.msra.mxu0 0.0
    %2446 = vmatprep.subr.mxu0 0.0
    %2447 = vmatpush1.msra.mxu0 0.0
    %2448 = vmatprep.subr.mxu0 0.0
    %2449 = vmatpush1.msra.mxu0 0.0
    %2450 = vmatprep.subr.mxu0 0.0
    %2451 = vmatpush1.msra.mxu0 0.0
    %2452 = vmatprep.subr.mxu0 0.0
    %2453 = vmatpush1.msra.mxu0 0.0
    %2454 = vmatprep.subr.mxu0 0.0
    %2455 = vmatpush1.msra.mxu0 0.0
    %2456 = vmatprep.subr.mxu0 0.0
    %2457 = vmatpush1.msra.mxu0 0.0
    %2458 = vmatprep.subr.mxu0 0.0
    %2459 = vmatpush1.msra.mxu0 0.0
    %2460 = vmatprep.subr.mxu0 0.0
    %2461 = vmatpush1.msra.mxu0 0.0
    %2462 = vmatprep.subr.mxu0 0.0
    %2463 = vmatpush1.msra.mxu0 0.0
    %2464 = vmatprep.subr.mxu0 0.0
    %2465 = vmatpush1.msra.mxu0 0.0
    %2466 = vmatprep.mubr.f32.mxu0 0.0
    %2467 = vmatmul.mubr.f32.gmra.mrb[0].mxu0 %v2398
    %v2468 = vpop.f32.mrb[0].mxu0
    %v2469 = vadd.f32 0.0, %v2468
    %v2470 = vpop.f32.mrb[0].mxu0
    %2471 = vmatprep.mubr.f32.mxu0 0.0
    %2472 = vmatmul.mubr.f32.gmra.mrb[0].mxu0 %v2400
    %v2473 = vpop.f32.mrb[0].mxu0
    %v2474 = vadd.f32 0.0, %v2473
    %v2475 = vpop.f32.mrb[0].mxu0
    %2476 = vdwg.mxu0
    %2477 = vrot.lane.b32.xlu0 %v2302, 96
    %v2478 = vpop.permute.xlu0 %2477
    %2479 = vrot.lane.b32.xlu0 %v2304, 96
    %v2480 = vpop.permute.xlu0 %2479
    %v2481 = vsel %vm433, %v2478, 0
    %v2483 = vsel %vm433, %v2480, 0
    %2485 = vmatprep.subr.mxu0 0.0
    %2486 = vmatpush1.msra.mxu0 %v1932
    %2487 = vmatprep.subr.mxu0 0.0
    %2488 = vmatpush1.msra.mxu0 %v1936
    %2489 = vmatprep.subr.mxu0 0.0
    %2490 = vmatpush1.msra.mxu0 0.0
    %2491 = vmatprep.subr.mxu0 0.0
    %2492 = vmatpush1.msra.mxu0 0.0
    %2493 = vmatprep.subr.mxu0 0.0
    %2494 = vmatpush1.msra.mxu0 0.0
    %2495 = vmatprep.subr.mxu0 0.0
    %2496 = vmatpush1.msra.mxu0 0.0
    %2497 = vmatprep.subr.mxu0 0.0
    %2498 = vmatpush1.msra.mxu0 0.0
    %2499 = vmatprep.subr.mxu0 0.0
    %2500 = vmatpush1.msra.mxu0 0.0
    %2501 = vmatprep.subr.mxu0 0.0
    %2502 = vmatpush1.msra.mxu0 0.0
    %2503 = vmatprep.subr.mxu0 0.0
    %2504 = vmatpush1.msra.mxu0 0.0
    %2505 = vmatprep.subr.mxu0 0.0
    %2506 = vmatpush1.msra.mxu0 0.0
    %2507 = vmatprep.subr.mxu0 0.0
    %2508 = vmatpush1.msra.mxu0 0.0
    %2509 = vmatprep.subr.mxu0 0.0
    %2510 = vmatpush1.msra.mxu0 0.0
    %2511 = vmatprep.subr.mxu0 0.0
    %2512 = vmatpush1.msra.mxu0 0.0
    %2513 = vmatprep.subr.mxu0 0.0
    %2514 = vmatpush1.msra.mxu0 0.0
    %2515 = vmatprep.subr.mxu0 0.0
    %2516 = vmatpush1.msra.mxu0 0.0
    %2517 = vmatprep.subr.mxu0 0.0
    %2518 = vmatpush1.msra.mxu0 0.0
    %2519 = vmatprep.subr.mxu0 0.0
    %2520 = vmatpush1.msra.mxu0 0.0
    %2521 = vmatprep.subr.mxu0 0.0
    %2522 = vmatpush1.msra.mxu0 0.0
    %2523 = vmatprep.subr.mxu0 0.0
    %2524 = vmatpush1.msra.mxu0 0.0
    %2525 = vmatprep.subr.mxu0 0.0
    %2526 = vmatpush1.msra.mxu0 0.0
    %2527 = vmatprep.subr.mxu0 0.0
    %2528 = vmatpush1.msra.mxu0 0.0
    %2529 = vmatprep.subr.mxu0 0.0
    %2530 = vmatpush1.msra.mxu0 0.0
    %2531 = vmatprep.subr.mxu0 0.0
    %2532 = vmatpush1.msra.mxu0 0.0
    %2533 = vmatprep.subr.mxu0 0.0
    %2534 = vmatpush1.msra.mxu0 0.0
    %2535 = vmatprep.subr.mxu0 0.0
    %2536 = vmatpush1.msra.mxu0 0.0
    %2537 = vmatprep.subr.mxu0 0.0
    %2538 = vmatpush1.msra.mxu0 0.0
    %2539 = vmatprep.subr.mxu0 0.0
    %2540 = vmatpush1.msra.mxu0 0.0
    %2541 = vmatprep.subr.mxu0 0.0
    %2542 = vmatpush1.msra.mxu0 0.0
    %2543 = vmatprep.subr.mxu0 0.0
    %2544 = vmatpush1.msra.mxu0 0.0
    %2545 = vmatprep.subr.mxu0 0.0
    %2546 = vmatpush1.msra.mxu0 0.0
    %2547 = vmatprep.subr.mxu0 0.0
    %2548 = vmatpush1.msra.mxu0 0.0
    %2549 = vmatprep.mubr.f32.mxu0 0.0
    %2550 = vmatmul.mubr.f32.gmra.mrb[0].mxu0 %v2481
    %v2551 = vpop.f32.mrb[0].mxu0
    %v2552 = vadd.f32 0.0, %v2551
    %v2553 = vpop.f32.mrb[0].mxu0
    %2554 = vmatprep.mubr.f32.mxu0 0.0
    %2555 = vmatmul.mubr.f32.gmra.mrb[0].mxu0 %v2483
    %v2556 = vpop.f32.mrb[0].mxu0
    %v2557 = vadd.f32 0.0, %v2556
    %v2558 = vpop.f32.mrb[0].mxu0
    %2559 = vdwg.mxu0
    %2560 = vrot.lane.b32.xlu0 %v2302, 80
    %v2561 = vpop.permute.xlu0 %2560
    %2562 = vrot.lane.b32.xlu0 %v2304, 80
    %v2563 = vpop.permute.xlu0 %2562
    %2566 = vrot.lane.b32.xlu0 %v1932, 64
    %v2567 = vpop.permute.xlu0 %2566
    %2568 = vrot.lane.b32.xlu0 %v1936, 64
    %v2569 = vpop.permute.xlu0 %2568
    %v2572 = vsel %vm433, %v2561, 0
    %v2574 = vsel %vm433, %v2563, 0
    %2576 = vmatprep.subr.mxu0 0.0
    %2577 = vmatpush1.msra.mxu0 %v2567
    %2578 = vmatprep.subr.mxu0 0.0
    %2579 = vmatpush1.msra.mxu0 %v2569
    %2580 = vmatprep.subr.mxu0 0.0
    %2581 = vmatpush1.msra.mxu0 0.0
    %2582 = vmatprep.subr.mxu0 0.0
    %2583 = vmatpush1.msra.mxu0 0.0
    %2584 = vmatprep.subr.mxu0 0.0
    %2585 = vmatpush1.msra.mxu0 0.0
    %2586 = vmatprep.subr.mxu0 0.0
    %2587 = vmatpush1.msra.mxu0 0.0
    %2588 = vmatprep.subr.mxu0 0.0
    %2589 = vmatpush1.msra.mxu0 0.0
    %2590 = vmatprep.subr.mxu0 0.0
    %2591 = vmatpush1.msra.mxu0 0.0
    %2592 = vmatprep.subr.mxu0 0.0
    %2593 = vmatpush1.msra.mxu0 0.0
    %2594 = vmatprep.subr.mxu0 0.0
    %2595 = vmatpush1.msra.mxu0 0.0
    %2596 = vmatprep.subr.mxu0 0.0
    %2597 = vmatpush1.msra.mxu0 0.0
    %2598 = vmatprep.subr.mxu0 0.0
    %2599 = vmatpush1.msra.mxu0 0.0
    %2600 = vmatprep.subr.mxu0 0.0
    %2601 = vmatpush1.msra.mxu0 0.0
    %2602 = vmatprep.subr.mxu0 0.0
    %2603 = vmatpush1.msra.mxu0 0.0
    %2604 = vmatprep.subr.mxu0 0.0
    %2605 = vmatpush1.msra.mxu0 0.0
    %2606 = vmatprep.subr.mxu0 0.0
    %2607 = vmatpush1.msra.mxu0 0.0
    %2608 = vmatprep.subr.mxu0 0.0
    %2609 = vmatpush1.msra.mxu0 0.0
    %2610 = vmatprep.subr.mxu0 0.0
    %2611 = vmatpush1.msra.mxu0 0.0
    %2612 = vmatprep.subr.mxu0 0.0
    %2613 = vmatpush1.msra.mxu0 0.0
    %2614 = vmatprep.subr.mxu0 0.0
    %2615 = vmatpush1.msra.mxu0 0.0
    %2616 = vmatprep.subr.mxu0 0.0
    %2617 = vmatpush1.msra.mxu0 0.0
    %2618 = vmatprep.subr.mxu0 0.0
    %2619 = vmatpush1.msra.mxu0 0.0
    %2620 = vmatprep.subr.mxu0 0.0
    %2621 = vmatpush1.msra.mxu0 0.0
    %2622 = vmatprep.subr.mxu0 0.0
    %2623 = vmatpush1.msra.mxu0 0.0
    %2624 = vmatprep.subr.mxu0 0.0
    %2625 = vmatpush1.msra.mxu0 0.0
    %2626 = vmatprep.subr.mxu0 0.0
    %2627 = vmatpush1.msra.mxu0 0.0
    %2628 = vmatprep.subr.mxu0 0.0
    %2629 = vmatpush1.msra.mxu0 0.0
    %2630 = vmatprep.subr.mxu0 0.0
    %2631 = vmatpush1.msra.mxu0 0.0
    %2632 = vmatprep.subr.mxu0 0.0
    %2633 = vmatpush1.msra.mxu0 0.0
    %2634 = vmatprep.subr.mxu0 0.0
    %2635 = vmatpush1.msra.mxu0 0.0
    %2636 = vmatprep.subr.mxu0 0.0
    %2637 = vmatpush1.msra.mxu0 0.0
    %2638 = vmatprep.subr.mxu0 0.0
    %2639 = vmatpush1.msra.mxu0 0.0
    %2640 = vmatprep.mubr.f32.mxu0 0.0
    %2641 = vmatmul.mubr.f32.gmra.mrb[0].mxu0 %v2572
    %v2642 = vpop.f32.mrb[0].mxu0
    %v2643 = vadd.f32 0.0, %v2642
    %v2644 = vpop.f32.mrb[0].mxu0
    %2645 = vmatprep.mubr.f32.mxu0 0.0
    %2646 = vmatmul.mubr.f32.gmra.mrb[0].mxu0 %v2574
    %v2647 = vpop.f32.mrb[0].mxu0
    %v2648 = vadd.f32 0.0, %v2647
    %v2649 = vpop.f32.mrb[0].mxu0
    %2650 = vdwg.mxu0
    %2653 = vrot.lane.b32.xlu0 %v2469, 64
    %v2654 = vpop.permute.xlu0 %2653
    %2655 = vrot.lane.b32.xlu0 %v2474, 64
    %v2656 = vpop.permute.xlu0 %2655
    %2661 = vrot.lane.b32.xlu0 %v2643, 64
    %v2662 = vpop.permute.xlu0 %2661
    %2663 = vrot.lane.b32.xlu0 %v2648, 64
    %v2664 = vpop.permute.xlu0 %2663
    %v2667 = vsel %vm931, %v2378, %v2654
    %v2668 = vsel %vm931, %v2383, %v2656
    %v2669 = vsel %vm931, %v2552, %v2662
    %v2670 = vsel %vm931, %v2557, %v2664
    %v2672 = vlaneseq
    %v2673 = vshrl.u32 %v2672, 7
    %v2674 = vsub.s32 0, %v2673
    %v2675 = vrot.slane %v1795, %v2674
    %v2676 = vlaneseq
    %v2677 = vshrl.u32 %v2676, 7
    %v2678 = vsub.s32 1, %v2677
    %v2679 = vrot.slane %v1795, %v2678
    %v2682 = vmul.f32 %v2667, %v2675
    %v2683 = vmul.f32 %v2669, %v2679
    %v2684 = vmul.f32 %v2668, %v2675
    %v2685 = vmul.f32 %v2670, %v2679
    %v2687 = vlaneseq
    %v2688 = vshrl.u32 %v2687, 7
    %v2689 = vsub.s32 0, %v2688
    %v2690 = vrot.slane %v1797, %v2689
    %v2691 = vlaneseq
    %v2692 = vshrl.u32 %v2691, 7
    %v2693 = vsub.s32 1, %v2692
    %v2694 = vrot.slane %v1797, %v2693
    %v2697 = vadd.f32 %v2682, %v2690
    %v2698 = vadd.f32 %v2683, %v2694
    %v2699 = vadd.f32 %v2684, %v2690
    %v2700 = vadd.f32 %v2685, %v2694
    %v2701 = vmax.f32 %v2697, 0.0
    %v2702 = vmax.f32 %v2698, 0.0
    %v2703 = vmax.f32 %v2699, 0.0
    %v2704 = vmax.f32 %v2700, 0.0
    %s2705 = scalar_lea.vmem [#allocation6], 23
    %v2706 = vld [vmem:[%s2705] ss:$8 sm:$0x3]
    %s2707 = scalar_lea.vmem [#allocation6], 32
    %v2708 = vld [vmem:[%s2707] ss:$8 sm:$0x3]
    %v2709 = vld [vmem:[#allocation6 + $0x21] ss:$0 sm:$0xff]
    %s2710 = scalar_lea.vmem [#allocation6], 34
    %v2711 = vld [vmem:[%s2710] ss:$8 sm:$0x3]
    %s2712 = scalar_lea.vmem [#allocation6], 35
    %v2713 = vld [vmem:[%s2712] ss:$8 sm:$0x3]
    %v2714 = vpack.c.bf16 %v2703, %v2701
    %v2715 = vpack.c.bf16 %v2704, %v2702
    %v2716 = vld [vmem:[#allocation9] sm:$0xff]
    %v2717 = vld [vmem:[#allocation9 + $0x8] sm:$0xff]
    %v2718 = vld [vmem:[#allocation9 + $0x10] sm:$0xff]
    %v2719 = vld [vmem:[#allocation9 + $0x18] sm:$0xff]
    %v2720 = vld [vmem:[#allocation9 + $0x20] sm:$0xff]
    %v2721 = vld [vmem:[#allocation9 + $0x28] sm:$0xff]
    %v2722 = vld [vmem:[#allocation9 + $0x30] sm:$0xff]
    %v2723 = vld [vmem:[#allocation9 + $0x38] sm:$0xff]
    %v2724 = vld [vmem:[#allocation9 + $0x40] sm:$0xff]
    %v2725 = vld [vmem:[#allocation9 + $0x48] sm:$0xff]
    %v2726 = vld [vmem:[#allocation9 + $0x50] sm:$0xff]
    %v2727 = vld [vmem:[#allocation9 + $0x58] sm:$0xff]
    %v2728 = vld [vmem:[#allocation9 + $0x60] sm:$0xff]
    %v2729 = vld [vmem:[#allocation9 + $0x68] sm:$0xff]
    %v2730 = vld [vmem:[#allocation9 + $0x70] sm:$0xff]
    %v2731 = vld [vmem:[#allocation9 + $0x78] sm:$0xff]
    %v2732 = vld [vmem:[#allocation9 + $0x80] sm:$0xff]
    %v2733 = vld [vmem:[#allocation9 + $0x88] sm:$0xff]
    %v2734 = vld [vmem:[#allocation9 + $0x90] sm:$0xff]
    %v2735 = vld [vmem:[#allocation9 + $0x98] sm:$0xff]
    %v2736 = vld [vmem:[#allocation9 + $0xa0] sm:$0xff]
    %v2737 = vld [vmem:[#allocation9 + $0xa8] sm:$0xff]
    %v2738 = vld [vmem:[#allocation9 + $0xb0] sm:$0xff]
    %v2739 = vld [vmem:[#allocation9 + $0xb8] sm:$0xff]
    %v2740 = vld [vmem:[#allocation9 + $0xc0] sm:$0xff]
    %v2741 = vld [vmem:[#allocation9 + $0xc8] sm:$0xff]
    %v2742 = vld [vmem:[#allocation9 + $0xd0] sm:$0xff]
    %v2743 = vld [vmem:[#allocation9 + $0xd8] sm:$0xff]
    %v2744 = vld [vmem:[#allocation9 + $0xe0] sm:$0xff]
    %v2745 = vld [vmem:[#allocation9 + $0xe8] sm:$0xff]
    %v2746 = vld [vmem:[#allocation9 + $0xf0] sm:$0xff]
    %v2747 = vld [vmem:[#allocation9 + $0xf8] sm:$0xff]
    %v2780 = vunpack.c.l.b16 %v2716
    %v2781 = vunpack.c.h.b16 %v2716
    %v2782 = vunpack.c.l.b16 %v2717
    %v2783 = vunpack.c.h.b16 %v2717
    %v2784 = vunpack.c.l.b16 %v2718
    %v2785 = vunpack.c.h.b16 %v2718
    %v2786 = vunpack.c.l.b16 %v2719
    %v2787 = vunpack.c.h.b16 %v2719
    %v2788 = vunpack.c.l.b16 %v2720
    %v2789 = vunpack.c.h.b16 %v2720
    %v2790 = vunpack.c.l.b16 %v2721
    %v2791 = vunpack.c.h.b16 %v2721
    %v2792 = vunpack.c.l.b16 %v2722
    %v2793 = vunpack.c.h.b16 %v2722
    %v2794 = vunpack.c.l.b16 %v2723
    %v2795 = vunpack.c.h.b16 %v2723
    %v2796 = vunpack.c.l.b16 %v2724
    %v2797 = vunpack.c.h.b16 %v2724
    %v2798 = vunpack.c.l.b16 %v2725
    %v2799 = vunpack.c.h.b16 %v2725
    %v2800 = vunpack.c.l.b16 %v2726
    %v2801 = vunpack.c.h.b16 %v2726
    %v2802 = vunpack.c.l.b16 %v2727
    %v2803 = vunpack.c.h.b16 %v2727
    %v2804 = vunpack.c.l.b16 %v2728
    %v2805 = vunpack.c.h.b16 %v2728
    %v2806 = vunpack.c.l.b16 %v2729
    %v2807 = vunpack.c.h.b16 %v2729
    %v2808 = vunpack.c.l.b16 %v2730
    %v2809 = vunpack.c.h.b16 %v2730
    %v2810 = vunpack.c.l.b16 %v2731
    %v2811 = vunpack.c.h.b16 %v2731
    %v2812 = vunpack.c.l.b16 %v2732
    %v2813 = vunpack.c.h.b16 %v2732
    %v2814 = vunpack.c.l.b16 %v2733
    %v2815 = vunpack.c.h.b16 %v2733
    %v2816 = vunpack.c.l.b16 %v2734
    %v2817 = vunpack.c.h.b16 %v2734
    %v2818 = vunpack.c.l.b16 %v2735
    %v2819 = vunpack.c.h.b16 %v2735
    %v2820 = vunpack.c.l.b16 %v2736
    %v2821 = vunpack.c.h.b16 %v2736
    %v2822 = vunpack.c.l.b16 %v2737
    %v2823 = vunpack.c.h.b16 %v2737
    %v2824 = vunpack.c.l.b16 %v2738
    %v2825 = vunpack.c.h.b16 %v2738
    %v2826 = vunpack.c.l.b16 %v2739
    %v2827 = vunpack.c.h.b16 %v2739
    %v2828 = vunpack.c.l.b16 %v2740
    %v2829 = vunpack.c.h.b16 %v2740
    %v2830 = vunpack.c.l.b16 %v2741
    %v2831 = vunpack.c.h.b16 %v2741
    %v2832 = vunpack.c.l.b16 %v2742
    %v2833 = vunpack.c.h.b16 %v2742
    %v2834 = vunpack.c.l.b16 %v2743
    %v2835 = vunpack.c.h.b16 %v2743
    %v2836 = vunpack.c.l.b16 %v2744
    %v2837 = vunpack.c.h.b16 %v2744
    %v2838 = vunpack.c.l.b16 %v2745
    %v2839 = vunpack.c.h.b16 %v2745
    %v2840 = vunpack.c.l.b16 %v2746
    %v2841 = vunpack.c.h.b16 %v2746
    %v2842 = vunpack.c.l.b16 %v2747
    %v2843 = vunpack.c.h.b16 %v2747
    %v2844 = vpack.c.b16 %v2782, %v2780
    %v2845 = vpack.c.b16 %v2783, %v2781
    %v2846 = vpack.c.b16 %v2786, %v2784
    %v2847 = vpack.c.b16 %v2787, %v2785
    %v2848 = vpack.c.b16 %v2790, %v2788
    %v2849 = vpack.c.b16 %v2791, %v2789
    %v2850 = vpack.c.b16 %v2794, %v2792
    %v2851 = vpack.c.b16 %v2795, %v2793
    %v2852 = vpack.c.b16 %v2798, %v2796
    %v2853 = vpack.c.b16 %v2799, %v2797
    %v2854 = vpack.c.b16 %v2802, %v2800
    %v2855 = vpack.c.b16 %v2803, %v2801
    %v2856 = vpack.c.b16 %v2806, %v2804
    %v2857 = vpack.c.b16 %v2807, %v2805
    %v2858 = vpack.c.b16 %v2810, %v2808
    %v2859 = vpack.c.b16 %v2811, %v2809
    %v2860 = vpack.c.b16 %v2814, %v2812
    %v2861 = vpack.c.b16 %v2815, %v2813
    %v2862 = vpack.c.b16 %v2818, %v2816
    %v2863 = vpack.c.b16 %v2819, %v2817
    %v2864 = vpack.c.b16 %v2822, %v2820
    %v2865 = vpack.c.b16 %v2823, %v2821
    %v2866 = vpack.c.b16 %v2826, %v2824
    %v2867 = vpack.c.b16 %v2827, %v2825
    %v2868 = vpack.c.b16 %v2830, %v2828
    %v2869 = vpack.c.b16 %v2831, %v2829
    %v2870 = vpack.c.b16 %v2834, %v2832
    %v2871 = vpack.c.b16 %v2835, %v2833
    %v2872 = vpack.c.b16 %v2838, %v2836
    %v2873 = vpack.c.b16 %v2839, %v2837
    %v2874 = vpack.c.b16 %v2842, %v2840
    %v2875 = vpack.c.b16 %v2843, %v2841
    %2908 = vmatprep.subr.bf16.mxu0 %v2845
    %2909 = vmatpush1.bf16.msra.mxu0 %v2844
    %2910 = vmatprep.subr.bf16.mxu0 %v2847
    %2911 = vmatpush1.bf16.msra.mxu0 %v2846
    %2912 = vmatprep.subr.bf16.mxu0 %v2849
    %2913 = vmatpush1.bf16.msra.mxu0 %v2848
    %2914 = vmatprep.subr.bf16.mxu0 %v2851
    %2915 = vmatpush1.bf16.msra.mxu0 %v2850
    %2916 = vmatprep.subr.bf16.mxu0 %v2853
    %2917 = vmatpush1.bf16.msra.mxu0 %v2852
    %2918 = vmatprep.subr.bf16.mxu0 %v2855
    %2919 = vmatpush1.bf16.msra.mxu0 %v2854
    %2920 = vmatprep.subr.bf16.mxu0 %v2857
    %2921 = vmatpush1.bf16.msra.mxu0 %v2856
    %2922 = vmatprep.subr.bf16.mxu0 %v2859
    %2923 = vmatpush1.bf16.msra.mxu0 %v2858
    %2924 = vmatprep.subr.bf16.mxu0 %v2861
    %2925 = vmatpush1.bf16.msra.mxu0 %v2860
    %2926 = vmatprep.subr.bf16.mxu0 %v2863
    %2927 = vmatpush1.bf16.msra.mxu0 %v2862
    %2928 = vmatprep.subr.bf16.mxu0 %v2865
    %2929 = vmatpush1.bf16.msra.mxu0 %v2864
    %2930 = vmatprep.subr.bf16.mxu0 %v2867
    %2931 = vmatpush1.bf16.msra.mxu0 %v2866
    %2932 = vmatprep.subr.bf16.mxu0 %v2869
    %2933 = vmatpush1.bf16.msra.mxu0 %v2868
    %2934 = vmatprep.subr.bf16.mxu0 %v2871
    %2935 = vmatpush1.bf16.msra.mxu0 %v2870
    %2936 = vmatprep.subr.bf16.mxu0 %v2873
    %2937 = vmatpush1.bf16.msra.mxu0 %v2872
    %2938 = vmatprep.subr.bf16.mxu0 %v2875
    %2939 = vmatpush1.bf16.msra.mxu0 %v2874
    %2940 = vmatprep.mubr.bf16.mxu0 %v2715
    %2941 = vmatmul.mubr.bf16.gmra.mrb[0].mxu0 %v2714
    %v2942 = vpop.f32.mrb[0].mxu0
    %v2943 = vadd.f32 0.0, %v2942
    %v2944 = vpop.f32.mrb[0].mxu0
    %v2945 = vadd.f32 0.0, %v2944
    %v2946 = vpop.f32.mrb[0].mxu0
    %v2947 = vadd.f32 0.0, %v2946
    %v2948 = vpop.f32.mrb[0].mxu0
    %v2949 = vadd.f32 0.0, %v2948
    %2950 = vdwg.mxu0
    %v2952 = vlaneseq
    %v2953 = vshrl.u32 %v2952, 7
    %v2954 = vsub.s32 0, %v2953
    %v2955 = vrot.slane %v2706, %v2954
    %v2956 = vlaneseq
    %v2957 = vshrl.u32 %v2956, 7
    %v2958 = vsub.s32 1, %v2957
    %v2959 = vrot.slane %v2706, %v2958
    %v2962 = vmul.f32 %v2943, %v2955
    %v2963 = vmul.f32 %v2945, %v2959
    %v2964 = vmul.f32 %v2947, %v2955
    %v2965 = vmul.f32 %v2949, %v2959
    %v2967 = vlaneseq
    %v2968 = vshrl.u32 %v2967, 7
    %v2969 = vsub.s32 0, %v2968
    %v2970 = vrot.slane %v2708, %v2969
    %v2971 = vlaneseq
    %v2972 = vshrl.u32 %v2971, 7
    %v2973 = vsub.s32 1, %v2972
    %v2974 = vrot.slane %v2708, %v2973
    %v2977 = vmul.f32 %v2943, %v2970
    %v2978 = vmul.f32 %v2945, %v2974
    %v2979 = vmul.f32 %v2947, %v2970
    %v2980 = vmul.f32 %v2949, %v2974
    %v2981 = vsel %vm931, %v2962, 0.0
    %2982 = vadd.xlane.f32.xlu0 %v2981
    %v2983 = vpop.xlane.xlu0 %2982
    %v2984 = vsel %vm931, %v2964, 0.0
    %2985 = vadd.xlane.f32.xlu0 %v2984
    %v2986 = vpop.xlane.xlu0 %2985
    %2987 = vxpose.xlu0.b32.start [1/16] %v2983, 128
    %2988 = vxpose.xlu0.b32.cont [2/16] %v2986, 128
    %2989 = vxpose.xlu0.b32.cont [3/16] 0.0, 128
    %2990 = vxpose.xlu0.b32.cont [4/16] 0.0, 128
    %2991 = vxpose.xlu0.b32.cont [5/16] 0.0, 128
    %2992 = vxpose.xlu0.b32.cont [6/16] 0.0, 128
    %2993 = vxpose.xlu0.b32.cont [7/16] 0.0, 128
    %2994 = vxpose.xlu0.b32.cont [8/16] 0.0, 128
    %2995 = vxpose.xlu0.b32.cont [9/16] 0.0, 128
    %2996 = vxpose.xlu0.b32.cont [10/16] 0.0, 128
    %2997 = vxpose.xlu0.b32.cont [11/16] 0.0, 128
    %2998 = vxpose.xlu0.b32.cont [12/16] 0.0, 128
    %2999 = vxpose.xlu0.b32.cont [13/16] 0.0, 128
    %3000 = vxpose.xlu0.b32.cont [14/16] 0.0, 128
    %3001 = vxpose.xlu0.b32.cont [15/16] 0.0, 128
    %3002 = vxpose.xlu0.b32.end [16/16] 0.0, 128
    %v3003 = vpop.trf.xlu0
    %v3004 = vpop.trf.xlu0
    %v3005 = vpop.trf.xlu0
    %v3006 = vpop.trf.xlu0
    %v3007 = vpop.trf.xlu0
    %v3008 = vpop.trf.xlu0
    %v3009 = vpop.trf.xlu0
    %v3010 = vpop.trf.xlu0
    %v3011 = vpop.trf.xlu0
    %v3012 = vpop.trf.xlu0
    %v3013 = vpop.trf.xlu0
    %v3014 = vpop.trf.xlu0
    %v3015 = vpop.trf.xlu0
    %v3016 = vpop.trf.xlu0
    %v3017 = vpop.trf.xlu0
    %v3018 = vpop.trf.xlu0
    %v3019 = vsel %vm931, %v2977, 0.0
    %3020 = vadd.xlane.f32.xlu0 %v3019
    %v3021 = vpop.xlane.xlu0 %3020
    %v3022 = vsel %vm931, %v2979, 0.0
    %3023 = vadd.xlane.f32.xlu0 %v3022
    %v3024 = vpop.xlane.xlu0 %3023
    %3027 = vrot.lane.b32.xlu0 %v2962, 64
    %v3028 = vpop.permute.xlu0 %3027
    %3029 = vrot.lane.b32.xlu0 %v2964, 64
    %v3030 = vpop.permute.xlu0 %3029
    %v3033 = vsel %vm931, %v3028, 0.0
    %3034 = vadd.xlane.f32.xlu0 %v3033
    %v3035 = vpop.xlane.xlu0 %3034
    %v3036 = vsel %vm931, %v3030, 0.0
    %3037 = vadd.xlane.f32.xlu0 %v3036
    %v3038 = vpop.xlane.xlu0 %3037
    %3039 = vxpose.xlu0.b32.start [1/16] %v3035, 128
    %3040 = vxpose.xlu0.b32.cont [2/16] %v3038, 128
    %3041 = vxpose.xlu0.b32.cont [3/16] 0.0, 128
    %3042 = vxpose.xlu0.b32.cont [4/16] 0.0, 128
    %3043 = vxpose.xlu0.b32.cont [5/16] 0.0, 128
    %3044 = vxpose.xlu0.b32.cont [6/16] 0.0, 128
    %3045 = vxpose.xlu0.b32.cont [7/16] 0.0, 128
    %3046 = vxpose.xlu0.b32.cont [8/16] 0.0, 128
    %3047 = vxpose.xlu0.b32.cont [9/16] 0.0, 128
    %3048 = vxpose.xlu0.b32.cont [10/16] 0.0, 128
    %3049 = vxpose.xlu0.b32.cont [11/16] 0.0, 128
    %3050 = vxpose.xlu0.b32.cont [12/16] 0.0, 128
    %3051 = vxpose.xlu0.b32.cont [13/16] 0.0, 128
    %3052 = vxpose.xlu0.b32.cont [14/16] 0.0, 128
    %3053 = vxpose.xlu0.b32.cont [15/16] 0.0, 128
    %3054 = vxpose.xlu0.b32.end [16/16] 0.0, 128
    %v3055 = vpop.trf.xlu0
    %v3056 = vpop.trf.xlu0
    %v3057 = vpop.trf.xlu0
    %v3058 = vpop.trf.xlu0
    %v3059 = vpop.trf.xlu0
    %v3060 = vpop.trf.xlu0
    %v3061 = vpop.trf.xlu0
    %v3062 = vpop.trf.xlu0
    %v3063 = vpop.trf.xlu0
    %v3064 = vpop.trf.xlu0
    %v3065 = vpop.trf.xlu0
    %v3066 = vpop.trf.xlu0
    %v3067 = vpop.trf.xlu0
    %v3068 = vpop.trf.xlu0
    %v3069 = vpop.trf.xlu0
    %v3070 = vpop.trf.xlu0
    %3073 = vrot.lane.b32.xlu0 %v2977, 64
    %v3074 = vpop.permute.xlu0 %3073
    %3075 = vrot.lane.b32.xlu0 %v2979, 64
    %v3076 = vpop.permute.xlu0 %3075
    %v3079 = vsel %vm931, %v3074, 0.0
    %3080 = vadd.xlane.f32.xlu0 %v3079
    %v3081 = vpop.xlane.xlu0 %3080
    %v3082 = vsel %vm931, %v3076, 0.0
    %3083 = vadd.xlane.f32.xlu0 %v3082
    %v3084 = vpop.xlane.xlu0 %3083
    %v3085 = vsel %vm931, %v2963, 0.0
    %3086 = vadd.xlane.f32.xlu0 %v3085
    %v3087 = vpop.xlane.xlu0 %3086
    %v3088 = vsel %vm931, %v2965, 0.0
    %3089 = vadd.xlane.f32.xlu0 %v3088
    %v3090 = vpop.xlane.xlu0 %3089
    %3091 = vxpose.xlu0.b32.start [1/16] %v3087, 128
    %3092 = vxpose.xlu0.b32.cont [2/16] %v3090, 128
    %3093 = vxpose.xlu0.b32.cont [3/16] 0.0, 128
    %3094 = vxpose.xlu0.b32.cont [4/16] 0.0, 128
    %3095 = vxpose.xlu0.b32.cont [5/16] 0.0, 128
    %3096 = vxpose.xlu0.b32.cont [6/16] 0.0, 128
    %3097 = vxpose.xlu0.b32.cont [7/16] 0.0, 128
    %3098 = vxpose.xlu0.b32.cont [8/16] 0.0, 128
    %3099 = vxpose.xlu0.b32.cont [9/16] 0.0, 128
    %3100 = vxpose.xlu0.b32.cont [10/16] 0.0, 128
    %3101 = vxpose.xlu0.b32.cont [11/16] 0.0, 128
    %3102 = vxpose.xlu0.b32.cont [12/16] 0.0, 128
    %3103 = vxpose.xlu0.b32.cont [13/16] 0.0, 128
    %3104 = vxpose.xlu0.b32.cont [14/16] 0.0, 128
    %3105 = vxpose.xlu0.b32.cont [15/16] 0.0, 128
    %3106 = vxpose.xlu0.b32.end [16/16] 0.0, 128
    %v3107 = vpop.trf.xlu0
    %v3108 = vpop.trf.xlu0
    %v3109 = vpop.trf.xlu0
    %v3110 = vpop.trf.xlu0
    %v3111 = vpop.trf.xlu0
    %v3112 = vpop.trf.xlu0
    %v3113 = vpop.trf.xlu0
    %v3114 = vpop.trf.xlu0
    %v3115 = vpop.trf.xlu0
    %v3116 = vpop.trf.xlu0
    %v3117 = vpop.trf.xlu0
    %v3118 = vpop.trf.xlu0
    %v3119 = vpop.trf.xlu0
    %v3120 = vpop.trf.xlu0
    %v3121 = vpop.trf.xlu0
    %v3122 = vpop.trf.xlu0
    %v3123 = vsel %vm931, %v2978, 0.0
    %3124 = vadd.xlane.f32.xlu0 %v3123
    %v3125 = vpop.xlane.xlu0 %3124
    %v3126 = vsel %vm931, %v2980, 0.0
    %3127 = vadd.xlane.f32.xlu0 %v3126
    %v3128 = vpop.xlane.xlu0 %3127
    %3131 = vrot.lane.b32.xlu0 %v2963, 64
    %v3132 = vpop.permute.xlu0 %3131
    %3133 = vrot.lane.b32.xlu0 %v2965, 64
    %v3134 = vpop.permute.xlu0 %3133
    %v3137 = vsel %vm931, %v3132, 0.0
    %3138 = vadd.xlane.f32.xlu0 %v3137
    %v3139 = vpop.xlane.xlu0 %3138
    %v3140 = vsel %vm931, %v3134, 0.0
    %3141 = vadd.xlane.f32.xlu0 %v3140
    %v3142 = vpop.xlane.xlu0 %3141
    %3143 = vxpose.xlu0.b32.start [1/16] %v3139, 128
    %3144 = vxpose.xlu0.b32.cont [2/16] %v3142, 128
    %3145 = vxpose.xlu0.b32.cont [3/16] 0.0, 128
    %3146 = vxpose.xlu0.b32.cont [4/16] 0.0, 128
    %3147 = vxpose.xlu0.b32.cont [5/16] 0.0, 128
    %3148 = vxpose.xlu0.b32.cont [6/16] 0.0, 128
    %3149 = vxpose.xlu0.b32.cont [7/16] 0.0, 128
    %3150 = vxpose.xlu0.b32.cont [8/16] 0.0, 128
    %3151 = vxpose.xlu0.b32.cont [9/16] 0.0, 128
    %3152 = vxpose.xlu0.b32.cont [10/16] 0.0, 128
    %3153 = vxpose.xlu0.b32.cont [11/16] 0.0, 128
    %3154 = vxpose.xlu0.b32.cont [12/16] 0.0, 128
    %3155 = vxpose.xlu0.b32.cont [13/16] 0.0, 128
    %3156 = vxpose.xlu0.b32.cont [14/16] 0.0, 128
    %3157 = vxpose.xlu0.b32.cont [15/16] 0.0, 128
    %3158 = vxpose.xlu0.b32.end [16/16] 0.0, 128
    %v3159 = vpop.trf.xlu0
    %v3160 = vpop.trf.xlu0
    %v3161 = vpop.trf.xlu0
    %v3162 = vpop.trf.xlu0
    %v3163 = vpop.trf.xlu0
    %v3164 = vpop.trf.xlu0
    %v3165 = vpop.trf.xlu0
    %v3166 = vpop.trf.xlu0
    %v3167 = vpop.trf.xlu0
    %v3168 = vpop.trf.xlu0
    %v3169 = vpop.trf.xlu0
    %v3170 = vpop.trf.xlu0
    %v3171 = vpop.trf.xlu0
    %v3172 = vpop.trf.xlu0
    %v3173 = vpop.trf.xlu0
    %v3174 = vpop.trf.xlu0
    %3177 = vrot.lane.b32.xlu0 %v2978, 64
    %v3178 = vpop.permute.xlu0 %3177
    %3179 = vrot.lane.b32.xlu0 %v2980, 64
    %v3180 = vpop.permute.xlu0 %3179
    %v3183 = vsel %vm931, %v3178, 0.0
    %3184 = vadd.xlane.f32.xlu0 %v3183
    %v3185 = vpop.xlane.xlu0 %3184
    %v3186 = vsel %vm931, %v3180, 0.0
    %3187 = vadd.xlane.f32.xlu0 %v3186
    %v3188 = vpop.xlane.xlu0 %3187
    %3190 = vrot.lane.b32.xlu0 %v3055, 16
    %v3191 = vpop.permute.xlu0 %3190
    %3194 = vrot.lane.b32.xlu0 %v3107, 32
    %v3195 = vpop.permute.xlu0 %3194
    %3198 = vrot.lane.b32.xlu0 %v3159, 48
    %v3199 = vpop.permute.xlu0 %3198
    %v3201 = vsel %vm433, %v3003, %v3191
    %v3202 = vsel %vm204, %v3201, %v3195
    %v3203 = vsel %vm436, %v3202, %v3199
    %v3204 = vsel %vm433, %v3021, %v3081
    %v3205 = vsel %vm433, %v3024, %v3084
    %v3206 = vsel %vm204, %v3204, %v3125
    %v3207 = vsel %vm204, %v3205, %v3128
    %v3208 = vsel %vm436, %v3206, %v3185
    %v3209 = vsel %vm436, %v3207, %v3188
    %v3210 = vlaneseq
    %v3211 = vshrl.u32 %v3210, 7
    %v3212 = vsub.s32 0, %v3211
    %v3213 = vrot.slane %v3203, %v3212
    %v3214 = vadd.f32 %v3208, %v3213
    %v3215 = vadd.f32 %v3209, %v3213
    %v3216 = vmul.f32 %v140, %v2709
    %v3217 = vmul.f32 %v141, %v2709
    %v3218 = vadd.f32 %v3214, %v3216
    %v3219 = vadd.f32 %v3215, %v3217
    %vm3220 = vcmp.gt.f32.partialorder %v3218, 0.0
    %vm3221 = vcmp.gt.f32.partialorder %v3219, 0.0
    %v3222 = vmul.f32 %v3218, 0.2
    %v3223 = vmul.f32 %v3219, 0.2
    %v3224 = vsel %vm3220, %v3218, %v3222
    %v3225 = vsel %vm3221, %v3219, %v3223
    %v3226 = vadd.f32 %v3224, %v138
    %v3227 = vadd.f32 %v3225, %v139
    %v3228 = vsel %vm433, %v3226, -inf
    %3229 = vmax.xlane.f32.xlu0 %v3228
    %v3230 = vpop.xlane.xlu0 %3229
    %v3231 = vsel %vm433, %v3227, -inf
    %3232 = vmax.xlane.f32.xlu0 %v3231
    %v3233 = vpop.xlane.xlu0 %3232
    %v3234 = vsel %vm468, %v3226, -inf
    %3235 = vmax.xlane.f32.xlu0 %v3234
    %v3236 = vpop.xlane.xlu0 %3235
    %v3237 = vsel %vm468, %v3227, -inf
    %3238 = vmax.xlane.f32.xlu0 %v3237
    %v3239 = vpop.xlane.xlu0 %3238
    %v3240 = vsel %vm475, %v3226, -inf
    %3241 = vmax.xlane.f32.xlu0 %v3240
    %v3242 = vpop.xlane.xlu0 %3241
    %v3243 = vsel %vm475, %v3227, -inf
    %3244 = vmax.xlane.f32.xlu0 %v3243
    %v3245 = vpop.xlane.xlu0 %3244
    %v3246 = vsel %vm482, %v3226, -inf
    %3247 = vmax.xlane.f32.xlu0 %v3246
    %v3248 = vpop.xlane.xlu0 %3247
    %v3249 = vsel %vm482, %v3227, -inf
    %3250 = vmax.xlane.f32.xlu0 %v3249
    %v3251 = vpop.xlane.xlu0 %3250
    %v3252 = vsel %vm433, %v3230, %v3236
    %v3253 = vsel %vm433, %v3233, %v3239
    %v3254 = vsel %vm204, %v3252, %v3242
    %v3255 = vsel %vm204, %v3253, %v3245
    %v3256 = vsel %vm436, %v3254, %v3248
    %v3257 = vsel %vm436, %v3255, %v3251
    %v3258 = vsub.f32 %v3226, %v3256
    %v3259 = vsub.f32 %v3227, %v3257
    %v3260 = vmul.f32 %v3258, 1.442695
    %v3261 = vpow.pop %v3260
    %v3262 = vmul.f32 %v3259, 1.442695
    %v3263 = vpow.pop %v3262
    %v3264 = vsel %vm433, %v3261, 0.0
    %3265 = vadd.xlane.f32.xlu0 %v3264
    %v3266 = vpop.xlane.xlu0 %3265
    %v3267 = vsel %vm433, %v3263, 0.0
    %3268 = vadd.xlane.f32.xlu0 %v3267
    %v3269 = vpop.xlane.xlu0 %3268
    %3272 = vrot.lane.b32.xlu0 %v3261, 112
    %v3273 = vpop.permute.xlu0 %3272
    %3274 = vrot.lane.b32.xlu0 %v3263, 112
    %v3275 = vpop.permute.xlu0 %3274
    %v3278 = vsel %vm433, %v3273, 0.0
    %3279 = vadd.xlane.f32.xlu0 %v3278
    %v3280 = vpop.xlane.xlu0 %3279
    %v3281 = vsel %vm433, %v3275, 0.0
    %3282 = vadd.xlane.f32.xlu0 %v3281
    %v3283 = vpop.xlane.xlu0 %3282
    %3284 = vrot.lane.b32.xlu0 %v3261, 96
    %v3285 = vpop.permute.xlu0 %3284
    %3286 = vrot.lane.b32.xlu0 %v3263, 96
    %v3287 = vpop.permute.xlu0 %3286
    %v3290 = vsel %vm433, %v3285, 0.0
    %3291 = vadd.xlane.f32.xlu0 %v3290
    %v3292 = vpop.xlane.xlu0 %3291
    %v3293 = vsel %vm433, %v3287, 0.0
    %3294 = vadd.xlane.f32.xlu0 %v3293
    %v3295 = vpop.xlane.xlu0 %3294
    %3296 = vrot.lane.b32.xlu0 %v3261, 80
    %v3297 = vpop.permute.xlu0 %3296
    %3298 = vrot.lane.b32.xlu0 %v3263, 80
    %v3299 = vpop.permute.xlu0 %3298
    %v3302 = vsel %vm433, %v3297, 0.0
    %3303 = vadd.xlane.f32.xlu0 %v3302
    %v3304 = vpop.xlane.xlu0 %3303
    %v3305 = vsel %vm433, %v3299, 0.0
    %3306 = vadd.xlane.f32.xlu0 %v3305
    %v3307 = vpop.xlane.xlu0 %3306
    %v3308 = vsel %vm433, %v3266, %v3280
    %v3309 = vsel %vm433, %v3269, %v3283
    %v3310 = vsel %vm204, %v3308, %v3292
    %v3311 = vsel %vm204, %v3309, %v3295
    %v3312 = vsel %vm436, %v3310, %v3304
    %v3313 = vsel %vm436, %v3311, %v3307
    %v3314 = vrcp.pop %v3312
    %v3315 = vmul.f32 %v3261, %v3314
    %v3316 = vrcp.pop %v3313
    %v3317 = vmul.f32 %v3263, %v3316
    %v3319 = vsel %vm433, %v3315, 0
    %v3322 = vsel %vm433, %v3317, 0
    %3324 = vmatprep.subr.mxu0 0.0
    %3325 = vmatpush1.msra.mxu0 %v2943
    %3326 = vmatprep.subr.mxu0 0.0
    %3327 = vmatpush1.msra.mxu0 %v2947
    %3328 = vmatprep.subr.mxu0 0.0
    %3329 = vmatpush1.msra.mxu0 0.0
    %3330 = vmatprep.subr.mxu0 0.0
    %3331 = vmatpush1.msra.mxu0 0.0
    %3332 = vmatprep.subr.mxu0 0.0
    %3333 = vmatpush1.msra.mxu0 0.0
    %3334 = vmatprep.subr.mxu0 0.0
    %3335 = vmatpush1.msra.mxu0 0.0
    %3336 = vmatprep.subr.mxu0 0.0
    %3337 = vmatpush1.msra.mxu0 0.0
    %3338 = vmatprep.subr.mxu0 0.0
    %3339 = vmatpush1.msra.mxu0 0.0
    %3340 = vmatprep.subr.mxu0 0.0
    %3341 = vmatpush1.msra.mxu0 0.0
    %3342 = vmatprep.subr.mxu0 0.0
    %3343 = vmatpush1.msra.mxu0 0.0
    %3344 = vmatprep.subr.mxu0 0.0
    %3345 = vmatpush1.msra.mxu0 0.0
    %3346 = vmatprep.subr.mxu0 0.0
    %3347 = vmatpush1.msra.mxu0 0.0
    %3348 = vmatprep.subr.mxu0 0.0
    %3349 = vmatpush1.msra.mxu0 0.0
    %3350 = vmatprep.subr.mxu0 0.0
    %3351 = vmatpush1.msra.mxu0 0.0
    %3352 = vmatprep.subr.mxu0 0.0
    %3353 = vmatpush1.msra.mxu0 0.0
    %3354 = vmatprep.subr.mxu0 0.0
    %3355 = vmatpush1.msra.mxu0 0.0
    %3356 = vmatprep.subr.mxu0 0.0
    %3357 = vmatpush1.msra.mxu0 0.0
    %3358 = vmatprep.subr.mxu0 0.0
    %3359 = vmatpush1.msra.mxu0 0.0
    %3360 = vmatprep.subr.mxu0 0.0
    %3361 = vmatpush1.msra.mxu0 0.0
    %3362 = vmatprep.subr.mxu0 0.0
    %3363 = vmatpush1.msra.mxu0 0.0
    %3364 = vmatprep.subr.mxu0 0.0
    %3365 = vmatpush1.msra.mxu0 0.0
    %3366 = vmatprep.subr.mxu0 0.0
    %3367 = vmatpush1.msra.mxu0 0.0
    %3368 = vmatprep.subr.mxu0 0.0
    %3369 = vmatpush1.msra.mxu0 0.0
    %3370 = vmatprep.subr.mxu0 0.0
    %3371 = vmatpush1.msra.mxu0 0.0
    %3372 = vmatprep.subr.mxu0 0.0
    %3373 = vmatpush1.msra.mxu0 0.0
    %3374 = vmatprep.subr.mxu0 0.0
    %3375 = vmatpush1.msra.mxu0 0.0
    %3376 = vmatprep.subr.mxu0 0.0
    %3377 = vmatpush1.msra.mxu0 0.0
    %3378 = vmatprep.subr.mxu0 0.0
    %3379 = vmatpush1.msra.mxu0 0.0
    %3380 = vmatprep.subr.mxu0 0.0
    %3381 = vmatpush1.msra.mxu0 0.0
    %3382 = vmatprep.subr.mxu0 0.0
    %3383 = vmatpush1.msra.mxu0 0.0
    %3384 = vmatprep.subr.mxu0 0.0
    %3385 = vmatpush1.msra.mxu0 0.0
    %3386 = vmatprep.subr.mxu0 0.0
    %3387 = vmatpush1.msra.mxu0 0.0
    %3388 = vmatprep.mubr.f32.mxu0 0.0
    %3389 = vmatmul.mubr.f32.gmra.mrb[0].mxu0 %v3319
    %v3390 = vpop.f32.mrb[0].mxu0
    %v3391 = vadd.f32 0.0, %v3390
    %v3392 = vpop.f32.mrb[0].mxu0
    %3393 = vmatprep.mubr.f32.mxu0 0.0
    %3394 = vmatmul.mubr.f32.gmra.mrb[0].mxu0 %v3322
    %v3395 = vpop.f32.mrb[0].mxu0
    %v3396 = vadd.f32 0.0, %v3395
    %v3397 = vpop.f32.mrb[0].mxu0
    %3398 = vdwg.mxu0
    %3399 = vrot.lane.b32.xlu0 %v3315, 112
    %v3400 = vpop.permute.xlu0 %3399
    %3401 = vrot.lane.b32.xlu0 %v3317, 112
    %v3402 = vpop.permute.xlu0 %3401
    %3405 = vrot.lane.b32.xlu0 %v2943, 64
    %v3406 = vpop.permute.xlu0 %3405
    %3407 = vrot.lane.b32.xlu0 %v2947, 64
    %v3408 = vpop.permute.xlu0 %3407
    %v3411 = vsel %vm433, %v3400, 0
    %v3413 = vsel %vm433, %v3402, 0
    %3415 = vmatprep.subr.mxu0 0.0
    %3416 = vmatpush1.msra.mxu0 %v3406
    %3417 = vmatprep.subr.mxu0 0.0
    %3418 = vmatpush1.msra.mxu0 %v3408
    %3419 = vmatprep.subr.mxu0 0.0
    %3420 = vmatpush1.msra.mxu0 0.0
    %3421 = vmatprep.subr.mxu0 0.0
    %3422 = vmatpush1.msra.mxu0 0.0
    %3423 = vmatprep.subr.mxu0 0.0
    %3424 = vmatpush1.msra.mxu0 0.0
    %3425 = vmatprep.subr.mxu0 0.0
    %3426 = vmatpush1.msra.mxu0 0.0
    %3427 = vmatprep.subr.mxu0 0.0
    %3428 = vmatpush1.msra.mxu0 0.0
    %3429 = vmatprep.subr.mxu0 0.0
    %3430 = vmatpush1.msra.mxu0 0.0
    %3431 = vmatprep.subr.mxu0 0.0
    %3432 = vmatpush1.msra.mxu0 0.0
    %3433 = vmatprep.subr.mxu0 0.0
    %3434 = vmatpush1.msra.mxu0 0.0
    %3435 = vmatprep.subr.mxu0 0.0
    %3436 = vmatpush1.msra.mxu0 0.0
    %3437 = vmatprep.subr.mxu0 0.0
    %3438 = vmatpush1.msra.mxu0 0.0
    %3439 = vmatprep.subr.mxu0 0.0
    %3440 = vmatpush1.msra.mxu0 0.0
    %3441 = vmatprep.subr.mxu0 0.0
    %3442 = vmatpush1.msra.mxu0 0.0
    %3443 = vmatprep.subr.mxu0 0.0
    %3444 = vmatpush1.msra.mxu0 0.0
    %3445 = vmatprep.subr.mxu0 0.0
    %3446 = vmatpush1.msra.mxu0 0.0
    %3447 = vmatprep.subr.mxu0 0.0
    %3448 = vmatpush1.msra.mxu0 0.0
    %3449 = vmatprep.subr.mxu0 0.0
    %3450 = vmatpush1.msra.mxu0 0.0
    %3451 = vmatprep.subr.mxu0 0.0
    %3452 = vmatpush1.msra.mxu0 0.0
    %3453 = vmatprep.subr.mxu0 0.0
    %3454 = vmatpush1.msra.mxu0 0.0
    %3455 = vmatprep.subr.mxu0 0.0
    %3456 = vmatpush1.msra.mxu0 0.0
    %3457 = vmatprep.subr.mxu0 0.0
    %3458 = vmatpush1.msra.mxu0 0.0
    %3459 = vmatprep.subr.mxu0 0.0
    %3460 = vmatpush1.msra.mxu0 0.0
    %3461 = vmatprep.subr.mxu0 0.0
    %3462 = vmatpush1.msra.mxu0 0.0
    %3463 = vmatprep.subr.mxu0 0.0
    %3464 = vmatpush1.msra.mxu0 0.0
    %3465 = vmatprep.subr.mxu0 0.0
    %3466 = vmatpush1.msra.mxu0 0.0
    %3467 = vmatprep.subr.mxu0 0.0
    %3468 = vmatpush1.msra.mxu0 0.0
    %3469 = vmatprep.subr.mxu0 0.0
    %3470 = vmatpush1.msra.mxu0 0.0
    %3471 = vmatprep.subr.mxu0 0.0
    %3472 = vmatpush1.msra.mxu0 0.0
    %3473 = vmatprep.subr.mxu0 0.0
    %3474 = vmatpush1.msra.mxu0 0.0
    %3475 = vmatprep.subr.mxu0 0.0
    %3476 = vmatpush1.msra.mxu0 0.0
    %3477 = vmatprep.subr.mxu0 0.0
    %3478 = vmatpush1.msra.mxu0 0.0
    %3479 = vmatprep.mubr.f32.mxu0 0.0
    %3480 = vmatmul.mubr.f32.gmra.mrb[0].mxu0 %v3411
    %v3481 = vpop.f32.mrb[0].mxu0
    %v3482 = vadd.f32 0.0, %v3481
    %v3483 = vpop.f32.mrb[0].mxu0
    %3484 = vmatprep.mubr.f32.mxu0 0.0
    %3485 = vmatmul.mubr.f32.gmra.mrb[0].mxu0 %v3413
    %v3486 = vpop.f32.mrb[0].mxu0
    %v3487 = vadd.f32 0.0, %v3486
    %v3488 = vpop.f32.mrb[0].mxu0
    %3489 = vdwg.mxu0
    %3490 = vrot.lane.b32.xlu0 %v3315, 96
    %v3491 = vpop.permute.xlu0 %3490
    %3492 = vrot.lane.b32.xlu0 %v3317, 96
    %v3493 = vpop.permute.xlu0 %3492
    %v3494 = vsel %vm433, %v3491, 0
    %v3496 = vsel %vm433, %v3493, 0
    %3498 = vmatprep.subr.mxu0 0.0
    %3499 = vmatpush1.msra.mxu0 %v2945
    %3500 = vmatprep.subr.mxu0 0.0
    %3501 = vmatpush1.msra.mxu0 %v2949
    %3502 = vmatprep.subr.mxu0 0.0
    %3503 = vmatpush1.msra.mxu0 0.0
    %3504 = vmatprep.subr.mxu0 0.0
    %3505 = vmatpush1.msra.mxu0 0.0
    %3506 = vmatprep.subr.mxu0 0.0
    %3507 = vmatpush1.msra.mxu0 0.0
    %3508 = vmatprep.subr.mxu0 0.0
    %3509 = vmatpush1.msra.mxu0 0.0
    %3510 = vmatprep.subr.mxu0 0.0
    %3511 = vmatpush1.msra.mxu0 0.0
    %3512 = vmatprep.subr.mxu0 0.0
    %3513 = vmatpush1.msra.mxu0 0.0
    %3514 = vmatprep.subr.mxu0 0.0
    %3515 = vmatpush1.msra.mxu0 0.0
    %3516 = vmatprep.subr.mxu0 0.0
    %3517 = vmatpush1.msra.mxu0 0.0
    %3518 = vmatprep.subr.mxu0 0.0
    %3519 = vmatpush1.msra.mxu0 0.0
    %3520 = vmatprep.subr.mxu0 0.0
    %3521 = vmatpush1.msra.mxu0 0.0
    %3522 = vmatprep.subr.mxu0 0.0
    %3523 = vmatpush1.msra.mxu0 0.0
    %3524 = vmatprep.subr.mxu0 0.0
    %3525 = vmatpush1.msra.mxu0 0.0
    %3526 = vmatprep.subr.mxu0 0.0
    %3527 = vmatpush1.msra.mxu0 0.0
    %3528 = vmatprep.subr.mxu0 0.0
    %3529 = vmatpush1.msra.mxu0 0.0
    %3530 = vmatprep.subr.mxu0 0.0
    %3531 = vmatpush1.msra.mxu0 0.0
    %3532 = vmatprep.subr.mxu0 0.0
    %3533 = vmatpush1.msra.mxu0 0.0
    %3534 = vmatprep.subr.mxu0 0.0
    %3535 = vmatpush1.msra.mxu0 0.0
    %3536 = vmatprep.subr.mxu0 0.0
    %3537 = vmatpush1.msra.mxu0 0.0
    %3538 = vmatprep.subr.mxu0 0.0
    %3539 = vmatpush1.msra.mxu0 0.0
    %3540 = vmatprep.subr.mxu0 0.0
    %3541 = vmatpush1.msra.mxu0 0.0
    %3542 = vmatprep.subr.mxu0 0.0
    %3543 = vmatpush1.msra.mxu0 0.0
    %3544 = vmatprep.subr.mxu0 0.0
    %3545 = vmatpush1.msra.mxu0 0.0
    %3546 = vmatprep.subr.mxu0 0.0
    %3547 = vmatpush1.msra.mxu0 0.0
    %3548 = vmatprep.subr.mxu0 0.0
    %3549 = vmatpush1.msra.mxu0 0.0
    %3550 = vmatprep.subr.mxu0 0.0
    %3551 = vmatpush1.msra.mxu0 0.0
    %3552 = vmatprep.subr.mxu0 0.0
    %3553 = vmatpush1.msra.mxu0 0.0
    %3554 = vmatprep.subr.mxu0 0.0
    %3555 = vmatpush1.msra.mxu0 0.0
    %3556 = vmatprep.subr.mxu0 0.0
    %3557 = vmatpush1.msra.mxu0 0.0
    %3558 = vmatprep.subr.mxu0 0.0
    %3559 = vmatpush1.msra.mxu0 0.0
    %3560 = vmatprep.subr.mxu0 0.0
    %3561 = vmatpush1.msra.mxu0 0.0
    %3562 = vmatprep.mubr.f32.mxu0 0.0
    %3563 = vmatmul.mubr.f32.gmra.mrb[0].mxu0 %v3494
    %v3564 = vpop.f32.mrb[0].mxu0
    %v3565 = vadd.f32 0.0, %v3564
    %v3566 = vpop.f32.mrb[0].mxu0
    %3567 = vmatprep.mubr.f32.mxu0 0.0
    %3568 = vmatmul.mubr.f32.gmra.mrb[0].mxu0 %v3496
    %v3569 = vpop.f32.mrb[0].mxu0
    %v3570 = vadd.f32 0.0, %v3569
    %v3571 = vpop.f32.mrb[0].mxu0
    %3572 = vdwg.mxu0
    %3573 = vrot.lane.b32.xlu0 %v3315, 80
    %v3574 = vpop.permute.xlu0 %3573
    %3575 = vrot.lane.b32.xlu0 %v3317, 80
    %v3576 = vpop.permute.xlu0 %3575
    %3579 = vrot.lane.b32.xlu0 %v2945, 64
    %v3580 = vpop.permute.xlu0 %3579
    %3581 = vrot.lane.b32.xlu0 %v2949, 64
    %v3582 = vpop.permute.xlu0 %3581
    %v3585 = vsel %vm433, %v3574, 0
    %v3587 = vsel %vm433, %v3576, 0
    %3589 = vmatprep.subr.mxu0 0.0
    %3590 = vmatpush1.msra.mxu0 %v3580
    %3591 = vmatprep.subr.mxu0 0.0
    %3592 = vmatpush1.msra.mxu0 %v3582
    %3593 = vmatprep.subr.mxu0 0.0
    %3594 = vmatpush1.msra.mxu0 0.0
    %3595 = vmatprep.subr.mxu0 0.0
    %3596 = vmatpush1.msra.mxu0 0.0
    %3597 = vmatprep.subr.mxu0 0.0
    %3598 = vmatpush1.msra.mxu0 0.0
    %3599 = vmatprep.subr.mxu0 0.0
    %3600 = vmatpush1.msra.mxu0 0.0
    %3601 = vmatprep.subr.mxu0 0.0
    %3602 = vmatpush1.msra.mxu0 0.0
    %3603 = vmatprep.subr.mxu0 0.0
    %3604 = vmatpush1.msra.mxu0 0.0
    %3605 = vmatprep.subr.mxu0 0.0
    %3606 = vmatpush1.msra.mxu0 0.0
    %3607 = vmatprep.subr.mxu0 0.0
    %3608 = vmatpush1.msra.mxu0 0.0
    %3609 = vmatprep.subr.mxu0 0.0
    %3610 = vmatpush1.msra.mxu0 0.0
    %3611 = vmatprep.subr.mxu0 0.0
    %3612 = vmatpush1.msra.mxu0 0.0
    %3613 = vmatprep.subr.mxu0 0.0
    %3614 = vmatpush1.msra.mxu0 0.0
    %3615 = vmatprep.subr.mxu0 0.0
    %3616 = vmatpush1.msra.mxu0 0.0
    %3617 = vmatprep.subr.mxu0 0.0
    %3618 = vmatpush1.msra.mxu0 0.0
    %3619 = vmatprep.subr.mxu0 0.0
    %3620 = vmatpush1.msra.mxu0 0.0
    %3621 = vmatprep.subr.mxu0 0.0
    %3622 = vmatpush1.msra.mxu0 0.0
    %3623 = vmatprep.subr.mxu0 0.0
    %3624 = vmatpush1.msra.mxu0 0.0
    %3625 = vmatprep.subr.mxu0 0.0
    %3626 = vmatpush1.msra.mxu0 0.0
    %3627 = vmatprep.subr.mxu0 0.0
    %3628 = vmatpush1.msra.mxu0 0.0
    %3629 = vmatprep.subr.mxu0 0.0
    %3630 = vmatpush1.msra.mxu0 0.0
    %3631 = vmatprep.subr.mxu0 0.0
    %3632 = vmatpush1.msra.mxu0 0.0
    %3633 = vmatprep.subr.mxu0 0.0
    %3634 = vmatpush1.msra.mxu0 0.0
    %3635 = vmatprep.subr.mxu0 0.0
    %3636 = vmatpush1.msra.mxu0 0.0
    %3637 = vmatprep.subr.mxu0 0.0
    %3638 = vmatpush1.msra.mxu0 0.0
    %3639 = vmatprep.subr.mxu0 0.0
    %3640 = vmatpush1.msra.mxu0 0.0
    %3641 = vmatprep.subr.mxu0 0.0
    %3642 = vmatpush1.msra.mxu0 0.0
    %3643 = vmatprep.subr.mxu0 0.0
    %3644 = vmatpush1.msra.mxu0 0.0
    %3645 = vmatprep.subr.mxu0 0.0
    %3646 = vmatpush1.msra.mxu0 0.0
    %3647 = vmatprep.subr.mxu0 0.0
    %3648 = vmatpush1.msra.mxu0 0.0
    %3649 = vmatprep.subr.mxu0 0.0
    %3650 = vmatpush1.msra.mxu0 0.0
    %3651 = vmatprep.subr.mxu0 0.0
    %3652 = vmatpush1.msra.mxu0 0.0
    %3653 = vmatprep.mubr.f32.mxu0 0.0
    %3654 = vmatmul.mubr.f32.gmra.mrb[0].mxu0 %v3585
    %v3655 = vpop.f32.mrb[0].mxu0
    %v3656 = vadd.f32 0.0, %v3655
    %v3657 = vpop.f32.mrb[0].mxu0
    %3658 = vmatprep.mubr.f32.mxu0 0.0
    %3659 = vmatmul.mubr.f32.gmra.mrb[0].mxu0 %v3587
    %v3660 = vpop.f32.mrb[0].mxu0
    %v3661 = vadd.f32 0.0, %v3660
    %v3662 = vpop.f32.mrb[0].mxu0
    %3663 = vdwg.mxu0
    %3666 = vrot.lane.b32.xlu0 %v3482, 64
    %v3667 = vpop.permute.xlu0 %3666
    %3668 = vrot.lane.b32.xlu0 %v3487, 64
    %v3669 = vpop.permute.xlu0 %3668
    %3674 = vrot.lane.b32.xlu0 %v3656, 64
    %v3675 = vpop.permute.xlu0 %3674
    %3676 = vrot.lane.b32.xlu0 %v3661, 64
    %v3677 = vpop.permute.xlu0 %3676
    %v3680 = vsel %vm931, %v3391, %v3667
    %v3681 = vsel %vm931, %v3396, %v3669
    %v3682 = vsel %vm931, %v3565, %v3675
    %v3683 = vsel %vm931, %v3570, %v3677
    %v3685 = vlaneseq
    %v3686 = vshrl.u32 %v3685, 7
    %v3687 = vsub.s32 0, %v3686
    %v3688 = vrot.slane %v2711, %v3687
    %v3689 = vlaneseq
    %v3690 = vshrl.u32 %v3689, 7
    %v3691 = vsub.s32 1, %v3690
    %v3692 = vrot.slane %v2711, %v3691
    %v3695 = vmul.f32 %v3680, %v3688
    %v3696 = vmul.f32 %v3682, %v3692
    %v3697 = vmul.f32 %v3681, %v3688
    %v3698 = vmul.f32 %v3683, %v3692
    %v3700 = vlaneseq
    %v3701 = vshrl.u32 %v3700, 7
    %v3702 = vsub.s32 0, %v3701
    %v3703 = vrot.slane %v2713, %v3702
    %v3704 = vlaneseq
    %v3705 = vshrl.u32 %v3704, 7
    %v3706 = vsub.s32 1, %v3705
    %v3707 = vrot.slane %v2713, %v3706
    %v3710 = vadd.f32 %v3695, %v3703
    %v3711 = vadd.f32 %v3696, %v3707
    %v3712 = vadd.f32 %v3697, %v3703
    %v3713 = vadd.f32 %v3698, %v3707
    %v3714 = vmax.f32 %v3710, 0.0
    %v3715 = vmax.f32 %v3711, 0.0
    %v3716 = vmax.f32 %v3712, 0.0
    %v3717 = vmax.f32 %v3713, 0.0
    %v3718 = vld [vmem:[#allocation6 + $0x24] ss:$0 sm:$0xff]
    %v3719 = vld [vmem:[#allocation6 + $0x25] ss:$0 sm:$0xff]
    %v3720 = vld [vmem:[#allocation6 + $0x26] ss:$0 sm:$0xff]
    %v3721 = vld [vmem:[#allocation6 + $0x27] ss:$0 sm:$0xff]
    %v3722 = vld [vmem:[#allocation6 + $0x30] ss:$0 sm:$0xff]
    %v3723 = vpack.c.bf16 %v3716, %v3714
    %v3724 = vpack.c.bf16 %v3717, %v3715
    %v3725 = vld [vmem:[#allocation10] sm:$0xf]
    %v3726 = vld [vmem:[#allocation10 + $0x4] sm:$0xf]
    %v3727 = vld [vmem:[#allocation10 + $0x8] sm:$0xf]
    %v3728 = vld [vmem:[#allocation10 + $0xc] sm:$0xf]
    %v3729 = vld [vmem:[#allocation10 + $0x10] sm:$0xf]
    %v3730 = vld [vmem:[#allocation10 + $0x14] sm:$0xf]
    %v3731 = vld [vmem:[#allocation10 + $0x18] sm:$0xf]
    %v3732 = vld [vmem:[#allocation10 + $0x1c] sm:$0xf]
    %v3733 = vld [vmem:[#allocation10 + $0x20] sm:$0xf]
    %v3734 = vld [vmem:[#allocation10 + $0x24] sm:$0xf]
    %v3735 = vld [vmem:[#allocation10 + $0x28] sm:$0xf]
    %v3736 = vld [vmem:[#allocation10 + $0x2c] sm:$0xf]
    %v3737 = vld [vmem:[#allocation10 + $0x30] sm:$0xf]
    %v3738 = vld [vmem:[#allocation10 + $0x34] sm:$0xf]
    %v3739 = vld [vmem:[#allocation10 + $0x38] sm:$0xf]
    %v3740 = vld [vmem:[#allocation10 + $0x3c] sm:$0xf]
    %v3741 = vld [vmem:[#allocation10 + $0x40] sm:$0xf]
    %v3742 = vld [vmem:[#allocation10 + $0x44] sm:$0xf]
    %v3743 = vld [vmem:[#allocation10 + $0x48] sm:$0xf]
    %v3744 = vld [vmem:[#allocation10 + $0x4c] sm:$0xf]
    %v3745 = vld [vmem:[#allocation10 + $0x50] sm:$0xf]
    %v3746 = vld [vmem:[#allocation10 + $0x54] sm:$0xf]
    %v3747 = vld [vmem:[#allocation10 + $0x58] sm:$0xf]
    %v3748 = vld [vmem:[#allocation10 + $0x5c] sm:$0xf]
    %v3749 = vld [vmem:[#allocation10 + $0x60] sm:$0xf]
    %v3750 = vld [vmem:[#allocation10 + $0x64] sm:$0xf]
    %v3751 = vld [vmem:[#allocation10 + $0x68] sm:$0xf]
    %v3752 = vld [vmem:[#allocation10 + $0x6c] sm:$0xf]
    %v3753 = vld [vmem:[#allocation10 + $0x70] sm:$0xf]
    %v3754 = vld [vmem:[#allocation10 + $0x74] sm:$0xf]
    %v3755 = vld [vmem:[#allocation10 + $0x78] sm:$0xf]
    %v3756 = vld [vmem:[#allocation10 + $0x7c] sm:$0xf]
    %v3789 = vunpack.c.l.b16 %v3725
    %v3790 = vunpack.c.l.b16 %v3726
    %v3791 = vunpack.c.l.b16 %v3727
    %v3792 = vunpack.c.l.b16 %v3728
    %v3793 = vunpack.c.l.b16 %v3729
    %v3794 = vunpack.c.l.b16 %v3730
    %v3795 = vunpack.c.l.b16 %v3731
    %v3796 = vunpack.c.l.b16 %v3732
    %v3797 = vunpack.c.l.b16 %v3733
    %v3798 = vunpack.c.l.b16 %v3734
    %v3799 = vunpack.c.l.b16 %v3735
    %v3800 = vunpack.c.l.b16 %v3736
    %v3801 = vunpack.c.l.b16 %v3737
    %v3802 = vunpack.c.l.b16 %v3738
    %v3803 = vunpack.c.l.b16 %v3739
    %v3804 = vunpack.c.l.b16 %v3740
    %v3805 = vunpack.c.l.b16 %v3741
    %v3806 = vunpack.c.l.b16 %v3742
    %v3807 = vunpack.c.l.b16 %v3743
    %v3808 = vunpack.c.l.b16 %v3744
    %v3809 = vunpack.c.l.b16 %v3745
    %v3810 = vunpack.c.l.b16 %v3746
    %v3811 = vunpack.c.l.b16 %v3747
    %v3812 = vunpack.c.l.b16 %v3748
    %v3813 = vunpack.c.l.b16 %v3749
    %v3814 = vunpack.c.l.b16 %v3750
    %v3815 = vunpack.c.l.b16 %v3751
    %v3816 = vunpack.c.l.b16 %v3752
    %v3817 = vunpack.c.l.b16 %v3753
    %v3818 = vunpack.c.l.b16 %v3754
    %v3819 = vunpack.c.l.b16 %v3755
    %v3820 = vunpack.c.l.b16 %v3756
    %v3821 = vpack.c.b16 %v3790, %v3789
    %v3822 = vpack.c.b16 %v3792, %v3791
    %v3823 = vpack.c.b16 %v3794, %v3793
    %v3824 = vpack.c.b16 %v3796, %v3795
    %v3825 = vpack.c.b16 %v3798, %v3797
    %v3826 = vpack.c.b16 %v3800, %v3799
    %v3827 = vpack.c.b16 %v3802, %v3801
    %v3828 = vpack.c.b16 %v3804, %v3803
    %v3829 = vpack.c.b16 %v3806, %v3805
    %v3830 = vpack.c.b16 %v3808, %v3807
    %v3831 = vpack.c.b16 %v3810, %v3809
    %v3832 = vpack.c.b16 %v3812, %v3811
    %v3833 = vpack.c.b16 %v3814, %v3813
    %v3834 = vpack.c.b16 %v3816, %v3815
    %v3835 = vpack.c.b16 %v3818, %v3817
    %v3836 = vpack.c.b16 %v3820, %v3819
    %3853 = vmatprep.subr.bf16.mxu0 0
    %3854 = vmatpush1.bf16.msra.mxu0 %v3821
    %3855 = vmatprep.subr.bf16.mxu0 0
    %3856 = vmatpush1.bf16.msra.mxu0 %v3822
    %3857 = vmatprep.subr.bf16.mxu0 0
    %3858 = vmatpush1.bf16.msra.mxu0 %v3823
    %3859 = vmatprep.subr.bf16.mxu0 0
    %3860 = vmatpush1.bf16.msra.mxu0 %v3824
    %3861 = vmatprep.subr.bf16.mxu0 0
    %3862 = vmatpush1.bf16.msra.mxu0 %v3825
    %3863 = vmatprep.subr.bf16.mxu0 0
    %3864 = vmatpush1.bf16.msra.mxu0 %v3826
    %3865 = vmatprep.subr.bf16.mxu0 0
    %3866 = vmatpush1.bf16.msra.mxu0 %v3827
    %3867 = vmatprep.subr.bf16.mxu0 0
    %3868 = vmatpush1.bf16.msra.mxu0 %v3828
    %3869 = vmatprep.subr.bf16.mxu0 0
    %3870 = vmatpush1.bf16.msra.mxu0 %v3829
    %3871 = vmatprep.subr.bf16.mxu0 0
    %3872 = vmatpush1.bf16.msra.mxu0 %v3830
    %3873 = vmatprep.subr.bf16.mxu0 0
    %3874 = vmatpush1.bf16.msra.mxu0 %v3831
    %3875 = vmatprep.subr.bf16.mxu0 0
    %3876 = vmatpush1.bf16.msra.mxu0 %v3832
    %3877 = vmatprep.subr.bf16.mxu0 0
    %3878 = vmatpush1.bf16.msra.mxu0 %v3833
    %3879 = vmatprep.subr.bf16.mxu0 0
    %3880 = vmatpush1.bf16.msra.mxu0 %v3834
    %3881 = vmatprep.subr.bf16.mxu0 0
    %3882 = vmatpush1.bf16.msra.mxu0 %v3835
    %3883 = vmatprep.subr.bf16.mxu0 0
    %3884 = vmatpush1.bf16.msra.mxu0 %v3836
    %3885 = vmatprep.mubr.bf16.mxu0 %v3724
    %3886 = vmatmul.mubr.bf16.gmra.mrb[0].mxu0 %v3723
    %v3887 = vpop.f32.mrb[0].mxu0
    %v3888 = vadd.f32 0.0, %v3887
    %v3889 = vpop.f32.mrb[0].mxu0
    %v3890 = vpop.f32.mrb[0].mxu0
    %v3891 = vadd.f32 0.0, %v3890
    %v3892 = vpop.f32.mrb[0].mxu0
    %3893 = vdwg.mxu0
    %v3894 = vmul.f32 %v3888, %v3718
    %v3895 = vmul.f32 %v3891, %v3718
    %v3896 = vmul.f32 %v3888, %v3719
    %v3897 = vmul.f32 %v3891, %v3719
    %v3898 = vsel %vm204, %v3894, 0.0
    %3899 = vadd.xlane.f32.xlu0 %v3898
    %v3900 = vpop.xlane.xlu0 %3899
    %v3901 = vsel %vm204, %v3895, 0.0
    %3902 = vadd.xlane.f32.xlu0 %v3901
    %v3903 = vpop.xlane.xlu0 %3902
    %3904 = vxpose.xlu0.b32.start [1/16] %v3900, 128
    %3905 = vxpose.xlu0.b32.cont [2/16] %v3903, 128
    %3906 = vxpose.xlu0.b32.cont [3/16] 0.0, 128
    %3907 = vxpose.xlu0.b32.cont [4/16] 0.0, 128
    %3908 = vxpose.xlu0.b32.cont [5/16] 0.0, 128
    %3909 = vxpose.xlu0.b32.cont [6/16] 0.0, 128
    %3910 = vxpose.xlu0.b32.cont [7/16] 0.0, 128
    %3911 = vxpose.xlu0.b32.cont [8/16] 0.0, 128
    %3912 = vxpose.xlu0.b32.cont [9/16] 0.0, 128
    %3913 = vxpose.xlu0.b32.cont [10/16] 0.0, 128
    %3914 = vxpose.xlu0.b32.cont [11/16] 0.0, 128
    %3915 = vxpose.xlu0.b32.cont [12/16] 0.0, 128
    %3916 = vxpose.xlu0.b32.cont [13/16] 0.0, 128
    %3917 = vxpose.xlu0.b32.cont [14/16] 0.0, 128
    %3918 = vxpose.xlu0.b32.cont [15/16] 0.0, 128
    %3919 = vxpose.xlu0.b32.end [16/16] 0.0, 128
    %v3920 = vpop.trf.xlu0
    %v3921 = vpop.trf.xlu0
    %v3922 = vpop.trf.xlu0
    %v3923 = vpop.trf.xlu0
    %v3924 = vpop.trf.xlu0
    %v3925 = vpop.trf.xlu0
    %v3926 = vpop.trf.xlu0
    %v3927 = vpop.trf.xlu0
    %v3928 = vpop.trf.xlu0
    %v3929 = vpop.trf.xlu0
    %v3930 = vpop.trf.xlu0
    %v3931 = vpop.trf.xlu0
    %v3932 = vpop.trf.xlu0
    %v3933 = vpop.trf.xlu0
    %v3934 = vpop.trf.xlu0
    %v3935 = vpop.trf.xlu0
    %v3936 = vsel %vm204, %v3896, 0.0
    %3937 = vadd.xlane.f32.xlu0 %v3936
    %v3938 = vpop.xlane.xlu0 %3937
    %v3939 = vsel %vm204, %v3897, 0.0
    %3940 = vadd.xlane.f32.xlu0 %v3939
    %v3941 = vpop.xlane.xlu0 %3940
    %3944 = vrot.lane.b32.xlu0 %v3894, 96
    %v3945 = vpop.permute.xlu0 %3944
    %3946 = vrot.lane.b32.xlu0 %v3895, 96
    %v3947 = vpop.permute.xlu0 %3946
    %v3950 = vsel %vm204, %v3945, 0.0
    %3951 = vadd.xlane.f32.xlu0 %v3950
    %v3952 = vpop.xlane.xlu0 %3951
    %v3953 = vsel %vm204, %v3947, 0.0
    %3954 = vadd.xlane.f32.xlu0 %v3953
    %v3955 = vpop.xlane.xlu0 %3954
    %3956 = vxpose.xlu0.b32.start [1/16] %v3952, 128
    %3957 = vxpose.xlu0.b32.cont [2/16] %v3955, 128
    %3958 = vxpose.xlu0.b32.cont [3/16] 0.0, 128
    %3959 = vxpose.xlu0.b32.cont [4/16] 0.0, 128
    %3960 = vxpose.xlu0.b32.cont [5/16] 0.0, 128
    %3961 = vxpose.xlu0.b32.cont [6/16] 0.0, 128
    %3962 = vxpose.xlu0.b32.cont [7/16] 0.0, 128
    %3963 = vxpose.xlu0.b32.cont [8/16] 0.0, 128
    %3964 = vxpose.xlu0.b32.cont [9/16] 0.0, 128
    %3965 = vxpose.xlu0.b32.cont [10/16] 0.0, 128
    %3966 = vxpose.xlu0.b32.cont [11/16] 0.0, 128
    %3967 = vxpose.xlu0.b32.cont [12/16] 0.0, 128
    %3968 = vxpose.xlu0.b32.cont [13/16] 0.0, 128
    %3969 = vxpose.xlu0.b32.cont [14/16] 0.0, 128
    %3970 = vxpose.xlu0.b32.cont [15/16] 0.0, 128
    %3971 = vxpose.xlu0.b32.end [16/16] 0.0, 128
    %v3972 = vpop.trf.xlu0
    %v3973 = vpop.trf.xlu0
    %v3974 = vpop.trf.xlu0
    %v3975 = vpop.trf.xlu0
    %v3976 = vpop.trf.xlu0
    %v3977 = vpop.trf.xlu0
    %v3978 = vpop.trf.xlu0
    %v3979 = vpop.trf.xlu0
    %v3980 = vpop.trf.xlu0
    %v3981 = vpop.trf.xlu0
    %v3982 = vpop.trf.xlu0
    %v3983 = vpop.trf.xlu0
    %v3984 = vpop.trf.xlu0
    %v3985 = vpop.trf.xlu0
    %v3986 = vpop.trf.xlu0
    %v3987 = vpop.trf.xlu0
    %3990 = vrot.lane.b32.xlu0 %v3896, 96
    %v3991 = vpop.permute.xlu0 %3990
    %3992 = vrot.lane.b32.xlu0 %v3897, 96
    %v3993 = vpop.permute.xlu0 %3992
    %v3996 = vsel %vm204, %v3991, 0.0
    %3997 = vadd.xlane.f32.xlu0 %v3996
    %v3998 = vpop.xlane.xlu0 %3997
    %v3999 = vsel %vm204, %v3993, 0.0
    %4000 = vadd.xlane.f32.xlu0 %v3999
    %v4001 = vpop.xlane.xlu0 %4000
    %4002 = vrot.lane.b32.xlu0 %v3894, 64
    %v4003 = vpop.permute.xlu0 %4002
    %4004 = vrot.lane.b32.xlu0 %v3895, 64
    %v4005 = vpop.permute.xlu0 %4004
    %v4008 = vsel %vm204, %v4003, 0.0
    %4009 = vadd.xlane.f32.xlu0 %v4008
    %v4010 = vpop.xlane.xlu0 %4009
    %v4011 = vsel %vm204, %v4005, 0.0
    %4012 = vadd.xlane.f32.xlu0 %v4011
    %v4013 = vpop.xlane.xlu0 %4012
    %4014 = vxpose.xlu0.b32.start [1/16] %v4010, 128
    %4015 = vxpose.xlu0.b32.cont [2/16] %v4013, 128
    %4016 = vxpose.xlu0.b32.cont [3/16] 0.0, 128
    %4017 = vxpose.xlu0.b32.cont [4/16] 0.0, 128
    %4018 = vxpose.xlu0.b32.cont [5/16] 0.0, 128
    %4019 = vxpose.xlu0.b32.cont [6/16] 0.0, 128
    %4020 = vxpose.xlu0.b32.cont [7/16] 0.0, 128
    %4021 = vxpose.xlu0.b32.cont [8/16] 0.0, 128
    %4022 = vxpose.xlu0.b32.cont [9/16] 0.0, 128
    %4023 = vxpose.xlu0.b32.cont [10/16] 0.0, 128
    %4024 = vxpose.xlu0.b32.cont [11/16] 0.0, 128
    %4025 = vxpose.xlu0.b32.cont [12/16] 0.0, 128
    %4026 = vxpose.xlu0.b32.cont [13/16] 0.0, 128
    %4027 = vxpose.xlu0.b32.cont [14/16] 0.0, 128
    %4028 = vxpose.xlu0.b32.cont [15/16] 0.0, 128
    %4029 = vxpose.xlu0.b32.end [16/16] 0.0, 128
    %v4030 = vpop.trf.xlu0
    %v4031 = vpop.trf.xlu0
    %v4032 = vpop.trf.xlu0
    %v4033 = vpop.trf.xlu0
    %v4034 = vpop.trf.xlu0
    %v4035 = vpop.trf.xlu0
    %v4036 = vpop.trf.xlu0
    %v4037 = vpop.trf.xlu0
    %v4038 = vpop.trf.xlu0
    %v4039 = vpop.trf.xlu0
    %v4040 = vpop.trf.xlu0
    %v4041 = vpop.trf.xlu0
    %v4042 = vpop.trf.xlu0
    %v4043 = vpop.trf.xlu0
    %v4044 = vpop.trf.xlu0
    %v4045 = vpop.trf.xlu0
    %4046 = vrot.lane.b32.xlu0 %v3896, 64
    %v4047 = vpop.permute.xlu0 %4046
    %4048 = vrot.lane.b32.xlu0 %v3897, 64
    %v4049 = vpop.permute.xlu0 %4048
    %v4052 = vsel %vm204, %v4047, 0.0
    %4053 = vadd.xlane.f32.xlu0 %v4052
    %v4054 = vpop.xlane.xlu0 %4053
    %v4055 = vsel %vm204, %v4049, 0.0
    %4056 = vadd.xlane.f32.xlu0 %v4055
    %v4057 = vpop.xlane.xlu0 %4056
    %4058 = vrot.lane.b32.xlu0 %v3894, 32
    %v4059 = vpop.permute.xlu0 %4058
    %4060 = vrot.lane.b32.xlu0 %v3895, 32
    %v4061 = vpop.permute.xlu0 %4060
    %v4064 = vsel %vm204, %v4059, 0.0
    %4065 = vadd.xlane.f32.xlu0 %v4064
    %v4066 = vpop.xlane.xlu0 %4065
    %v4067 = vsel %vm204, %v4061, 0.0
    %4068 = vadd.xlane.f32.xlu0 %v4067
    %v4069 = vpop.xlane.xlu0 %4068
    %4070 = vxpose.xlu0.b32.start [1/16] %v4066, 128
    %4071 = vxpose.xlu0.b32.cont [2/16] %v4069, 128
    %4072 = vxpose.xlu0.b32.cont [3/16] 0.0, 128
    %4073 = vxpose.xlu0.b32.cont [4/16] 0.0, 128
    %4074 = vxpose.xlu0.b32.cont [5/16] 0.0, 128
    %4075 = vxpose.xlu0.b32.cont [6/16] 0.0, 128
    %4076 = vxpose.xlu0.b32.cont [7/16] 0.0, 128
    %4077 = vxpose.xlu0.b32.cont [8/16] 0.0, 128
    %4078 = vxpose.xlu0.b32.cont [9/16] 0.0, 128
    %4079 = vxpose.xlu0.b32.cont [10/16] 0.0, 128
    %4080 = vxpose.xlu0.b32.cont [11/16] 0.0, 128
    %4081 = vxpose.xlu0.b32.cont [12/16] 0.0, 128
    %4082 = vxpose.xlu0.b32.cont [13/16] 0.0, 128
    %4083 = vxpose.xlu0.b32.cont [14/16] 0.0, 128
    %4084 = vxpose.xlu0.b32.cont [15/16] 0.0, 128
    %4085 = vxpose.xlu0.b32.end [16/16] 0.0, 128
    %v4086 = vpop.trf.xlu0
    %v4087 = vpop.trf.xlu0
    %v4088 = vpop.trf.xlu0
    %v4089 = vpop.trf.xlu0
    %v4090 = vpop.trf.xlu0
    %v4091 = vpop.trf.xlu0
    %v4092 = vpop.trf.xlu0
    %v4093 = vpop.trf.xlu0
    %v4094 = vpop.trf.xlu0
    %v4095 = vpop.trf.xlu0
    %v4096 = vpop.trf.xlu0
    %v4097 = vpop.trf.xlu0
    %v4098 = vpop.trf.xlu0
    %v4099 = vpop.trf.xlu0
    %v4100 = vpop.trf.xlu0
    %v4101 = vpop.trf.xlu0
    %4102 = vrot.lane.b32.xlu0 %v3896, 32
    %v4103 = vpop.permute.xlu0 %4102
    %4104 = vrot.lane.b32.xlu0 %v3897, 32
    %v4105 = vpop.permute.xlu0 %4104
    %v4108 = vsel %vm204, %v4103, 0.0
    %4109 = vadd.xlane.f32.xlu0 %v4108
    %v4110 = vpop.xlane.xlu0 %4109
    %v4111 = vsel %vm204, %v4105, 0.0
    %4112 = vadd.xlane.f32.xlu0 %v4111
    %v4113 = vpop.xlane.xlu0 %4112
    %4115 = vrot.lane.b32.xlu0 %v3972, 16
    %v4116 = vpop.permute.xlu0 %4115
    %4119 = vrot.lane.b32.xlu0 %v4030, 32
    %v4120 = vpop.permute.xlu0 %4119
    %4123 = vrot.lane.b32.xlu0 %v4086, 48
    %v4124 = vpop.permute.xlu0 %4123
    %v4126 = vsel %vm433, %v3920, %v4116
    %v4127 = vsel %vm204, %v4126, %v4120
    %v4128 = vsel %vm436, %v4127, %v4124
    %v4129 = vsel %vm433, %v3938, %v3998
    %v4130 = vsel %vm433, %v3941, %v4001
    %v4131 = vsel %vm204, %v4129, %v4054
    %v4132 = vsel %vm204, %v4130, %v4057
    %v4133 = vsel %vm436, %v4131, %v4110
    %v4134 = vsel %vm436, %v4132, %v4113
    %v4135 = vlaneseq
    %v4136 = vshrl.u32 %v4135, 7
    %v4137 = vsub.s32 0, %v4136
    %v4138 = vrot.slane %v4128, %v4137
    %v4139 = vadd.f32 %v4133, %v4138
    %v4140 = vadd.f32 %v4134, %v4138
    %v4141 = vmul.f32 %v140, %v3720
    %v4142 = vmul.f32 %v141, %v3720
    %v4143 = vadd.f32 %v4139, %v4141
    %v4144 = vadd.f32 %v4140, %v4142
    %vm4145 = vcmp.gt.f32.partialorder %v4143, 0.0
    %vm4146 = vcmp.gt.f32.partialorder %v4144, 0.0
    %v4147 = vmul.f32 %v4143, 0.2
    %v4148 = vmul.f32 %v4144, 0.2
    %v4149 = vsel %vm4145, %v4143, %v4147
    %v4150 = vsel %vm4146, %v4144, %v4148
    %v4151 = vadd.f32 %v4149, %v138
    %v4152 = vadd.f32 %v4150, %v139
    %v4153 = vsel %vm433, %v4151, -inf
    %4154 = vmax.xlane.f32.xlu0 %v4153
    %v4155 = vpop.xlane.xlu0 %4154
    %v4156 = vsel %vm433, %v4152, -inf
    %4157 = vmax.xlane.f32.xlu0 %v4156
    %v4158 = vpop.xlane.xlu0 %4157
    %v4159 = vsel %vm468, %v4151, -inf
    %4160 = vmax.xlane.f32.xlu0 %v4159
    %v4161 = vpop.xlane.xlu0 %4160
    %v4162 = vsel %vm468, %v4152, -inf
    %4163 = vmax.xlane.f32.xlu0 %v4162
    %v4164 = vpop.xlane.xlu0 %4163
    %v4165 = vsel %vm475, %v4151, -inf
    %4166 = vmax.xlane.f32.xlu0 %v4165
    %v4167 = vpop.xlane.xlu0 %4166
    %v4168 = vsel %vm475, %v4152, -inf
    %4169 = vmax.xlane.f32.xlu0 %v4168
    %v4170 = vpop.xlane.xlu0 %4169
    %v4171 = vsel %vm482, %v4151, -inf
    %4172 = vmax.xlane.f32.xlu0 %v4171
    %v4173 = vpop.xlane.xlu0 %4172
    %v4174 = vsel %vm482, %v4152, -inf
    %4175 = vmax.xlane.f32.xlu0 %v4174
    %v4176 = vpop.xlane.xlu0 %4175
    %v4177 = vsel %vm433, %v4155, %v4161
    %v4178 = vsel %vm433, %v4158, %v4164
    %v4179 = vsel %vm204, %v4177, %v4167
    %v4180 = vsel %vm204, %v4178, %v4170
    %v4181 = vsel %vm436, %v4179, %v4173
    %v4182 = vsel %vm436, %v4180, %v4176
    %v4183 = vsub.f32 %v4151, %v4181
    %v4184 = vsub.f32 %v4152, %v4182
    %v4185 = vmul.f32 %v4183, 1.442695
    %v4186 = vpow.pop %v4185
    %v4187 = vmul.f32 %v4184, 1.442695
    %v4188 = vpow.pop %v4187
    %v4189 = vsel %vm433, %v4186, 0.0
    %4190 = vadd.xlane.f32.xlu0 %v4189
    %v4191 = vpop.xlane.xlu0 %4190
    %v4192 = vsel %vm433, %v4188, 0.0
    %4193 = vadd.xlane.f32.xlu0 %v4192
    %v4194 = vpop.xlane.xlu0 %4193
    %4197 = vrot.lane.b32.xlu0 %v4186, 112
    %v4198 = vpop.permute.xlu0 %4197
    %4199 = vrot.lane.b32.xlu0 %v4188, 112
    %v4200 = vpop.permute.xlu0 %4199
    %v4203 = vsel %vm433, %v4198, 0.0
    %4204 = vadd.xlane.f32.xlu0 %v4203
    %v4205 = vpop.xlane.xlu0 %4204
    %v4206 = vsel %vm433, %v4200, 0.0
    %4207 = vadd.xlane.f32.xlu0 %v4206
    %v4208 = vpop.xlane.xlu0 %4207
    %4209 = vrot.lane.b32.xlu0 %v4186, 96
    %v4210 = vpop.permute.xlu0 %4209
    %4211 = vrot.lane.b32.xlu0 %v4188, 96
    %v4212 = vpop.permute.xlu0 %4211
    %v4215 = vsel %vm433, %v4210, 0.0
    %4216 = vadd.xlane.f32.xlu0 %v4215
    %v4217 = vpop.xlane.xlu0 %4216
    %v4218 = vsel %vm433, %v4212, 0.0
    %4219 = vadd.xlane.f32.xlu0 %v4218
    %v4220 = vpop.xlane.xlu0 %4219
    %4221 = vrot.lane.b32.xlu0 %v4186, 80
    %v4222 = vpop.permute.xlu0 %4221
    %4223 = vrot.lane.b32.xlu0 %v4188, 80
    %v4224 = vpop.permute.xlu0 %4223
    %v4227 = vsel %vm433, %v4222, 0.0
    %4228 = vadd.xlane.f32.xlu0 %v4227
    %v4229 = vpop.xlane.xlu0 %4228
    %v4230 = vsel %vm433, %v4224, 0.0
    %4231 = vadd.xlane.f32.xlu0 %v4230
    %v4232 = vpop.xlane.xlu0 %4231
    %v4233 = vsel %vm433, %v4191, %v4205
    %v4234 = vsel %vm433, %v4194, %v4208
    %v4235 = vsel %vm204, %v4233, %v4217
    %v4236 = vsel %vm204, %v4234, %v4220
    %v4237 = vsel %vm436, %v4235, %v4229
    %v4238 = vsel %vm436, %v4236, %v4232
    %v4239 = vrcp.pop %v4237
    %v4240 = vmul.f32 %v4186, %v4239
    %v4241 = vrcp.pop %v4238
    %v4242 = vmul.f32 %v4188, %v4241
    %v4244 = vsel %vm433, %v4240, 0
    %v4247 = vsel %vm433, %v4242, 0
    %4249 = vmatprep.subr.mxu0 0.0
    %4250 = vmatpush1.msra.mxu0 %v3888
    %4251 = vmatprep.subr.mxu0 0.0
    %4252 = vmatpush1.msra.mxu0 %v3891
    %4253 = vmatprep.subr.mxu0 0.0
    %4254 = vmatpush1.msra.mxu0 0.0
    %4255 = vmatprep.subr.mxu0 0.0
    %4256 = vmatpush1.msra.mxu0 0.0
    %4257 = vmatprep.subr.mxu0 0.0
    %4258 = vmatpush1.msra.mxu0 0.0
    %4259 = vmatprep.subr.mxu0 0.0
    %4260 = vmatpush1.msra.mxu0 0.0
    %4261 = vmatprep.subr.mxu0 0.0
    %4262 = vmatpush1.msra.mxu0 0.0
    %4263 = vmatprep.subr.mxu0 0.0
    %4264 = vmatpush1.msra.mxu0 0.0
    %4265 = vmatprep.subr.mxu0 0.0
    %4266 = vmatpush1.msra.mxu0 0.0
    %4267 = vmatprep.subr.mxu0 0.0
    %4268 = vmatpush1.msra.mxu0 0.0
    %4269 = vmatprep.subr.mxu0 0.0
    %4270 = vmatpush1.msra.mxu0 0.0
    %4271 = vmatprep.subr.mxu0 0.0
    %4272 = vmatpush1.msra.mxu0 0.0
    %4273 = vmatprep.subr.mxu0 0.0
    %4274 = vmatpush1.msra.mxu0 0.0
    %4275 = vmatprep.subr.mxu0 0.0
    %4276 = vmatpush1.msra.mxu0 0.0
    %4277 = vmatprep.subr.mxu0 0.0
    %4278 = vmatpush1.msra.mxu0 0.0
    %4279 = vmatprep.subr.mxu0 0.0
    %4280 = vmatpush1.msra.mxu0 0.0
    %4281 = vmatprep.subr.mxu0 0.0
    %4282 = vmatpush1.msra.mxu0 0.0
    %4283 = vmatprep.subr.mxu0 0.0
    %4284 = vmatpush1.msra.mxu0 0.0
    %4285 = vmatprep.subr.mxu0 0.0
    %4286 = vmatpush1.msra.mxu0 0.0
    %4287 = vmatprep.subr.mxu0 0.0
    %4288 = vmatpush1.msra.mxu0 0.0
    %4289 = vmatprep.subr.mxu0 0.0
    %4290 = vmatpush1.msra.mxu0 0.0
    %4291 = vmatprep.subr.mxu0 0.0
    %4292 = vmatpush1.msra.mxu0 0.0
    %4293 = vmatprep.subr.mxu0 0.0
    %4294 = vmatpush1.msra.mxu0 0.0
    %4295 = vmatprep.subr.mxu0 0.0
    %4296 = vmatpush1.msra.mxu0 0.0
    %4297 = vmatprep.subr.mxu0 0.0
    %4298 = vmatpush1.msra.mxu0 0.0
    %4299 = vmatprep.subr.mxu0 0.0
    %4300 = vmatpush1.msra.mxu0 0.0
    %4301 = vmatprep.subr.mxu0 0.0
    %4302 = vmatpush1.msra.mxu0 0.0
    %4303 = vmatprep.subr.mxu0 0.0
    %4304 = vmatpush1.msra.mxu0 0.0
    %4305 = vmatprep.subr.mxu0 0.0
    %4306 = vmatpush1.msra.mxu0 0.0
    %4307 = vmatprep.subr.mxu0 0.0
    %4308 = vmatpush1.msra.mxu0 0.0
    %4309 = vmatprep.subr.mxu0 0.0
    %4310 = vmatpush1.msra.mxu0 0.0
    %4311 = vmatprep.subr.mxu0 0.0
    %4312 = vmatpush1.msra.mxu0 0.0
    %4313 = vmatprep.mubr.f32.mxu0 0.0
    %4314 = vmatmul.mubr.f32.gmra.mrb[0].mxu0 %v4244
    %v4315 = vpop.f32.mrb[0].mxu0
    %v4316 = vadd.f32 0.0, %v4315
    %v4317 = vpop.f32.mrb[0].mxu0
    %4318 = vmatprep.mubr.f32.mxu0 0.0
    %4319 = vmatmul.mubr.f32.gmra.mrb[0].mxu0 %v4247
    %v4320 = vpop.f32.mrb[0].mxu0
    %v4321 = vadd.f32 0.0, %v4320
    %v4322 = vpop.f32.mrb[0].mxu0
    %4323 = vdwg.mxu0
    %4324 = vrot.lane.b32.xlu0 %v4240, 112
    %v4325 = vpop.permute.xlu0 %4324
    %4326 = vrot.lane.b32.xlu0 %v4242, 112
    %v4327 = vpop.permute.xlu0 %4326
    %4330 = vrot.lane.b32.xlu0 %v3888, 96
    %v4331 = vpop.permute.xlu0 %4330
    %4332 = vrot.lane.b32.xlu0 %v3891, 96
    %v4333 = vpop.permute.xlu0 %4332
    %v4336 = vsel %vm433, %v4325, 0
    %v4338 = vsel %vm433, %v4327, 0
    %4340 = vmatprep.subr.mxu0 0.0
    %4341 = vmatpush1.msra.mxu0 %v4331
    %4342 = vmatprep.subr.mxu0 0.0
    %4343 = vmatpush1.msra.mxu0 %v4333
    %4344 = vmatprep.subr.mxu0 0.0
    %4345 = vmatpush1.msra.mxu0 0.0
    %4346 = vmatprep.subr.mxu0 0.0
    %4347 = vmatpush1.msra.mxu0 0.0
    %4348 = vmatprep.subr.mxu0 0.0
    %4349 = vmatpush1.msra.mxu0 0.0
    %4350 = vmatprep.subr.mxu0 0.0
    %4351 = vmatpush1.msra.mxu0 0.0
    %4352 = vmatprep.subr.mxu0 0.0
    %4353 = vmatpush1.msra.mxu0 0.0
    %4354 = vmatprep.subr.mxu0 0.0
    %4355 = vmatpush1.msra.mxu0 0.0
    %4356 = vmatprep.subr.mxu0 0.0
    %4357 = vmatpush1.msra.mxu0 0.0
    %4358 = vmatprep.subr.mxu0 0.0
    %4359 = vmatpush1.msra.mxu0 0.0
    %4360 = vmatprep.subr.mxu0 0.0
    %4361 = vmatpush1.msra.mxu0 0.0
    %4362 = vmatprep.subr.mxu0 0.0
    %4363 = vmatpush1.msra.mxu0 0.0
    %4364 = vmatprep.subr.mxu0 0.0
    %4365 = vmatpush1.msra.mxu0 0.0
    %4366 = vmatprep.subr.mxu0 0.0
    %4367 = vmatpush1.msra.mxu0 0.0
    %4368 = vmatprep.subr.mxu0 0.0
    %4369 = vmatpush1.msra.mxu0 0.0
    %4370 = vmatprep.subr.mxu0 0.0
    %4371 = vmatpush1.msra.mxu0 0.0
    %4372 = vmatprep.subr.mxu0 0.0
    %4373 = vmatpush1.msra.mxu0 0.0
    %4374 = vmatprep.subr.mxu0 0.0
    %4375 = vmatpush1.msra.mxu0 0.0
    %4376 = vmatprep.subr.mxu0 0.0
    %4377 = vmatpush1.msra.mxu0 0.0
    %4378 = vmatprep.subr.mxu0 0.0
    %4379 = vmatpush1.msra.mxu0 0.0
    %4380 = vmatprep.subr.mxu0 0.0
    %4381 = vmatpush1.msra.mxu0 0.0
    %4382 = vmatprep.subr.mxu0 0.0
    %4383 = vmatpush1.msra.mxu0 0.0
    %4384 = vmatprep.subr.mxu0 0.0
    %4385 = vmatpush1.msra.mxu0 0.0
    %4386 = vmatprep.subr.mxu0 0.0
    %4387 = vmatpush1.msra.mxu0 0.0
    %4388 = vmatprep.subr.mxu0 0.0
    %4389 = vmatpush1.msra.mxu0 0.0
    %4390 = vmatprep.subr.mxu0 0.0
    %4391 = vmatpush1.msra.mxu0 0.0
    %4392 = vmatprep.subr.mxu0 0.0
    %4393 = vmatpush1.msra.mxu0 0.0
    %4394 = vmatprep.subr.mxu0 0.0
    %4395 = vmatpush1.msra.mxu0 0.0
    %4396 = vmatprep.subr.mxu0 0.0
    %4397 = vmatpush1.msra.mxu0 0.0
    %4398 = vmatprep.subr.mxu0 0.0
    %4399 = vmatpush1.msra.mxu0 0.0
    %4400 = vmatprep.subr.mxu0 0.0
    %4401 = vmatpush1.msra.mxu0 0.0
    %4402 = vmatprep.subr.mxu0 0.0
    %4403 = vmatpush1.msra.mxu0 0.0
    %4404 = vmatprep.mubr.f32.mxu0 0.0
    %4405 = vmatmul.mubr.f32.gmra.mrb[0].mxu0 %v4336
    %v4406 = vpop.f32.mrb[0].mxu0
    %v4407 = vadd.f32 0.0, %v4406
    %v4408 = vpop.f32.mrb[0].mxu0
    %4409 = vmatprep.mubr.f32.mxu0 0.0
    %4410 = vmatmul.mubr.f32.gmra.mrb[0].mxu0 %v4338
    %v4411 = vpop.f32.mrb[0].mxu0
    %v4412 = vadd.f32 0.0, %v4411
    %v4413 = vpop.f32.mrb[0].mxu0
    %4414 = vdwg.mxu0
    %4415 = vrot.lane.b32.xlu0 %v4240, 96
    %v4416 = vpop.permute.xlu0 %4415
    %4417 = vrot.lane.b32.xlu0 %v4242, 96
    %v4418 = vpop.permute.xlu0 %4417
    %4419 = vrot.lane.b32.xlu0 %v3888, 64
    %v4420 = vpop.permute.xlu0 %4419
    %4421 = vrot.lane.b32.xlu0 %v3891, 64
    %v4422 = vpop.permute.xlu0 %4421
    %v4425 = vsel %vm433, %v4416, 0
    %v4427 = vsel %vm433, %v4418, 0
    %4429 = vmatprep.subr.mxu0 0.0
    %4430 = vmatpush1.msra.mxu0 %v4420
    %4431 = vmatprep.subr.mxu0 0.0
    %4432 = vmatpush1.msra.mxu0 %v4422
    %4433 = vmatprep.subr.mxu0 0.0
    %4434 = vmatpush1.msra.mxu0 0.0
    %4435 = vmatprep.subr.mxu0 0.0
    %4436 = vmatpush1.msra.mxu0 0.0
    %4437 = vmatprep.subr.mxu0 0.0
    %4438 = vmatpush1.msra.mxu0 0.0
    %4439 = vmatprep.subr.mxu0 0.0
    %4440 = vmatpush1.msra.mxu0 0.0
    %4441 = vmatprep.subr.mxu0 0.0
    %4442 = vmatpush1.msra.mxu0 0.0
    %4443 = vmatprep.subr.mxu0 0.0
    %4444 = vmatpush1.msra.mxu0 0.0
    %4445 = vmatprep.subr.mxu0 0.0
    %4446 = vmatpush1.msra.mxu0 0.0
    %4447 = vmatprep.subr.mxu0 0.0
    %4448 = vmatpush1.msra.mxu0 0.0
    %4449 = vmatprep.subr.mxu0 0.0
    %4450 = vmatpush1.msra.mxu0 0.0
    %4451 = vmatprep.subr.mxu0 0.0
    %4452 = vmatpush1.msra.mxu0 0.0
    %4453 = vmatprep.subr.mxu0 0.0
    %4454 = vmatpush1.msra.mxu0 0.0
    %4455 = vmatprep.subr.mxu0 0.0
    %4456 = vmatpush1.msra.mxu0 0.0
    %4457 = vmatprep.subr.mxu0 0.0
    %4458 = vmatpush1.msra.mxu0 0.0
    %4459 = vmatprep.subr.mxu0 0.0
    %4460 = vmatpush1.msra.mxu0 0.0
    %4461 = vmatprep.subr.mxu0 0.0
    %4462 = vmatpush1.msra.mxu0 0.0
    %4463 = vmatprep.subr.mxu0 0.0
    %4464 = vmatpush1.msra.mxu0 0.0
    %4465 = vmatprep.subr.mxu0 0.0
    %4466 = vmatpush1.msra.mxu0 0.0
    %4467 = vmatprep.subr.mxu0 0.0
    %4468 = vmatpush1.msra.mxu0 0.0
    %4469 = vmatprep.subr.mxu0 0.0
    %4470 = vmatpush1.msra.mxu0 0.0
    %4471 = vmatprep.subr.mxu0 0.0
    %4472 = vmatpush1.msra.mxu0 0.0
    %4473 = vmatprep.subr.mxu0 0.0
    %4474 = vmatpush1.msra.mxu0 0.0
    %4475 = vmatprep.subr.mxu0 0.0
    %4476 = vmatpush1.msra.mxu0 0.0
    %4477 = vmatprep.subr.mxu0 0.0
    %4478 = vmatpush1.msra.mxu0 0.0
    %4479 = vmatprep.subr.mxu0 0.0
    %4480 = vmatpush1.msra.mxu0 0.0
    %4481 = vmatprep.subr.mxu0 0.0
    %4482 = vmatpush1.msra.mxu0 0.0
    %4483 = vmatprep.subr.mxu0 0.0
    %4484 = vmatpush1.msra.mxu0 0.0
    %4485 = vmatprep.subr.mxu0 0.0
    %4486 = vmatpush1.msra.mxu0 0.0
    %4487 = vmatprep.subr.mxu0 0.0
    %4488 = vmatpush1.msra.mxu0 0.0
    %4489 = vmatprep.subr.mxu0 0.0
    %4490 = vmatpush1.msra.mxu0 0.0
    %4491 = vmatprep.subr.mxu0 0.0
    %4492 = vmatpush1.msra.mxu0 0.0
    %4493 = vmatprep.mubr.f32.mxu0 0.0
    %4494 = vmatmul.mubr.f32.gmra.mrb[0].mxu0 %v4425
    %v4495 = vpop.f32.mrb[0].mxu0
    %v4496 = vadd.f32 0.0, %v4495
    %v4497 = vpop.f32.mrb[0].mxu0
    %4498 = vmatprep.mubr.f32.mxu0 0.0
    %4499 = vmatmul.mubr.f32.gmra.mrb[0].mxu0 %v4427
    %v4500 = vpop.f32.mrb[0].mxu0
    %v4501 = vadd.f32 0.0, %v4500
    %v4502 = vpop.f32.mrb[0].mxu0
    %4503 = vdwg.mxu0
    %4504 = vrot.lane.b32.xlu0 %v4240, 80
    %v4505 = vpop.permute.xlu0 %4504
    %4506 = vrot.lane.b32.xlu0 %v4242, 80
    %v4507 = vpop.permute.xlu0 %4506
    %4508 = vrot.lane.b32.xlu0 %v3888, 32
    %v4509 = vpop.permute.xlu0 %4508
    %4510 = vrot.lane.b32.xlu0 %v3891, 32
    %v4511 = vpop.permute.xlu0 %4510
    %v4514 = vsel %vm433, %v4505, 0
    %v4516 = vsel %vm433, %v4507, 0
    %4518 = vmatprep.subr.mxu0 0.0
    %4519 = vmatpush1.msra.mxu0 %v4509
    %4520 = vmatprep.subr.mxu0 0.0
    %4521 = vmatpush1.msra.mxu0 %v4511
    %4522 = vmatprep.subr.mxu0 0.0
    %4523 = vmatpush1.msra.mxu0 0.0
    %4524 = vmatprep.subr.mxu0 0.0
    %4525 = vmatpush1.msra.mxu0 0.0
    %4526 = vmatprep.subr.mxu0 0.0
    %4527 = vmatpush1.msra.mxu0 0.0
    %4528 = vmatprep.subr.mxu0 0.0
    %4529 = vmatpush1.msra.mxu0 0.0
    %4530 = vmatprep.subr.mxu0 0.0
    %4531 = vmatpush1.msra.mxu0 0.0
    %4532 = vmatprep.subr.mxu0 0.0
    %4533 = vmatpush1.msra.mxu0 0.0
    %4534 = vmatprep.subr.mxu0 0.0
    %4535 = vmatpush1.msra.mxu0 0.0
    %4536 = vmatprep.subr.mxu0 0.0
    %4537 = vmatpush1.msra.mxu0 0.0
    %4538 = vmatprep.subr.mxu0 0.0
    %4539 = vmatpush1.msra.mxu0 0.0
    %4540 = vmatprep.subr.mxu0 0.0
    %4541 = vmatpush1.msra.mxu0 0.0
    %4542 = vmatprep.subr.mxu0 0.0
    %4543 = vmatpush1.msra.mxu0 0.0
    %4544 = vmatprep.subr.mxu0 0.0
    %4545 = vmatpush1.msra.mxu0 0.0
    %4546 = vmatprep.subr.mxu0 0.0
    %4547 = vmatpush1.msra.mxu0 0.0
    %4548 = vmatprep.subr.mxu0 0.0
    %4549 = vmatpush1.msra.mxu0 0.0
    %4550 = vmatprep.subr.mxu0 0.0
    %4551 = vmatpush1.msra.mxu0 0.0
    %4552 = vmatprep.subr.mxu0 0.0
    %4553 = vmatpush1.msra.mxu0 0.0
    %4554 = vmatprep.subr.mxu0 0.0
    %4555 = vmatpush1.msra.mxu0 0.0
    %4556 = vmatprep.subr.mxu0 0.0
    %4557 = vmatpush1.msra.mxu0 0.0
    %4558 = vmatprep.subr.mxu0 0.0
    %4559 = vmatpush1.msra.mxu0 0.0
    %4560 = vmatprep.subr.mxu0 0.0
    %4561 = vmatpush1.msra.mxu0 0.0
    %4562 = vmatprep.subr.mxu0 0.0
    %4563 = vmatpush1.msra.mxu0 0.0
    %4564 = vmatprep.subr.mxu0 0.0
    %4565 = vmatpush1.msra.mxu0 0.0
    %4566 = vmatprep.subr.mxu0 0.0
    %4567 = vmatpush1.msra.mxu0 0.0
    %4568 = vmatprep.subr.mxu0 0.0
    %4569 = vmatpush1.msra.mxu0 0.0
    %4570 = vmatprep.subr.mxu0 0.0
    %4571 = vmatpush1.msra.mxu0 0.0
    %4572 = vmatprep.subr.mxu0 0.0
    %4573 = vmatpush1.msra.mxu0 0.0
    %4574 = vmatprep.subr.mxu0 0.0
    %4575 = vmatpush1.msra.mxu0 0.0
    %4576 = vmatprep.subr.mxu0 0.0
    %4577 = vmatpush1.msra.mxu0 0.0
    %4578 = vmatprep.subr.mxu0 0.0
    %4579 = vmatpush1.msra.mxu0 0.0
    %4580 = vmatprep.subr.mxu0 0.0
    %4581 = vmatpush1.msra.mxu0 0.0
    %4582 = vmatprep.mubr.f32.mxu0 0.0
    %4583 = vmatmul.mubr.f32.gmra.mrb[0].mxu0 %v4514
    %v4584 = vpop.f32.mrb[0].mxu0
    %v4585 = vadd.f32 0.0, %v4584
    %v4586 = vpop.f32.mrb[0].mxu0
    %4587 = vmatprep.mubr.f32.mxu0 0.0
    %4588 = vmatmul.mubr.f32.gmra.mrb[0].mxu0 %v4516
    %v4589 = vpop.f32.mrb[0].mxu0
    %v4590 = vadd.f32 0.0, %v4589
    %v4591 = vpop.f32.mrb[0].mxu0
    %4592 = vdwg.mxu0
    %4595 = vrot.lane.b32.xlu0 %v4407, 32
    %v4596 = vpop.permute.xlu0 %4595
    %4597 = vrot.lane.b32.xlu0 %v4412, 32
    %v4598 = vpop.permute.xlu0 %4597
    %4603 = vrot.lane.b32.xlu0 %v4496, 64
    %v4604 = vpop.permute.xlu0 %4603
    %4605 = vrot.lane.b32.xlu0 %v4501, 64
    %v4606 = vpop.permute.xlu0 %4605
    %4611 = vrot.lane.b32.xlu0 %v4585, 96
    %v4612 = vpop.permute.xlu0 %4611
    %4613 = vrot.lane.b32.xlu0 %v4590, 96
    %v4614 = vpop.permute.xlu0 %4613
    %v4617 = vsel %vm204, %v4316, %v4596
    %v4618 = vsel %vm204, %v4321, %v4598
    %v4619 = vsel %vm931, %v4617, %v4604
    %v4620 = vsel %vm931, %v4618, %v4606
    %v4621 = vsel %vm934, %v4619, %v4612
    %v4622 = vsel %vm934, %v4620, %v4614
    %v4623 = vmul.f32 %v4621, %v3721
    %v4624 = vmul.f32 %v4622, %v3721
    %v4625 = vadd.f32 %v4623, %v3722
    %v4626 = vadd.f32 %v4624, %v3722
    %v4627 = vmax.f32 %v4625, 0.0
    %v4628 = vmax.f32 %v4626, 0.0
    %v4629 = vld [vmem:[#allocation6 + $0x31] ss:$0 sm:$0xff]
    %v4630 = vld [vmem:[#allocation6 + $0x32] ss:$0 sm:$0xff]
    %v4631 = vld [vmem:[#allocation6 + $0x33] ss:$0 sm:$0xff]
    %v4632 = vld [vmem:[#allocation6 + $0x34] ss:$0 sm:$0xff]
    %v4633 = vld [vmem:[#allocation6 + $0x35] ss:$0 sm:$0xff]
    %v4634 = vpack.c.bf16 %v4628, %v4627
    %v4635 = vld [vmem:[%s9] sm:$0xf]
    %v4636 = vld [vmem:[%s9 + $0x4] sm:$0xf]
    %v4637 = vld [vmem:[%s9 + $0x8] sm:$0xf]
    %v4638 = vld [vmem:[%s9 + $0xc] sm:$0xf]
    %v4639 = vld [vmem:[%s9 + $0x10] sm:$0xf]
    %v4640 = vld [vmem:[%s9 + $0x14] sm:$0xf]
    %v4641 = vld [vmem:[%s9 + $0x18] sm:$0xf]
    %v4642 = vld [vmem:[%s9 + $0x1c] sm:$0xf]
    %v4643 = vld [vmem:[%s9 + $0x20] sm:$0xf]
    %v4644 = vld [vmem:[%s9 + $0x24] sm:$0xf]
    %v4645 = vld [vmem:[%s9 + $0x28] sm:$0xf]
    %v4646 = vld [vmem:[%s9 + $0x2c] sm:$0xf]
    %v4647 = vld [vmem:[%s9 + $0x30] sm:$0xf]
    %v4648 = vld [vmem:[%s9 + $0x34] sm:$0xf]
    %v4649 = vld [vmem:[%s9 + $0x38] sm:$0xf]
    %v4650 = vld [vmem:[%s9 + $0x3c] sm:$0xf]
    %v4667 = vunpack.c.l.b16 %v4635
    %v4668 = vunpack.c.l.b16 %v4636
    %v4669 = vunpack.c.l.b16 %v4637
    %v4670 = vunpack.c.l.b16 %v4638
    %v4671 = vunpack.c.l.b16 %v4639
    %v4672 = vunpack.c.l.b16 %v4640
    %v4673 = vunpack.c.l.b16 %v4641
    %v4674 = vunpack.c.l.b16 %v4642
    %v4675 = vunpack.c.l.b16 %v4643
    %v4676 = vunpack.c.l.b16 %v4644
    %v4677 = vunpack.c.l.b16 %v4645
    %v4678 = vunpack.c.l.b16 %v4646
    %v4679 = vunpack.c.l.b16 %v4647
    %v4680 = vunpack.c.l.b16 %v4648
    %v4681 = vunpack.c.l.b16 %v4649
    %v4682 = vunpack.c.l.b16 %v4650
    %v4683 = vpack.c.b16 %v4668, %v4667
    %v4684 = vpack.c.b16 %v4670, %v4669
    %v4685 = vpack.c.b16 %v4672, %v4671
    %v4686 = vpack.c.b16 %v4674, %v4673
    %v4687 = vpack.c.b16 %v4676, %v4675
    %v4688 = vpack.c.b16 %v4678, %v4677
    %v4689 = vpack.c.b16 %v4680, %v4679
    %v4690 = vpack.c.b16 %v4682, %v4681
    %4699 = vmatprep.subr.bf16.mxu0 0
    %4700 = vmatpush1.bf16.msra.mxu0 %v4683
    %4701 = vmatprep.subr.bf16.mxu0 0
    %4702 = vmatpush1.bf16.msra.mxu0 %v4684
    %4703 = vmatprep.subr.bf16.mxu0 0
    %4704 = vmatpush1.bf16.msra.mxu0 %v4685
    %4705 = vmatprep.subr.bf16.mxu0 0
    %4706 = vmatpush1.bf16.msra.mxu0 %v4686
    %4707 = vmatprep.subr.bf16.mxu0 0
    %4708 = vmatpush1.bf16.msra.mxu0 %v4687
    %4709 = vmatprep.subr.bf16.mxu0 0
    %4710 = vmatpush1.bf16.msra.mxu0 %v4688
    %4711 = vmatprep.subr.bf16.mxu0 0
    %4712 = vmatpush1.bf16.msra.mxu0 %v4689
    %4713 = vmatprep.subr.bf16.mxu0 0
    %4714 = vmatpush1.bf16.msra.mxu0 %v4690
    %4715 = vmatprep.subr.bf16.mxu0 0
    %4716 = vmatpush1.bf16.msra.mxu0 0
    %4717 = vmatprep.subr.bf16.mxu0 0
    %4718 = vmatpush1.bf16.msra.mxu0 0
    %4719 = vmatprep.subr.bf16.mxu0 0
    %4720 = vmatpush1.bf16.msra.mxu0 0
    %4721 = vmatprep.subr.bf16.mxu0 0
    %4722 = vmatpush1.bf16.msra.mxu0 0
    %4723 = vmatprep.subr.bf16.mxu0 0
    %4724 = vmatpush1.bf16.msra.mxu0 0
    %4725 = vmatprep.subr.bf16.mxu0 0
    %4726 = vmatpush1.bf16.msra.mxu0 0
    %4727 = vmatprep.subr.bf16.mxu0 0
    %4728 = vmatpush1.bf16.msra.mxu0 0
    %4729 = vmatprep.subr.bf16.mxu0 0
    %4730 = vmatpush1.bf16.msra.mxu0 0
    %4731 = vmatprep.mubr.bf16.mxu0 0
    %4732 = vmatmul.mubr.bf16.gmra.mrb[0].mxu0 %v4634
    %v4733 = vpop.f32.mrb[0].mxu0
    %v4734 = vadd.f32 0.0, %v4733
    %v4735 = vpop.f32.mrb[0].mxu0
    %v4736 = vpop.f32.mrb[0].mxu0
    %v4737 = vadd.f32 0.0, %v4736
    %v4738 = vpop.f32.mrb[0].mxu0
    %4739 = vdwg.mxu0
    %v4740 = vmul.f32 %v4734, %v4629
    %v4741 = vmul.f32 %v4737, %v4629
    %v4742 = vmul.f32 %v4734, %v4630
    %v4743 = vmul.f32 %v4737, %v4630
    %v4744 = vsel %vm204, %v4740, 0.0
    %4745 = vadd.xlane.f32.xlu0 %v4744
    %v4746 = vpop.xlane.xlu0 %4745
    %v4747 = vsel %vm204, %v4741, 0.0
    %4748 = vadd.xlane.f32.xlu0 %v4747
    %v4749 = vpop.xlane.xlu0 %4748
    %4750 = vxpose.xlu0.b32.start [1/16] %v4746, 128
    %4751 = vxpose.xlu0.b32.cont [2/16] %v4749, 128
    %4752 = vxpose.xlu0.b32.cont [3/16] 0.0, 128
    %4753 = vxpose.xlu0.b32.cont [4/16] 0.0, 128
    %4754 = vxpose.xlu0.b32.cont [5/16] 0.0, 128
    %4755 = vxpose.xlu0.b32.cont [6/16] 0.0, 128
    %4756 = vxpose.xlu0.b32.cont [7/16] 0.0, 128
    %4757 = vxpose.xlu0.b32.cont [8/16] 0.0, 128
    %4758 = vxpose.xlu0.b32.cont [9/16] 0.0, 128
    %4759 = vxpose.xlu0.b32.cont [10/16] 0.0, 128
    %4760 = vxpose.xlu0.b32.cont [11/16] 0.0, 128
    %4761 = vxpose.xlu0.b32.cont [12/16] 0.0, 128
    %4762 = vxpose.xlu0.b32.cont [13/16] 0.0, 128
    %4763 = vxpose.xlu0.b32.cont [14/16] 0.0, 128
    %4764 = vxpose.xlu0.b32.cont [15/16] 0.0, 128
    %4765 = vxpose.xlu0.b32.end [16/16] 0.0, 128
    %v4766 = vpop.trf.xlu0
    %v4767 = vpop.trf.xlu0
    %v4768 = vpop.trf.xlu0
    %v4769 = vpop.trf.xlu0
    %v4770 = vpop.trf.xlu0
    %v4771 = vpop.trf.xlu0
    %v4772 = vpop.trf.xlu0
    %v4773 = vpop.trf.xlu0
    %v4774 = vpop.trf.xlu0
    %v4775 = vpop.trf.xlu0
    %v4776 = vpop.trf.xlu0
    %v4777 = vpop.trf.xlu0
    %v4778 = vpop.trf.xlu0
    %v4779 = vpop.trf.xlu0
    %v4780 = vpop.trf.xlu0
    %v4781 = vpop.trf.xlu0
    %v4782 = vsel %vm204, %v4742, 0.0
    %4783 = vadd.xlane.f32.xlu0 %v4782
    %v4784 = vpop.xlane.xlu0 %4783
    %v4785 = vsel %vm204, %v4743, 0.0
    %4786 = vadd.xlane.f32.xlu0 %v4785
    %v4787 = vpop.xlane.xlu0 %4786
    %v4788 = vlaneseq
    %v4789 = vshrl.u32 %v4788, 7
    %v4790 = vsub.s32 0, %v4789
    %v4791 = vrot.slane %v4766, %v4790
    %v4792 = vadd.f32 %v4784, %v4791
    %v4793 = vadd.f32 %v4787, %v4791
    %v4794 = vmul.f32 %v140, %v4631
    %v4795 = vmul.f32 %v141, %v4631
    %v4796 = vadd.f32 %v4792, %v4794
    %v4797 = vadd.f32 %v4793, %v4795
    %vm4798 = vcmp.gt.f32.partialorder %v4796, 0.0
    %vm4799 = vcmp.gt.f32.partialorder %v4797, 0.0
    %v4800 = vmul.f32 %v4796, 0.2
    %v4801 = vmul.f32 %v4797, 0.2
    %v4802 = vsel %vm4798, %v4796, %v4800
    %v4803 = vsel %vm4799, %v4797, %v4801
    %v4804 = vadd.f32 %v4802, %v138
    %v4805 = vadd.f32 %v4803, %v139
    %v4806 = vsel %vm433, %v4804, -inf
    %4807 = vmax.xlane.f32.xlu0 %v4806
    %v4808 = vpop.xlane.xlu0 %4807
    %v4809 = vsel %vm433, %v4805, -inf
    %4810 = vmax.xlane.f32.xlu0 %v4809
    %v4811 = vpop.xlane.xlu0 %4810
    %v4812 = vsub.f32 %v4804, %v4808
    %v4813 = vsub.f32 %v4805, %v4811
    %v4814 = vmul.f32 %v4812, 1.442695
    %v4815 = vpow.pop %v4814
    %v4816 = vmul.f32 %v4813, 1.442695
    %v4817 = vpow.pop %v4816
    %v4818 = vsel %vm433, %v4815, 0.0
    %4819 = vadd.xlane.f32.xlu0 %v4818
    %v4820 = vpop.xlane.xlu0 %4819
    %v4821 = vsel %vm433, %v4817, 0.0
    %4822 = vadd.xlane.f32.xlu0 %v4821
    %v4823 = vpop.xlane.xlu0 %4822
    %v4824 = vrcp.pop %v4820
    %v4825 = vmul.f32 %v4815, %v4824
    %v4826 = vrcp.pop %v4823
    %v4827 = vmul.f32 %v4817, %v4826
    %v4829 = vsel %vm433, %v4825, 0
    %v4832 = vsel %vm433, %v4827, 0
    %4834 = vmatprep.subr.mxu0 0.0
    %4835 = vmatpush1.msra.mxu0 %v4734
    %4836 = vmatprep.subr.mxu0 0.0
    %4837 = vmatpush1.msra.mxu0 %v4737
    %4838 = vmatprep.subr.mxu0 0.0
    %4839 = vmatpush1.msra.mxu0 0.0
    %4840 = vmatprep.subr.mxu0 0.0
    %4841 = vmatpush1.msra.mxu0 0.0
    %4842 = vmatprep.subr.mxu0 0.0
    %4843 = vmatpush1.msra.mxu0 0.0
    %4844 = vmatprep.subr.mxu0 0.0
    %4845 = vmatpush1.msra.mxu0 0.0
    %4846 = vmatprep.subr.mxu0 0.0
    %4847 = vmatpush1.msra.mxu0 0.0
    %4848 = vmatprep.subr.mxu0 0.0
    %4849 = vmatpush1.msra.mxu0 0.0
    %4850 = vmatprep.subr.mxu0 0.0
    %4851 = vmatpush1.msra.mxu0 0.0
    %4852 = vmatprep.subr.mxu0 0.0
    %4853 = vmatpush1.msra.mxu0 0.0
    %4854 = vmatprep.subr.mxu0 0.0
    %4855 = vmatpush1.msra.mxu0 0.0
    %4856 = vmatprep.subr.mxu0 0.0
    %4857 = vmatpush1.msra.mxu0 0.0
    %4858 = vmatprep.subr.mxu0 0.0
    %4859 = vmatpush1.msra.mxu0 0.0
    %4860 = vmatprep.subr.mxu0 0.0
    %4861 = vmatpush1.msra.mxu0 0.0
    %4862 = vmatprep.subr.mxu0 0.0
    %4863 = vmatpush1.msra.mxu0 0.0
    %4864 = vmatprep.subr.mxu0 0.0
    %4865 = vmatpush1.msra.mxu0 0.0
    %4866 = vmatprep.subr.mxu0 0.0
    %4867 = vmatpush1.msra.mxu0 0.0
    %4868 = vmatprep.subr.mxu0 0.0
    %4869 = vmatpush1.msra.mxu0 0.0
    %4870 = vmatprep.subr.mxu0 0.0
    %4871 = vmatpush1.msra.mxu0 0.0
    %4872 = vmatprep.subr.mxu0 0.0
    %4873 = vmatpush1.msra.mxu0 0.0
    %4874 = vmatprep.subr.mxu0 0.0
    %4875 = vmatpush1.msra.mxu0 0.0
    %4876 = vmatprep.subr.mxu0 0.0
    %4877 = vmatpush1.msra.mxu0 0.0
    %4878 = vmatprep.subr.mxu0 0.0
    %4879 = vmatpush1.msra.mxu0 0.0
    %4880 = vmatprep.subr.mxu0 0.0
    %4881 = vmatpush1.msra.mxu0 0.0
    %4882 = vmatprep.subr.mxu0 0.0
    %4883 = vmatpush1.msra.mxu0 0.0
    %4884 = vmatprep.subr.mxu0 0.0
    %4885 = vmatpush1.msra.mxu0 0.0
    %4886 = vmatprep.subr.mxu0 0.0
    %4887 = vmatpush1.msra.mxu0 0.0
    %4888 = vmatprep.subr.mxu0 0.0
    %4889 = vmatpush1.msra.mxu0 0.0
    %4890 = vmatprep.subr.mxu0 0.0
    %4891 = vmatpush1.msra.mxu0 0.0
    %4892 = vmatprep.subr.mxu0 0.0
    %4893 = vmatpush1.msra.mxu0 0.0
    %4894 = vmatprep.subr.mxu0 0.0
    %4895 = vmatpush1.msra.mxu0 0.0
    %4896 = vmatprep.subr.mxu0 0.0
    %4897 = vmatpush1.msra.mxu0 0.0
    %4898 = vmatprep.mubr.f32.mxu0 0.0
    %4899 = vmatmul.mubr.f32.gmra.mrb[0].mxu0 %v4829
    %v4900 = vpop.f32.mrb[0].mxu0
    %v4901 = vadd.f32 0.0, %v4900
    %v4902 = vpop.f32.mrb[0].mxu0
    %4903 = vmatprep.mubr.f32.mxu0 0.0
    %4904 = vmatmul.mubr.f32.gmra.mrb[0].mxu0 %v4832
    %v4905 = vpop.f32.mrb[0].mxu0
    %v4906 = vadd.f32 0.0, %v4905
    %v4907 = vpop.f32.mrb[0].mxu0
    %4908 = vdwg.mxu0
    %v4909 = vmul.f32 %v4901, %v4632
    %v4910 = vmul.f32 %v4906, %v4632
    %v4911 = vadd.f32 %v4909, %v4633
    %v4912 = vadd.f32 %v4910, %v4633
    %v4913 = vmax.f32 %v4911, 0.0
    %v4914 = vmax.f32 %v4912, 0.0
    %v4915 = vld [vmem:[#allocation6 + $0x36] ss:$0 sm:$0xff]
    %v4916 = vld [vmem:[#allocation6 + $0x37] ss:$0 sm:$0xff]
    %v4917 = vld [vmem:[#allocation6 + $0x40] ss:$0 sm:$0xff]
    %v4918 = vld [vmem:[#allocation6 + $0x41] ss:$0 sm:$0xff]
    %v4919 = vld [vmem:[#allocation6 + $0x42] ss:$0 sm:$0xff]
    %v4920 = vpack.c.bf16 %v4914, %v4913
    %v4921 = vld [vmem:[#allocation12] sm:$0xf]
    %v4922 = vld [vmem:[#allocation12 + $0x4] sm:$0xf]
    %v4923 = vld [vmem:[#allocation12 + $0x8] sm:$0xf]
    %v4924 = vld [vmem:[#allocation12 + $0xc] sm:$0xf]
    %v4929 = vunpack.c.l.b16 %v4921
    %v4930 = vunpack.c.l.b16 %v4922
    %v4931 = vunpack.c.l.b16 %v4923
    %v4932 = vunpack.c.l.b16 %v4924
    %v4933 = vpack.c.b16 %v4930, %v4929
    %v4934 = vpack.c.b16 %v4932, %v4931
    %v4938 = vsel %vm204, %v4920, 0
    %4940 = vmatprep.subr.bf16.mxu0 0
    %4941 = vmatpush1.bf16.msra.mxu0 %v4933
    %4942 = vmatprep.subr.bf16.mxu0 0
    %4943 = vmatpush1.bf16.msra.mxu0 %v4934
    %4944 = vmatprep.subr.bf16.mxu0 0
    %4945 = vmatpush1.bf16.msra.mxu0 0
    %4946 = vmatprep.subr.bf16.mxu0 0
    %4947 = vmatpush1.bf16.msra.mxu0 0
    %4948 = vmatprep.subr.bf16.mxu0 0
    %4949 = vmatpush1.bf16.msra.mxu0 0
    %4950 = vmatprep.subr.bf16.mxu0 0
    %4951 = vmatpush1.bf16.msra.mxu0 0
    %4952 = vmatprep.subr.bf16.mxu0 0
    %4953 = vmatpush1.bf16.msra.mxu0 0
    %4954 = vmatprep.subr.bf16.mxu0 0
    %4955 = vmatpush1.bf16.msra.mxu0 0
    %4956 = vmatprep.subr.bf16.mxu0 0
    %4957 = vmatpush1.bf16.msra.mxu0 0
    %4958 = vmatprep.subr.bf16.mxu0 0
    %4959 = vmatpush1.bf16.msra.mxu0 0
    %4960 = vmatprep.subr.bf16.mxu0 0
    %4961 = vmatpush1.bf16.msra.mxu0 0
    %4962 = vmatprep.subr.bf16.mxu0 0
    %4963 = vmatpush1.bf16.msra.mxu0 0
    %4964 = vmatprep.subr.bf16.mxu0 0
    %4965 = vmatpush1.bf16.msra.mxu0 0
    %4966 = vmatprep.subr.bf16.mxu0 0
    %4967 = vmatpush1.bf16.msra.mxu0 0
    %4968 = vmatprep.subr.bf16.mxu0 0
    %4969 = vmatpush1.bf16.msra.mxu0 0
    %4970 = vmatprep.subr.bf16.mxu0 0
    %4971 = vmatpush1.bf16.msra.mxu0 0
    %4972 = vmatprep.mubr.bf16.mxu0 0
    %4973 = vmatmul.mubr.bf16.gmra.mrb[0].mxu0 %v4938
    %v4974 = vpop.f32.mrb[0].mxu0
    %v4975 = vadd.f32 0.0, %v4974
    %v4976 = vpop.f32.mrb[0].mxu0
    %v4977 = vpop.f32.mrb[0].mxu0
    %v4978 = vadd.f32 0.0, %v4977
    %v4979 = vpop.f32.mrb[0].mxu0
    %4980 = vdwg.mxu0
    %v4981 = vmul.f32 %v4975, %v4915
    %v4982 = vmul.f32 %v4978, %v4915
    %v4983 = vadd.f32 %v4981, %v4916
    %v4984 = vadd.f32 %v4982, %v4916
    %v4985 = vmax.f32 %v4983, 0.0
    %v4986 = vmax.f32 %v4984, 0.0
    %v4987 = vpack.c.bf16 %v4986, %v4985
    %v4988 = vld [vmem:[%s11] sm:$0xf]
    %v4989 = vld [vmem:[%s11 + $0x4] sm:$0xf]
    %v4990 = vld [vmem:[%s11 + $0x8] sm:$0xf]
    %v4991 = vld [vmem:[%s11 + $0xc] sm:$0xf]
    %v4992 = vld [vmem:[%s11 + $0x10] sm:$0xf]
    %v4993 = vld [vmem:[%s11 + $0x14] sm:$0xf]
    %v4994 = vld [vmem:[%s11 + $0x18] sm:$0xf]
    %v4995 = vld [vmem:[%s11 + $0x1c] sm:$0xf]
    %v5004 = vunpack.c.l.b16 %v4988
    %v5005 = vunpack.c.l.b16 %v4989
    %v5006 = vunpack.c.l.b16 %v4990
    %v5007 = vunpack.c.l.b16 %v4991
    %v5008 = vunpack.c.l.b16 %v4992
    %v5009 = vunpack.c.l.b16 %v4993
    %v5010 = vunpack.c.l.b16 %v4994
    %v5011 = vunpack.c.l.b16 %v4995
    %v5012 = vpack.c.b16 %v5005, %v5004
    %v5013 = vpack.c.b16 %v5007, %v5006
    %v5014 = vpack.c.b16 %v5009, %v5008
    %v5015 = vpack.c.b16 %v5011, %v5010
    %v5021 = vsel %vm931, %v4987, 0
    %5023 = vmatprep.subr.bf16.mxu0 0
    %5024 = vmatpush1.bf16.msra.mxu0 %v5012
    %5025 = vmatprep.subr.bf16.mxu0 0
    %5026 = vmatpush1.bf16.msra.mxu0 %v5013
    %5027 = vmatprep.subr.bf16.mxu0 0
    %5028 = vmatpush1.bf16.msra.mxu0 %v5014
    %5029 = vmatprep.subr.bf16.mxu0 0
    %5030 = vmatpush1.bf16.msra.mxu0 %v5015
    %5031 = vmatprep.subr.bf16.mxu0 0
    %5032 = vmatpush1.bf16.msra.mxu0 0
    %5033 = vmatprep.subr.bf16.mxu0 0
    %5034 = vmatpush1.bf16.msra.mxu0 0
    %5035 = vmatprep.subr.bf16.mxu0 0
    %5036 = vmatpush1.bf16.msra.mxu0 0
    %5037 = vmatprep.subr.bf16.mxu0 0
    %5038 = vmatpush1.bf16.msra.mxu0 0
    %5039 = vmatprep.subr.bf16.mxu0 0
    %5040 = vmatpush1.bf16.msra.mxu0 0
    %5041 = vmatprep.subr.bf16.mxu0 0
    %5042 = vmatpush1.bf16.msra.mxu0 0
    %5043 = vmatprep.subr.bf16.mxu0 0
    %5044 = vmatpush1.bf16.msra.mxu0 0
    %5045 = vmatprep.subr.bf16.mxu0 0
    %5046 = vmatpush1.bf16.msra.mxu0 0
    %5047 = vmatprep.subr.bf16.mxu0 0
    %5048 = vmatpush1.bf16.msra.mxu0 0
    %5049 = vmatprep.subr.bf16.mxu0 0
    %5050 = vmatpush1.bf16.msra.mxu0 0
    %5051 = vmatprep.subr.bf16.mxu0 0
    %5052 = vmatpush1.bf16.msra.mxu0 0
    %5053 = vmatprep.subr.bf16.mxu0 0
    %5054 = vmatpush1.bf16.msra.mxu0 0
    %5055 = vmatprep.mubr.bf16.mxu0 0
    %5056 = vmatmul.mubr.bf16.gmra.mrb[0].mxu0 %v5021
    %v5057 = vpop.f32.mrb[0].mxu0
    %v5058 = vadd.f32 0.0, %v5057
    %v5059 = vpop.f32.mrb[0].mxu0
    %v5060 = vpop.f32.mrb[0].mxu0
    %v5061 = vadd.f32 0.0, %v5060
    %v5062 = vpop.f32.mrb[0].mxu0
    %5063 = vdwg.mxu0
    %v5064 = vmul.f32 %v5058, %v4917
    %v5065 = vmul.f32 %v5061, %v4917
    %v5066 = vadd.f32 %v5064, %v4918
    %v5067 = vadd.f32 %v5065, %v4918
    %v5068 = vmax.f32 %v5066, 0.0
    %v5069 = vmax.f32 %v5067, 0.0
    %v5070 = vpack.c.bf16 %v5069, %v5068
    %v5071 = vld [vmem:[%s12] sm:$0xf]
    %v5072 = vld [vmem:[%s12 + $0x4] sm:$0xf]
    %v5073 = vld [vmem:[%s12 + $0x8] sm:$0xf]
    %v5074 = vld [vmem:[%s12 + $0xc] sm:$0xf]
    %v5079 = vunpack.c.l.b16 %v5071
    %v5080 = vunpack.c.l.b16 %v5072
    %v5081 = vunpack.c.l.b16 %v5073
    %v5082 = vunpack.c.l.b16 %v5074
    %v5083 = vpack.c.b16 %v5080, %v5079
    %v5084 = vpack.c.b16 %v5082, %v5081
    %v5088 = vsel %vm204, %v5070, 0
    %5090 = vmatprep.subr.bf16.mxu0 0
    %5091 = vmatpush1.bf16.msra.mxu0 %v5083
    %5092 = vmatprep.subr.bf16.mxu0 0
    %5093 = vmatpush1.bf16.msra.mxu0 %v5084
    %5094 = vmatprep.subr.bf16.mxu0 0
    %5095 = vmatpush1.bf16.msra.mxu0 0
    %5096 = vmatprep.subr.bf16.mxu0 0
    %5097 = vmatpush1.bf16.msra.mxu0 0
    %5098 = vmatprep.subr.bf16.mxu0 0
    %5099 = vmatpush1.bf16.msra.mxu0 0
    %5100 = vmatprep.subr.bf16.mxu0 0
    %5101 = vmatpush1.bf16.msra.mxu0 0
    %5102 = vmatprep.subr.bf16.mxu0 0
    %5103 = vmatpush1.bf16.msra.mxu0 0
    %5104 = vmatprep.subr.bf16.mxu0 0
    %5105 = vmatpush1.bf16.msra.mxu0 0
    %5106 = vmatprep.subr.bf16.mxu0 0
    %5107 = vmatpush1.bf16.msra.mxu0 0
    %5108 = vmatprep.subr.bf16.mxu0 0
    %5109 = vmatpush1.bf16.msra.mxu0 0
    %5110 = vmatprep.subr.bf16.mxu0 0
    %5111 = vmatpush1.bf16.msra.mxu0 0
    %5112 = vmatprep.subr.bf16.mxu0 0
    %5113 = vmatpush1.bf16.msra.mxu0 0
    %5114 = vmatprep.subr.bf16.mxu0 0
    %5115 = vmatpush1.bf16.msra.mxu0 0
    %5116 = vmatprep.subr.bf16.mxu0 0
    %5117 = vmatpush1.bf16.msra.mxu0 0
    %5118 = vmatprep.subr.bf16.mxu0 0
    %5119 = vmatpush1.bf16.msra.mxu0 0
    %5120 = vmatprep.subr.bf16.mxu0 0
    %5121 = vmatpush1.bf16.msra.mxu0 0
    %5122 = vmatprep.mubr.bf16.mxu0 0
    %5123 = vmatmul.mubr.bf16.gmra.mrb[0].mxu0 %v5088
    %v5124 = vpop.f32.mrb[0].mxu0
    %v5125 = vadd.f32 %v4919, %v5124
    %v5126 = vpop.f32.mrb[0].mxu0
    %v5127 = vpop.f32.mrb[0].mxu0
    %v5128 = vadd.f32 %v4919, %v5127
    %v5129 = vpop.f32.mrb[0].mxu0
    %5130 = vdwg.mxu0
    %vm5131 = vcmask 23552
    %v5132 = vsel %vm5131, %v5125, -inf
    %5133 = vmax.xlane.f32.xlu0 %v5132
    %v5134 = vpop.xlane.xlu0 %5133
    %v5135 = vsel %vm5131, %v5128, -inf
    %5136 = vmax.xlane.f32.xlu0 %v5135
    %v5137 = vpop.xlane.xlu0 %5136
    %v5138 = vsub.f32 %v5125, %v5134
    %v5139 = vsub.f32 %v5128, %v5137
    %v5140 = vmul.f32 %v5138, 1.442695
    %v5141 = vpow.pop %v5140
    %v5142 = vmul.f32 %v5139, 1.442695
    %v5143 = vpow.pop %v5142
    %v5144 = vsel %vm5131, %v5141, 0.0
    %5145 = vadd.xlane.f32.xlu0 %v5144
    %v5146 = vpop.xlane.xlu0 %5145
    %v5147 = vsel %vm5131, %v5143, 0.0
    %5148 = vadd.xlane.f32.xlu0 %v5147
    %v5149 = vpop.xlane.xlu0 %5148
    %v5150 = vlog2.pop %v5146
    %v5151 = vmul.f32 %v5150, 0.6931472
    %v5152 = vlog2.pop %v5149
    %v5153 = vmul.f32 %v5152, 0.6931472
    %v5154 = vsub.f32 %v5138, %v5151
    %v5155 = vsub.f32 %v5139, %v5153
    %5156 = vst.msk [vmem:[%s13] sm:$0xff] %vm5131, %v5154
    %5157 = vst.msk [vmem:[%s13 + $0x8] sm:$0xff] %vm5131, %v5155
    // Predicated region
    $region82: #{tpu_custom_call.1} parent=1 // pred_check
      _
    $region83: #{tpu_custom_call.1} parent=1 // pred_check_branch
      %5159 = sbr.rel (0) target = $region85
    $region84: #{tpu_custom_call.1} parent=1 // pred_region
      _
    $region85: #{tpu_custom_call.1} parent=1 // pred_fallthru
      _
    // Predicated region
    $region86: #{tpu_custom_call.1} parent=1 // pred_check
      _
    $region87: #{tpu_custom_call.1} parent=1 // pred_check_branch
      %5161 = sbr.rel (0) target = $region89
    $region88: #{tpu_custom_call.1} parent=1 // pred_region
      _
    $region89: #{tpu_custom_call.1} parent=1 // pred_fallthru
      _
    %5162 = vsyncpa [#allocation3], 1
    %5163 = vsyncpa [#allocation5], 1
    %5164 = vsyncpa [#allocation8], 1
    %5165 = vsyncpa [#allocation11], 1

</llo_original>
